<compile_context>
chip_gen: v5e
topology: v5e:2x2
jax: 0.10.0
libtpu: 0.0.40
codegen_flags: <defaults>
</compile_context>

<pallas_src>
import functools

import numpy as np
import jax
import jax.numpy as jnp
from jax.experimental import pallas as pl
from jax.experimental.pallas import tpu as pltpu

NEG_SLOPE = 0.2      # LeakyReLU(0.2)
BN_EPS = 1e-5        # nn.BatchNorm2d default eps
TM_CAP = 512         # layer-1 M=512 -> single grid step, >=256 rows for MXU
TN_CAP = 512         # keep N tiles >=256 when OC>=256 (v6e/v7x 256-wide MXU)
TK_CAP = 4096        # worst-case bf16 weight block 4 MiB -> v7x VMEM friendly
VMEM_LIMIT = 48 * 1024 * 1024   # explicit scoped-VMEM budget (safe on v7x)


def _round_up(x, m):
    return (x + m - 1) // m * m


def _lrelu(v):
    return jnp.where(v > 0, v, NEG_SLOPE * v)


# ---------------------------------------------------------------------------
# Kernel 1: conv-as-matmul (bf16 MXU inputs, f32 accumulate) with three
# epilogue modes:
#   "plain"    : + bias, optional LeakyReLU                       (layer 1)
#   "bn_fused" : two-pass BatchNorm + LeakyReLU fused in epilogue (layers 2-4)
#   "bn_stats" : emit per-channel sum / sum-of-squares (fallback when the
#                M or K grid has >1 tile; normalize in a separate kernel)
# ---------------------------------------------------------------------------
def _conv_kernel(x_ref, w_ref, *refs, mode, apply_lrelu, nk, inv_count,
                 m_real):
    if mode == "plain":
        b_ref, o_ref = refs[0], refs[1]
        scratch = refs[2:]
    elif mode == "bn_fused":
        g_ref, bt_ref, o_ref = refs[0], refs[1], refs[2]
        scratch = refs[3:]
    else:  # "bn_stats"
        o_ref, sum_ref, sq_ref = refs[0], refs[1], refs[2]
        scratch = refs[3:]
    acc_ref = scratch[0] if nk > 1 else None

    i = pl.program_id(1)      # M-tile index   (grid order is (j, i, k))
    k = pl.program_id(2)      # K-tile index

    def epilogue(acc):
        if mode == "plain":
            out = acc + b_ref[...]                    # f32 epilogue
            if apply_lrelu:
                out = _lrelu(out)
            o_ref[...] = out.astype(o_ref.dtype)
        elif mode == "bn_fused":
            # Entire batch (all M rows) is resident in this single block, so
            # do an exact two-pass BN: mean, then masked centered variance
            # (avoids catastrophic cancellation of E[x^2]-E[x]^2).
            mean = jnp.sum(acc, axis=0, keepdims=True) * inv_count
            cen = acc - mean
            if m_real < acc.shape[0]:                 # mask zero-padded rows
                rows = jax.lax.broadcasted_iota(jnp.int32, acc.shape, 0)
                cen = jnp.where(rows < m_real, cen, 0.0)
            var = jnp.sum(cen * cen, axis=0, keepdims=True) * inv_count
            scale = g_ref[...] * jax.lax.rsqrt(var + BN_EPS)
            shift = bt_ref[...] - mean * scale
            y = acc * scale + shift
            if apply_lrelu:
                y = _lrelu(y)
            o_ref[...] = y.astype(o_ref.dtype)
        else:  # "bn_stats" fallback: stats of the (bias-free) conv output.
            o_ref[...] = acc.astype(o_ref.dtype)

            @pl.when(i == 0)
            def _():
                sum_ref[...] = jnp.zeros(sum_ref.shape, sum_ref.dtype)
                sq_ref[...] = jnp.zeros(sq_ref.shape, sq_ref.dtype)

            sum_ref[...] += jnp.sum(acc, axis=0, keepdims=True)
            sq_ref[...] += jnp.sum(acc * acc, axis=0, keepdims=True)

    if nk == 1:
        # Single K block: no accumulator scratch, no init/finalize branches.
        epilogue(jnp.dot(x_ref[...], w_ref[...],
                         preferred_element_type=jnp.float32))
    else:
        @pl.when(k == 0)
        def _():
            acc_ref[...] = jnp.zeros_like(acc_ref)

        acc_ref[...] += jnp.dot(x_ref[...], w_ref[...],
                                preferred_element_type=jnp.float32)

        @pl.when(k == nk - 1)
        def _():
            epilogue(acc_ref[...])


def conv_layer(patches, weight, bias, *, apply_lrelu, bn, gamma=None,
               beta=None):
    """(M,K) @ (K,OC) with a fused epilogue. Returns padded (Mp, Np) bf16.

    bn=True layers follow nn.Conv2d(bias=False): no bias is ever added on the
    BN paths (so fused BN statistics are exact by construction).
    """
    M, K = patches.shape
    OC = weight.shape[1]
    TM = min(TM_CAP, _round_up(M, 16))
    TN = min(TN_CAP, _round_up(OC, 128))
    TK = min(TK_CAP, _round_up(K, 128))
    Mp, Np, Kp = _round_up(M, TM), _round_up(OC, TN), _round_up(K, TK)
    ni, nj, nk = Mp // TM, Np // TN, Kp // TK

    x = jnp.pad(patches.astype(jnp.bfloat16), ((0, Mp - M), (0, Kp - K)))
    w = jnp.pad(weight.astype(jnp.bfloat16), ((0, Kp - K), (0, Np - OC)))

    if bn:
        mode = "bn_fused" if (ni == 1 and nk == 1) else "bn_stats"
    else:
        mode = "plain"

    vec_spec = pl.BlockSpec((1, TN), lambda j, i, k: (0, j))
    in_arrays = [x, w]
    in_specs = [pl.BlockSpec((TM, TK), lambda j, i, k: (i, k)),
                pl.BlockSpec((TK, TN), lambda j, i, k: (k, j))]
    if mode == "plain":
        b = jnp.pad(bias.astype(jnp.float32), (0, Np - OC)).reshape(1, Np)
        in_arrays.append(b)
        in_specs.append(vec_spec)
    elif mode == "bn_fused":
        g = jnp.pad(gamma.astype(jnp.float32), (0, Np - OC)).reshape(1, Np)
        bt = jnp.pad(beta.astype(jnp.float32), (0, Np - OC)).reshape(1, Np)
        in_arrays += [g, bt]
        in_specs += [vec_spec, vec_spec]

    out_shapes = [jax.ShapeDtypeStruct((Mp, Np), jnp.bfloat16)]
    out_specs = [pl.BlockSpec((TM, TN), lambda j, i, k: (i, j))]
    if mode == "bn_stats":
        out_shapes += [jax.ShapeDtypeStruct((1, Np), jnp.float32)] * 2
        out_specs += [vec_spec, vec_spec]

    scratch = [pltpu.VMEM((TM, TN), jnp.float32)] if nk > 1 else []

    if mode == "bn_stats":
        # stats accumulate across i and k -> those axes must be "arbitrary"
        sems = ("parallel", "arbitrary", "arbitrary")
    else:
        sems = ("parallel", "parallel", "arbitrary")

    cost = pl.CostEstimate(
        flops=2 * M * K * OC,
        transcendentals=OC if bn else 0,
        bytes_accessed=2 * (Mp * Kp + Kp * Np + Mp * Np) + 12 * Np)

    kern = functools.partial(_conv_kernel, mode=mode, apply_lrelu=apply_lrelu,
                             nk=nk, inv_count=1.0 / float(M), m_real=M)
    res = pl.pallas_call(
        kern,
        out_shape=tuple(out_shapes),
        grid_spec=pltpu.PrefetchScalarGridSpec(
            num_scalar_prefetch=0,
            grid=(nj, ni, nk),                       # (j, i, k)
            in_specs=in_specs,
            out_specs=tuple(out_specs),
            scratch_shapes=scratch,
        ),
        compiler_params=pltpu.CompilerParams(
            dimension_semantics=sems, vmem_limit_bytes=VMEM_LIMIT),
        cost_estimate=cost,
    )(*in_arrays)

    if mode == "bn_stats":
        out_p, s, sq = res
        return batchnorm_act(out_p, s, sq, gamma, beta, count=M,
                             apply_lrelu=apply_lrelu)
    return res[0]


# ---------------------------------------------------------------------------
# Kernel 2: BatchNorm normalize + LeakyReLU fallback (only used when the conv
# grid has more than one M/K tile; never triggered at the spec shapes).
# ---------------------------------------------------------------------------
def _bn_affine_kernel(x_ref, sum_ref, sq_ref, gamma_ref, beta_ref, o_ref, *,
                      inv_count, apply_lrelu):
    mean = sum_ref[...] * inv_count
    var = sq_ref[...] * inv_count - mean * mean          # biased variance
    scale = gamma_ref[...] * jax.lax.rsqrt(var + BN_EPS)
    shift = beta_ref[...] - mean * scale
    y = x_ref[...].astype(jnp.float32) * scale + shift
    if apply_lrelu:
        y = _lrelu(y)
    o_ref[...] = y.astype(o_ref.dtype)


def batchnorm_act(x_pad, bn_sum, bn_sq, gamma, beta, count, apply_lrelu):
    """Training-mode BatchNorm2d (batch stats, biased var) + LeakyReLU(0.2)."""
    Mp, Np = x_pad.shape
    OC = gamma.shape[0]
    g = jnp.pad(gamma.astype(jnp.float32), (0, Np - OC)).reshape(1, Np)
    bt = jnp.pad(beta.astype(jnp.float32), (0, Np - OC)).reshape(1, Np)
    TMb = Mp if Mp <= 512 else 512      # Mp is a multiple of 512 when > 512

    kern = functools.partial(_bn_affine_kernel, inv_count=1.0 / float(count),
                             apply_lrelu=apply_lrelu)
    vec_spec = pl.BlockSpec((1, Np), lambda i: (0, 0))
    cost = pl.CostEstimate(flops=5 * Mp * Np, transcendentals=Np,
                           bytes_accessed=4 * Mp * Np)
    return pl.pallas_call(
        kern,
        out_shape=jax.ShapeDtypeStruct((Mp, Np), jnp.bfloat16),
        grid_spec=pltpu.PrefetchScalarGridSpec(
            num_scalar_prefetch=0,
            grid=(Mp // TMb,),
            in_specs=[pl.BlockSpec((TMb, Np), lambda i: (i, 0)),
                      vec_spec, vec_spec, vec_spec, vec_spec],
            out_specs=pl.BlockSpec((TMb, Np), lambda i: (i, 0)),
        ),
        compiler_params=pltpu.CompilerParams(
            dimension_semantics=("parallel",), vmem_limit_bytes=VMEM_LIMIT),
        cost_estimate=cost,
    )(x_pad, bn_sum, bn_sq, g, bt)


# ---------------------------------------------------------------------------
# Kernel 3: final OC=1 conv head as a VPU multiply + lane reduce over K.
# Avoids zero-padding the (K,1) weight to (K,128) and a 99%-idle MXU call.
# ---------------------------------------------------------------------------
def _final_head_kernel(x_ref, w_ref, b_ref, o_ref):
    x = x_ref[...].astype(jnp.float32)
    w = w_ref[...].astype(jnp.float32)
    o_ref[...] = jnp.sum(x * w, axis=1, keepdims=True) + b_ref[...]


def final_conv_1ch(patches, weight, bias):
    """(M,K) @ (K,1) + bias via VPU elementwise multiply + reduce over K."""
    M, K = patches.shape
    Kp = _round_up(K, 128)
    TM = min(512, _round_up(M, 8))
    Mp = _round_up(M, TM)

    x = jnp.pad(patches.astype(jnp.bfloat16), ((0, Mp - M), (0, Kp - K)))
    w = jnp.pad(weight.reshape(1, K).astype(jnp.bfloat16),
                ((0, 0), (0, Kp - K)))
    b = bias.astype(jnp.float32).reshape(1, 1)

    cost = pl.CostEstimate(flops=2 * M * K, transcendentals=0,
                           bytes_accessed=2 * (Mp * Kp + Kp) + 4 * Mp)
    return pl.pallas_call(
        _final_head_kernel,
        out_shape=jax.ShapeDtypeStruct((Mp, 1), jnp.float32),
        grid_spec=pltpu.PrefetchScalarGridSpec(
            num_scalar_prefetch=0,
            grid=(Mp // TM,),
            in_specs=[pl.BlockSpec((TM, Kp), lambda i: (i, 0)),
                      pl.BlockSpec((1, Kp), lambda i: (0, 0)),
                      pl.BlockSpec((1, 1), lambda i: (0, 0))],
            out_specs=pl.BlockSpec((TM, 1), lambda i: (i, 0)),
        ),
        compiler_params=pltpu.CompilerParams(
            dimension_semantics=("parallel",), vmem_limit_bytes=VMEM_LIMIT),
        cost_estimate=cost,
    )(x, w, b)


# ---------------------------------------------------------------------------
# JAX glue: reflect pad + im2col via static strided slices (no gathers)
# ---------------------------------------------------------------------------
def reflect_pad_and_patches(x_nhwc, k, stride):
    xp = jnp.pad(x_nhwc.astype(jnp.bfloat16),
                 ((0, 0), (1, 1), (1, 1), (0, 0)), mode="reflect")
    N, Hp, Wp, C = xp.shape
    OH = (Hp - k) // stride + 1
    OW = (Wp - k) // stride + 1
    taps = []
    for kh in range(k):
        for kw in range(k):
            taps.append(jax.lax.slice(
                xp,
                (0, kh, kw, 0),
                (N, kh + (OH - 1) * stride + 1, kw + (OW - 1) * stride + 1, C),
                (1, stride, stride, 1)))               # (N, OH, OW, C)
    p = jnp.stack(taps, axis=3)                        # (N, OH, OW, k*k, C)
    return p.reshape(N * OH * OW, k * k * C), (N, OH, OW)


# ---------------------------------------------------------------------------
# Parameter init (deterministic, synthetic)
# ---------------------------------------------------------------------------
def init_params(key, in_channels=3, features=(64, 128, 256, 512)):
    specs = []
    specs.append(dict(cin=in_channels * 2, cout=features[0], stride=2,
                      bias=True, bn=False, act=True))            # self.initial
    cin = features[0]
    for f in features[1:]:
        stride = 1 if f == features[-1] else 2
        specs.append(dict(cin=cin, cout=f, stride=stride,
                          bias=False, bn=True, act=True))        # CNNBlock
        cin = f
    specs.append(dict(cin=cin, cout=1, stride=1,
                      bias=True, bn=False, act=False))           # final Conv2d

    params = []
    for s in specs:
        key, k1, k2, k3, k4 = jax.random.split(key, 5)
        w = jax.random.normal(k1, (4, 4, s["cin"], s["cout"]), jnp.float32) * 0.05
        b = (jax.random.normal(k2, (s["cout"],), jnp.float32) * 0.05
             if s["bias"] else jnp.zeros((s["cout"],), jnp.float32))
        gamma = (1.0 + 0.1 * jax.random.normal(k3, (s["cout"],), jnp.float32)
                 if s["bn"] else None)
        beta = (0.1 * jax.random.normal(k4, (s["cout"],), jnp.float32)
                if s["bn"] else None)
        params.append(dict(w=w, b=b, gamma=gamma, beta=beta, **s))
    return params


# ---------------------------------------------------------------------------
# Forward pass (Pallas) and pure-JAX reference
# ---------------------------------------------------------------------------
def discriminator_forward(params, x_nchw, y_nchw):
    z = jnp.concatenate([x_nchw, y_nchw], axis=1)       # cat along channels
    h = jnp.transpose(z, (0, 2, 3, 1))                  # NCHW -> NHWC
    last = len(params) - 1
    for li, p in enumerate(params):
        patches, (N, OH, OW) = reflect_pad_and_patches(h, 4, p["stride"])
        M, OC = N * OH * OW, p["cout"]
        w2d = p["w"].reshape(4 * 4 * p["cin"], OC)
        if li == last and OC == 1:
            out_p = final_conv_1ch(patches, w2d, p["b"])      # f32 output
        else:
            out_p = conv_layer(patches, w2d, p["b"],
                               apply_lrelu=p["act"], bn=p["bn"],
                               gamma=p["gamma"], beta=p["beta"])  # bf16 output
        h = out_p[:M, :OC].reshape(N, OH, OW, OC)
    return jnp.transpose(h, (0, 3, 1, 2))               # NHWC -> NCHW


def reference_forward(params, x_nchw, y_nchw):
    z = jnp.concatenate([x_nchw, y_nchw], axis=1)
    h = jnp.transpose(z, (0, 2, 3, 1))
    for p in params:
        hp = jnp.pad(h, ((0, 0), (1, 1), (1, 1), (0, 0)), mode="reflect")
        out = jax.lax.conv_general_dilated(
            hp, p["w"], window_strides=(p["stride"], p["stride"]),
            padding="VALID", dimension_numbers=("NHWC", "HWIO", "NHWC"),
            precision=jax.lax.Precision.HIGHEST)
        out = out + p["b"][None, None, None, :]
        if p["bn"]:
            mean = out.mean(axis=(0, 1, 2))
            var = out.var(axis=(0, 1, 2))
            out = (out - mean) / jnp.sqrt(var + BN_EPS) * p["gamma"] + p["beta"]
        if p["act"]:
            out = jnp.where(out > 0, out, NEG_SLOPE * out)
        h = out
    return jnp.transpose(h, (0, 3, 1, 2))


if __name__ == "__main__":
    key = jax.random.PRNGKey(0)
    kx, ky, kp = jax.random.split(key, 3)
    N, C, H, W = 2, 3, 32, 32
    x = jax.random.normal(kx, (N, C, H, W), jnp.float32)
    y = jax.random.normal(ky, (N, C, H, W), jnp.float32)
    params = init_params(kp)

    fwd = jax.jit(lambda a, b: discriminator_forward(params, a, b))
    out = jax.block_until_ready(fwd(x, y))

    ref = jax.block_until_ready(reference_forward(params, x, y))
    assert out.shape == ref.shape == (N, 1, 2, 2), out.shape

    out_np, ref_np = np.asarray(out, dtype=np.float32), np.asarray(ref)
    err = float(np.max(np.abs(out_np - ref_np)))
    # bf16 MXU inputs / bf16 activations with f32 accumulation: tolerance
    # scaled by the output range.
    tol = 2e-2 * max(1.0, float(np.max(np.abs(ref_np))))
    assert err <= tol, f"max abs err {err} > tol {tol}"
    print("KERNEL_OK")
</pallas_src>

<mosaic_0001>
module attributes {stable_mosaic.version = 11 : i64} {
  func.func @_conv_kernel(%arg0: i32, %arg1: i32, %arg2: i32, %arg3: memref<512x128xbf16, #tpu.memory_space<vmem>>, %arg4: memref<128x128xbf16, #tpu.memory_space<vmem>>, %arg5: memref<1x128xf32, #tpu.memory_space<vmem>>, %arg6: memref<512x128xbf16, #tpu.memory_space<vmem>>) attributes {dimension_semantics = [#tpu.dimension_semantics<parallel>, #tpu.dimension_semantics<parallel>, #tpu.dimension_semantics<arbitrary>], iteration_bounds = array<i64: 1, 1, 1>, scalar_prefetch = 0 : i64, scratch_operands = 0 : i64, tpu.core_type = #tpu.core_type<tc>, window_params = [{transform_indices = @transform_0, window_bounds = array<i64: 512, 128>}, {transform_indices = @transform_1, window_bounds = array<i64: 128, 128>}, {transform_indices = @transform_2, window_bounds = array<i64: 1, 128>}, {transform_indices = @transform_3, window_bounds = array<i64: 512, 128>}]} {
    %c0 = arith.constant 0 : index
    %c0_0 = arith.constant 0 : index
    %0 = vector.load %arg3[%c0, %c0_0] : memref<512x128xbf16, #tpu.memory_space<vmem>>, vector<512x128xbf16>
    %c0_1 = arith.constant 0 : index
    %c0_2 = arith.constant 0 : index
    %1 = vector.load %arg4[%c0_1, %c0_2] : memref<128x128xbf16, #tpu.memory_space<vmem>>, vector<128x128xbf16>
    %cst = arith.constant dense<0.000000e+00> : vector<512x128xf32>
    %2 = tpu.matmul %0, %1, %cst {dimension_numbers = #tpu.dot_dimension_numbers<[1], [0], [0], [1], [0, 0, 1, 1], [], []>} : vector<512x128xbf16>, vector<128x128xbf16>, vector<512x128xf32> -> vector<512x128xf32>
    %c0_3 = arith.constant 0 : index
    %c0_4 = arith.constant 0 : index
    %3 = vector.load %arg5[%c0_3, %c0_4] : memref<1x128xf32, #tpu.memory_space<vmem>>, vector<1x128xf32>
    %4 = vector.broadcast %3 : vector<1x128xf32> to vector<512x128xf32>
    %5 = arith.addf %2, %4 : vector<512x128xf32>
    %cst_5 = arith.constant 0.000000e+00 : f32
    %6 = vector.broadcast %cst_5 : f32 to vector<512x128xf32>
    %7 = arith.cmpf ogt, %5, %6 : vector<512x128xf32>
    %cst_6 = arith.constant 2.000000e-01 : f32
    %8 = vector.broadcast %cst_6 : f32 to vector<512x128xf32>
    %9 = arith.mulf %8, %5 : vector<512x128xf32>
    %10 = arith.select %7, %5, %9 : vector<512x128xi1>, vector<512x128xf32>
    %11 = arith.truncf %10 : vector<512x128xf32> to vector<512x128xbf16>
    %c0_7 = arith.constant 0 : index
    %c0_8 = arith.constant 0 : index
    %12 = vector.load %arg6[%c0_7, %c0_8] : memref<512x128xbf16, #tpu.memory_space<vmem>>, vector<512x128xbf16>
    tpu.vector_store %arg6[%c0_7, %c0_8], %11 {strides = array<i32>} : memref<512x128xbf16, #tpu.memory_space<vmem>>, vector<512x128xbf16>,
    return
  }
  func.func @transform_0(%arg0: i32, %arg1: i32, %arg2: i32) -> (i32, i32) {
    %c0_i32 = arith.constant 0 : i32
    return %arg1, %arg2 : i32, i32
  }
  func.func @transform_1(%arg0: i32, %arg1: i32, %arg2: i32) -> (i32, i32) {
    %c0_i32 = arith.constant 0 : i32
    return %arg2, %arg0 : i32, i32
  }
  func.func @transform_2(%arg0: i32, %arg1: i32, %arg2: i32) -> (i32, i32) {
    %c0_i32 = arith.constant 0 : i32
    %c0_i32_0 = arith.constant 0 : i32
    return %c0_i32, %arg0 : i32, i32
  }
  func.func @transform_3(%arg0: i32, %arg1: i32, %arg2: i32) -> (i32, i32) {
    %c0_i32 = arith.constant 0 : i32
    return %arg1, %arg0 : i32, i32
  }
}

module attributes {stable_mosaic.version = 11 : i64} {
  func.func @_conv_kernel(%arg0: i32, %arg1: i32, %arg2: i32, %arg3: memref<128x1024xbf16, #tpu.memory_space<vmem>>, %arg4: memref<1024x128xbf16, #tpu.memory_space<vmem>>, %arg5: memref<1x128xf32, #tpu.memory_space<vmem>>, %arg6: memref<1x128xf32, #tpu.memory_space<vmem>>, %arg7: memref<128x128xbf16, #tpu.memory_space<vmem>>) attributes {dimension_semantics = [#tpu.dimension_semantics<parallel>, #tpu.dimension_semantics<parallel>, #tpu.dimension_semantics<arbitrary>], iteration_bounds = array<i64: 1, 1, 1>, scalar_prefetch = 0 : i64, scratch_operands = 0 : i64, tpu.core_type = #tpu.core_type<tc>, window_params = [{transform_indices = @transform_0, window_bounds = array<i64: 128, 1024>}, {transform_indices = @transform_1, window_bounds = array<i64: 1024, 128>}, {transform_indices = @transform_2, window_bounds = array<i64: 1, 128>}, {transform_indices = @transform_3, window_bounds = array<i64: 1, 128>}, {transform_indices = @transform_4, window_bounds = array<i64: 128, 128>}]} {
    %c0 = arith.constant 0 : index
    %c0_0 = arith.constant 0 : index
    %0 = vector.load %arg3[%c0, %c0_0] : memref<128x1024xbf16, #tpu.memory_space<vmem>>, vector<128x1024xbf16>
    %c0_1 = arith.constant 0 : index
    %c0_2 = arith.constant 0 : index
    %1 = vector.load %arg4[%c0_1, %c0_2] : memref<1024x128xbf16, #tpu.memory_space<vmem>>, vector<1024x128xbf16>
    %cst = arith.constant dense<0.000000e+00> : vector<128x128xf32>
    %2 = tpu.matmul %0, %1, %cst {dimension_numbers = #tpu.dot_dimension_numbers<[1], [0], [0], [1], [0, 0, 1, 1], [], []>} : vector<128x1024xbf16>, vector<1024x128xbf16>, vector<128x128xf32> -> vector<128x128xf32>
    %cst_3 = arith.constant dense<0.000000e+00> : vector<128xf32>
    %3 = vector.multi_reduction <add>, %2, %cst_3 [0] : vector<128x128xf32> to vector<128xf32>
    %4 = vector.shape_cast %3 : vector<128xf32> to vector<1x128xf32>
    %cst_4 = arith.constant 7.812500e-03 : f32
    %5 = vector.broadcast %cst_4 : f32 to vector<1x128xf32>
    %6 = arith.mulf %4, %5 : vector<1x128xf32>
    %7 = vector.broadcast %6 : vector<1x128xf32> to vector<128x128xf32>
    %8 = arith.subf %2, %7 : vector<128x128xf32>
    %9 = arith.mulf %8, %8 : vector<128x128xf32>
    %cst_5 = arith.constant dense<0.000000e+00> : vector<128xf32>
    %10 = vector.multi_reduction <add>, %9, %cst_5 [0] : vector<128x128xf32> to vector<128xf32>
    %11 = vector.shape_cast %10 : vector<128xf32> to vector<1x128xf32>
    %cst_6 = arith.constant 7.812500e-03 : f32
    %12 = vector.broadcast %cst_6 : f32 to vector<1x128xf32>
    %13 = arith.mulf %11, %12 : vector<1x128xf32>
    %c0_7 = arith.constant 0 : index
    %c0_8 = arith.constant 0 : index
    %14 = vector.load %arg5[%c0_7, %c0_8] : memref<1x128xf32, #tpu.memory_space<vmem>>, vector<1x128xf32>
    %cst_9 = arith.constant 9.99999974E-6 : f32
    %15 = vector.broadcast %cst_9 : f32 to vector<1x128xf32>
    %16 = arith.addf %13, %15 : vector<1x128xf32>
    %17 = math.rsqrt %16 : vector<1x128xf32>
    %18 = arith.mulf %14, %17 : vector<1x128xf32>
    %c0_10 = arith.constant 0 : index
    %c0_11 = arith.constant 0 : index
    %19 = vector.load %arg6[%c0_10, %c0_11] : memref<1x128xf32, #tpu.memory_space<vmem>>, vector<1x128xf32>
    %20 = arith.mulf %6, %18 : vector<1x128xf32>
    %21 = arith.subf %19, %20 : vector<1x128xf32>
    %22 = vector.broadcast %18 : vector<1x128xf32> to vector<128x128xf32>
    %23 = arith.mulf %2, %22 : vector<128x128xf32>
    %24 = vector.broadcast %21 : vector<1x128xf32> to vector<128x128xf32>
    %25 = arith.addf %23, %24 : vector<128x128xf32>
    %cst_12 = arith.constant 0.000000e+00 : f32
    %26 = vector.broadcast %cst_12 : f32 to vector<128x128xf32>
    %27 = arith.cmpf ogt, %25, %26 : vector<128x128xf32>
    %cst_13 = arith.constant 2.000000e-01 : f32
    %28 = vector.broadcast %cst_13 : f32 to vector<128x128xf32>
    %29 = arith.mulf %28, %25 : vector<128x128xf32>
    %30 = arith.select %27, %25, %29 : vector<128x128xi1>, vector<128x128xf32>
    %31 = arith.truncf %30 : vector<128x128xf32> to vector<128x128xbf16>
    %c0_14 = arith.constant 0 : index
    %c0_15 = arith.constant 0 : index
    %32 = vector.load %arg7[%c0_14, %c0_15] : memref<128x128xbf16, #tpu.memory_space<vmem>>, vector<128x128xbf16>
    tpu.vector_store %arg7[%c0_14, %c0_15], %31 {strides = array<i32>} : memref<128x128xbf16, #tpu.memory_space<vmem>>, vector<128x128xbf16>,
    return
  }
  func.func @transform_0(%arg0: i32, %arg1: i32, %arg2: i32) -> (i32, i32) {
    %c0_i32 = arith.constant 0 : i32
    return %arg1, %arg2 : i32, i32
  }
  func.func @transform_1(%arg0: i32, %arg1: i32, %arg2: i32) -> (i32, i32) {
    %c0_i32 = arith.constant 0 : i32
    return %arg2, %arg0 : i32, i32
  }
  func.func @transform_2(%arg0: i32, %arg1: i32, %arg2: i32) -> (i32, i32) {
    %c0_i32 = arith.constant 0 : i32
    %c0_i32_0 = arith.constant 0 : i32
    return %c0_i32, %arg0 : i32, i32
  }
  func.func @transform_3(%arg0: i32, %arg1: i32, %arg2: i32) -> (i32, i32) {
    %c0_i32 = arith.constant 0 : i32
    %c0_i32_0 = arith.constant 0 : i32
    return %c0_i32, %arg0 : i32, i32
  }
  func.func @transform_4(%arg0: i32, %arg1: i32, %arg2: i32) -> (i32, i32) {
    %c0_i32 = arith.constant 0 : i32
    return %arg1, %arg0 : i32, i32
  }
}

module attributes {stable_mosaic.version = 11 : i64} {
  func.func @_conv_kernel(%arg0: i32, %arg1: i32, %arg2: i32, %arg3: memref<32x2048xbf16, #tpu.memory_space<vmem>>, %arg4: memref<2048x256xbf16, #tpu.memory_space<vmem>>, %arg5: memref<1x256xf32, #tpu.memory_space<vmem>>, %arg6: memref<1x256xf32, #tpu.memory_space<vmem>>, %arg7: memref<32x256xbf16, #tpu.memory_space<vmem>>) attributes {dimension_semantics = [#tpu.dimension_semantics<parallel>, #tpu.dimension_semantics<parallel>, #tpu.dimension_semantics<arbitrary>], iteration_bounds = array<i64: 1, 1, 1>, scalar_prefetch = 0 : i64, scratch_operands = 0 : i64, tpu.core_type = #tpu.core_type<tc>, window_params = [{transform_indices = @transform_0, window_bounds = array<i64: 32, 2048>}, {transform_indices = @transform_1, window_bounds = array<i64: 2048, 256>}, {transform_indices = @transform_2, window_bounds = array<i64: 1, 256>}, {transform_indices = @transform_3, window_bounds = array<i64: 1, 256>}, {transform_indices = @transform_4, window_bounds = array<i64: 32, 256>}]} {
    %c0 = arith.constant 0 : index
    %c0_0 = arith.constant 0 : index
    %0 = vector.load %arg3[%c0, %c0_0] : memref<32x2048xbf16, #tpu.memory_space<vmem>>, vector<32x2048xbf16>
    %c0_1 = arith.constant 0 : index
    %c0_2 = arith.constant 0 : index
    %1 = vector.load %arg4[%c0_1, %c0_2] : memref<2048x256xbf16, #tpu.memory_space<vmem>>, vector<2048x256xbf16>
    %cst = arith.constant dense<0.000000e+00> : vector<32x256xf32>
    %2 = tpu.matmul %0, %1, %cst {dimension_numbers = #tpu.dot_dimension_numbers<[1], [0], [0], [1], [0, 0, 1, 1], [], []>} : vector<32x2048xbf16>, vector<2048x256xbf16>, vector<32x256xf32> -> vector<32x256xf32>
    %cst_3 = arith.constant dense<0.000000e+00> : vector<256xf32>
    %3 = vector.multi_reduction <add>, %2, %cst_3 [0] : vector<32x256xf32> to vector<256xf32>
    %4 = vector.shape_cast %3 : vector<256xf32> to vector<1x256xf32>
    %cst_4 = arith.constant 3.125000e-02 : f32
    %5 = vector.broadcast %cst_4 : f32 to vector<1x256xf32>
    %6 = arith.mulf %4, %5 : vector<1x256xf32>
    %7 = vector.broadcast %6 : vector<1x256xf32> to vector<32x256xf32>
    %8 = arith.subf %2, %7 : vector<32x256xf32>
    %9 = arith.mulf %8, %8 : vector<32x256xf32>
    %cst_5 = arith.constant dense<0.000000e+00> : vector<256xf32>
    %10 = vector.multi_reduction <add>, %9, %cst_5 [0] : vector<32x256xf32> to vector<256xf32>
    %11 = vector.shape_cast %10 : vector<256xf32> to vector<1x256xf32>
    %cst_6 = arith.constant 3.125000e-02 : f32
    %12 = vector.broadcast %cst_6 : f32 to vector<1x256xf32>
    %13 = arith.mulf %11, %12 : vector<1x256xf32>
    %c0_7 = arith.constant 0 : index
    %c0_8 = arith.constant 0 : index
    %14 = vector.load %arg5[%c0_7, %c0_8] : memref<1x256xf32, #tpu.memory_space<vmem>>, vector<1x256xf32>
    %cst_9 = arith.constant 9.99999974E-6 : f32
    %15 = vector.broadcast %cst_9 : f32 to vector<1x256xf32>
    %16 = arith.addf %13, %15 : vector<1x256xf32>
    %17 = math.rsqrt %16 : vector<1x256xf32>
    %18 = arith.mulf %14, %17 : vector<1x256xf32>
    %c0_10 = arith.constant 0 : index
    %c0_11 = arith.constant 0 : index
    %19 = vector.load %arg6[%c0_10, %c0_11] : memref<1x256xf32, #tpu.memory_space<vmem>>, vector<1x256xf32>
    %20 = arith.mulf %6, %18 : vector<1x256xf32>
    %21 = arith.subf %19, %20 : vector<1x256xf32>
    %22 = vector.broadcast %18 : vector<1x256xf32> to vector<32x256xf32>
    %23 = arith.mulf %2, %22 : vector<32x256xf32>
    %24 = vector.broadcast %21 : vector<1x256xf32> to vector<32x256xf32>
    %25 = arith.addf %23, %24 : vector<32x256xf32>
    %cst_12 = arith.constant 0.000000e+00 : f32
    %26 = vector.broadcast %cst_12 : f32 to vector<32x256xf32>
    %27 = arith.cmpf ogt, %25, %26 : vector<32x256xf32>
    %cst_13 = arith.constant 2.000000e-01 : f32
    %28 = vector.broadcast %cst_13 : f32 to vector<32x256xf32>
    %29 = arith.mulf %28, %25 : vector<32x256xf32>
    %30 = arith.select %27, %25, %29 : vector<32x256xi1>, vector<32x256xf32>
    %31 = arith.truncf %30 : vector<32x256xf32> to vector<32x256xbf16>
    %c0_14 = arith.constant 0 : index
    %c0_15 = arith.constant 0 : index
    %32 = vector.load %arg7[%c0_14, %c0_15] : memref<32x256xbf16, #tpu.memory_space<vmem>>, vector<32x256xbf16>
    tpu.vector_store %arg7[%c0_14, %c0_15], %31 {strides = array<i32>} : memref<32x256xbf16, #tpu.memory_space<vmem>>, vector<32x256xbf16>,
    return
  }
  func.func @transform_0(%arg0: i32, %arg1: i32, %arg2: i32) -> (i32, i32) {
    %c0_i32 = arith.constant 0 : i32
    return %arg1, %arg2 : i32, i32
  }
  func.func @transform_1(%arg0: i32, %arg1: i32, %arg2: i32) -> (i32, i32) {
    %c0_i32 = arith.constant 0 : i32
    return %arg2, %arg0 : i32, i32
  }
  func.func @transform_2(%arg0: i32, %arg1: i32, %arg2: i32) -> (i32, i32) {
    %c0_i32 = arith.constant 0 : i32
    %c0_i32_0 = arith.constant 0 : i32
    return %c0_i32, %arg0 : i32, i32
  }
  func.func @transform_3(%arg0: i32, %arg1: i32, %arg2: i32) -> (i32, i32) {
    %c0_i32 = arith.constant 0 : i32
    %c0_i32_0 = arith.constant 0 : i32
    return %c0_i32, %arg0 : i32, i32
  }
  func.func @transform_4(%arg0: i32, %arg1: i32, %arg2: i32) -> (i32, i32) {
    %c0_i32 = arith.constant 0 : i32
    return %arg1, %arg0 : i32, i32
  }
}

module attributes {stable_mosaic.version = 11 : i64} {
  func.func @_conv_kernel(%arg0: i32, %arg1: i32, %arg2: i32, %arg3: memref<32x4096xbf16, #tpu.memory_space<vmem>>, %arg4: memref<4096x512xbf16, #tpu.memory_space<vmem>>, %arg5: memref<1x512xf32, #tpu.memory_space<vmem>>, %arg6: memref<1x512xf32, #tpu.memory_space<vmem>>, %arg7: memref<32x512xbf16, #tpu.memory_space<vmem>>) attributes {dimension_semantics = [#tpu.dimension_semantics<parallel>, #tpu.dimension_semantics<parallel>, #tpu.dimension_semantics<arbitrary>], iteration_bounds = array<i64: 1, 1, 1>, scalar_prefetch = 0 : i64, scratch_operands = 0 : i64, tpu.core_type = #tpu.core_type<tc>, window_params = [{transform_indices = @transform_0, window_bounds = array<i64: 32, 4096>}, {transform_indices = @transform_1, window_bounds = array<i64: 4096, 512>}, {transform_indices = @transform_2, window_bounds = array<i64: 1, 512>}, {transform_indices = @transform_3, window_bounds = array<i64: 1, 512>}, {transform_indices = @transform_4, window_bounds = array<i64: 32, 512>}]} {
    %c0 = arith.constant 0 : index
    %c0_0 = arith.constant 0 : index
    %0 = vector.load %arg3[%c0, %c0_0] : memref<32x4096xbf16, #tpu.memory_space<vmem>>, vector<32x4096xbf16>
    %c0_1 = arith.constant 0 : index
    %c0_2 = arith.constant 0 : index
    %1 = vector.load %arg4[%c0_1, %c0_2] : memref<4096x512xbf16, #tpu.memory_space<vmem>>, vector<4096x512xbf16>
    %cst = arith.constant dense<0.000000e+00> : vector<32x512xf32>
    %2 = tpu.matmul %0, %1, %cst {dimension_numbers = #tpu.dot_dimension_numbers<[1], [0], [0], [1], [0, 0, 1, 1], [], []>} : vector<32x4096xbf16>, vector<4096x512xbf16>, vector<32x512xf32> -> vector<32x512xf32>
    %cst_3 = arith.constant dense<0.000000e+00> : vector<512xf32>
    %3 = vector.multi_reduction <add>, %2, %cst_3 [0] : vector<32x512xf32> to vector<512xf32>
    %4 = vector.shape_cast %3 : vector<512xf32> to vector<1x512xf32>
    %cst_4 = arith.constant 0.055555556 : f32
    %5 = vector.broadcast %cst_4 : f32 to vector<1x512xf32>
    %6 = arith.mulf %4, %5 : vector<1x512xf32>
    %7 = vector.broadcast %6 : vector<1x512xf32> to vector<32x512xf32>
    %8 = arith.subf %2, %7 : vector<32x512xf32>
    %9 = tpu.iota {dimensions = array<i32: 0>} : vector<32x512xi32>
    %c18_i32 = arith.constant 18 : i32
    %10 = vector.broadcast %c18_i32 : i32 to vector<32x512xi32>
    %11 = arith.cmpi slt, %9, %10 : vector<32x512xi32>
    %cst_5 = arith.constant 0.000000e+00 : f32
    %12 = vector.broadcast %cst_5 : f32 to vector<32x512xf32>
    %13 = arith.select %11, %8, %12 : vector<32x512xi1>, vector<32x512xf32>
    %14 = arith.mulf %13, %13 : vector<32x512xf32>
    %cst_6 = arith.constant dense<0.000000e+00> : vector<512xf32>
    %15 = vector.multi_reduction <add>, %14, %cst_6 [0] : vector<32x512xf32> to vector<512xf32>
    %16 = vector.shape_cast %15 : vector<512xf32> to vector<1x512xf32>
    %cst_7 = arith.constant 0.055555556 : f32
    %17 = vector.broadcast %cst_7 : f32 to vector<1x512xf32>
    %18 = arith.mulf %16, %17 : vector<1x512xf32>
    %c0_8 = arith.constant 0 : index
    %c0_9 = arith.constant 0 : index
    %19 = vector.load %arg5[%c0_8, %c0_9] : memref<1x512xf32, #tpu.memory_space<vmem>>, vector<1x512xf32>
    %cst_10 = arith.constant 9.99999974E-6 : f32
    %20 = vector.broadcast %cst_10 : f32 to vector<1x512xf32>
    %21 = arith.addf %18, %20 : vector<1x512xf32>
    %22 = math.rsqrt %21 : vector<1x512xf32>
    %23 = arith.mulf %19, %22 : vector<1x512xf32>
    %c0_11 = arith.constant 0 : index
    %c0_12 = arith.constant 0 : index
    %24 = vector.load %arg6[%c0_11, %c0_12] : memref<1x512xf32, #tpu.memory_space<vmem>>, vector<1x512xf32>
    %25 = arith.mulf %6, %23 : vector<1x512xf32>
    %26 = arith.subf %24, %25 : vector<1x512xf32>
    %27 = vector.broadcast %23 : vector<1x512xf32> to vector<32x512xf32>
    %28 = arith.mulf %2, %27 : vector<32x512xf32>
    %29 = vector.broadcast %26 : vector<1x512xf32> to vector<32x512xf32>
    %30 = arith.addf %28, %29 : vector<32x512xf32>
    %cst_13 = arith.constant 0.000000e+00 : f32
    %31 = vector.broadcast %cst_13 : f32 to vector<32x512xf32>
    %32 = arith.cmpf ogt, %30, %31 : vector<32x512xf32>
    %cst_14 = arith.constant 2.000000e-01 : f32
    %33 = vector.broadcast %cst_14 : f32 to vector<32x512xf32>
    %34 = arith.mulf %33, %30 : vector<32x512xf32>
    %35 = arith.select %32, %30, %34 : vector<32x512xi1>, vector<32x512xf32>
    %36 = arith.truncf %35 : vector<32x512xf32> to vector<32x512xbf16>
    %c0_15 = arith.constant 0 : index
    %c0_16 = arith.constant 0 : index
    %37 = vector.load %arg7[%c0_15, %c0_16] : memref<32x512xbf16, #tpu.memory_space<vmem>>, vector<32x512xbf16>
    tpu.vector_store %arg7[%c0_15, %c0_16], %36 {strides = array<i32>} : memref<32x512xbf16, #tpu.memory_space<vmem>>, vector<32x512xbf16>,
    return
  }
  func.func @transform_0(%arg0: i32, %arg1: i32, %arg2: i32) -> (i32, i32) {
    %c0_i32 = arith.constant 0 : i32
    return %arg1, %arg2 : i32, i32
  }
  func.func @transform_1(%arg0: i32, %arg1: i32, %arg2: i32) -> (i32, i32) {
    %c0_i32 = arith.constant 0 : i32
    return %arg2, %arg0 : i32, i32
  }
  func.func @transform_2(%arg0: i32, %arg1: i32, %arg2: i32) -> (i32, i32) {
    %c0_i32 = arith.constant 0 : i32
    %c0_i32_0 = arith.constant 0 : i32
    return %c0_i32, %arg0 : i32, i32
  }
  func.func @transform_3(%arg0: i32, %arg1: i32, %arg2: i32) -> (i32, i32) {
    %c0_i32 = arith.constant 0 : i32
    %c0_i32_0 = arith.constant 0 : i32
    return %c0_i32, %arg0 : i32, i32
  }
  func.func @transform_4(%arg0: i32, %arg1: i32, %arg2: i32) -> (i32, i32) {
    %c0_i32 = arith.constant 0 : i32
    return %arg1, %arg0 : i32, i32
  }
}

module attributes {stable_mosaic.version = 11 : i64} {
  func.func @_final_head_kernel(%arg0: i32, %arg1: memref<8x8192xbf16, #tpu.memory_space<vmem>>, %arg2: memref<1x8192xbf16, #tpu.memory_space<vmem>>, %arg3: memref<1x1xf32, #tpu.memory_space<vmem>>, %arg4: memref<8x1xf32, #tpu.memory_space<vmem>>) attributes {dimension_semantics = [#tpu.dimension_semantics<parallel>], iteration_bounds = array<i64: 1>, scalar_prefetch = 0 : i64, scratch_operands = 0 : i64, tpu.core_type = #tpu.core_type<tc>, window_params = [{transform_indices = @transform_0, window_bounds = array<i64: 8, 8192>}, {pipeline_mode = #tpu.pipeline_mode<synchronous>, transform_indices = @transform_1, window_bounds = array<i64: 1, 8192>}, {pipeline_mode = #tpu.pipeline_mode<synchronous>, transform_indices = @transform_2, window_bounds = array<i64: 1, 1>}, {transform_indices = @transform_3, window_bounds = array<i64: 8, 1>}]} {
    %c0 = arith.constant 0 : index
    %c0_0 = arith.constant 0 : index
    %0 = vector.load %arg1[%c0, %c0_0] : memref<8x8192xbf16, #tpu.memory_space<vmem>>, vector<8x8192xbf16>
    %1 = arith.extf %0 : vector<8x8192xbf16> to vector<8x8192xf32>
    %c0_1 = arith.constant 0 : index
    %c0_2 = arith.constant 0 : index
    %2 = vector.load %arg2[%c0_1, %c0_2] : memref<1x8192xbf16, #tpu.memory_space<vmem>>, vector<1x8192xbf16>
    %3 = arith.extf %2 : vector<1x8192xbf16> to vector<1x8192xf32>
    %4 = vector.broadcast %3 : vector<1x8192xf32> to vector<8x8192xf32>
    %5 = arith.mulf %1, %4 : vector<8x8192xf32>
    %cst = arith.constant dense<0.000000e+00> : vector<8xf32>
    %6 = vector.multi_reduction <add>, %5, %cst [1] : vector<8x8192xf32> to vector<8xf32>
    %7 = vector.shape_cast %6 : vector<8xf32> to vector<8x1xf32>
    %c0_3 = arith.constant 0 : index
    %c0_4 = arith.constant 0 : index
    %8 = vector.load %arg3[%c0_3, %c0_4] : memref<1x1xf32, #tpu.memory_space<vmem>>, vector<1x1xf32>
    %9 = vector.broadcast %8 : vector<1x1xf32> to vector<8x1xf32>
    %10 = arith.addf %7, %9 : vector<8x1xf32>
    %c0_5 = arith.constant 0 : index
    %c0_6 = arith.constant 0 : index
    %11 = vector.load %arg4[%c0_5, %c0_6] : memref<8x1xf32, #tpu.memory_space<vmem>>, vector<8x1xf32>
    tpu.vector_store %arg4[%c0_5, %c0_6], %10 {strides = array<i32>} : memref<8x1xf32, #tpu.memory_space<vmem>>, vector<8x1xf32>,
    return
  }
  func.func @transform_0(%arg0: i32) -> (i32, i32) {
    %c0_i32 = arith.constant 0 : i32
    %c0_i32_0 = arith.constant 0 : i32
    return %arg0, %c0_i32 : i32, i32
  }
  func.func @transform_1(%arg0: i32) -> (i32, i32) {
    %c0_i32 = arith.constant 0 : i32
    %c0_i32_0 = arith.constant 0 : i32
    %c0_i32_1 = arith.constant 0 : i32
    return %c0_i32, %c0_i32_0 : i32, i32
  }
  func.func @transform_2(%arg0: i32) -> (i32, i32) {
    %c0_i32 = arith.constant 0 : i32
    %c0_i32_0 = arith.constant 0 : i32
    %c0_i32_1 = arith.constant 0 : i32
    return %c0_i32, %c0_i32_0 : i32, i32
  }
  func.func @transform_3(%arg0: i32) -> (i32, i32) {
    %c0_i32 = arith.constant 0 : i32
    %c0_i32_0 = arith.constant 0 : i32
    return %arg0, %c0_i32 : i32, i32
  }
}

</mosaic_0001>

<llo_original>
// kernel: _lambda_.5
$region0: #{_lambda_.5}
  #allocation0 [shape = 'u32[]', space=smem, size = 0x4, offset = 0x4, fixed_abs, tag = 'smem constant byte address 0x4 - core index']
  #allocation1 [shape = 'u32[72,128]{1,0:T(1,128)}', space=vmem, size = 0x9000, scoped, tag = 'internal scratch']
  %s0 = inlined_call_operand.vmem [shape: bf16[512,128], index: 0, kind: input, shape index: {}]
  %s1 = inlined_call_operand.vmem [shape: bf16[128,128], index: 1, kind: input, shape index: {}]
  %s2 = inlined_call_operand.vmem [shape: f32[1,128], index: 2, kind: input, shape index: {}]
  %s3 = inlined_call_operand.vmem [shape: bf16[512,128], index: 3, kind: output, shape index: {}]
  %s4 = sld [smem:[#allocation0]]
  $region22: #{_lambda_.5} parent=0
    _
  %s6 = ssub.s32 1, %s4
  %s7 = scalar_select 0, %s6, %s4
  // Predicated region
  $region2: #{_lambda_.5} parent=0 // pred_check
    _
  $region3: #{_lambda_.5} parent=0 // pred_check_branch
    %9 = sbr.rel (0) target = $region5
  $region4: #{_lambda_.5} parent=0 // pred_region
    _
  $region5: #{_lambda_.5} parent=0 // pred_fallthru
    _
  // Predicated region
  $region6: #{_lambda_.5} parent=0 // pred_check
    _
  $region7: #{_lambda_.5} parent=0 // pred_check_branch
    %11 = sbr.rel (0) target = $region9
  $region8: #{_lambda_.5} parent=0 // pred_region
    _
  $region9: #{_lambda_.5} parent=0 // pred_fallthru
    _
  // Predicated region
  $region10: #{_lambda_.5} parent=0 // pred_check
    _
  $region11: #{_lambda_.5} parent=0 // pred_check_branch
    %13 = sbr.rel (0) target = $region13
  $region12: #{_lambda_.5} parent=0 // pred_region
    _
  $region13: #{_lambda_.5} parent=0 // pred_fallthru
    _
  %v14 = vld [vmem:[%s0] sm:$0xf]
  %v15 = vld [vmem:[%s0 + $0x4] sm:$0xf]
  %v16 = vld [vmem:[%s0 + $0x8] sm:$0xf]
  %v17 = vld [vmem:[%s0 + $0xc] sm:$0xf]
  %v18 = vld [vmem:[%s0 + $0x10] sm:$0xf]
  %v19 = vld [vmem:[%s0 + $0x14] sm:$0xf]
  %v20 = vld [vmem:[%s0 + $0x18] sm:$0xf]
  %v21 = vld [vmem:[%s0 + $0x1c] sm:$0xf]
  %v22 = vld [vmem:[%s0 + $0x20] sm:$0xf]
  %v23 = vld [vmem:[%s0 + $0x24] sm:$0xf]
  %v24 = vld [vmem:[%s0 + $0x28] sm:$0xf]
  %v25 = vld [vmem:[%s0 + $0x2c] sm:$0xf]
  %v26 = vld [vmem:[%s0 + $0x30] sm:$0xf]
  %v27 = vld [vmem:[%s0 + $0x34] sm:$0xf]
  %v28 = vld [vmem:[%s0 + $0x38] sm:$0xf]
  %v29 = vld [vmem:[%s0 + $0x3c] sm:$0xf]
  %v30 = vld [vmem:[%s0 + $0x40] sm:$0xf]
  %v31 = vld [vmem:[%s0 + $0x44] sm:$0xf]
  %v32 = vld [vmem:[%s0 + $0x48] sm:$0xf]
  %v33 = vld [vmem:[%s0 + $0x4c] sm:$0xf]
  %v34 = vld [vmem:[%s0 + $0x50] sm:$0xf]
  %v35 = vld [vmem:[%s0 + $0x54] sm:$0xf]
  %v36 = vld [vmem:[%s0 + $0x58] sm:$0xf]
  %v37 = vld [vmem:[%s0 + $0x5c] sm:$0xf]
  %v38 = vld [vmem:[%s0 + $0x60] sm:$0xf]
  %v39 = vld [vmem:[%s0 + $0x64] sm:$0xf]
  %v40 = vld [vmem:[%s0 + $0x68] sm:$0xf]
  %v41 = vld [vmem:[%s0 + $0x6c] sm:$0xf]
  %v42 = vld [vmem:[%s0 + $0x70] sm:$0xf]
  %v43 = vld [vmem:[%s0 + $0x74] sm:$0xf]
  %v44 = vld [vmem:[%s0 + $0x78] sm:$0xf]
  %v45 = vld [vmem:[%s0 + $0x7c] sm:$0xf]
  %v46 = vld [vmem:[%s0 + $0x80] sm:$0xf]
  %v47 = vld [vmem:[%s0 + $0x84] sm:$0xf]
  %v48 = vld [vmem:[%s0 + $0x88] sm:$0xf]
  %v49 = vld [vmem:[%s0 + $0x8c] sm:$0xf]
  %v50 = vld [vmem:[%s0 + $0x90] sm:$0xf]
  %v51 = vld [vmem:[%s0 + $0x94] sm:$0xf]
  %v52 = vld [vmem:[%s0 + $0x98] sm:$0xf]
  %v53 = vld [vmem:[%s0 + $0x9c] sm:$0xf]
  %v54 = vld [vmem:[%s0 + $0xa0] sm:$0xf]
  %v55 = vld [vmem:[%s0 + $0xa4] sm:$0xf]
  %v56 = vld [vmem:[%s0 + $0xa8] sm:$0xf]
  %v57 = vld [vmem:[%s0 + $0xac] sm:$0xf]
  %v58 = vld [vmem:[%s0 + $0xb0] sm:$0xf]
  %v59 = vld [vmem:[%s0 + $0xb4] sm:$0xf]
  %v60 = vld [vmem:[%s0 + $0xb8] sm:$0xf]
  %v61 = vld [vmem:[%s0 + $0xbc] sm:$0xf]
  %v62 = vld [vmem:[%s0 + $0xc0] sm:$0xf]
  %v63 = vld [vmem:[%s0 + $0xc4] sm:$0xf]
  %v64 = vld [vmem:[%s0 + $0xc8] sm:$0xf]
  %v65 = vld [vmem:[%s0 + $0xcc] sm:$0xf]
  %v66 = vld [vmem:[%s0 + $0xd0] sm:$0xf]
  %v67 = vld [vmem:[%s0 + $0xd4] sm:$0xf]
  %v68 = vld [vmem:[%s0 + $0xd8] sm:$0xf]
  %v69 = vld [vmem:[%s0 + $0xdc] sm:$0xf]
  %v70 = vld [vmem:[%s0 + $0xe0] sm:$0xf]
  %v71 = vld [vmem:[%s0 + $0xe4] sm:$0xf]
  %v72 = vld [vmem:[%s0 + $0xe8] sm:$0xf]
  %v73 = vld [vmem:[%s0 + $0xec] sm:$0xf]
  %v74 = vld [vmem:[%s0 + $0xf0] sm:$0xf]
  %v75 = vld [vmem:[%s0 + $0xf4] sm:$0xf]
  %v76 = vld [vmem:[%s0 + $0xf8] sm:$0xf]
  %v77 = vld [vmem:[%s0 + $0xfc] sm:$0xf]
  %v78 = vld [vmem:[%s1] sm:$0xf]
  %v79 = vld [vmem:[%s1 + $0x4] sm:$0xf]
  %v80 = vld [vmem:[%s1 + $0x8] sm:$0xf]
  %v81 = vld [vmem:[%s1 + $0xc] sm:$0xf]
  %v82 = vld [vmem:[%s1 + $0x10] sm:$0xf]
  %v83 = vld [vmem:[%s1 + $0x14] sm:$0xf]
  %v84 = vld [vmem:[%s1 + $0x18] sm:$0xf]
  %v85 = vld [vmem:[%s1 + $0x1c] sm:$0xf]
  %v86 = vld [vmem:[%s1 + $0x20] sm:$0xf]
  %v87 = vld [vmem:[%s1 + $0x24] sm:$0xf]
  %v88 = vld [vmem:[%s1 + $0x28] sm:$0xf]
  %v89 = vld [vmem:[%s1 + $0x2c] sm:$0xf]
  %v90 = vld [vmem:[%s1 + $0x30] sm:$0xf]
  %v91 = vld [vmem:[%s1 + $0x34] sm:$0xf]
  %v92 = vld [vmem:[%s1 + $0x38] sm:$0xf]
  %v93 = vld [vmem:[%s1 + $0x3c] sm:$0xf]
  %v94 = vld [vmem:[%s2] sm:$0x1]
  %v96 = vperm.slane %v94, 0
  %v162 = vunpack.c.l.b16 %v14
  %v163 = vunpack.c.l.b16 %v15
  %v164 = vunpack.c.l.b16 %v16
  %v165 = vunpack.c.l.b16 %v17
  %v166 = vunpack.c.l.b16 %v18
  %v167 = vunpack.c.l.b16 %v19
  %v168 = vunpack.c.l.b16 %v20
  %v169 = vunpack.c.l.b16 %v21
  %v170 = vunpack.c.l.b16 %v22
  %v171 = vunpack.c.l.b16 %v23
  %v172 = vunpack.c.l.b16 %v24
  %v173 = vunpack.c.l.b16 %v25
  %v174 = vunpack.c.l.b16 %v26
  %v175 = vunpack.c.l.b16 %v27
  %v176 = vunpack.c.l.b16 %v28
  %v177 = vunpack.c.l.b16 %v29
  %v178 = vunpack.c.l.b16 %v30
  %v179 = vunpack.c.l.b16 %v31
  %v180 = vunpack.c.l.b16 %v32
  %v181 = vunpack.c.l.b16 %v33
  %v182 = vunpack.c.l.b16 %v34
  %v183 = vunpack.c.l.b16 %v35
  %v184 = vunpack.c.l.b16 %v36
  %v185 = vunpack.c.l.b16 %v37
  %v186 = vunpack.c.l.b16 %v38
  %v187 = vunpack.c.l.b16 %v39
  %v188 = vunpack.c.l.b16 %v40
  %v189 = vunpack.c.l.b16 %v41
  %v190 = vunpack.c.l.b16 %v42
  %v191 = vunpack.c.l.b16 %v43
  %v192 = vunpack.c.l.b16 %v44
  %v193 = vunpack.c.l.b16 %v45
  %v194 = vunpack.c.l.b16 %v46
  %v195 = vunpack.c.l.b16 %v47
  %v196 = vunpack.c.l.b16 %v48
  %v197 = vunpack.c.l.b16 %v49
  %v198 = vunpack.c.l.b16 %v50
  %v199 = vunpack.c.l.b16 %v51
  %v200 = vunpack.c.l.b16 %v52
  %v201 = vunpack.c.l.b16 %v53
  %v202 = vunpack.c.l.b16 %v54
  %v203 = vunpack.c.l.b16 %v55
  %v204 = vunpack.c.l.b16 %v56
  %v205 = vunpack.c.l.b16 %v57
  %v206 = vunpack.c.l.b16 %v58
  %v207 = vunpack.c.l.b16 %v59
  %v208 = vunpack.c.l.b16 %v60
  %v209 = vunpack.c.l.b16 %v61
  %v210 = vunpack.c.l.b16 %v62
  %v211 = vunpack.c.l.b16 %v63
  %v212 = vunpack.c.l.b16 %v64
  %v213 = vunpack.c.l.b16 %v65
  %v214 = vunpack.c.l.b16 %v66
  %v215 = vunpack.c.l.b16 %v67
  %v216 = vunpack.c.l.b16 %v68
  %v217 = vunpack.c.l.b16 %v69
  %v218 = vunpack.c.l.b16 %v70
  %v219 = vunpack.c.l.b16 %v71
  %v220 = vunpack.c.l.b16 %v72
  %v221 = vunpack.c.l.b16 %v73
  %v222 = vunpack.c.l.b16 %v74
  %v223 = vunpack.c.l.b16 %v75
  %v224 = vunpack.c.l.b16 %v76
  %v225 = vunpack.c.l.b16 %v77
  %v226 = vpack.c.b16 %v163, %v162
  %v227 = vpack.c.b16 %v165, %v164
  %v228 = vpack.c.b16 %v167, %v166
  %v229 = vpack.c.b16 %v169, %v168
  %v230 = vpack.c.b16 %v171, %v170
  %v231 = vpack.c.b16 %v173, %v172
  %v232 = vpack.c.b16 %v175, %v174
  %v233 = vpack.c.b16 %v177, %v176
  %v234 = vpack.c.b16 %v179, %v178
  %v235 = vpack.c.b16 %v181, %v180
  %v236 = vpack.c.b16 %v183, %v182
  %v237 = vpack.c.b16 %v185, %v184
  %v238 = vpack.c.b16 %v187, %v186
  %v239 = vpack.c.b16 %v189, %v188
  %v240 = vpack.c.b16 %v191, %v190
  %v241 = vpack.c.b16 %v193, %v192
  %v242 = vpack.c.b16 %v195, %v194
  %v243 = vpack.c.b16 %v197, %v196
  %v244 = vpack.c.b16 %v199, %v198
  %v245 = vpack.c.b16 %v201, %v200
  %v246 = vpack.c.b16 %v203, %v202
  %v247 = vpack.c.b16 %v205, %v204
  %v248 = vpack.c.b16 %v207, %v206
  %v249 = vpack.c.b16 %v209, %v208
  %v250 = vpack.c.b16 %v211, %v210
  %v251 = vpack.c.b16 %v213, %v212
  %v252 = vpack.c.b16 %v215, %v214
  %v253 = vpack.c.b16 %v217, %v216
  %v254 = vpack.c.b16 %v219, %v218
  %v255 = vpack.c.b16 %v221, %v220
  %v256 = vpack.c.b16 %v223, %v222
  %v257 = vpack.c.b16 %v225, %v224
  %v306 = vunpack.c.l.b16 %v78
  %v307 = vunpack.c.l.b16 %v79
  %v308 = vunpack.c.l.b16 %v80
  %v309 = vunpack.c.l.b16 %v81
  %v310 = vunpack.c.l.b16 %v82
  %v311 = vunpack.c.l.b16 %v83
  %v312 = vunpack.c.l.b16 %v84
  %v313 = vunpack.c.l.b16 %v85
  %v314 = vunpack.c.l.b16 %v86
  %v315 = vunpack.c.l.b16 %v87
  %v316 = vunpack.c.l.b16 %v88
  %v317 = vunpack.c.l.b16 %v89
  %v318 = vunpack.c.l.b16 %v90
  %v319 = vunpack.c.l.b16 %v91
  %v320 = vunpack.c.l.b16 %v92
  %v321 = vunpack.c.l.b16 %v93
  %v322 = vpack.c.b16 %v307, %v306
  %v323 = vpack.c.b16 %v309, %v308
  %v324 = vpack.c.b16 %v311, %v310
  %v325 = vpack.c.b16 %v313, %v312
  %v326 = vpack.c.b16 %v315, %v314
  %v327 = vpack.c.b16 %v317, %v316
  %v328 = vpack.c.b16 %v319, %v318
  %v329 = vpack.c.b16 %v321, %v320
  %338 = vmatpush.bf16.msra.mxu0 %v329
  %339 = vmatpush.bf16.msra.mxu0 %v328
  %340 = vmatpush.bf16.msra.mxu0 %v327
  %341 = vmatpush.bf16.msra.mxu0 %v326
  %342 = vmatpush.bf16.msra.mxu0 %v325
  %343 = vmatpush.bf16.msra.mxu0 %v324
  %344 = vmatpush.bf16.msra.mxu0 %v323
  %345 = vmatpush.bf16.msra.mxu0 %v322
  %346 = vmatmul.bf16.gmra.mxu0 %v226
  %v347 = vpop.f32.mrf.mxu0
  %v348 = vadd.f32 %v96, %v347
  %v349 = vpop.f32.mrf.mxu0
  %v350 = vadd.f32 %v96, %v349
  %351 = vmatmul.bf16.gmra.mxu0 %v227
  %v352 = vpop.f32.mrf.mxu0
  %v353 = vadd.f32 %v96, %v352
  %v354 = vpop.f32.mrf.mxu0
  %v355 = vadd.f32 %v96, %v354
  %356 = vmatmul.bf16.gmra.mxu0 %v228
  %v357 = vpop.f32.mrf.mxu0
  %v358 = vadd.f32 %v96, %v357
  %v359 = vpop.f32.mrf.mxu0
  %v360 = vadd.f32 %v96, %v359
  %361 = vmatmul.bf16.gmra.mxu0 %v229
  %v362 = vpop.f32.mrf.mxu0
  %v363 = vadd.f32 %v96, %v362
  %v364 = vpop.f32.mrf.mxu0
  %v365 = vadd.f32 %v96, %v364
  %366 = vmatmul.bf16.gmra.mxu0 %v230
  %v367 = vpop.f32.mrf.mxu0
  %v368 = vadd.f32 %v96, %v367
  %v369 = vpop.f32.mrf.mxu0
  %v370 = vadd.f32 %v96, %v369
  %371 = vmatmul.bf16.gmra.mxu0 %v231
  %v372 = vpop.f32.mrf.mxu0
  %v373 = vadd.f32 %v96, %v372
  %v374 = vpop.f32.mrf.mxu0
  %v375 = vadd.f32 %v96, %v374
  %376 = vmatmul.bf16.gmra.mxu0 %v232
  %v377 = vpop.f32.mrf.mxu0
  %v378 = vadd.f32 %v96, %v377
  %v379 = vpop.f32.mrf.mxu0
  %v380 = vadd.f32 %v96, %v379
  %381 = vmatmul.bf16.gmra.mxu0 %v233
  %v382 = vpop.f32.mrf.mxu0
  %v383 = vadd.f32 %v96, %v382
  %v384 = vpop.f32.mrf.mxu0
  %v385 = vadd.f32 %v96, %v384
  %386 = vmatmul.bf16.gmra.mxu0 %v234
  %v387 = vpop.f32.mrf.mxu0
  %v388 = vadd.f32 %v96, %v387
  %v389 = vpop.f32.mrf.mxu0
  %v390 = vadd.f32 %v96, %v389
  %391 = vmatmul.bf16.gmra.mxu0 %v235
  %v392 = vpop.f32.mrf.mxu0
  %v393 = vadd.f32 %v96, %v392
  %v394 = vpop.f32.mrf.mxu0
  %v395 = vadd.f32 %v96, %v394
  %396 = vmatmul.bf16.gmra.mxu0 %v236
  %v397 = vpop.f32.mrf.mxu0
  %v398 = vadd.f32 %v96, %v397
  %v399 = vpop.f32.mrf.mxu0
  %v400 = vadd.f32 %v96, %v399
  %401 = vmatmul.bf16.gmra.mxu0 %v237
  %v402 = vpop.f32.mrf.mxu0
  %v403 = vadd.f32 %v96, %v402
  %v404 = vpop.f32.mrf.mxu0
  %v405 = vadd.f32 %v96, %v404
  %406 = vmatmul.bf16.gmra.mxu0 %v238
  %v407 = vpop.f32.mrf.mxu0
  %v408 = vadd.f32 %v96, %v407
  %v409 = vpop.f32.mrf.mxu0
  %v410 = vadd.f32 %v96, %v409
  %411 = vmatmul.bf16.gmra.mxu0 %v239
  %v412 = vpop.f32.mrf.mxu0
  %v413 = vadd.f32 %v96, %v412
  %v414 = vpop.f32.mrf.mxu0
  %v415 = vadd.f32 %v96, %v414
  %416 = vmatmul.bf16.gmra.mxu0 %v240
  %v417 = vpop.f32.mrf.mxu0
  %v418 = vadd.f32 %v96, %v417
  %v419 = vpop.f32.mrf.mxu0
  %v420 = vadd.f32 %v96, %v419
  %421 = vmatmul.bf16.gmra.mxu0 %v241
  %v422 = vpop.f32.mrf.mxu0
  %v423 = vadd.f32 %v96, %v422
  %v424 = vpop.f32.mrf.mxu0
  %v425 = vadd.f32 %v96, %v424
  %426 = vmatmul.bf16.gmra.mxu0 %v242
  %v427 = vpop.f32.mrf.mxu0
  %v428 = vadd.f32 %v96, %v427
  %v429 = vpop.f32.mrf.mxu0
  %v430 = vadd.f32 %v96, %v429
  %431 = vmatmul.bf16.gmra.mxu0 %v243
  %v432 = vpop.f32.mrf.mxu0
  %v433 = vadd.f32 %v96, %v432
  %v434 = vpop.f32.mrf.mxu0
  %v435 = vadd.f32 %v96, %v434
  %436 = vmatmul.bf16.gmra.mxu0 %v244
  %v437 = vpop.f32.mrf.mxu0
  %v438 = vadd.f32 %v96, %v437
  %v439 = vpop.f32.mrf.mxu0
  %v440 = vadd.f32 %v96, %v439
  %441 = vmatmul.bf16.gmra.mxu0 %v245
  %v442 = vpop.f32.mrf.mxu0
  %v443 = vadd.f32 %v96, %v442
  %v444 = vpop.f32.mrf.mxu0
  %v445 = vadd.f32 %v96, %v444
  %446 = vmatmul.bf16.gmra.mxu0 %v246
  %v447 = vpop.f32.mrf.mxu0
  %v448 = vadd.f32 %v96, %v447
  %v449 = vpop.f32.mrf.mxu0
  %v450 = vadd.f32 %v96, %v449
  %451 = vmatmul.bf16.gmra.mxu0 %v247
  %v452 = vpop.f32.mrf.mxu0
  %v453 = vadd.f32 %v96, %v452
  %v454 = vpop.f32.mrf.mxu0
  %v455 = vadd.f32 %v96, %v454
  %456 = vmatmul.bf16.gmra.mxu0 %v248
  %v457 = vpop.f32.mrf.mxu0
  %v458 = vadd.f32 %v96, %v457
  %v459 = vpop.f32.mrf.mxu0
  %v460 = vadd.f32 %v96, %v459
  %461 = vmatmul.bf16.gmra.mxu0 %v249
  %v462 = vpop.f32.mrf.mxu0
  %v463 = vadd.f32 %v96, %v462
  %v464 = vpop.f32.mrf.mxu0
  %v465 = vadd.f32 %v96, %v464
  %466 = vmatmul.bf16.gmra.mxu0 %v250
  %v467 = vpop.f32.mrf.mxu0
  %v468 = vadd.f32 %v96, %v467
  %v469 = vpop.f32.mrf.mxu0
  %v470 = vadd.f32 %v96, %v469
  %471 = vmatmul.bf16.gmra.mxu0 %v251
  %v472 = vpop.f32.mrf.mxu0
  %v473 = vadd.f32 %v96, %v472
  %v474 = vpop.f32.mrf.mxu0
  %v475 = vadd.f32 %v96, %v474
  %476 = vmatmul.bf16.gmra.mxu0 %v252
  %v477 = vpop.f32.mrf.mxu0
  %v478 = vadd.f32 %v96, %v477
  %v479 = vpop.f32.mrf.mxu0
  %v480 = vadd.f32 %v96, %v479
  %481 = vmatmul.bf16.gmra.mxu0 %v253
  %v482 = vpop.f32.mrf.mxu0
  %v483 = vadd.f32 %v96, %v482
  %v484 = vpop.f32.mrf.mxu0
  %v485 = vadd.f32 %v96, %v484
  %486 = vmatmul.bf16.gmra.mxu0 %v254
  %v487 = vpop.f32.mrf.mxu0
  %v488 = vadd.f32 %v96, %v487
  %v489 = vpop.f32.mrf.mxu0
  %v490 = vadd.f32 %v96, %v489
  %491 = vmatmul.bf16.gmra.mxu0 %v255
  %v492 = vpop.f32.mrf.mxu0
  %v493 = vadd.f32 %v96, %v492
  %v494 = vpop.f32.mrf.mxu0
  %v495 = vadd.f32 %v96, %v494
  %496 = vmatmul.bf16.gmra.mxu0 %v256
  %v497 = vpop.f32.mrf.mxu0
  %v498 = vadd.f32 %v96, %v497
  %v499 = vpop.f32.mrf.mxu0
  %v500 = vadd.f32 %v96, %v499
  %501 = vmatmul.bf16.gmra.mxu0 %v257
  %v502 = vpop.f32.mrf.mxu0
  %v503 = vadd.f32 %v96, %v502
  %v504 = vpop.f32.mrf.mxu0
  %v505 = vadd.f32 %v96, %v504
  %506 = vdwg.mxu0
  %vm507 = vcmp.gt.f32.partialorder %v348, 0.0
  %vm508 = vcmp.gt.f32.partialorder %v350, 0.0
  %vm509 = vcmp.gt.f32.partialorder %v353, 0.0
  %vm510 = vcmp.gt.f32.partialorder %v355, 0.0
  %vm511 = vcmp.gt.f32.partialorder %v358, 0.0
  %vm512 = vcmp.gt.f32.partialorder %v360, 0.0
  %vm513 = vcmp.gt.f32.partialorder %v363, 0.0
  %vm514 = vcmp.gt.f32.partialorder %v365, 0.0
  %vm515 = vcmp.gt.f32.partialorder %v368, 0.0
  %vm516 = vcmp.gt.f32.partialorder %v370, 0.0
  %vm517 = vcmp.gt.f32.partialorder %v373, 0.0
  %vm518 = vcmp.gt.f32.partialorder %v375, 0.0
  %vm519 = vcmp.gt.f32.partialorder %v378, 0.0
  %vm520 = vcmp.gt.f32.partialorder %v380, 0.0
  %vm521 = vcmp.gt.f32.partialorder %v383, 0.0
  %vm522 = vcmp.gt.f32.partialorder %v385, 0.0
  %vm523 = vcmp.gt.f32.partialorder %v388, 0.0
  %vm524 = vcmp.gt.f32.partialorder %v390, 0.0
  %vm525 = vcmp.gt.f32.partialorder %v393, 0.0
  %vm526 = vcmp.gt.f32.partialorder %v395, 0.0
  %vm527 = vcmp.gt.f32.partialorder %v398, 0.0
  %vm528 = vcmp.gt.f32.partialorder %v400, 0.0
  %vm529 = vcmp.gt.f32.partialorder %v403, 0.0
  %vm530 = vcmp.gt.f32.partialorder %v405, 0.0
  %vm531 = vcmp.gt.f32.partialorder %v408, 0.0
  %vm532 = vcmp.gt.f32.partialorder %v410, 0.0
  %vm533 = vcmp.gt.f32.partialorder %v413, 0.0
  %vm534 = vcmp.gt.f32.partialorder %v415, 0.0
  %vm535 = vcmp.gt.f32.partialorder %v418, 0.0
  %vm536 = vcmp.gt.f32.partialorder %v420, 0.0
  %vm537 = vcmp.gt.f32.partialorder %v423, 0.0
  %vm538 = vcmp.gt.f32.partialorder %v425, 0.0
  %vm539 = vcmp.gt.f32.partialorder %v428, 0.0
  %vm540 = vcmp.gt.f32.partialorder %v430, 0.0
  %vm541 = vcmp.gt.f32.partialorder %v433, 0.0
  %vm542 = vcmp.gt.f32.partialorder %v435, 0.0
  %vm543 = vcmp.gt.f32.partialorder %v438, 0.0
  %vm544 = vcmp.gt.f32.partialorder %v440, 0.0
  %vm545 = vcmp.gt.f32.partialorder %v443, 0.0
  %vm546 = vcmp.gt.f32.partialorder %v445, 0.0
  %vm547 = vcmp.gt.f32.partialorder %v448, 0.0
  %vm548 = vcmp.gt.f32.partialorder %v450, 0.0
  %vm549 = vcmp.gt.f32.partialorder %v453, 0.0
  %vm550 = vcmp.gt.f32.partialorder %v455, 0.0
  %vm551 = vcmp.gt.f32.partialorder %v458, 0.0
  %vm552 = vcmp.gt.f32.partialorder %v460, 0.0
  %vm553 = vcmp.gt.f32.partialorder %v463, 0.0
  %vm554 = vcmp.gt.f32.partialorder %v465, 0.0
  %vm555 = vcmp.gt.f32.partialorder %v468, 0.0
  %vm556 = vcmp.gt.f32.partialorder %v470, 0.0
  %vm557 = vcmp.gt.f32.partialorder %v473, 0.0
  %vm558 = vcmp.gt.f32.partialorder %v475, 0.0
  %vm559 = vcmp.gt.f32.partialorder %v478, 0.0
  %vm560 = vcmp.gt.f32.partialorder %v480, 0.0
  %vm561 = vcmp.gt.f32.partialorder %v483, 0.0
  %vm562 = vcmp.gt.f32.partialorder %v485, 0.0
  %vm563 = vcmp.gt.f32.partialorder %v488, 0.0
  %vm564 = vcmp.gt.f32.partialorder %v490, 0.0
  %vm565 = vcmp.gt.f32.partialorder %v493, 0.0
  %vm566 = vcmp.gt.f32.partialorder %v495, 0.0
  %vm567 = vcmp.gt.f32.partialorder %v498, 0.0
  %vm568 = vcmp.gt.f32.partialorder %v500, 0.0
  %vm569 = vcmp.gt.f32.partialorder %v503, 0.0
  %vm570 = vcmp.gt.f32.partialorder %v505, 0.0
  %v571 = vmul.f32 %v348, 0.2
  %v572 = vmul.f32 %v350, 0.2
  %v573 = vmul.f32 %v353, 0.2
  %v574 = vmul.f32 %v355, 0.2
  %v575 = vmul.f32 %v358, 0.2
  %v576 = vmul.f32 %v360, 0.2
  %v577 = vmul.f32 %v363, 0.2
  %v578 = vmul.f32 %v365, 0.2
  %v579 = vmul.f32 %v368, 0.2
  %v580 = vmul.f32 %v370, 0.2
  %v581 = vmul.f32 %v373, 0.2
  %v582 = vmul.f32 %v375, 0.2
  %v583 = vmul.f32 %v378, 0.2
  %v584 = vmul.f32 %v380, 0.2
  %v585 = vmul.f32 %v383, 0.2
  %v586 = vmul.f32 %v385, 0.2
  %v587 = vmul.f32 %v388, 0.2
  %v588 = vmul.f32 %v390, 0.2
  %v589 = vmul.f32 %v393, 0.2
  %v590 = vmul.f32 %v395, 0.2
  %v591 = vmul.f32 %v398, 0.2
  %v592 = vmul.f32 %v400, 0.2
  %v593 = vmul.f32 %v403, 0.2
  %v594 = vmul.f32 %v405, 0.2
  %v595 = vmul.f32 %v408, 0.2
  %v596 = vmul.f32 %v410, 0.2
  %v597 = vmul.f32 %v413, 0.2
  %v598 = vmul.f32 %v415, 0.2
  %v599 = vmul.f32 %v418, 0.2
  %v600 = vmul.f32 %v420, 0.2
  %v601 = vmul.f32 %v423, 0.2
  %v602 = vmul.f32 %v425, 0.2
  %v603 = vmul.f32 %v428, 0.2
  %v604 = vmul.f32 %v430, 0.2
  %v605 = vmul.f32 %v433, 0.2
  %v606 = vmul.f32 %v435, 0.2
  %v607 = vmul.f32 %v438, 0.2
  %v608 = vmul.f32 %v440, 0.2
  %v609 = vmul.f32 %v443, 0.2
  %v610 = vmul.f32 %v445, 0.2
  %v611 = vmul.f32 %v448, 0.2
  %v612 = vmul.f32 %v450, 0.2
  %v613 = vmul.f32 %v453, 0.2
  %v614 = vmul.f32 %v455, 0.2
  %v615 = vmul.f32 %v458, 0.2
  %v616 = vmul.f32 %v460, 0.2
  %v617 = vmul.f32 %v463, 0.2
  %v618 = vmul.f32 %v465, 0.2
  %v619 = vmul.f32 %v468, 0.2
  %v620 = vmul.f32 %v470, 0.2
  %v621 = vmul.f32 %v473, 0.2
  %v622 = vmul.f32 %v475, 0.2
  %v623 = vmul.f32 %v478, 0.2
  %v624 = vmul.f32 %v480, 0.2
  %v625 = vmul.f32 %v483, 0.2
  %v626 = vmul.f32 %v485, 0.2
  %v627 = vmul.f32 %v488, 0.2
  %v628 = vmul.f32 %v490, 0.2
  %v629 = vmul.f32 %v493, 0.2
  %v630 = vmul.f32 %v495, 0.2
  %v631 = vmul.f32 %v498, 0.2
  %v632 = vmul.f32 %v500, 0.2
  %v633 = vmul.f32 %v503, 0.2
  %v634 = vmul.f32 %v505, 0.2
  %v635 = vsel %vm507, %v348, %v571
  %v636 = vsel %vm508, %v350, %v572
  %v637 = vsel %vm509, %v353, %v573
  %v638 = vsel %vm510, %v355, %v574
  %v639 = vsel %vm511, %v358, %v575
  %v640 = vsel %vm512, %v360, %v576
  %v641 = vsel %vm513, %v363, %v577
  %v642 = vsel %vm514, %v365, %v578
  %v643 = vsel %vm515, %v368, %v579
  %v644 = vsel %vm516, %v370, %v580
  %v645 = vsel %vm517, %v373, %v581
  %v646 = vsel %vm518, %v375, %v582
  %v647 = vsel %vm519, %v378, %v583
  %v648 = vsel %vm520, %v380, %v584
  %v649 = vsel %vm521, %v383, %v585
  %v650 = vsel %vm522, %v385, %v586
  %v651 = vsel %vm523, %v388, %v587
  %v652 = vsel %vm524, %v390, %v588
  %v653 = vsel %vm525, %v393, %v589
  %v654 = vsel %vm526, %v395, %v590
  %v655 = vsel %vm527, %v398, %v591
  %v656 = vsel %vm528, %v400, %v592
  %v657 = vsel %vm529, %v403, %v593
  %v658 = vsel %vm530, %v405, %v594
  %v659 = vsel %vm531, %v408, %v595
  %v660 = vsel %vm532, %v410, %v596
  %v661 = vsel %vm533, %v413, %v597
  %v662 = vsel %vm534, %v415, %v598
  %v663 = vsel %vm535, %v418, %v599
  %v664 = vsel %vm536, %v420, %v600
  %v665 = vsel %vm537, %v423, %v601
  %v666 = vsel %vm538, %v425, %v602
  %v667 = vsel %vm539, %v428, %v603
  %v668 = vsel %vm540, %v430, %v604
  %v669 = vsel %vm541, %v433, %v605
  %v670 = vsel %vm542, %v435, %v606
  %v671 = vsel %vm543, %v438, %v607
  %v672 = vsel %vm544, %v440, %v608
  %v673 = vsel %vm545, %v443, %v609
  %v674 = vsel %vm546, %v445, %v610
  %v675 = vsel %vm547, %v448, %v611
  %v676 = vsel %vm548, %v450, %v612
  %v677 = vsel %vm549, %v453, %v613
  %v678 = vsel %vm550, %v455, %v614
  %v679 = vsel %vm551, %v458, %v615
  %v680 = vsel %vm552, %v460, %v616
  %v681 = vsel %vm553, %v463, %v617
  %v682 = vsel %vm554, %v465, %v618
  %v683 = vsel %vm555, %v468, %v619
  %v684 = vsel %vm556, %v470, %v620
  %v685 = vsel %vm557, %v473, %v621
  %v686 = vsel %vm558, %v475, %v622
  %v687 = vsel %vm559, %v478, %v623
  %v688 = vsel %vm560, %v480, %v624
  %v689 = vsel %vm561, %v483, %v625
  %v690 = vsel %vm562, %v485, %v626
  %v691 = vsel %vm563, %v488, %v627
  %v692 = vsel %vm564, %v490, %v628
  %v693 = vsel %vm565, %v493, %v629
  %v694 = vsel %vm566, %v495, %v630
  %v695 = vsel %vm567, %v498, %v631
  %v696 = vsel %vm568, %v500, %v632
  %v697 = vsel %vm569, %v503, %v633
  %v698 = vsel %vm570, %v505, %v634
  %v699 = vpack.c.bf16 %v635, %v635
  %v700 = vpack.c.bf16 %v636, %v636
  %v701 = vpack.c.bf16 %v637, %v637
  %v702 = vpack.c.bf16 %v638, %v638
  %v703 = vpack.c.bf16 %v639, %v639
  %v704 = vpack.c.bf16 %v640, %v640
  %v705 = vpack.c.bf16 %v641, %v641
  %v706 = vpack.c.bf16 %v642, %v642
  %v707 = vpack.c.bf16 %v643, %v643
  %v708 = vpack.c.bf16 %v644, %v644
  %v709 = vpack.c.bf16 %v645, %v645
  %v710 = vpack.c.bf16 %v646, %v646
  %v711 = vpack.c.bf16 %v647, %v647
  %v712 = vpack.c.bf16 %v648, %v648
  %v713 = vpack.c.bf16 %v649, %v649
  %v714 = vpack.c.bf16 %v650, %v650
  %v715 = vpack.c.bf16 %v651, %v651
  %v716 = vpack.c.bf16 %v652, %v652
  %v717 = vpack.c.bf16 %v653, %v653
  %v718 = vpack.c.bf16 %v654, %v654
  %v719 = vpack.c.bf16 %v655, %v655
  %v720 = vpack.c.bf16 %v656, %v656
  %v721 = vpack.c.bf16 %v657, %v657
  %v722 = vpack.c.bf16 %v658, %v658
  %v723 = vpack.c.bf16 %v659, %v659
  %v724 = vpack.c.bf16 %v660, %v660
  %v725 = vpack.c.bf16 %v661, %v661
  %v726 = vpack.c.bf16 %v662, %v662
  %v727 = vpack.c.bf16 %v663, %v663
  %v728 = vpack.c.bf16 %v664, %v664
  %v729 = vpack.c.bf16 %v665, %v665
  %v730 = vpack.c.bf16 %v666, %v666
  %v731 = vpack.c.bf16 %v667, %v667
  %v732 = vpack.c.bf16 %v668, %v668
  %v733 = vpack.c.bf16 %v669, %v669
  %v734 = vpack.c.bf16 %v670, %v670
  %v735 = vpack.c.bf16 %v671, %v671
  %v736 = vpack.c.bf16 %v672, %v672
  %v737 = vpack.c.bf16 %v673, %v673
  %v738 = vpack.c.bf16 %v674, %v674
  %v739 = vpack.c.bf16 %v675, %v675
  %v740 = vpack.c.bf16 %v676, %v676
  %v741 = vpack.c.bf16 %v677, %v677
  %v742 = vpack.c.bf16 %v678, %v678
  %v743 = vpack.c.bf16 %v679, %v679
  %v744 = vpack.c.bf16 %v680, %v680
  %v745 = vpack.c.bf16 %v681, %v681
  %v746 = vpack.c.bf16 %v682, %v682
  %v747 = vpack.c.bf16 %v683, %v683
  %v748 = vpack.c.bf16 %v684, %v684
  %v749 = vpack.c.bf16 %v685, %v685
  %v750 = vpack.c.bf16 %v686, %v686
  %v751 = vpack.c.bf16 %v687, %v687
  %v752 = vpack.c.bf16 %v688, %v688
  %v753 = vpack.c.bf16 %v689, %v689
  %v754 = vpack.c.bf16 %v690, %v690
  %v755 = vpack.c.bf16 %v691, %v691
  %v756 = vpack.c.bf16 %v692, %v692
  %v757 = vpack.c.bf16 %v693, %v693
  %v758 = vpack.c.bf16 %v694, %v694
  %v759 = vpack.c.bf16 %v695, %v695
  %v760 = vpack.c.bf16 %v696, %v696
  %v761 = vpack.c.bf16 %v697, %v697
  %v762 = vpack.c.bf16 %v698, %v698
  %763 = vst [vmem:[%s3] sm:$0xf] %v699
  %764 = vst [vmem:[%s3 + $0x4] sm:$0xf] %v700
  %765 = vst [vmem:[%s3 + $0x8] sm:$0xf] %v701
  %766 = vst [vmem:[%s3 + $0xc] sm:$0xf] %v702
  %767 = vst [vmem:[%s3 + $0x10] sm:$0xf] %v703
  %768 = vst [vmem:[%s3 + $0x14] sm:$0xf] %v704
  %769 = vst [vmem:[%s3 + $0x18] sm:$0xf] %v705
  %770 = vst [vmem:[%s3 + $0x1c] sm:$0xf] %v706
  %771 = vst [vmem:[%s3 + $0x20] sm:$0xf] %v707
  %772 = vst [vmem:[%s3 + $0x24] sm:$0xf] %v708
  %773 = vst [vmem:[%s3 + $0x28] sm:$0xf] %v709
  %774 = vst [vmem:[%s3 + $0x2c] sm:$0xf] %v710
  %775 = vst [vmem:[%s3 + $0x30] sm:$0xf] %v711
  %776 = vst [vmem:[%s3 + $0x34] sm:$0xf] %v712
  %777 = vst [vmem:[%s3 + $0x38] sm:$0xf] %v713
  %778 = vst [vmem:[%s3 + $0x3c] sm:$0xf] %v714
  %779 = vst [vmem:[%s3 + $0x40] sm:$0xf] %v715
  %780 = vst [vmem:[%s3 + $0x44] sm:$0xf] %v716
  %781 = vst [vmem:[%s3 + $0x48] sm:$0xf] %v717
  %782 = vst [vmem:[%s3 + $0x4c] sm:$0xf] %v718
  %783 = vst [vmem:[%s3 + $0x50] sm:$0xf] %v719
  %784 = vst [vmem:[%s3 + $0x54] sm:$0xf] %v720
  %785 = vst [vmem:[%s3 + $0x58] sm:$0xf] %v721
  %786 = vst [vmem:[%s3 + $0x5c] sm:$0xf] %v722
  %787 = vst [vmem:[%s3 + $0x60] sm:$0xf] %v723
  %788 = vst [vmem:[%s3 + $0x64] sm:$0xf] %v724
  %789 = vst [vmem:[%s3 + $0x68] sm:$0xf] %v725
  %790 = vst [vmem:[%s3 + $0x6c] sm:$0xf] %v726
  %791 = vst [vmem:[%s3 + $0x70] sm:$0xf] %v727
  %792 = vst [vmem:[%s3 + $0x74] sm:$0xf] %v728
  %793 = vst [vmem:[%s3 + $0x78] sm:$0xf] %v729
  %794 = vst [vmem:[%s3 + $0x7c] sm:$0xf] %v730
  %795 = vst [vmem:[%s3 + $0x80] sm:$0xf] %v731
  %796 = vst [vmem:[%s3 + $0x84] sm:$0xf] %v732
  %797 = vst [vmem:[%s3 + $0x88] sm:$0xf] %v733
  %798 = vst [vmem:[%s3 + $0x8c] sm:$0xf] %v734
  %799 = vst [vmem:[%s3 + $0x90] sm:$0xf] %v735
  %800 = vst [vmem:[%s3 + $0x94] sm:$0xf] %v736
  %801 = vst [vmem:[%s3 + $0x98] sm:$0xf] %v737
  %802 = vst [vmem:[%s3 + $0x9c] sm:$0xf] %v738
  %803 = vst [vmem:[%s3 + $0xa0] sm:$0xf] %v739
  %804 = vst [vmem:[%s3 + $0xa4] sm:$0xf] %v740
  %805 = vst [vmem:[%s3 + $0xa8] sm:$0xf] %v741
  %806 = vst [vmem:[%s3 + $0xac] sm:$0xf] %v742
  %807 = vst [vmem:[%s3 + $0xb0] sm:$0xf] %v743
  %808 = vst [vmem:[%s3 + $0xb4] sm:$0xf] %v744
  %809 = vst [vmem:[%s3 + $0xb8] sm:$0xf] %v745
  %810 = vst [vmem:[%s3 + $0xbc] sm:$0xf] %v746
  %811 = vst [vmem:[%s3 + $0xc0] sm:$0xf] %v747
  %812 = vst [vmem:[%s3 + $0xc4] sm:$0xf] %v748
  %813 = vst [vmem:[%s3 + $0xc8] sm:$0xf] %v749
  %814 = vst [vmem:[%s3 + $0xcc] sm:$0xf] %v750
  %815 = vst [vmem:[%s3 + $0xd0] sm:$0xf] %v751
  %816 = vst [vmem:[%s3 + $0xd4] sm:$0xf] %v752
  %817 = vst [vmem:[%s3 + $0xd8] sm:$0xf] %v753
  %818 = vst [vmem:[%s3 + $0xdc] sm:$0xf] %v754
  %819 = vst [vmem:[%s3 + $0xe0] sm:$0xf] %v755
  %820 = vst [vmem:[%s3 + $0xe4] sm:$0xf] %v756
  %821 = vst [vmem:[%s3 + $0xe8] sm:$0xf] %v757
  %822 = vst [vmem:[%s3 + $0xec] sm:$0xf] %v758
  %823 = vst [vmem:[%s3 + $0xf0] sm:$0xf] %v759
  %824 = vst [vmem:[%s3 + $0xf4] sm:$0xf] %v760
  %825 = vst [vmem:[%s3 + $0xf8] sm:$0xf] %v761
  %826 = vst [vmem:[%s3 + $0xfc] sm:$0xf] %v762
  // Predicated region
  $region14: #{_lambda_.5} parent=0 // pred_check
    _
  $region15: #{_lambda_.5} parent=0 // pred_check_branch
    %828 = sbr.rel (0) target = $region17
  $region16: #{_lambda_.5} parent=0 // pred_region
    _
  $region17: #{_lambda_.5} parent=0 // pred_fallthru
    _
  // Predicated region
  $region18: #{_lambda_.5} parent=0 // pred_check
    _
  $region19: #{_lambda_.5} parent=0 // pred_check_branch
    %830 = sbr.rel (0) target = $region21
  $region20: #{_lambda_.5} parent=0 // pred_region
    _
  $region21: #{_lambda_.5} parent=0 // pred_fallthru
    _

// kernel: _lambda_.6
$region0: #{_lambda_.6}
  #allocation0 [shape = 'u32[]', space=smem, size = 0x4, offset = 0x4, fixed_abs, tag = 'smem constant byte address 0x4 - core index']
  #allocation1 [shape = 'u32[72,128]{1,0:T(1,128)}', space=vmem, size = 0x9000, scoped, tag = 'internal scratch']
  %s0 = inlined_call_operand.vmem [shape: bf16[128,1024], index: 0, kind: input, shape index: {}]
  %s1 = inlined_call_operand.vmem [shape: bf16[1024,128], index: 1, kind: input, shape index: {}]
  %s2 = inlined_call_operand.vmem [shape: f32[1,128], index: 2, kind: input, shape index: {}]
  %s3 = inlined_call_operand.vmem [shape: f32[1,128], index: 3, kind: input, shape index: {}]
  %s4 = inlined_call_operand.vmem [shape: bf16[128,128], index: 4, kind: output, shape index: {}]
  %s5 = sld [smem:[#allocation0]]
  $region26: #{_lambda_.6} parent=0
    _
  %s7 = ssub.s32 1, %s5
  %s8 = scalar_select 0, %s7, %s5
  // Predicated region
  $region2: #{_lambda_.6} parent=0 // pred_check
    _
  $region3: #{_lambda_.6} parent=0 // pred_check_branch
    %10 = sbr.rel (0) target = $region5
  $region4: #{_lambda_.6} parent=0 // pred_region
    _
  $region5: #{_lambda_.6} parent=0 // pred_fallthru
    _
  // Predicated region
  $region6: #{_lambda_.6} parent=0 // pred_check
    _
  $region7: #{_lambda_.6} parent=0 // pred_check_branch
    %12 = sbr.rel (0) target = $region9
  $region8: #{_lambda_.6} parent=0 // pred_region
    _
  $region9: #{_lambda_.6} parent=0 // pred_fallthru
    _
  // Predicated region
  $region10: #{_lambda_.6} parent=0 // pred_check
    _
  $region11: #{_lambda_.6} parent=0 // pred_check_branch
    %14 = sbr.rel (0) target = $region13
  $region12: #{_lambda_.6} parent=0 // pred_region
    _
  $region13: #{_lambda_.6} parent=0 // pred_fallthru
    _
  // Predicated region
  $region14: #{_lambda_.6} parent=0 // pred_check
    _
  $region15: #{_lambda_.6} parent=0 // pred_check_branch
    %16 = sbr.rel (0) target = $region17
  $region16: #{_lambda_.6} parent=0 // pred_region
    _
  $region17: #{_lambda_.6} parent=0 // pred_fallthru
    _
  %v17 = vld [vmem:[%s0] sm:$0xff]
  %v18 = vld [vmem:[%s0 + $0x8] sm:$0xff]
  %v19 = vld [vmem:[%s0 + $0x10] sm:$0xff]
  %v20 = vld [vmem:[%s0 + $0x18] sm:$0xff]
  %v21 = vld [vmem:[%s0 + $0x20] sm:$0xff]
  %v22 = vld [vmem:[%s0 + $0x28] sm:$0xff]
  %v23 = vld [vmem:[%s0 + $0x30] sm:$0xff]
  %v24 = vld [vmem:[%s0 + $0x38] sm:$0xff]
  %v25 = vld [vmem:[%s0 + $0x40] sm:$0xff]
  %v26 = vld [vmem:[%s0 + $0x48] sm:$0xff]
  %v27 = vld [vmem:[%s0 + $0x50] sm:$0xff]
  %v28 = vld [vmem:[%s0 + $0x58] sm:$0xff]
  %v29 = vld [vmem:[%s0 + $0x60] sm:$0xff]
  %v30 = vld [vmem:[%s0 + $0x68] sm:$0xff]
  %v31 = vld [vmem:[%s0 + $0x70] sm:$0xff]
  %v32 = vld [vmem:[%s0 + $0x78] sm:$0xff]
  %v33 = vld [vmem:[%s0 + $0x80] sm:$0xff]
  %v34 = vld [vmem:[%s0 + $0x88] sm:$0xff]
  %v35 = vld [vmem:[%s0 + $0x90] sm:$0xff]
  %v36 = vld [vmem:[%s0 + $0x98] sm:$0xff]
  %v37 = vld [vmem:[%s0 + $0xa0] sm:$0xff]
  %v38 = vld [vmem:[%s0 + $0xa8] sm:$0xff]
  %v39 = vld [vmem:[%s0 + $0xb0] sm:$0xff]
  %v40 = vld [vmem:[%s0 + $0xb8] sm:$0xff]
  %v41 = vld [vmem:[%s0 + $0xc0] sm:$0xff]
  %v42 = vld [vmem:[%s0 + $0xc8] sm:$0xff]
  %v43 = vld [vmem:[%s0 + $0xd0] sm:$0xff]
  %v44 = vld [vmem:[%s0 + $0xd8] sm:$0xff]
  %v45 = vld [vmem:[%s0 + $0xe0] sm:$0xff]
  %v46 = vld [vmem:[%s0 + $0xe8] sm:$0xff]
  %v47 = vld [vmem:[%s0 + $0xf0] sm:$0xff]
  %v48 = vld [vmem:[%s0 + $0xf8] sm:$0xff]
  %v49 = vld [vmem:[%s0 + $0x100] sm:$0xff]
  %v50 = vld [vmem:[%s0 + $0x108] sm:$0xff]
  %v51 = vld [vmem:[%s0 + $0x110] sm:$0xff]
  %v52 = vld [vmem:[%s0 + $0x118] sm:$0xff]
  %v53 = vld [vmem:[%s0 + $0x120] sm:$0xff]
  %v54 = vld [vmem:[%s0 + $0x128] sm:$0xff]
  %v55 = vld [vmem:[%s0 + $0x130] sm:$0xff]
  %v56 = vld [vmem:[%s0 + $0x138] sm:$0xff]
  %v57 = vld [vmem:[%s0 + $0x140] sm:$0xff]
  %v58 = vld [vmem:[%s0 + $0x148] sm:$0xff]
  %v59 = vld [vmem:[%s0 + $0x150] sm:$0xff]
  %v60 = vld [vmem:[%s0 + $0x158] sm:$0xff]
  %v61 = vld [vmem:[%s0 + $0x160] sm:$0xff]
  %v62 = vld [vmem:[%s0 + $0x168] sm:$0xff]
  %v63 = vld [vmem:[%s0 + $0x170] sm:$0xff]
  %v64 = vld [vmem:[%s0 + $0x178] sm:$0xff]
  %v65 = vld [vmem:[%s0 + $0x180] sm:$0xff]
  %v66 = vld [vmem:[%s0 + $0x188] sm:$0xff]
  %v67 = vld [vmem:[%s0 + $0x190] sm:$0xff]
  %v68 = vld [vmem:[%s0 + $0x198] sm:$0xff]
  %v69 = vld [vmem:[%s0 + $0x1a0] sm:$0xff]
  %v70 = vld [vmem:[%s0 + $0x1a8] sm:$0xff]
  %v71 = vld [vmem:[%s0 + $0x1b0] sm:$0xff]
  %v72 = vld [vmem:[%s0 + $0x1b8] sm:$0xff]
  %v73 = vld [vmem:[%s0 + $0x1c0] sm:$0xff]
  %v74 = vld [vmem:[%s0 + $0x1c8] sm:$0xff]
  %v75 = vld [vmem:[%s0 + $0x1d0] sm:$0xff]
  %v76 = vld [vmem:[%s0 + $0x1d8] sm:$0xff]
  %v77 = vld [vmem:[%s0 + $0x1e0] sm:$0xff]
  %v78 = vld [vmem:[%s0 + $0x1e8] sm:$0xff]
  %v79 = vld [vmem:[%s0 + $0x1f0] sm:$0xff]
  %v80 = vld [vmem:[%s0 + $0x1f8] sm:$0xff]
  %v81 = vld [vmem:[%s1] sm:$0xf]
  %v82 = vld [vmem:[%s1 + $0x4] sm:$0xf]
  %v83 = vld [vmem:[%s1 + $0x8] sm:$0xf]
  %v84 = vld [vmem:[%s1 + $0xc] sm:$0xf]
  %v85 = vld [vmem:[%s1 + $0x10] sm:$0xf]
  %v86 = vld [vmem:[%s1 + $0x14] sm:$0xf]
  %v87 = vld [vmem:[%s1 + $0x18] sm:$0xf]
  %v88 = vld [vmem:[%s1 + $0x1c] sm:$0xf]
  %v89 = vld [vmem:[%s1 + $0x20] sm:$0xf]
  %v90 = vld [vmem:[%s1 + $0x24] sm:$0xf]
  %v91 = vld [vmem:[%s1 + $0x28] sm:$0xf]
  %v92 = vld [vmem:[%s1 + $0x2c] sm:$0xf]
  %v93 = vld [vmem:[%s1 + $0x30] sm:$0xf]
  %v94 = vld [vmem:[%s1 + $0x34] sm:$0xf]
  %v95 = vld [vmem:[%s1 + $0x38] sm:$0xf]
  %v96 = vld [vmem:[%s1 + $0x3c] sm:$0xf]
  %v97 = vld [vmem:[%s1 + $0x40] sm:$0xf]
  %v98 = vld [vmem:[%s1 + $0x44] sm:$0xf]
  %v99 = vld [vmem:[%s1 + $0x48] sm:$0xf]
  %v100 = vld [vmem:[%s1 + $0x4c] sm:$0xf]
  %v101 = vld [vmem:[%s1 + $0x50] sm:$0xf]
  %v102 = vld [vmem:[%s1 + $0x54] sm:$0xf]
  %v103 = vld [vmem:[%s1 + $0x58] sm:$0xf]
  %v104 = vld [vmem:[%s1 + $0x5c] sm:$0xf]
  %v105 = vld [vmem:[%s1 + $0x60] sm:$0xf]
  %v106 = vld [vmem:[%s1 + $0x64] sm:$0xf]
  %v107 = vld [vmem:[%s1 + $0x68] sm:$0xf]
  %v108 = vld [vmem:[%s1 + $0x6c] sm:$0xf]
  %v109 = vld [vmem:[%s1 + $0x70] sm:$0xf]
  %v110 = vld [vmem:[%s1 + $0x74] sm:$0xf]
  %v111 = vld [vmem:[%s1 + $0x78] sm:$0xf]
  %v112 = vld [vmem:[%s1 + $0x7c] sm:$0xf]
  %v113 = vld [vmem:[%s1 + $0x80] sm:$0xf]
  %v114 = vld [vmem:[%s1 + $0x84] sm:$0xf]
  %v115 = vld [vmem:[%s1 + $0x88] sm:$0xf]
  %v116 = vld [vmem:[%s1 + $0x8c] sm:$0xf]
  %v117 = vld [vmem:[%s1 + $0x90] sm:$0xf]
  %v118 = vld [vmem:[%s1 + $0x94] sm:$0xf]
  %v119 = vld [vmem:[%s1 + $0x98] sm:$0xf]
  %v120 = vld [vmem:[%s1 + $0x9c] sm:$0xf]
  %v121 = vld [vmem:[%s1 + $0xa0] sm:$0xf]
  %v122 = vld [vmem:[%s1 + $0xa4] sm:$0xf]
  %v123 = vld [vmem:[%s1 + $0xa8] sm:$0xf]
  %v124 = vld [vmem:[%s1 + $0xac] sm:$0xf]
  %v125 = vld [vmem:[%s1 + $0xb0] sm:$0xf]
  %v126 = vld [vmem:[%s1 + $0xb4] sm:$0xf]
  %v127 = vld [vmem:[%s1 + $0xb8] sm:$0xf]
  %v128 = vld [vmem:[%s1 + $0xbc] sm:$0xf]
  %v129 = vld [vmem:[%s1 + $0xc0] sm:$0xf]
  %v130 = vld [vmem:[%s1 + $0xc4] sm:$0xf]
  %v131 = vld [vmem:[%s1 + $0xc8] sm:$0xf]
  %v132 = vld [vmem:[%s1 + $0xcc] sm:$0xf]
  %v133 = vld [vmem:[%s1 + $0xd0] sm:$0xf]
  %v134 = vld [vmem:[%s1 + $0xd4] sm:$0xf]
  %v135 = vld [vmem:[%s1 + $0xd8] sm:$0xf]
  %v136 = vld [vmem:[%s1 + $0xdc] sm:$0xf]
  %v137 = vld [vmem:[%s1 + $0xe0] sm:$0xf]
  %v138 = vld [vmem:[%s1 + $0xe4] sm:$0xf]
  %v139 = vld [vmem:[%s1 + $0xe8] sm:$0xf]
  %v140 = vld [vmem:[%s1 + $0xec] sm:$0xf]
  %v141 = vld [vmem:[%s1 + $0xf0] sm:$0xf]
  %v142 = vld [vmem:[%s1 + $0xf4] sm:$0xf]
  %v143 = vld [vmem:[%s1 + $0xf8] sm:$0xf]
  %v144 = vld [vmem:[%s1 + $0xfc] sm:$0xf]
  %v145 = vld [vmem:[%s1 + $0x100] sm:$0xf]
  %v146 = vld [vmem:[%s1 + $0x104] sm:$0xf]
  %v147 = vld [vmem:[%s1 + $0x108] sm:$0xf]
  %v148 = vld [vmem:[%s1 + $0x10c] sm:$0xf]
  %v149 = vld [vmem:[%s1 + $0x110] sm:$0xf]
  %v150 = vld [vmem:[%s1 + $0x114] sm:$0xf]
  %v151 = vld [vmem:[%s1 + $0x118] sm:$0xf]
  %v152 = vld [vmem:[%s1 + $0x11c] sm:$0xf]
  %v153 = vld [vmem:[%s1 + $0x120] sm:$0xf]
  %v154 = vld [vmem:[%s1 + $0x124] sm:$0xf]
  %v155 = vld [vmem:[%s1 + $0x128] sm:$0xf]
  %v156 = vld [vmem:[%s1 + $0x12c] sm:$0xf]
  %v157 = vld [vmem:[%s1 + $0x130] sm:$0xf]
  %v158 = vld [vmem:[%s1 + $0x134] sm:$0xf]
  %v159 = vld [vmem:[%s1 + $0x138] sm:$0xf]
  %v160 = vld [vmem:[%s1 + $0x13c] sm:$0xf]
  %v161 = vld [vmem:[%s1 + $0x140] sm:$0xf]
  %v162 = vld [vmem:[%s1 + $0x144] sm:$0xf]
  %v163 = vld [vmem:[%s1 + $0x148] sm:$0xf]
  %v164 = vld [vmem:[%s1 + $0x14c] sm:$0xf]
  %v165 = vld [vmem:[%s1 + $0x150] sm:$0xf]
  %v166 = vld [vmem:[%s1 + $0x154] sm:$0xf]
  %v167 = vld [vmem:[%s1 + $0x158] sm:$0xf]
  %v168 = vld [vmem:[%s1 + $0x15c] sm:$0xf]
  %v169 = vld [vmem:[%s1 + $0x160] sm:$0xf]
  %v170 = vld [vmem:[%s1 + $0x164] sm:$0xf]
  %v171 = vld [vmem:[%s1 + $0x168] sm:$0xf]
  %v172 = vld [vmem:[%s1 + $0x16c] sm:$0xf]
  %v173 = vld [vmem:[%s1 + $0x170] sm:$0xf]
  %v174 = vld [vmem:[%s1 + $0x174] sm:$0xf]
  %v175 = vld [vmem:[%s1 + $0x178] sm:$0xf]
  %v176 = vld [vmem:[%s1 + $0x17c] sm:$0xf]
  %v177 = vld [vmem:[%s1 + $0x180] sm:$0xf]
  %v178 = vld [vmem:[%s1 + $0x184] sm:$0xf]
  %v179 = vld [vmem:[%s1 + $0x188] sm:$0xf]
  %v180 = vld [vmem:[%s1 + $0x18c] sm:$0xf]
  %v181 = vld [vmem:[%s1 + $0x190] sm:$0xf]
  %v182 = vld [vmem:[%s1 + $0x194] sm:$0xf]
  %v183 = vld [vmem:[%s1 + $0x198] sm:$0xf]
  %v184 = vld [vmem:[%s1 + $0x19c] sm:$0xf]
  %v185 = vld [vmem:[%s1 + $0x1a0] sm:$0xf]
  %v186 = vld [vmem:[%s1 + $0x1a4] sm:$0xf]
  %v187 = vld [vmem:[%s1 + $0x1a8] sm:$0xf]
  %v188 = vld [vmem:[%s1 + $0x1ac] sm:$0xf]
  %v189 = vld [vmem:[%s1 + $0x1b0] sm:$0xf]
  %v190 = vld [vmem:[%s1 + $0x1b4] sm:$0xf]
  %v191 = vld [vmem:[%s1 + $0x1b8] sm:$0xf]
  %v192 = vld [vmem:[%s1 + $0x1bc] sm:$0xf]
  %v193 = vld [vmem:[%s1 + $0x1c0] sm:$0xf]
  %v194 = vld [vmem:[%s1 + $0x1c4] sm:$0xf]
  %v195 = vld [vmem:[%s1 + $0x1c8] sm:$0xf]
  %v196 = vld [vmem:[%s1 + $0x1cc] sm:$0xf]
  %v197 = vld [vmem:[%s1 + $0x1d0] sm:$0xf]
  %v198 = vld [vmem:[%s1 + $0x1d4] sm:$0xf]
  %v199 = vld [vmem:[%s1 + $0x1d8] sm:$0xf]
  %v200 = vld [vmem:[%s1 + $0x1dc] sm:$0xf]
  %v201 = vld [vmem:[%s1 + $0x1e0] sm:$0xf]
  %v202 = vld [vmem:[%s1 + $0x1e4] sm:$0xf]
  %v203 = vld [vmem:[%s1 + $0x1e8] sm:$0xf]
  %v204 = vld [vmem:[%s1 + $0x1ec] sm:$0xf]
  %v205 = vld [vmem:[%s1 + $0x1f0] sm:$0xf]
  %v206 = vld [vmem:[%s1 + $0x1f4] sm:$0xf]
  %v207 = vld [vmem:[%s1 + $0x1f8] sm:$0xf]
  %v208 = vld [vmem:[%s1 + $0x1fc] sm:$0xf]
  %v273 = vunpack.c.l.b16 %v17
  %v274 = vunpack.c.h.b16 %v17
  %v275 = vunpack.c.l.b16 %v18
  %v276 = vunpack.c.h.b16 %v18
  %v277 = vunpack.c.l.b16 %v19
  %v278 = vunpack.c.h.b16 %v19
  %v279 = vunpack.c.l.b16 %v20
  %v280 = vunpack.c.h.b16 %v20
  %v281 = vunpack.c.l.b16 %v21
  %v282 = vunpack.c.h.b16 %v21
  %v283 = vunpack.c.l.b16 %v22
  %v284 = vunpack.c.h.b16 %v22
  %v285 = vunpack.c.l.b16 %v23
  %v286 = vunpack.c.h.b16 %v23
  %v287 = vunpack.c.l.b16 %v24
  %v288 = vunpack.c.h.b16 %v24
  %v289 = vunpack.c.l.b16 %v25
  %v290 = vunpack.c.h.b16 %v25
  %v291 = vunpack.c.l.b16 %v26
  %v292 = vunpack.c.h.b16 %v26
  %v293 = vunpack.c.l.b16 %v27
  %v294 = vunpack.c.h.b16 %v27
  %v295 = vunpack.c.l.b16 %v28
  %v296 = vunpack.c.h.b16 %v28
  %v297 = vunpack.c.l.b16 %v29
  %v298 = vunpack.c.h.b16 %v29
  %v299 = vunpack.c.l.b16 %v30
  %v300 = vunpack.c.h.b16 %v30
  %v301 = vunpack.c.l.b16 %v31
  %v302 = vunpack.c.h.b16 %v31
  %v303 = vunpack.c.l.b16 %v32
  %v304 = vunpack.c.h.b16 %v32
  %v305 = vunpack.c.l.b16 %v33
  %v306 = vunpack.c.h.b16 %v33
  %v307 = vunpack.c.l.b16 %v34
  %v308 = vunpack.c.h.b16 %v34
  %v309 = vunpack.c.l.b16 %v35
  %v310 = vunpack.c.h.b16 %v35
  %v311 = vunpack.c.l.b16 %v36
  %v312 = vunpack.c.h.b16 %v36
  %v313 = vunpack.c.l.b16 %v37
  %v314 = vunpack.c.h.b16 %v37
  %v315 = vunpack.c.l.b16 %v38
  %v316 = vunpack.c.h.b16 %v38
  %v317 = vunpack.c.l.b16 %v39
  %v318 = vunpack.c.h.b16 %v39
  %v319 = vunpack.c.l.b16 %v40
  %v320 = vunpack.c.h.b16 %v40
  %v321 = vunpack.c.l.b16 %v41
  %v322 = vunpack.c.h.b16 %v41
  %v323 = vunpack.c.l.b16 %v42
  %v324 = vunpack.c.h.b16 %v42
  %v325 = vunpack.c.l.b16 %v43
  %v326 = vunpack.c.h.b16 %v43
  %v327 = vunpack.c.l.b16 %v44
  %v328 = vunpack.c.h.b16 %v44
  %v329 = vunpack.c.l.b16 %v45
  %v330 = vunpack.c.h.b16 %v45
  %v331 = vunpack.c.l.b16 %v46
  %v332 = vunpack.c.h.b16 %v46
  %v333 = vunpack.c.l.b16 %v47
  %v334 = vunpack.c.h.b16 %v47
  %v335 = vunpack.c.l.b16 %v48
  %v336 = vunpack.c.h.b16 %v48
  %v337 = vunpack.c.l.b16 %v49
  %v338 = vunpack.c.h.b16 %v49
  %v339 = vunpack.c.l.b16 %v50
  %v340 = vunpack.c.h.b16 %v50
  %v341 = vunpack.c.l.b16 %v51
  %v342 = vunpack.c.h.b16 %v51
  %v343 = vunpack.c.l.b16 %v52
  %v344 = vunpack.c.h.b16 %v52
  %v345 = vunpack.c.l.b16 %v53
  %v346 = vunpack.c.h.b16 %v53
  %v347 = vunpack.c.l.b16 %v54
  %v348 = vunpack.c.h.b16 %v54
  %v349 = vunpack.c.l.b16 %v55
  %v350 = vunpack.c.h.b16 %v55
  %v351 = vunpack.c.l.b16 %v56
  %v352 = vunpack.c.h.b16 %v56
  %v353 = vunpack.c.l.b16 %v57
  %v354 = vunpack.c.h.b16 %v57
  %v355 = vunpack.c.l.b16 %v58
  %v356 = vunpack.c.h.b16 %v58
  %v357 = vunpack.c.l.b16 %v59
  %v358 = vunpack.c.h.b16 %v59
  %v359 = vunpack.c.l.b16 %v60
  %v360 = vunpack.c.h.b16 %v60
  %v361 = vunpack.c.l.b16 %v61
  %v362 = vunpack.c.h.b16 %v61
  %v363 = vunpack.c.l.b16 %v62
  %v364 = vunpack.c.h.b16 %v62
  %v365 = vunpack.c.l.b16 %v63
  %v366 = vunpack.c.h.b16 %v63
  %v367 = vunpack.c.l.b16 %v64
  %v368 = vunpack.c.h.b16 %v64
  %v369 = vunpack.c.l.b16 %v65
  %v370 = vunpack.c.h.b16 %v65
  %v371 = vunpack.c.l.b16 %v66
  %v372 = vunpack.c.h.b16 %v66
  %v373 = vunpack.c.l.b16 %v67
  %v374 = vunpack.c.h.b16 %v67
  %v375 = vunpack.c.l.b16 %v68
  %v376 = vunpack.c.h.b16 %v68
  %v377 = vunpack.c.l.b16 %v69
  %v378 = vunpack.c.h.b16 %v69
  %v379 = vunpack.c.l.b16 %v70
  %v380 = vunpack.c.h.b16 %v70
  %v381 = vunpack.c.l.b16 %v71
  %v382 = vunpack.c.h.b16 %v71
  %v383 = vunpack.c.l.b16 %v72
  %v384 = vunpack.c.h.b16 %v72
  %v385 = vunpack.c.l.b16 %v73
  %v386 = vunpack.c.h.b16 %v73
  %v387 = vunpack.c.l.b16 %v74
  %v388 = vunpack.c.h.b16 %v74
  %v389 = vunpack.c.l.b16 %v75
  %v390 = vunpack.c.h.b16 %v75
  %v391 = vunpack.c.l.b16 %v76
  %v392 = vunpack.c.h.b16 %v76
  %v393 = vunpack.c.l.b16 %v77
  %v394 = vunpack.c.h.b16 %v77
  %v395 = vunpack.c.l.b16 %v78
  %v396 = vunpack.c.h.b16 %v78
  %v397 = vunpack.c.l.b16 %v79
  %v398 = vunpack.c.h.b16 %v79
  %v399 = vunpack.c.l.b16 %v80
  %v400 = vunpack.c.h.b16 %v80
  %v401 = vpack.c.b16 %v281, %v273
  %v402 = vpack.c.b16 %v282, %v274
  %v403 = vpack.c.b16 %v283, %v275
  %v404 = vpack.c.b16 %v284, %v276
  %v405 = vpack.c.b16 %v285, %v277
  %v406 = vpack.c.b16 %v286, %v278
  %v407 = vpack.c.b16 %v287, %v279
  %v408 = vpack.c.b16 %v288, %v280
  %v409 = vpack.c.b16 %v297, %v289
  %v410 = vpack.c.b16 %v298, %v290
  %v411 = vpack.c.b16 %v299, %v291
  %v412 = vpack.c.b16 %v300, %v292
  %v413 = vpack.c.b16 %v301, %v293
  %v414 = vpack.c.b16 %v302, %v294
  %v415 = vpack.c.b16 %v303, %v295
  %v416 = vpack.c.b16 %v304, %v296
  %v417 = vpack.c.b16 %v313, %v305
  %v418 = vpack.c.b16 %v314, %v306
  %v419 = vpack.c.b16 %v315, %v307
  %v420 = vpack.c.b16 %v316, %v308
  %v421 = vpack.c.b16 %v317, %v309
  %v422 = vpack.c.b16 %v318, %v310
  %v423 = vpack.c.b16 %v319, %v311
  %v424 = vpack.c.b16 %v320, %v312
  %v425 = vpack.c.b16 %v329, %v321
  %v426 = vpack.c.b16 %v330, %v322
  %v427 = vpack.c.b16 %v331, %v323
  %v428 = vpack.c.b16 %v332, %v324
  %v429 = vpack.c.b16 %v333, %v325
  %v430 = vpack.c.b16 %v334, %v326
  %v431 = vpack.c.b16 %v335, %v327
  %v432 = vpack.c.b16 %v336, %v328
  %v433 = vpack.c.b16 %v345, %v337
  %v434 = vpack.c.b16 %v346, %v338
  %v435 = vpack.c.b16 %v347, %v339
  %v436 = vpack.c.b16 %v348, %v340
  %v437 = vpack.c.b16 %v349, %v341
  %v438 = vpack.c.b16 %v350, %v342
  %v439 = vpack.c.b16 %v351, %v343
  %v440 = vpack.c.b16 %v352, %v344
  %v441 = vpack.c.b16 %v361, %v353
  %v442 = vpack.c.b16 %v362, %v354
  %v443 = vpack.c.b16 %v363, %v355
  %v444 = vpack.c.b16 %v364, %v356
  %v445 = vpack.c.b16 %v365, %v357
  %v446 = vpack.c.b16 %v366, %v358
  %v447 = vpack.c.b16 %v367, %v359
  %v448 = vpack.c.b16 %v368, %v360
  %v449 = vpack.c.b16 %v377, %v369
  %v450 = vpack.c.b16 %v378, %v370
  %v451 = vpack.c.b16 %v379, %v371
  %v452 = vpack.c.b16 %v380, %v372
  %v453 = vpack.c.b16 %v381, %v373
  %v454 = vpack.c.b16 %v382, %v374
  %v455 = vpack.c.b16 %v383, %v375
  %v456 = vpack.c.b16 %v384, %v376
  %v457 = vpack.c.b16 %v393, %v385
  %v458 = vpack.c.b16 %v394, %v386
  %v459 = vpack.c.b16 %v395, %v387
  %v460 = vpack.c.b16 %v396, %v388
  %v461 = vpack.c.b16 %v397, %v389
  %v462 = vpack.c.b16 %v398, %v390
  %v463 = vpack.c.b16 %v399, %v391
  %v464 = vpack.c.b16 %v400, %v392
  %v657 = vunpack.c.l.b16 %v81
  %v658 = vunpack.c.l.b16 %v82
  %v659 = vunpack.c.l.b16 %v83
  %v660 = vunpack.c.l.b16 %v84
  %v661 = vunpack.c.l.b16 %v85
  %v662 = vunpack.c.l.b16 %v86
  %v663 = vunpack.c.l.b16 %v87
  %v664 = vunpack.c.l.b16 %v88
  %v665 = vunpack.c.l.b16 %v89
  %v666 = vunpack.c.l.b16 %v90
  %v667 = vunpack.c.l.b16 %v91
  %v668 = vunpack.c.l.b16 %v92
  %v669 = vunpack.c.l.b16 %v93
  %v670 = vunpack.c.l.b16 %v94
  %v671 = vunpack.c.l.b16 %v95
  %v672 = vunpack.c.l.b16 %v96
  %v673 = vunpack.c.l.b16 %v97
  %v674 = vunpack.c.l.b16 %v98
  %v675 = vunpack.c.l.b16 %v99
  %v676 = vunpack.c.l.b16 %v100
  %v677 = vunpack.c.l.b16 %v101
  %v678 = vunpack.c.l.b16 %v102
  %v679 = vunpack.c.l.b16 %v103
  %v680 = vunpack.c.l.b16 %v104
  %v681 = vunpack.c.l.b16 %v105
  %v682 = vunpack.c.l.b16 %v106
  %v683 = vunpack.c.l.b16 %v107
  %v684 = vunpack.c.l.b16 %v108
  %v685 = vunpack.c.l.b16 %v109
  %v686 = vunpack.c.l.b16 %v110
  %v687 = vunpack.c.l.b16 %v111
  %v688 = vunpack.c.l.b16 %v112
  %v689 = vunpack.c.l.b16 %v113
  %v690 = vunpack.c.l.b16 %v114
  %v691 = vunpack.c.l.b16 %v115
  %v692 = vunpack.c.l.b16 %v116
  %v693 = vunpack.c.l.b16 %v117
  %v694 = vunpack.c.l.b16 %v118
  %v695 = vunpack.c.l.b16 %v119
  %v696 = vunpack.c.l.b16 %v120
  %v697 = vunpack.c.l.b16 %v121
  %v698 = vunpack.c.l.b16 %v122
  %v699 = vunpack.c.l.b16 %v123
  %v700 = vunpack.c.l.b16 %v124
  %v701 = vunpack.c.l.b16 %v125
  %v702 = vunpack.c.l.b16 %v126
  %v703 = vunpack.c.l.b16 %v127
  %v704 = vunpack.c.l.b16 %v128
  %v705 = vunpack.c.l.b16 %v129
  %v706 = vunpack.c.l.b16 %v130
  %v707 = vunpack.c.l.b16 %v131
  %v708 = vunpack.c.l.b16 %v132
  %v709 = vunpack.c.l.b16 %v133
  %v710 = vunpack.c.l.b16 %v134
  %v711 = vunpack.c.l.b16 %v135
  %v712 = vunpack.c.l.b16 %v136
  %v713 = vunpack.c.l.b16 %v137
  %v714 = vunpack.c.l.b16 %v138
  %v715 = vunpack.c.l.b16 %v139
  %v716 = vunpack.c.l.b16 %v140
  %v717 = vunpack.c.l.b16 %v141
  %v718 = vunpack.c.l.b16 %v142
  %v719 = vunpack.c.l.b16 %v143
  %v720 = vunpack.c.l.b16 %v144
  %v721 = vunpack.c.l.b16 %v145
  %v722 = vunpack.c.l.b16 %v146
  %v723 = vunpack.c.l.b16 %v147
  %v724 = vunpack.c.l.b16 %v148
  %v725 = vunpack.c.l.b16 %v149
  %v726 = vunpack.c.l.b16 %v150
  %v727 = vunpack.c.l.b16 %v151
  %v728 = vunpack.c.l.b16 %v152
  %v729 = vunpack.c.l.b16 %v153
  %v730 = vunpack.c.l.b16 %v154
  %v731 = vunpack.c.l.b16 %v155
  %v732 = vunpack.c.l.b16 %v156
  %v733 = vunpack.c.l.b16 %v157
  %v734 = vunpack.c.l.b16 %v158
  %v735 = vunpack.c.l.b16 %v159
  %v736 = vunpack.c.l.b16 %v160
  %v737 = vunpack.c.l.b16 %v161
  %v738 = vunpack.c.l.b16 %v162
  %v739 = vunpack.c.l.b16 %v163
  %v740 = vunpack.c.l.b16 %v164
  %v741 = vunpack.c.l.b16 %v165
  %v742 = vunpack.c.l.b16 %v166
  %v743 = vunpack.c.l.b16 %v167
  %v744 = vunpack.c.l.b16 %v168
  %v745 = vunpack.c.l.b16 %v169
  %v746 = vunpack.c.l.b16 %v170
  %v747 = vunpack.c.l.b16 %v171
  %v748 = vunpack.c.l.b16 %v172
  %v749 = vunpack.c.l.b16 %v173
  %v750 = vunpack.c.l.b16 %v174
  %v751 = vunpack.c.l.b16 %v175
  %v752 = vunpack.c.l.b16 %v176
  %v753 = vunpack.c.l.b16 %v177
  %v754 = vunpack.c.l.b16 %v178
  %v755 = vunpack.c.l.b16 %v179
  %v756 = vunpack.c.l.b16 %v180
  %v757 = vunpack.c.l.b16 %v181
  %v758 = vunpack.c.l.b16 %v182
  %v759 = vunpack.c.l.b16 %v183
  %v760 = vunpack.c.l.b16 %v184
  %v761 = vunpack.c.l.b16 %v185
  %v762 = vunpack.c.l.b16 %v186
  %v763 = vunpack.c.l.b16 %v187
  %v764 = vunpack.c.l.b16 %v188
  %v765 = vunpack.c.l.b16 %v189
  %v766 = vunpack.c.l.b16 %v190
  %v767 = vunpack.c.l.b16 %v191
  %v768 = vunpack.c.l.b16 %v192
  %v769 = vunpack.c.l.b16 %v193
  %v770 = vunpack.c.l.b16 %v194
  %v771 = vunpack.c.l.b16 %v195
  %v772 = vunpack.c.l.b16 %v196
  %v773 = vunpack.c.l.b16 %v197
  %v774 = vunpack.c.l.b16 %v198
  %v775 = vunpack.c.l.b16 %v199
  %v776 = vunpack.c.l.b16 %v200
  %v777 = vunpack.c.l.b16 %v201
  %v778 = vunpack.c.l.b16 %v202
  %v779 = vunpack.c.l.b16 %v203
  %v780 = vunpack.c.l.b16 %v204
  %v781 = vunpack.c.l.b16 %v205
  %v782 = vunpack.c.l.b16 %v206
  %v783 = vunpack.c.l.b16 %v207
  %v784 = vunpack.c.l.b16 %v208
  %v785 = vpack.c.b16 %v658, %v657
  %v786 = vpack.c.b16 %v660, %v659
  %v787 = vpack.c.b16 %v662, %v661
  %v788 = vpack.c.b16 %v664, %v663
  %v789 = vpack.c.b16 %v666, %v665
  %v790 = vpack.c.b16 %v668, %v667
  %v791 = vpack.c.b16 %v670, %v669
  %v792 = vpack.c.b16 %v672, %v671
  %v793 = vpack.c.b16 %v674, %v673
  %v794 = vpack.c.b16 %v676, %v675
  %v795 = vpack.c.b16 %v678, %v677
  %v796 = vpack.c.b16 %v680, %v679
  %v797 = vpack.c.b16 %v682, %v681
  %v798 = vpack.c.b16 %v684, %v683
  %v799 = vpack.c.b16 %v686, %v685
  %v800 = vpack.c.b16 %v688, %v687
  %v801 = vpack.c.b16 %v690, %v689
  %v802 = vpack.c.b16 %v692, %v691
  %v803 = vpack.c.b16 %v694, %v693
  %v804 = vpack.c.b16 %v696, %v695
  %v805 = vpack.c.b16 %v698, %v697
  %v806 = vpack.c.b16 %v700, %v699
  %v807 = vpack.c.b16 %v702, %v701
  %v808 = vpack.c.b16 %v704, %v703
  %v809 = vpack.c.b16 %v706, %v705
  %v810 = vpack.c.b16 %v708, %v707
  %v811 = vpack.c.b16 %v710, %v709
  %v812 = vpack.c.b16 %v712, %v711
  %v813 = vpack.c.b16 %v714, %v713
  %v814 = vpack.c.b16 %v716, %v715
  %v815 = vpack.c.b16 %v718, %v717
  %v816 = vpack.c.b16 %v720, %v719
  %v817 = vpack.c.b16 %v722, %v721
  %v818 = vpack.c.b16 %v724, %v723
  %v819 = vpack.c.b16 %v726, %v725
  %v820 = vpack.c.b16 %v728, %v727
  %v821 = vpack.c.b16 %v730, %v729
  %v822 = vpack.c.b16 %v732, %v731
  %v823 = vpack.c.b16 %v734, %v733
  %v824 = vpack.c.b16 %v736, %v735
  %v825 = vpack.c.b16 %v738, %v737
  %v826 = vpack.c.b16 %v740, %v739
  %v827 = vpack.c.b16 %v742, %v741
  %v828 = vpack.c.b16 %v744, %v743
  %v829 = vpack.c.b16 %v746, %v745
  %v830 = vpack.c.b16 %v748, %v747
  %v831 = vpack.c.b16 %v750, %v749
  %v832 = vpack.c.b16 %v752, %v751
  %v833 = vpack.c.b16 %v754, %v753
  %v834 = vpack.c.b16 %v756, %v755
  %v835 = vpack.c.b16 %v758, %v757
  %v836 = vpack.c.b16 %v760, %v759
  %v837 = vpack.c.b16 %v762, %v761
  %v838 = vpack.c.b16 %v764, %v763
  %v839 = vpack.c.b16 %v766, %v765
  %v840 = vpack.c.b16 %v768, %v767
  %v841 = vpack.c.b16 %v770, %v769
  %v842 = vpack.c.b16 %v772, %v771
  %v843 = vpack.c.b16 %v774, %v773
  %v844 = vpack.c.b16 %v776, %v775
  %v845 = vpack.c.b16 %v778, %v777
  %v846 = vpack.c.b16 %v780, %v779
  %v847 = vpack.c.b16 %v782, %v781
  %v848 = vpack.c.b16 %v784, %v783
  %913 = vmatpush.bf16.msra.mxu0 %v792
  %914 = vmatpush.bf16.msra.mxu0 %v791
  %915 = vmatpush.bf16.msra.mxu0 %v790
  %916 = vmatpush.bf16.msra.mxu0 %v789
  %917 = vmatpush.bf16.msra.mxu0 %v788
  %918 = vmatpush.bf16.msra.mxu0 %v787
  %919 = vmatpush.bf16.msra.mxu0 %v786
  %920 = vmatpush.bf16.msra.mxu0 %v785
  %921 = vmatmul.bf16.gmra.mxu0 %v401
  %v922 = vpop.f32.mrf.mxu0
  %v923 = vadd.f32 0.0, %v922
  %v924 = vpop.f32.mrf.mxu0
  %v925 = vadd.f32 0.0, %v924
  %926 = vmatmul.bf16.gmra.mxu0 %v409
  %v927 = vpop.f32.mrf.mxu0
  %v928 = vadd.f32 0.0, %v927
  %v929 = vpop.f32.mrf.mxu0
  %v930 = vadd.f32 0.0, %v929
  %931 = vmatmul.bf16.gmra.mxu0 %v417
  %v932 = vpop.f32.mrf.mxu0
  %v933 = vadd.f32 0.0, %v932
  %v934 = vpop.f32.mrf.mxu0
  %v935 = vadd.f32 0.0, %v934
  %936 = vmatmul.bf16.gmra.mxu0 %v425
  %v937 = vpop.f32.mrf.mxu0
  %v938 = vadd.f32 0.0, %v937
  %v939 = vpop.f32.mrf.mxu0
  %v940 = vadd.f32 0.0, %v939
  %941 = vmatmul.bf16.gmra.mxu0 %v433
  %v942 = vpop.f32.mrf.mxu0
  %v943 = vadd.f32 0.0, %v942
  %v944 = vpop.f32.mrf.mxu0
  %v945 = vadd.f32 0.0, %v944
  %946 = vmatmul.bf16.gmra.mxu0 %v441
  %v947 = vpop.f32.mrf.mxu0
  %v948 = vadd.f32 0.0, %v947
  %v949 = vpop.f32.mrf.mxu0
  %v950 = vadd.f32 0.0, %v949
  %951 = vmatmul.bf16.gmra.mxu0 %v449
  %v952 = vpop.f32.mrf.mxu0
  %v953 = vadd.f32 0.0, %v952
  %v954 = vpop.f32.mrf.mxu0
  %v955 = vadd.f32 0.0, %v954
  %956 = vmatmul.bf16.gmra.mxu0 %v457
  %v957 = vpop.f32.mrf.mxu0
  %v958 = vadd.f32 0.0, %v957
  %v959 = vpop.f32.mrf.mxu0
  %v960 = vadd.f32 0.0, %v959
  %961 = vdwg.mxu0
  %962 = vmatpush.bf16.msra.mxu0 %v800
  %963 = vmatpush.bf16.msra.mxu0 %v799
  %964 = vmatpush.bf16.msra.mxu0 %v798
  %965 = vmatpush.bf16.msra.mxu0 %v797
  %966 = vmatpush.bf16.msra.mxu0 %v796
  %967 = vmatpush.bf16.msra.mxu0 %v795
  %968 = vmatpush.bf16.msra.mxu0 %v794
  %969 = vmatpush.bf16.msra.mxu0 %v793
  %970 = vmatmul.bf16.gmra.mxu0 %v402
  %v971 = vpop.f32.mrf.mxu0
  %v972 = vadd.f32 %v923, %v971
  %v973 = vpop.f32.mrf.mxu0
  %v974 = vadd.f32 %v925, %v973
  %975 = vmatmul.bf16.gmra.mxu0 %v410
  %v976 = vpop.f32.mrf.mxu0
  %v977 = vadd.f32 %v928, %v976
  %v978 = vpop.f32.mrf.mxu0
  %v979 = vadd.f32 %v930, %v978
  %980 = vmatmul.bf16.gmra.mxu0 %v418
  %v981 = vpop.f32.mrf.mxu0
  %v982 = vadd.f32 %v933, %v981
  %v983 = vpop.f32.mrf.mxu0
  %v984 = vadd.f32 %v935, %v983
  %985 = vmatmul.bf16.gmra.mxu0 %v426
  %v986 = vpop.f32.mrf.mxu0
  %v987 = vadd.f32 %v938, %v986
  %v988 = vpop.f32.mrf.mxu0
  %v989 = vadd.f32 %v940, %v988
  %990 = vmatmul.bf16.gmra.mxu0 %v434
  %v991 = vpop.f32.mrf.mxu0
  %v992 = vadd.f32 %v943, %v991
  %v993 = vpop.f32.mrf.mxu0
  %v994 = vadd.f32 %v945, %v993
  %995 = vmatmul.bf16.gmra.mxu0 %v442
  %v996 = vpop.f32.mrf.mxu0
  %v997 = vadd.f32 %v948, %v996
  %v998 = vpop.f32.mrf.mxu0
  %v999 = vadd.f32 %v950, %v998
  %1000 = vmatmul.bf16.gmra.mxu0 %v450
  %v1001 = vpop.f32.mrf.mxu0
  %v1002 = vadd.f32 %v953, %v1001
  %v1003 = vpop.f32.mrf.mxu0
  %v1004 = vadd.f32 %v955, %v1003
  %1005 = vmatmul.bf16.gmra.mxu0 %v458
  %v1006 = vpop.f32.mrf.mxu0
  %v1007 = vadd.f32 %v958, %v1006
  %v1008 = vpop.f32.mrf.mxu0
  %v1009 = vadd.f32 %v960, %v1008
  %1010 = vdwg.mxu0
  %1011 = vmatpush.bf16.msra.mxu0 %v808
  %1012 = vmatpush.bf16.msra.mxu0 %v807
  %1013 = vmatpush.bf16.msra.mxu0 %v806
  %1014 = vmatpush.bf16.msra.mxu0 %v805
  %1015 = vmatpush.bf16.msra.mxu0 %v804
  %1016 = vmatpush.bf16.msra.mxu0 %v803
  %1017 = vmatpush.bf16.msra.mxu0 %v802
  %1018 = vmatpush.bf16.msra.mxu0 %v801
  %1019 = vmatmul.bf16.gmra.mxu0 %v403
  %v1020 = vpop.f32.mrf.mxu0
  %v1021 = vadd.f32 %v972, %v1020
  %v1022 = vpop.f32.mrf.mxu0
  %v1023 = vadd.f32 %v974, %v1022
  %1024 = vmatmul.bf16.gmra.mxu0 %v411
  %v1025 = vpop.f32.mrf.mxu0
  %v1026 = vadd.f32 %v977, %v1025
  %v1027 = vpop.f32.mrf.mxu0
  %v1028 = vadd.f32 %v979, %v1027
  %1029 = vmatmul.bf16.gmra.mxu0 %v419
  %v1030 = vpop.f32.mrf.mxu0
  %v1031 = vadd.f32 %v982, %v1030
  %v1032 = vpop.f32.mrf.mxu0
  %v1033 = vadd.f32 %v984, %v1032
  %1034 = vmatmul.bf16.gmra.mxu0 %v427
  %v1035 = vpop.f32.mrf.mxu0
  %v1036 = vadd.f32 %v987, %v1035
  %v1037 = vpop.f32.mrf.mxu0
  %v1038 = vadd.f32 %v989, %v1037
  %1039 = vmatmul.bf16.gmra.mxu0 %v435
  %v1040 = vpop.f32.mrf.mxu0
  %v1041 = vadd.f32 %v992, %v1040
  %v1042 = vpop.f32.mrf.mxu0
  %v1043 = vadd.f32 %v994, %v1042
  %1044 = vmatmul.bf16.gmra.mxu0 %v443
  %v1045 = vpop.f32.mrf.mxu0
  %v1046 = vadd.f32 %v997, %v1045
  %v1047 = vpop.f32.mrf.mxu0
  %v1048 = vadd.f32 %v999, %v1047
  %1049 = vmatmul.bf16.gmra.mxu0 %v451
  %v1050 = vpop.f32.mrf.mxu0
  %v1051 = vadd.f32 %v1002, %v1050
  %v1052 = vpop.f32.mrf.mxu0
  %v1053 = vadd.f32 %v1004, %v1052
  %1054 = vmatmul.bf16.gmra.mxu0 %v459
  %v1055 = vpop.f32.mrf.mxu0
  %v1056 = vadd.f32 %v1007, %v1055
  %v1057 = vpop.f32.mrf.mxu0
  %v1058 = vadd.f32 %v1009, %v1057
  %1059 = vdwg.mxu0
  %1060 = vmatpush.bf16.msra.mxu0 %v816
  %1061 = vmatpush.bf16.msra.mxu0 %v815
  %1062 = vmatpush.bf16.msra.mxu0 %v814
  %1063 = vmatpush.bf16.msra.mxu0 %v813
  %1064 = vmatpush.bf16.msra.mxu0 %v812
  %1065 = vmatpush.bf16.msra.mxu0 %v811
  %1066 = vmatpush.bf16.msra.mxu0 %v810
  %1067 = vmatpush.bf16.msra.mxu0 %v809
  %1068 = vmatmul.bf16.gmra.mxu0 %v404
  %v1069 = vpop.f32.mrf.mxu0
  %v1070 = vadd.f32 %v1021, %v1069
  %v1071 = vpop.f32.mrf.mxu0
  %v1072 = vadd.f32 %v1023, %v1071
  %1073 = vmatmul.bf16.gmra.mxu0 %v412
  %v1074 = vpop.f32.mrf.mxu0
  %v1075 = vadd.f32 %v1026, %v1074
  %v1076 = vpop.f32.mrf.mxu0
  %v1077 = vadd.f32 %v1028, %v1076
  %1078 = vmatmul.bf16.gmra.mxu0 %v420
  %v1079 = vpop.f32.mrf.mxu0
  %v1080 = vadd.f32 %v1031, %v1079
  %v1081 = vpop.f32.mrf.mxu0
  %v1082 = vadd.f32 %v1033, %v1081
  %1083 = vmatmul.bf16.gmra.mxu0 %v428
  %v1084 = vpop.f32.mrf.mxu0
  %v1085 = vadd.f32 %v1036, %v1084
  %v1086 = vpop.f32.mrf.mxu0
  %v1087 = vadd.f32 %v1038, %v1086
  %1088 = vmatmul.bf16.gmra.mxu0 %v436
  %v1089 = vpop.f32.mrf.mxu0
  %v1090 = vadd.f32 %v1041, %v1089
  %v1091 = vpop.f32.mrf.mxu0
  %v1092 = vadd.f32 %v1043, %v1091
  %1093 = vmatmul.bf16.gmra.mxu0 %v444
  %v1094 = vpop.f32.mrf.mxu0
  %v1095 = vadd.f32 %v1046, %v1094
  %v1096 = vpop.f32.mrf.mxu0
  %v1097 = vadd.f32 %v1048, %v1096
  %1098 = vmatmul.bf16.gmra.mxu0 %v452
  %v1099 = vpop.f32.mrf.mxu0
  %v1100 = vadd.f32 %v1051, %v1099
  %v1101 = vpop.f32.mrf.mxu0
  %v1102 = vadd.f32 %v1053, %v1101
  %1103 = vmatmul.bf16.gmra.mxu0 %v460
  %v1104 = vpop.f32.mrf.mxu0
  %v1105 = vadd.f32 %v1056, %v1104
  %v1106 = vpop.f32.mrf.mxu0
  %v1107 = vadd.f32 %v1058, %v1106
  %1108 = vdwg.mxu0
  %1109 = vmatpush.bf16.msra.mxu0 %v824
  %1110 = vmatpush.bf16.msra.mxu0 %v823
  %1111 = vmatpush.bf16.msra.mxu0 %v822
  %1112 = vmatpush.bf16.msra.mxu0 %v821
  %1113 = vmatpush.bf16.msra.mxu0 %v820
  %1114 = vmatpush.bf16.msra.mxu0 %v819
  %1115 = vmatpush.bf16.msra.mxu0 %v818
  %1116 = vmatpush.bf16.msra.mxu0 %v817
  %1117 = vmatmul.bf16.gmra.mxu0 %v405
  %v1118 = vpop.f32.mrf.mxu0
  %v1119 = vadd.f32 %v1070, %v1118
  %v1120 = vpop.f32.mrf.mxu0
  %v1121 = vadd.f32 %v1072, %v1120
  %1122 = vmatmul.bf16.gmra.mxu0 %v413
  %v1123 = vpop.f32.mrf.mxu0
  %v1124 = vadd.f32 %v1075, %v1123
  %v1125 = vpop.f32.mrf.mxu0
  %v1126 = vadd.f32 %v1077, %v1125
  %1127 = vmatmul.bf16.gmra.mxu0 %v421
  %v1128 = vpop.f32.mrf.mxu0
  %v1129 = vadd.f32 %v1080, %v1128
  %v1130 = vpop.f32.mrf.mxu0
  %v1131 = vadd.f32 %v1082, %v1130
  %1132 = vmatmul.bf16.gmra.mxu0 %v429
  %v1133 = vpop.f32.mrf.mxu0
  %v1134 = vadd.f32 %v1085, %v1133
  %v1135 = vpop.f32.mrf.mxu0
  %v1136 = vadd.f32 %v1087, %v1135
  %1137 = vmatmul.bf16.gmra.mxu0 %v437
  %v1138 = vpop.f32.mrf.mxu0
  %v1139 = vadd.f32 %v1090, %v1138
  %v1140 = vpop.f32.mrf.mxu0
  %v1141 = vadd.f32 %v1092, %v1140
  %1142 = vmatmul.bf16.gmra.mxu0 %v445
  %v1143 = vpop.f32.mrf.mxu0
  %v1144 = vadd.f32 %v1095, %v1143
  %v1145 = vpop.f32.mrf.mxu0
  %v1146 = vadd.f32 %v1097, %v1145
  %1147 = vmatmul.bf16.gmra.mxu0 %v453
  %v1148 = vpop.f32.mrf.mxu0
  %v1149 = vadd.f32 %v1100, %v1148
  %v1150 = vpop.f32.mrf.mxu0
  %v1151 = vadd.f32 %v1102, %v1150
  %1152 = vmatmul.bf16.gmra.mxu0 %v461
  %v1153 = vpop.f32.mrf.mxu0
  %v1154 = vadd.f32 %v1105, %v1153
  %v1155 = vpop.f32.mrf.mxu0
  %v1156 = vadd.f32 %v1107, %v1155
  %1157 = vdwg.mxu0
  %1158 = vmatpush.bf16.msra.mxu0 %v832
  %1159 = vmatpush.bf16.msra.mxu0 %v831
  %1160 = vmatpush.bf16.msra.mxu0 %v830
  %1161 = vmatpush.bf16.msra.mxu0 %v829
  %1162 = vmatpush.bf16.msra.mxu0 %v828
  %1163 = vmatpush.bf16.msra.mxu0 %v827
  %1164 = vmatpush.bf16.msra.mxu0 %v826
  %1165 = vmatpush.bf16.msra.mxu0 %v825
  %1166 = vmatmul.bf16.gmra.mxu0 %v406
  %v1167 = vpop.f32.mrf.mxu0
  %v1168 = vadd.f32 %v1119, %v1167
  %v1169 = vpop.f32.mrf.mxu0
  %v1170 = vadd.f32 %v1121, %v1169
  %1171 = vmatmul.bf16.gmra.mxu0 %v414
  %v1172 = vpop.f32.mrf.mxu0
  %v1173 = vadd.f32 %v1124, %v1172
  %v1174 = vpop.f32.mrf.mxu0
  %v1175 = vadd.f32 %v1126, %v1174
  %1176 = vmatmul.bf16.gmra.mxu0 %v422
  %v1177 = vpop.f32.mrf.mxu0
  %v1178 = vadd.f32 %v1129, %v1177
  %v1179 = vpop.f32.mrf.mxu0
  %v1180 = vadd.f32 %v1131, %v1179
  %1181 = vmatmul.bf16.gmra.mxu0 %v430
  %v1182 = vpop.f32.mrf.mxu0
  %v1183 = vadd.f32 %v1134, %v1182
  %v1184 = vpop.f32.mrf.mxu0
  %v1185 = vadd.f32 %v1136, %v1184
  %1186 = vmatmul.bf16.gmra.mxu0 %v438
  %v1187 = vpop.f32.mrf.mxu0
  %v1188 = vadd.f32 %v1139, %v1187
  %v1189 = vpop.f32.mrf.mxu0
  %v1190 = vadd.f32 %v1141, %v1189
  %1191 = vmatmul.bf16.gmra.mxu0 %v446
  %v1192 = vpop.f32.mrf.mxu0
  %v1193 = vadd.f32 %v1144, %v1192
  %v1194 = vpop.f32.mrf.mxu0
  %v1195 = vadd.f32 %v1146, %v1194
  %1196 = vmatmul.bf16.gmra.mxu0 %v454
  %v1197 = vpop.f32.mrf.mxu0
  %v1198 = vadd.f32 %v1149, %v1197
  %v1199 = vpop.f32.mrf.mxu0
  %v1200 = vadd.f32 %v1151, %v1199
  %1201 = vmatmul.bf16.gmra.mxu0 %v462
  %v1202 = vpop.f32.mrf.mxu0
  %v1203 = vadd.f32 %v1154, %v1202
  %v1204 = vpop.f32.mrf.mxu0
  %v1205 = vadd.f32 %v1156, %v1204
  %1206 = vdwg.mxu0
  %1207 = vmatpush.bf16.msra.mxu0 %v840
  %1208 = vmatpush.bf16.msra.mxu0 %v839
  %1209 = vmatpush.bf16.msra.mxu0 %v838
  %1210 = vmatpush.bf16.msra.mxu0 %v837
  %1211 = vmatpush.bf16.msra.mxu0 %v836
  %1212 = vmatpush.bf16.msra.mxu0 %v835
  %1213 = vmatpush.bf16.msra.mxu0 %v834
  %1214 = vmatpush.bf16.msra.mxu0 %v833
  %1215 = vmatmul.bf16.gmra.mxu0 %v407
  %v1216 = vpop.f32.mrf.mxu0
  %v1217 = vadd.f32 %v1168, %v1216
  %v1218 = vpop.f32.mrf.mxu0
  %v1219 = vadd.f32 %v1170, %v1218
  %1220 = vmatmul.bf16.gmra.mxu0 %v415
  %v1221 = vpop.f32.mrf.mxu0
  %v1222 = vadd.f32 %v1173, %v1221
  %v1223 = vpop.f32.mrf.mxu0
  %v1224 = vadd.f32 %v1175, %v1223
  %1225 = vmatmul.bf16.gmra.mxu0 %v423
  %v1226 = vpop.f32.mrf.mxu0
  %v1227 = vadd.f32 %v1178, %v1226
  %v1228 = vpop.f32.mrf.mxu0
  %v1229 = vadd.f32 %v1180, %v1228
  %1230 = vmatmul.bf16.gmra.mxu0 %v431
  %v1231 = vpop.f32.mrf.mxu0
  %v1232 = vadd.f32 %v1183, %v1231
  %v1233 = vpop.f32.mrf.mxu0
  %v1234 = vadd.f32 %v1185, %v1233
  %1235 = vmatmul.bf16.gmra.mxu0 %v439
  %v1236 = vpop.f32.mrf.mxu0
  %v1237 = vadd.f32 %v1188, %v1236
  %v1238 = vpop.f32.mrf.mxu0
  %v1239 = vadd.f32 %v1190, %v1238
  %1240 = vmatmul.bf16.gmra.mxu0 %v447
  %v1241 = vpop.f32.mrf.mxu0
  %v1242 = vadd.f32 %v1193, %v1241
  %v1243 = vpop.f32.mrf.mxu0
  %v1244 = vadd.f32 %v1195, %v1243
  %1245 = vmatmul.bf16.gmra.mxu0 %v455
  %v1246 = vpop.f32.mrf.mxu0
  %v1247 = vadd.f32 %v1198, %v1246
  %v1248 = vpop.f32.mrf.mxu0
  %v1249 = vadd.f32 %v1200, %v1248
  %1250 = vmatmul.bf16.gmra.mxu0 %v463
  %v1251 = vpop.f32.mrf.mxu0
  %v1252 = vadd.f32 %v1203, %v1251
  %v1253 = vpop.f32.mrf.mxu0
  %v1254 = vadd.f32 %v1205, %v1253
  %1255 = vdwg.mxu0
  %1256 = vmatpush.bf16.msra.mxu0 %v848
  %1257 = vmatpush.bf16.msra.mxu0 %v847
  %1258 = vmatpush.bf16.msra.mxu0 %v846
  %1259 = vmatpush.bf16.msra.mxu0 %v845
  %1260 = vmatpush.bf16.msra.mxu0 %v844
  %1261 = vmatpush.bf16.msra.mxu0 %v843
  %1262 = vmatpush.bf16.msra.mxu0 %v842
  %1263 = vmatpush.bf16.msra.mxu0 %v841
  %1264 = vmatmul.bf16.gmra.mxu0 %v408
  %v1265 = vpop.f32.mrf.mxu0
  %v1266 = vadd.f32 %v1217, %v1265
  %v1267 = vpop.f32.mrf.mxu0
  %v1268 = vadd.f32 %v1219, %v1267
  %1269 = vmatmul.bf16.gmra.mxu0 %v416
  %v1270 = vpop.f32.mrf.mxu0
  %v1271 = vadd.f32 %v1222, %v1270
  %v1272 = vpop.f32.mrf.mxu0
  %v1273 = vadd.f32 %v1224, %v1272
  %1274 = vmatmul.bf16.gmra.mxu0 %v424
  %v1275 = vpop.f32.mrf.mxu0
  %v1276 = vadd.f32 %v1227, %v1275
  %v1277 = vpop.f32.mrf.mxu0
  %v1278 = vadd.f32 %v1229, %v1277
  %1279 = vmatmul.bf16.gmra.mxu0 %v432
  %v1280 = vpop.f32.mrf.mxu0
  %v1281 = vadd.f32 %v1232, %v1280
  %v1282 = vpop.f32.mrf.mxu0
  %v1283 = vadd.f32 %v1234, %v1282
  %1284 = vmatmul.bf16.gmra.mxu0 %v440
  %v1285 = vpop.f32.mrf.mxu0
  %v1286 = vadd.f32 %v1237, %v1285
  %v1287 = vpop.f32.mrf.mxu0
  %v1288 = vadd.f32 %v1239, %v1287
  %1289 = vmatmul.bf16.gmra.mxu0 %v448
  %v1290 = vpop.f32.mrf.mxu0
  %v1291 = vadd.f32 %v1242, %v1290
  %v1292 = vpop.f32.mrf.mxu0
  %v1293 = vadd.f32 %v1244, %v1292
  %1294 = vmatmul.bf16.gmra.mxu0 %v456
  %v1295 = vpop.f32.mrf.mxu0
  %v1296 = vadd.f32 %v1247, %v1295
  %v1297 = vpop.f32.mrf.mxu0
  %v1298 = vadd.f32 %v1249, %v1297
  %1299 = vmatmul.bf16.gmra.mxu0 %v464
  %v1300 = vpop.f32.mrf.mxu0
  %v1301 = vadd.f32 %v1252, %v1300
  %v1302 = vpop.f32.mrf.mxu0
  %v1303 = vadd.f32 %v1254, %v1302
  %1304 = vdwg.mxu0
  %v1305 = vadd.f32 %v1266, %v1268
  %v1306 = vadd.f32 %v1305, %v1271
  %v1307 = vadd.f32 %v1306, %v1273
  %v1308 = vadd.f32 %v1307, %v1276
  %v1309 = vadd.f32 %v1308, %v1278
  %v1310 = vadd.f32 %v1309, %v1281
  %v1311 = vadd.f32 %v1310, %v1283
  %v1312 = vadd.f32 %v1311, %v1286
  %v1313 = vadd.f32 %v1312, %v1288
  %v1314 = vadd.f32 %v1313, %v1291
  %v1315 = vadd.f32 %v1314, %v1293
  %v1316 = vadd.f32 %v1315, %v1296
  %v1317 = vadd.f32 %v1316, %v1298
  %v1318 = vadd.f32 %v1317, %v1301
  %v1319 = vadd.f32 %v1318, %v1303
  %v1320 = vrot.slane %v1319, 4
  %v1321 = vadd.f32 %v1319, %v1320
  %v1322 = vrot.slane %v1321, 2
  %v1323 = vadd.f32 %v1321, %v1322
  %v1324 = vrot.slane %v1323, 1
  %v1325 = vadd.f32 %v1323, %v1324
  %v1326 = vmul.f32 %v1325, 0.0078125
  %v1327 = vsub.f32 %v1266, %v1326
  %v1328 = vsub.f32 %v1268, %v1326
  %v1329 = vsub.f32 %v1271, %v1326
  %v1330 = vsub.f32 %v1273, %v1326
  %v1331 = vsub.f32 %v1276, %v1326
  %v1332 = vsub.f32 %v1278, %v1326
  %v1333 = vsub.f32 %v1281, %v1326
  %v1334 = vsub.f32 %v1283, %v1326
  %v1335 = vsub.f32 %v1286, %v1326
  %v1336 = vsub.f32 %v1288, %v1326
  %v1337 = vsub.f32 %v1291, %v1326
  %v1338 = vsub.f32 %v1293, %v1326
  %v1339 = vsub.f32 %v1296, %v1326
  %v1340 = vsub.f32 %v1298, %v1326
  %v1341 = vsub.f32 %v1301, %v1326
  %v1342 = vsub.f32 %v1303, %v1326
  %v1343 = vmul.f32 %v1327, %v1327
  %v1344 = vmul.f32 %v1328, %v1328
  %v1345 = vmul.f32 %v1329, %v1329
  %v1346 = vmul.f32 %v1330, %v1330
  %v1347 = vmul.f32 %v1331, %v1331
  %v1348 = vmul.f32 %v1332, %v1332
  %v1349 = vmul.f32 %v1333, %v1333
  %v1350 = vmul.f32 %v1334, %v1334
  %v1351 = vmul.f32 %v1335, %v1335
  %v1352 = vmul.f32 %v1336, %v1336
  %v1353 = vmul.f32 %v1337, %v1337
  %v1354 = vmul.f32 %v1338, %v1338
  %v1355 = vmul.f32 %v1339, %v1339
  %v1356 = vmul.f32 %v1340, %v1340
  %v1357 = vmul.f32 %v1341, %v1341
  %v1358 = vmul.f32 %v1342, %v1342
  %v1359 = vadd.f32 %v1343, %v1344
  %v1360 = vadd.f32 %v1359, %v1345
  %v1361 = vadd.f32 %v1360, %v1346
  %v1362 = vadd.f32 %v1361, %v1347
  %v1363 = vadd.f32 %v1362, %v1348
  %v1364 = vadd.f32 %v1363, %v1349
  %v1365 = vadd.f32 %v1364, %v1350
  %v1366 = vadd.f32 %v1365, %v1351
  %v1367 = vadd.f32 %v1366, %v1352
  %v1368 = vadd.f32 %v1367, %v1353
  %v1369 = vadd.f32 %v1368, %v1354
  %v1370 = vadd.f32 %v1369, %v1355
  %v1371 = vadd.f32 %v1370, %v1356
  %v1372 = vadd.f32 %v1371, %v1357
  %v1373 = vadd.f32 %v1372, %v1358
  %v1374 = vrot.slane %v1373, 4
  %v1375 = vadd.f32 %v1373, %v1374
  %v1376 = vrot.slane %v1375, 2
  %v1377 = vadd.f32 %v1375, %v1376
  %v1378 = vrot.slane %v1377, 1
  %v1379 = vadd.f32 %v1377, %v1378
  %v1380 = vmul.f32 %v1379, 0.0078125
  %v1381 = vld [vmem:[%s2] sm:$0x1]
  %v1382 = vadd.f32 %v1380, 1e-05
  %v1383 = vrsqrt.pop %v1382
  %v1384 = vmul.f32 %v1383, %v1382
  %v1385 = vmul.f32 %v1384, %v1383
  %v1386 = vmul.f32 0.5, %v1385
  %v1387 = vsub.f32 1.5, %v1386
  %v1388 = vmul.f32 %v1383, %v1387
  %vm1389 = vweird.f32 %v1382
  %vm1390 = vweird.f32 %v1383
  %vm1391 = vmor %vm1389, %vm1390
  %v1392 = vsel %vm1391, %v1383, %v1388
  %v1393 = vmul.f32 %v1381, %v1392
  %v1394 = vld [vmem:[%s3] sm:$0x1]
  %v1395 = vmul.f32 %v1326, %v1393
  %v1396 = vsub.f32 %v1394, %v1395
  %v1398 = vperm.slane %v1393, 0
  %v1400 = vmul.f32 %v1266, %v1398
  %v1401 = vmul.f32 %v1268, %v1398
  %v1402 = vmul.f32 %v1271, %v1398
  %v1403 = vmul.f32 %v1273, %v1398
  %v1404 = vmul.f32 %v1276, %v1398
  %v1405 = vmul.f32 %v1278, %v1398
  %v1406 = vmul.f32 %v1281, %v1398
  %v1407 = vmul.f32 %v1283, %v1398
  %v1408 = vmul.f32 %v1286, %v1398
  %v1409 = vmul.f32 %v1288, %v1398
  %v1410 = vmul.f32 %v1291, %v1398
  %v1411 = vmul.f32 %v1293, %v1398
  %v1412 = vmul.f32 %v1296, %v1398
  %v1413 = vmul.f32 %v1298, %v1398
  %v1414 = vmul.f32 %v1301, %v1398
  %v1415 = vmul.f32 %v1303, %v1398
  %v1417 = vperm.slane %v1396, 0
  %v1419 = vadd.f32 %v1400, %v1417
  %v1420 = vadd.f32 %v1401, %v1417
  %v1421 = vadd.f32 %v1402, %v1417
  %v1422 = vadd.f32 %v1403, %v1417
  %v1423 = vadd.f32 %v1404, %v1417
  %v1424 = vadd.f32 %v1405, %v1417
  %v1425 = vadd.f32 %v1406, %v1417
  %v1426 = vadd.f32 %v1407, %v1417
  %v1427 = vadd.f32 %v1408, %v1417
  %v1428 = vadd.f32 %v1409, %v1417
  %v1429 = vadd.f32 %v1410, %v1417
  %v1430 = vadd.f32 %v1411, %v1417
  %v1431 = vadd.f32 %v1412, %v1417
  %v1432 = vadd.f32 %v1413, %v1417
  %v1433 = vadd.f32 %v1414, %v1417
  %v1434 = vadd.f32 %v1415, %v1417
  %vm1435 = vcmp.gt.f32.partialorder %v1419, 0.0
  %vm1436 = vcmp.gt.f32.partialorder %v1420, 0.0
  %vm1437 = vcmp.gt.f32.partialorder %v1421, 0.0
  %vm1438 = vcmp.gt.f32.partialorder %v1422, 0.0
  %vm1439 = vcmp.gt.f32.partialorder %v1423, 0.0
  %vm1440 = vcmp.gt.f32.partialorder %v1424, 0.0
  %vm1441 = vcmp.gt.f32.partialorder %v1425, 0.0
  %vm1442 = vcmp.gt.f32.partialorder %v1426, 0.0
  %vm1443 = vcmp.gt.f32.partialorder %v1427, 0.0
  %vm1444 = vcmp.gt.f32.partialorder %v1428, 0.0
  %vm1445 = vcmp.gt.f32.partialorder %v1429, 0.0
  %vm1446 = vcmp.gt.f32.partialorder %v1430, 0.0
  %vm1447 = vcmp.gt.f32.partialorder %v1431, 0.0
  %vm1448 = vcmp.gt.f32.partialorder %v1432, 0.0
  %vm1449 = vcmp.gt.f32.partialorder %v1433, 0.0
  %vm1450 = vcmp.gt.f32.partialorder %v1434, 0.0
  %v1451 = vmul.f32 %v1419, 0.2
  %v1452 = vmul.f32 %v1420, 0.2
  %v1453 = vmul.f32 %v1421, 0.2
  %v1454 = vmul.f32 %v1422, 0.2
  %v1455 = vmul.f32 %v1423, 0.2
  %v1456 = vmul.f32 %v1424, 0.2
  %v1457 = vmul.f32 %v1425, 0.2
  %v1458 = vmul.f32 %v1426, 0.2
  %v1459 = vmul.f32 %v1427, 0.2
  %v1460 = vmul.f32 %v1428, 0.2
  %v1461 = vmul.f32 %v1429, 0.2
  %v1462 = vmul.f32 %v1430, 0.2
  %v1463 = vmul.f32 %v1431, 0.2
  %v1464 = vmul.f32 %v1432, 0.2
  %v1465 = vmul.f32 %v1433, 0.2
  %v1466 = vmul.f32 %v1434, 0.2
  %v1467 = vsel %vm1435, %v1419, %v1451
  %v1468 = vsel %vm1436, %v1420, %v1452
  %v1469 = vsel %vm1437, %v1421, %v1453
  %v1470 = vsel %vm1438, %v1422, %v1454
  %v1471 = vsel %vm1439, %v1423, %v1455
  %v1472 = vsel %vm1440, %v1424, %v1456
  %v1473 = vsel %vm1441, %v1425, %v1457
  %v1474 = vsel %vm1442, %v1426, %v1458
  %v1475 = vsel %vm1443, %v1427, %v1459
  %v1476 = vsel %vm1444, %v1428, %v1460
  %v1477 = vsel %vm1445, %v1429, %v1461
  %v1478 = vsel %vm1446, %v1430, %v1462
  %v1479 = vsel %vm1447, %v1431, %v1463
  %v1480 = vsel %vm1448, %v1432, %v1464
  %v1481 = vsel %vm1449, %v1433, %v1465
  %v1482 = vsel %vm1450, %v1434, %v1466
  %v1483 = vpack.c.bf16 %v1467, %v1467
  %v1484 = vpack.c.bf16 %v1468, %v1468
  %v1485 = vpack.c.bf16 %v1469, %v1469
  %v1486 = vpack.c.bf16 %v1470, %v1470
  %v1487 = vpack.c.bf16 %v1471, %v1471
  %v1488 = vpack.c.bf16 %v1472, %v1472
  %v1489 = vpack.c.bf16 %v1473, %v1473
  %v1490 = vpack.c.bf16 %v1474, %v1474
  %v1491 = vpack.c.bf16 %v1475, %v1475
  %v1492 = vpack.c.bf16 %v1476, %v1476
  %v1493 = vpack.c.bf16 %v1477, %v1477
  %v1494 = vpack.c.bf16 %v1478, %v1478
  %v1495 = vpack.c.bf16 %v1479, %v1479
  %v1496 = vpack.c.bf16 %v1480, %v1480
  %v1497 = vpack.c.bf16 %v1481, %v1481
  %v1498 = vpack.c.bf16 %v1482, %v1482
  %1499 = vst [vmem:[%s4] sm:$0xf] %v1483
  %1500 = vst [vmem:[%s4 + $0x4] sm:$0xf] %v1484
  %1501 = vst [vmem:[%s4 + $0x8] sm:$0xf] %v1485
  %1502 = vst [vmem:[%s4 + $0xc] sm:$0xf] %v1486
  %1503 = vst [vmem:[%s4 + $0x10] sm:$0xf] %v1487
  %1504 = vst [vmem:[%s4 + $0x14] sm:$0xf] %v1488
  %1505 = vst [vmem:[%s4 + $0x18] sm:$0xf] %v1489
  %1506 = vst [vmem:[%s4 + $0x1c] sm:$0xf] %v1490
  %1507 = vst [vmem:[%s4 + $0x20] sm:$0xf] %v1491
  %1508 = vst [vmem:[%s4 + $0x24] sm:$0xf] %v1492
  %1509 = vst [vmem:[%s4 + $0x28] sm:$0xf] %v1493
  %1510 = vst [vmem:[%s4 + $0x2c] sm:$0xf] %v1494
  %1511 = vst [vmem:[%s4 + $0x30] sm:$0xf] %v1495
  %1512 = vst [vmem:[%s4 + $0x34] sm:$0xf] %v1496
  %1513 = vst [vmem:[%s4 + $0x38] sm:$0xf] %v1497
  %1514 = vst [vmem:[%s4 + $0x3c] sm:$0xf] %v1498
  // Predicated region
  $region18: #{_lambda_.6} parent=0 // pred_check
    _
  $region19: #{_lambda_.6} parent=0 // pred_check_branch
    %1516 = sbr.rel (0) target = $region21
  $region20: #{_lambda_.6} parent=0 // pred_region
    _
  $region21: #{_lambda_.6} parent=0 // pred_fallthru
    _
  // Predicated region
  $region22: #{_lambda_.6} parent=0 // pred_check
    _
  $region23: #{_lambda_.6} parent=0 // pred_check_branch
    %1518 = sbr.rel (0) target = $region25
  $region24: #{_lambda_.6} parent=0 // pred_region
    _
  $region25: #{_lambda_.6} parent=0 // pred_fallthru
    _

// kernel: _lambda_.7
$region0: #{_lambda_.7}
  #allocation0 [shape = 'u32[]', space=smem, size = 0x4, offset = 0x4, fixed_abs, tag = 'smem constant byte address 0x4 - core index']
  #allocation1 [shape = 'u32[72,128]{1,0:T(1,128)}', space=vmem, size = 0x9000, scoped, tag = 'internal scratch']
  %s0 = inlined_call_operand.vmem [shape: bf16[32,2048], index: 0, kind: input, shape index: {}]
  %s1 = inlined_call_operand.vmem [shape: bf16[2048,256], index: 1, kind: input, shape index: {}]
  %s2 = inlined_call_operand.vmem [shape: f32[1,256], index: 2, kind: input, shape index: {}]
  %s3 = inlined_call_operand.vmem [shape: f32[1,256], index: 3, kind: input, shape index: {}]
  %s4 = inlined_call_operand.vmem [shape: bf16[32,256], index: 4, kind: output, shape index: {}]
  %s5 = sld [smem:[#allocation0]]
  $region26: #{_lambda_.7} parent=0
    _
  %s7 = ssub.s32 1, %s5
  %s8 = scalar_select 0, %s7, %s5
  // Predicated region
  $region2: #{_lambda_.7} parent=0 // pred_check
    _
  $region3: #{_lambda_.7} parent=0 // pred_check_branch
    %10 = sbr.rel (0) target = $region5
  $region4: #{_lambda_.7} parent=0 // pred_region
    _
  $region5: #{_lambda_.7} parent=0 // pred_fallthru
    _
  // Predicated region
  $region6: #{_lambda_.7} parent=0 // pred_check
    _
  $region7: #{_lambda_.7} parent=0 // pred_check_branch
    %12 = sbr.rel (0) target = $region9
  $region8: #{_lambda_.7} parent=0 // pred_region
    _
  $region9: #{_lambda_.7} parent=0 // pred_fallthru
    _
  // Predicated region
  $region10: #{_lambda_.7} parent=0 // pred_check
    _
  $region11: #{_lambda_.7} parent=0 // pred_check_branch
    %14 = sbr.rel (0) target = $region13
  $region12: #{_lambda_.7} parent=0 // pred_region
    _
  $region13: #{_lambda_.7} parent=0 // pred_fallthru
    _
  // Predicated region
  $region14: #{_lambda_.7} parent=0 // pred_check
    _
  $region15: #{_lambda_.7} parent=0 // pred_check_branch
    %16 = sbr.rel (0) target = $region17
  $region16: #{_lambda_.7} parent=0 // pred_region
    _
  $region17: #{_lambda_.7} parent=0 // pred_fallthru
    _
  %v17 = vld [vmem:[%s0] sm:$0xff]
  %v18 = vld [vmem:[%s0 + $0x8] sm:$0xff]
  %v19 = vld [vmem:[%s0 + $0x10] sm:$0xff]
  %v20 = vld [vmem:[%s0 + $0x18] sm:$0xff]
  %v21 = vld [vmem:[%s0 + $0x20] sm:$0xff]
  %v22 = vld [vmem:[%s0 + $0x28] sm:$0xff]
  %v23 = vld [vmem:[%s0 + $0x30] sm:$0xff]
  %v24 = vld [vmem:[%s0 + $0x38] sm:$0xff]
  %v25 = vld [vmem:[%s0 + $0x40] sm:$0xff]
  %v26 = vld [vmem:[%s0 + $0x48] sm:$0xff]
  %v27 = vld [vmem:[%s0 + $0x50] sm:$0xff]
  %v28 = vld [vmem:[%s0 + $0x58] sm:$0xff]
  %v29 = vld [vmem:[%s0 + $0x60] sm:$0xff]
  %v30 = vld [vmem:[%s0 + $0x68] sm:$0xff]
  %v31 = vld [vmem:[%s0 + $0x70] sm:$0xff]
  %v32 = vld [vmem:[%s0 + $0x78] sm:$0xff]
  %v33 = vld [vmem:[%s0 + $0x80] sm:$0xff]
  %v34 = vld [vmem:[%s0 + $0x88] sm:$0xff]
  %v35 = vld [vmem:[%s0 + $0x90] sm:$0xff]
  %v36 = vld [vmem:[%s0 + $0x98] sm:$0xff]
  %v37 = vld [vmem:[%s0 + $0xa0] sm:$0xff]
  %v38 = vld [vmem:[%s0 + $0xa8] sm:$0xff]
  %v39 = vld [vmem:[%s0 + $0xb0] sm:$0xff]
  %v40 = vld [vmem:[%s0 + $0xb8] sm:$0xff]
  %v41 = vld [vmem:[%s0 + $0xc0] sm:$0xff]
  %v42 = vld [vmem:[%s0 + $0xc8] sm:$0xff]
  %v43 = vld [vmem:[%s0 + $0xd0] sm:$0xff]
  %v44 = vld [vmem:[%s0 + $0xd8] sm:$0xff]
  %v45 = vld [vmem:[%s0 + $0xe0] sm:$0xff]
  %v46 = vld [vmem:[%s0 + $0xe8] sm:$0xff]
  %v47 = vld [vmem:[%s0 + $0xf0] sm:$0xff]
  %v48 = vld [vmem:[%s0 + $0xf8] sm:$0xff]
  %v49 = vld [vmem:[%s1] sm:$0xff]
  %v50 = vld [vmem:[%s1 + $0x8] sm:$0xff]
  %v51 = vld [vmem:[%s1 + $0x10] sm:$0xff]
  %v52 = vld [vmem:[%s1 + $0x18] sm:$0xff]
  %v53 = vld [vmem:[%s1 + $0x20] sm:$0xff]
  %v54 = vld [vmem:[%s1 + $0x28] sm:$0xff]
  %v55 = vld [vmem:[%s1 + $0x30] sm:$0xff]
  %v56 = vld [vmem:[%s1 + $0x38] sm:$0xff]
  %v57 = vld [vmem:[%s1 + $0x40] sm:$0xff]
  %v58 = vld [vmem:[%s1 + $0x48] sm:$0xff]
  %v59 = vld [vmem:[%s1 + $0x50] sm:$0xff]
  %v60 = vld [vmem:[%s1 + $0x58] sm:$0xff]
  %v61 = vld [vmem:[%s1 + $0x60] sm:$0xff]
  %v62 = vld [vmem:[%s1 + $0x68] sm:$0xff]
  %v63 = vld [vmem:[%s1 + $0x70] sm:$0xff]
  %v64 = vld [vmem:[%s1 + $0x78] sm:$0xff]
  %v65 = vld [vmem:[%s1 + $0x80] sm:$0xff]
  %v66 = vld [vmem:[%s1 + $0x88] sm:$0xff]
  %v67 = vld [vmem:[%s1 + $0x90] sm:$0xff]
  %v68 = vld [vmem:[%s1 + $0x98] sm:$0xff]
  %v69 = vld [vmem:[%s1 + $0xa0] sm:$0xff]
  %v70 = vld [vmem:[%s1 + $0xa8] sm:$0xff]
  %v71 = vld [vmem:[%s1 + $0xb0] sm:$0xff]
  %v72 = vld [vmem:[%s1 + $0xb8] sm:$0xff]
  %v73 = vld [vmem:[%s1 + $0xc0] sm:$0xff]
  %v74 = vld [vmem:[%s1 + $0xc8] sm:$0xff]
  %v75 = vld [vmem:[%s1 + $0xd0] sm:$0xff]
  %v76 = vld [vmem:[%s1 + $0xd8] sm:$0xff]
  %v77 = vld [vmem:[%s1 + $0xe0] sm:$0xff]
  %v78 = vld [vmem:[%s1 + $0xe8] sm:$0xff]
  %v79 = vld [vmem:[%s1 + $0xf0] sm:$0xff]
  %v80 = vld [vmem:[%s1 + $0xf8] sm:$0xff]
  %v81 = vld [vmem:[%s1 + $0x100] sm:$0xff]
  %v82 = vld [vmem:[%s1 + $0x108] sm:$0xff]
  %v83 = vld [vmem:[%s1 + $0x110] sm:$0xff]
  %v84 = vld [vmem:[%s1 + $0x118] sm:$0xff]
  %v85 = vld [vmem:[%s1 + $0x120] sm:$0xff]
  %v86 = vld [vmem:[%s1 + $0x128] sm:$0xff]
  %v87 = vld [vmem:[%s1 + $0x130] sm:$0xff]
  %v88 = vld [vmem:[%s1 + $0x138] sm:$0xff]
  %v89 = vld [vmem:[%s1 + $0x140] sm:$0xff]
  %v90 = vld [vmem:[%s1 + $0x148] sm:$0xff]
  %v91 = vld [vmem:[%s1 + $0x150] sm:$0xff]
  %v92 = vld [vmem:[%s1 + $0x158] sm:$0xff]
  %v93 = vld [vmem:[%s1 + $0x160] sm:$0xff]
  %v94 = vld [vmem:[%s1 + $0x168] sm:$0xff]
  %v95 = vld [vmem:[%s1 + $0x170] sm:$0xff]
  %v96 = vld [vmem:[%s1 + $0x178] sm:$0xff]
  %v97 = vld [vmem:[%s1 + $0x180] sm:$0xff]
  %v98 = vld [vmem:[%s1 + $0x188] sm:$0xff]
  %v99 = vld [vmem:[%s1 + $0x190] sm:$0xff]
  %v100 = vld [vmem:[%s1 + $0x198] sm:$0xff]
  %v101 = vld [vmem:[%s1 + $0x1a0] sm:$0xff]
  %v102 = vld [vmem:[%s1 + $0x1a8] sm:$0xff]
  %v103 = vld [vmem:[%s1 + $0x1b0] sm:$0xff]
  %v104 = vld [vmem:[%s1 + $0x1b8] sm:$0xff]
  %v105 = vld [vmem:[%s1 + $0x1c0] sm:$0xff]
  %v106 = vld [vmem:[%s1 + $0x1c8] sm:$0xff]
  %v107 = vld [vmem:[%s1 + $0x1d0] sm:$0xff]
  %v108 = vld [vmem:[%s1 + $0x1d8] sm:$0xff]
  %v109 = vld [vmem:[%s1 + $0x1e0] sm:$0xff]
  %v110 = vld [vmem:[%s1 + $0x1e8] sm:$0xff]
  %v111 = vld [vmem:[%s1 + $0x1f0] sm:$0xff]
  %v112 = vld [vmem:[%s1 + $0x1f8] sm:$0xff]
  %v113 = vld [vmem:[%s1 + $0x200] sm:$0xff]
  %v114 = vld [vmem:[%s1 + $0x208] sm:$0xff]
  %v115 = vld [vmem:[%s1 + $0x210] sm:$0xff]
  %v116 = vld [vmem:[%s1 + $0x218] sm:$0xff]
  %v117 = vld [vmem:[%s1 + $0x220] sm:$0xff]
  %v118 = vld [vmem:[%s1 + $0x228] sm:$0xff]
  %v119 = vld [vmem:[%s1 + $0x230] sm:$0xff]
  %v120 = vld [vmem:[%s1 + $0x238] sm:$0xff]
  %v121 = vld [vmem:[%s1 + $0x240] sm:$0xff]
  %v122 = vld [vmem:[%s1 + $0x248] sm:$0xff]
  %v123 = vld [vmem:[%s1 + $0x250] sm:$0xff]
  %v124 = vld [vmem:[%s1 + $0x258] sm:$0xff]
  %v125 = vld [vmem:[%s1 + $0x260] sm:$0xff]
  %v126 = vld [vmem:[%s1 + $0x268] sm:$0xff]
  %v127 = vld [vmem:[%s1 + $0x270] sm:$0xff]
  %v128 = vld [vmem:[%s1 + $0x278] sm:$0xff]
  %v129 = vld [vmem:[%s1 + $0x280] sm:$0xff]
  %v130 = vld [vmem:[%s1 + $0x288] sm:$0xff]
  %v131 = vld [vmem:[%s1 + $0x290] sm:$0xff]
  %v132 = vld [vmem:[%s1 + $0x298] sm:$0xff]
  %v133 = vld [vmem:[%s1 + $0x2a0] sm:$0xff]
  %v134 = vld [vmem:[%s1 + $0x2a8] sm:$0xff]
  %v135 = vld [vmem:[%s1 + $0x2b0] sm:$0xff]
  %v136 = vld [vmem:[%s1 + $0x2b8] sm:$0xff]
  %v137 = vld [vmem:[%s1 + $0x2c0] sm:$0xff]
  %v138 = vld [vmem:[%s1 + $0x2c8] sm:$0xff]
  %v139 = vld [vmem:[%s1 + $0x2d0] sm:$0xff]
  %v140 = vld [vmem:[%s1 + $0x2d8] sm:$0xff]
  %v141 = vld [vmem:[%s1 + $0x2e0] sm:$0xff]
  %v142 = vld [vmem:[%s1 + $0x2e8] sm:$0xff]
  %v143 = vld [vmem:[%s1 + $0x2f0] sm:$0xff]
  %v144 = vld [vmem:[%s1 + $0x2f8] sm:$0xff]
  %v145 = vld [vmem:[%s1 + $0x300] sm:$0xff]
  %v146 = vld [vmem:[%s1 + $0x308] sm:$0xff]
  %v147 = vld [vmem:[%s1 + $0x310] sm:$0xff]
  %v148 = vld [vmem:[%s1 + $0x318] sm:$0xff]
  %v149 = vld [vmem:[%s1 + $0x320] sm:$0xff]
  %v150 = vld [vmem:[%s1 + $0x328] sm:$0xff]
  %v151 = vld [vmem:[%s1 + $0x330] sm:$0xff]
  %v152 = vld [vmem:[%s1 + $0x338] sm:$0xff]
  %v153 = vld [vmem:[%s1 + $0x340] sm:$0xff]
  %v154 = vld [vmem:[%s1 + $0x348] sm:$0xff]
  %v155 = vld [vmem:[%s1 + $0x350] sm:$0xff]
  %v156 = vld [vmem:[%s1 + $0x358] sm:$0xff]
  %v157 = vld [vmem:[%s1 + $0x360] sm:$0xff]
  %v158 = vld [vmem:[%s1 + $0x368] sm:$0xff]
  %v159 = vld [vmem:[%s1 + $0x370] sm:$0xff]
  %v160 = vld [vmem:[%s1 + $0x378] sm:$0xff]
  %v161 = vld [vmem:[%s1 + $0x380] sm:$0xff]
  %v162 = vld [vmem:[%s1 + $0x388] sm:$0xff]
  %v163 = vld [vmem:[%s1 + $0x390] sm:$0xff]
  %v164 = vld [vmem:[%s1 + $0x398] sm:$0xff]
  %v165 = vld [vmem:[%s1 + $0x3a0] sm:$0xff]
  %v166 = vld [vmem:[%s1 + $0x3a8] sm:$0xff]
  %v167 = vld [vmem:[%s1 + $0x3b0] sm:$0xff]
  %v168 = vld [vmem:[%s1 + $0x3b8] sm:$0xff]
  %v169 = vld [vmem:[%s1 + $0x3c0] sm:$0xff]
  %v170 = vld [vmem:[%s1 + $0x3c8] sm:$0xff]
  %v171 = vld [vmem:[%s1 + $0x3d0] sm:$0xff]
  %v172 = vld [vmem:[%s1 + $0x3d8] sm:$0xff]
  %v173 = vld [vmem:[%s1 + $0x3e0] sm:$0xff]
  %v174 = vld [vmem:[%s1 + $0x3e8] sm:$0xff]
  %v175 = vld [vmem:[%s1 + $0x3f0] sm:$0xff]
  %v176 = vld [vmem:[%s1 + $0x3f8] sm:$0xff]
  %v177 = vld [vmem:[%s1 + $0x400] sm:$0xff]
  %v178 = vld [vmem:[%s1 + $0x408] sm:$0xff]
  %v179 = vld [vmem:[%s1 + $0x410] sm:$0xff]
  %v180 = vld [vmem:[%s1 + $0x418] sm:$0xff]
  %v181 = vld [vmem:[%s1 + $0x420] sm:$0xff]
  %v182 = vld [vmem:[%s1 + $0x428] sm:$0xff]
  %v183 = vld [vmem:[%s1 + $0x430] sm:$0xff]
  %v184 = vld [vmem:[%s1 + $0x438] sm:$0xff]
  %v185 = vld [vmem:[%s1 + $0x440] sm:$0xff]
  %v186 = vld [vmem:[%s1 + $0x448] sm:$0xff]
  %v187 = vld [vmem:[%s1 + $0x450] sm:$0xff]
  %v188 = vld [vmem:[%s1 + $0x458] sm:$0xff]
  %v189 = vld [vmem:[%s1 + $0x460] sm:$0xff]
  %v190 = vld [vmem:[%s1 + $0x468] sm:$0xff]
  %v191 = vld [vmem:[%s1 + $0x470] sm:$0xff]
  %v192 = vld [vmem:[%s1 + $0x478] sm:$0xff]
  %v193 = vld [vmem:[%s1 + $0x480] sm:$0xff]
  %v194 = vld [vmem:[%s1 + $0x488] sm:$0xff]
  %v195 = vld [vmem:[%s1 + $0x490] sm:$0xff]
  %v196 = vld [vmem:[%s1 + $0x498] sm:$0xff]
  %v197 = vld [vmem:[%s1 + $0x4a0] sm:$0xff]
  %v198 = vld [vmem:[%s1 + $0x4a8] sm:$0xff]
  %v199 = vld [vmem:[%s1 + $0x4b0] sm:$0xff]
  %v200 = vld [vmem:[%s1 + $0x4b8] sm:$0xff]
  %v201 = vld [vmem:[%s1 + $0x4c0] sm:$0xff]
  %v202 = vld [vmem:[%s1 + $0x4c8] sm:$0xff]
  %v203 = vld [vmem:[%s1 + $0x4d0] sm:$0xff]
  %v204 = vld [vmem:[%s1 + $0x4d8] sm:$0xff]
  %v205 = vld [vmem:[%s1 + $0x4e0] sm:$0xff]
  %v206 = vld [vmem:[%s1 + $0x4e8] sm:$0xff]
  %v207 = vld [vmem:[%s1 + $0x4f0] sm:$0xff]
  %v208 = vld [vmem:[%s1 + $0x4f8] sm:$0xff]
  %v209 = vld [vmem:[%s1 + $0x500] sm:$0xff]
  %v210 = vld [vmem:[%s1 + $0x508] sm:$0xff]
  %v211 = vld [vmem:[%s1 + $0x510] sm:$0xff]
  %v212 = vld [vmem:[%s1 + $0x518] sm:$0xff]
  %v213 = vld [vmem:[%s1 + $0x520] sm:$0xff]
  %v214 = vld [vmem:[%s1 + $0x528] sm:$0xff]
  %v215 = vld [vmem:[%s1 + $0x530] sm:$0xff]
  %v216 = vld [vmem:[%s1 + $0x538] sm:$0xff]
  %v217 = vld [vmem:[%s1 + $0x540] sm:$0xff]
  %v218 = vld [vmem:[%s1 + $0x548] sm:$0xff]
  %v219 = vld [vmem:[%s1 + $0x550] sm:$0xff]
  %v220 = vld [vmem:[%s1 + $0x558] sm:$0xff]
  %v221 = vld [vmem:[%s1 + $0x560] sm:$0xff]
  %v222 = vld [vmem:[%s1 + $0x568] sm:$0xff]
  %v223 = vld [vmem:[%s1 + $0x570] sm:$0xff]
  %v224 = vld [vmem:[%s1 + $0x578] sm:$0xff]
  %v225 = vld [vmem:[%s1 + $0x580] sm:$0xff]
  %v226 = vld [vmem:[%s1 + $0x588] sm:$0xff]
  %v227 = vld [vmem:[%s1 + $0x590] sm:$0xff]
  %v228 = vld [vmem:[%s1 + $0x598] sm:$0xff]
  %v229 = vld [vmem:[%s1 + $0x5a0] sm:$0xff]
  %v230 = vld [vmem:[%s1 + $0x5a8] sm:$0xff]
  %v231 = vld [vmem:[%s1 + $0x5b0] sm:$0xff]
  %v232 = vld [vmem:[%s1 + $0x5b8] sm:$0xff]
  %v233 = vld [vmem:[%s1 + $0x5c0] sm:$0xff]
  %v234 = vld [vmem:[%s1 + $0x5c8] sm:$0xff]
  %v235 = vld [vmem:[%s1 + $0x5d0] sm:$0xff]
  %v236 = vld [vmem:[%s1 + $0x5d8] sm:$0xff]
  %v237 = vld [vmem:[%s1 + $0x5e0] sm:$0xff]
  %v238 = vld [vmem:[%s1 + $0x5e8] sm:$0xff]
  %v239 = vld [vmem:[%s1 + $0x5f0] sm:$0xff]
  %v240 = vld [vmem:[%s1 + $0x5f8] sm:$0xff]
  %v241 = vld [vmem:[%s1 + $0x600] sm:$0xff]
  %v242 = vld [vmem:[%s1 + $0x608] sm:$0xff]
  %v243 = vld [vmem:[%s1 + $0x610] sm:$0xff]
  %v244 = vld [vmem:[%s1 + $0x618] sm:$0xff]
  %v245 = vld [vmem:[%s1 + $0x620] sm:$0xff]
  %v246 = vld [vmem:[%s1 + $0x628] sm:$0xff]
  %v247 = vld [vmem:[%s1 + $0x630] sm:$0xff]
  %v248 = vld [vmem:[%s1 + $0x638] sm:$0xff]
  %v249 = vld [vmem:[%s1 + $0x640] sm:$0xff]
  %v250 = vld [vmem:[%s1 + $0x648] sm:$0xff]
  %v251 = vld [vmem:[%s1 + $0x650] sm:$0xff]
  %v252 = vld [vmem:[%s1 + $0x658] sm:$0xff]
  %v253 = vld [vmem:[%s1 + $0x660] sm:$0xff]
  %v254 = vld [vmem:[%s1 + $0x668] sm:$0xff]
  %v255 = vld [vmem:[%s1 + $0x670] sm:$0xff]
  %v256 = vld [vmem:[%s1 + $0x678] sm:$0xff]
  %v257 = vld [vmem:[%s1 + $0x680] sm:$0xff]
  %v258 = vld [vmem:[%s1 + $0x688] sm:$0xff]
  %v259 = vld [vmem:[%s1 + $0x690] sm:$0xff]
  %v260 = vld [vmem:[%s1 + $0x698] sm:$0xff]
  %v261 = vld [vmem:[%s1 + $0x6a0] sm:$0xff]
  %v262 = vld [vmem:[%s1 + $0x6a8] sm:$0xff]
  %v263 = vld [vmem:[%s1 + $0x6b0] sm:$0xff]
  %v264 = vld [vmem:[%s1 + $0x6b8] sm:$0xff]
  %v265 = vld [vmem:[%s1 + $0x6c0] sm:$0xff]
  %v266 = vld [vmem:[%s1 + $0x6c8] sm:$0xff]
  %v267 = vld [vmem:[%s1 + $0x6d0] sm:$0xff]
  %v268 = vld [vmem:[%s1 + $0x6d8] sm:$0xff]
  %v269 = vld [vmem:[%s1 + $0x6e0] sm:$0xff]
  %v270 = vld [vmem:[%s1 + $0x6e8] sm:$0xff]
  %v271 = vld [vmem:[%s1 + $0x6f0] sm:$0xff]
  %v272 = vld [vmem:[%s1 + $0x6f8] sm:$0xff]
  %v273 = vld [vmem:[%s1 + $0x700] sm:$0xff]
  %v274 = vld [vmem:[%s1 + $0x708] sm:$0xff]
  %v275 = vld [vmem:[%s1 + $0x710] sm:$0xff]
  %v276 = vld [vmem:[%s1 + $0x718] sm:$0xff]
  %v277 = vld [vmem:[%s1 + $0x720] sm:$0xff]
  %v278 = vld [vmem:[%s1 + $0x728] sm:$0xff]
  %v279 = vld [vmem:[%s1 + $0x730] sm:$0xff]
  %v280 = vld [vmem:[%s1 + $0x738] sm:$0xff]
  %v281 = vld [vmem:[%s1 + $0x740] sm:$0xff]
  %v282 = vld [vmem:[%s1 + $0x748] sm:$0xff]
  %v283 = vld [vmem:[%s1 + $0x750] sm:$0xff]
  %v284 = vld [vmem:[%s1 + $0x758] sm:$0xff]
  %v285 = vld [vmem:[%s1 + $0x760] sm:$0xff]
  %v286 = vld [vmem:[%s1 + $0x768] sm:$0xff]
  %v287 = vld [vmem:[%s1 + $0x770] sm:$0xff]
  %v288 = vld [vmem:[%s1 + $0x778] sm:$0xff]
  %v289 = vld [vmem:[%s1 + $0x780] sm:$0xff]
  %v290 = vld [vmem:[%s1 + $0x788] sm:$0xff]
  %v291 = vld [vmem:[%s1 + $0x790] sm:$0xff]
  %v292 = vld [vmem:[%s1 + $0x798] sm:$0xff]
  %v293 = vld [vmem:[%s1 + $0x7a0] sm:$0xff]
  %v294 = vld [vmem:[%s1 + $0x7a8] sm:$0xff]
  %v295 = vld [vmem:[%s1 + $0x7b0] sm:$0xff]
  %v296 = vld [vmem:[%s1 + $0x7b8] sm:$0xff]
  %v297 = vld [vmem:[%s1 + $0x7c0] sm:$0xff]
  %v298 = vld [vmem:[%s1 + $0x7c8] sm:$0xff]
  %v299 = vld [vmem:[%s1 + $0x7d0] sm:$0xff]
  %v300 = vld [vmem:[%s1 + $0x7d8] sm:$0xff]
  %v301 = vld [vmem:[%s1 + $0x7e0] sm:$0xff]
  %v302 = vld [vmem:[%s1 + $0x7e8] sm:$0xff]
  %v303 = vld [vmem:[%s1 + $0x7f0] sm:$0xff]
  %v304 = vld [vmem:[%s1 + $0x7f8] sm:$0xff]
  %v337 = vunpack.c.l.b16 %v17
  %v338 = vunpack.c.h.b16 %v17
  %v339 = vunpack.c.l.b16 %v18
  %v340 = vunpack.c.h.b16 %v18
  %v341 = vunpack.c.l.b16 %v19
  %v342 = vunpack.c.h.b16 %v19
  %v343 = vunpack.c.l.b16 %v20
  %v344 = vunpack.c.h.b16 %v20
  %v345 = vunpack.c.l.b16 %v21
  %v346 = vunpack.c.h.b16 %v21
  %v347 = vunpack.c.l.b16 %v22
  %v348 = vunpack.c.h.b16 %v22
  %v349 = vunpack.c.l.b16 %v23
  %v350 = vunpack.c.h.b16 %v23
  %v351 = vunpack.c.l.b16 %v24
  %v352 = vunpack.c.h.b16 %v24
  %v353 = vunpack.c.l.b16 %v25
  %v354 = vunpack.c.h.b16 %v25
  %v355 = vunpack.c.l.b16 %v26
  %v356 = vunpack.c.h.b16 %v26
  %v357 = vunpack.c.l.b16 %v27
  %v358 = vunpack.c.h.b16 %v27
  %v359 = vunpack.c.l.b16 %v28
  %v360 = vunpack.c.h.b16 %v28
  %v361 = vunpack.c.l.b16 %v29
  %v362 = vunpack.c.h.b16 %v29
  %v363 = vunpack.c.l.b16 %v30
  %v364 = vunpack.c.h.b16 %v30
  %v365 = vunpack.c.l.b16 %v31
  %v366 = vunpack.c.h.b16 %v31
  %v367 = vunpack.c.l.b16 %v32
  %v368 = vunpack.c.h.b16 %v32
  %v369 = vunpack.c.l.b16 %v33
  %v370 = vunpack.c.h.b16 %v33
  %v371 = vunpack.c.l.b16 %v34
  %v372 = vunpack.c.h.b16 %v34
  %v373 = vunpack.c.l.b16 %v35
  %v374 = vunpack.c.h.b16 %v35
  %v375 = vunpack.c.l.b16 %v36
  %v376 = vunpack.c.h.b16 %v36
  %v377 = vunpack.c.l.b16 %v37
  %v378 = vunpack.c.h.b16 %v37
  %v379 = vunpack.c.l.b16 %v38
  %v380 = vunpack.c.h.b16 %v38
  %v381 = vunpack.c.l.b16 %v39
  %v382 = vunpack.c.h.b16 %v39
  %v383 = vunpack.c.l.b16 %v40
  %v384 = vunpack.c.h.b16 %v40
  %v385 = vunpack.c.l.b16 %v41
  %v386 = vunpack.c.h.b16 %v41
  %v387 = vunpack.c.l.b16 %v42
  %v388 = vunpack.c.h.b16 %v42
  %v389 = vunpack.c.l.b16 %v43
  %v390 = vunpack.c.h.b16 %v43
  %v391 = vunpack.c.l.b16 %v44
  %v392 = vunpack.c.h.b16 %v44
  %v393 = vunpack.c.l.b16 %v45
  %v394 = vunpack.c.h.b16 %v45
  %v395 = vunpack.c.l.b16 %v46
  %v396 = vunpack.c.h.b16 %v46
  %v397 = vunpack.c.l.b16 %v47
  %v398 = vunpack.c.h.b16 %v47
  %v399 = vunpack.c.l.b16 %v48
  %v400 = vunpack.c.h.b16 %v48
  %v401 = vpack.c.b16 %v353, %v337
  %v402 = vpack.c.b16 %v354, %v338
  %v403 = vpack.c.b16 %v355, %v339
  %v404 = vpack.c.b16 %v356, %v340
  %v405 = vpack.c.b16 %v357, %v341
  %v406 = vpack.c.b16 %v358, %v342
  %v407 = vpack.c.b16 %v359, %v343
  %v408 = vpack.c.b16 %v360, %v344
  %v409 = vpack.c.b16 %v361, %v345
  %v410 = vpack.c.b16 %v362, %v346
  %v411 = vpack.c.b16 %v363, %v347
  %v412 = vpack.c.b16 %v364, %v348
  %v413 = vpack.c.b16 %v365, %v349
  %v414 = vpack.c.b16 %v366, %v350
  %v415 = vpack.c.b16 %v367, %v351
  %v416 = vpack.c.b16 %v368, %v352
  %v417 = vpack.c.b16 %v385, %v369
  %v418 = vpack.c.b16 %v386, %v370
  %v419 = vpack.c.b16 %v387, %v371
  %v420 = vpack.c.b16 %v388, %v372
  %v421 = vpack.c.b16 %v389, %v373
  %v422 = vpack.c.b16 %v390, %v374
  %v423 = vpack.c.b16 %v391, %v375
  %v424 = vpack.c.b16 %v392, %v376
  %v425 = vpack.c.b16 %v393, %v377
  %v426 = vpack.c.b16 %v394, %v378
  %v427 = vpack.c.b16 %v395, %v379
  %v428 = vpack.c.b16 %v396, %v380
  %v429 = vpack.c.b16 %v397, %v381
  %v430 = vpack.c.b16 %v398, %v382
  %v431 = vpack.c.b16 %v399, %v383
  %v432 = vpack.c.b16 %v400, %v384
  %v721 = vunpack.c.l.b16 %v49
  %v722 = vunpack.c.h.b16 %v49
  %v723 = vunpack.c.l.b16 %v50
  %v724 = vunpack.c.h.b16 %v50
  %v725 = vunpack.c.l.b16 %v51
  %v726 = vunpack.c.h.b16 %v51
  %v727 = vunpack.c.l.b16 %v52
  %v728 = vunpack.c.h.b16 %v52
  %v729 = vunpack.c.l.b16 %v53
  %v730 = vunpack.c.h.b16 %v53
  %v731 = vunpack.c.l.b16 %v54
  %v732 = vunpack.c.h.b16 %v54
  %v733 = vunpack.c.l.b16 %v55
  %v734 = vunpack.c.h.b16 %v55
  %v735 = vunpack.c.l.b16 %v56
  %v736 = vunpack.c.h.b16 %v56
  %v737 = vunpack.c.l.b16 %v57
  %v738 = vunpack.c.h.b16 %v57
  %v739 = vunpack.c.l.b16 %v58
  %v740 = vunpack.c.h.b16 %v58
  %v741 = vunpack.c.l.b16 %v59
  %v742 = vunpack.c.h.b16 %v59
  %v743 = vunpack.c.l.b16 %v60
  %v744 = vunpack.c.h.b16 %v60
  %v745 = vunpack.c.l.b16 %v61
  %v746 = vunpack.c.h.b16 %v61
  %v747 = vunpack.c.l.b16 %v62
  %v748 = vunpack.c.h.b16 %v62
  %v749 = vunpack.c.l.b16 %v63
  %v750 = vunpack.c.h.b16 %v63
  %v751 = vunpack.c.l.b16 %v64
  %v752 = vunpack.c.h.b16 %v64
  %v753 = vunpack.c.l.b16 %v65
  %v754 = vunpack.c.h.b16 %v65
  %v755 = vunpack.c.l.b16 %v66
  %v756 = vunpack.c.h.b16 %v66
  %v757 = vunpack.c.l.b16 %v67
  %v758 = vunpack.c.h.b16 %v67
  %v759 = vunpack.c.l.b16 %v68
  %v760 = vunpack.c.h.b16 %v68
  %v761 = vunpack.c.l.b16 %v69
  %v762 = vunpack.c.h.b16 %v69
  %v763 = vunpack.c.l.b16 %v70
  %v764 = vunpack.c.h.b16 %v70
  %v765 = vunpack.c.l.b16 %v71
  %v766 = vunpack.c.h.b16 %v71
  %v767 = vunpack.c.l.b16 %v72
  %v768 = vunpack.c.h.b16 %v72
  %v769 = vunpack.c.l.b16 %v73
  %v770 = vunpack.c.h.b16 %v73
  %v771 = vunpack.c.l.b16 %v74
  %v772 = vunpack.c.h.b16 %v74
  %v773 = vunpack.c.l.b16 %v75
  %v774 = vunpack.c.h.b16 %v75
  %v775 = vunpack.c.l.b16 %v76
  %v776 = vunpack.c.h.b16 %v76
  %v777 = vunpack.c.l.b16 %v77
  %v778 = vunpack.c.h.b16 %v77
  %v779 = vunpack.c.l.b16 %v78
  %v780 = vunpack.c.h.b16 %v78
  %v781 = vunpack.c.l.b16 %v79
  %v782 = vunpack.c.h.b16 %v79
  %v783 = vunpack.c.l.b16 %v80
  %v784 = vunpack.c.h.b16 %v80
  %v785 = vunpack.c.l.b16 %v81
  %v786 = vunpack.c.h.b16 %v81
  %v787 = vunpack.c.l.b16 %v82
  %v788 = vunpack.c.h.b16 %v82
  %v789 = vunpack.c.l.b16 %v83
  %v790 = vunpack.c.h.b16 %v83
  %v791 = vunpack.c.l.b16 %v84
  %v792 = vunpack.c.h.b16 %v84
  %v793 = vunpack.c.l.b16 %v85
  %v794 = vunpack.c.h.b16 %v85
  %v795 = vunpack.c.l.b16 %v86
  %v796 = vunpack.c.h.b16 %v86
  %v797 = vunpack.c.l.b16 %v87
  %v798 = vunpack.c.h.b16 %v87
  %v799 = vunpack.c.l.b16 %v88
  %v800 = vunpack.c.h.b16 %v88
  %v801 = vunpack.c.l.b16 %v89
  %v802 = vunpack.c.h.b16 %v89
  %v803 = vunpack.c.l.b16 %v90
  %v804 = vunpack.c.h.b16 %v90
  %v805 = vunpack.c.l.b16 %v91
  %v806 = vunpack.c.h.b16 %v91
  %v807 = vunpack.c.l.b16 %v92
  %v808 = vunpack.c.h.b16 %v92
  %v809 = vunpack.c.l.b16 %v93
  %v810 = vunpack.c.h.b16 %v93
  %v811 = vunpack.c.l.b16 %v94
  %v812 = vunpack.c.h.b16 %v94
  %v813 = vunpack.c.l.b16 %v95
  %v814 = vunpack.c.h.b16 %v95
  %v815 = vunpack.c.l.b16 %v96
  %v816 = vunpack.c.h.b16 %v96
  %v817 = vunpack.c.l.b16 %v97
  %v818 = vunpack.c.h.b16 %v97
  %v819 = vunpack.c.l.b16 %v98
  %v820 = vunpack.c.h.b16 %v98
  %v821 = vunpack.c.l.b16 %v99
  %v822 = vunpack.c.h.b16 %v99
  %v823 = vunpack.c.l.b16 %v100
  %v824 = vunpack.c.h.b16 %v100
  %v825 = vunpack.c.l.b16 %v101
  %v826 = vunpack.c.h.b16 %v101
  %v827 = vunpack.c.l.b16 %v102
  %v828 = vunpack.c.h.b16 %v102
  %v829 = vunpack.c.l.b16 %v103
  %v830 = vunpack.c.h.b16 %v103
  %v831 = vunpack.c.l.b16 %v104
  %v832 = vunpack.c.h.b16 %v104
  %v833 = vunpack.c.l.b16 %v105
  %v834 = vunpack.c.h.b16 %v105
  %v835 = vunpack.c.l.b16 %v106
  %v836 = vunpack.c.h.b16 %v106
  %v837 = vunpack.c.l.b16 %v107
  %v838 = vunpack.c.h.b16 %v107
  %v839 = vunpack.c.l.b16 %v108
  %v840 = vunpack.c.h.b16 %v108
  %v841 = vunpack.c.l.b16 %v109
  %v842 = vunpack.c.h.b16 %v109
  %v843 = vunpack.c.l.b16 %v110
  %v844 = vunpack.c.h.b16 %v110
  %v845 = vunpack.c.l.b16 %v111
  %v846 = vunpack.c.h.b16 %v111
  %v847 = vunpack.c.l.b16 %v112
  %v848 = vunpack.c.h.b16 %v112
  %v849 = vunpack.c.l.b16 %v113
  %v850 = vunpack.c.h.b16 %v113
  %v851 = vunpack.c.l.b16 %v114
  %v852 = vunpack.c.h.b16 %v114
  %v853 = vunpack.c.l.b16 %v115
  %v854 = vunpack.c.h.b16 %v115
  %v855 = vunpack.c.l.b16 %v116
  %v856 = vunpack.c.h.b16 %v116
  %v857 = vunpack.c.l.b16 %v117
  %v858 = vunpack.c.h.b16 %v117
  %v859 = vunpack.c.l.b16 %v118
  %v860 = vunpack.c.h.b16 %v118
  %v861 = vunpack.c.l.b16 %v119
  %v862 = vunpack.c.h.b16 %v119
  %v863 = vunpack.c.l.b16 %v120
  %v864 = vunpack.c.h.b16 %v120
  %v865 = vunpack.c.l.b16 %v121
  %v866 = vunpack.c.h.b16 %v121
  %v867 = vunpack.c.l.b16 %v122
  %v868 = vunpack.c.h.b16 %v122
  %v869 = vunpack.c.l.b16 %v123
  %v870 = vunpack.c.h.b16 %v123
  %v871 = vunpack.c.l.b16 %v124
  %v872 = vunpack.c.h.b16 %v124
  %v873 = vunpack.c.l.b16 %v125
  %v874 = vunpack.c.h.b16 %v125
  %v875 = vunpack.c.l.b16 %v126
  %v876 = vunpack.c.h.b16 %v126
  %v877 = vunpack.c.l.b16 %v127
  %v878 = vunpack.c.h.b16 %v127
  %v879 = vunpack.c.l.b16 %v128
  %v880 = vunpack.c.h.b16 %v128
  %v881 = vunpack.c.l.b16 %v129
  %v882 = vunpack.c.h.b16 %v129
  %v883 = vunpack.c.l.b16 %v130
  %v884 = vunpack.c.h.b16 %v130
  %v885 = vunpack.c.l.b16 %v131
  %v886 = vunpack.c.h.b16 %v131
  %v887 = vunpack.c.l.b16 %v132
  %v888 = vunpack.c.h.b16 %v132
  %v889 = vunpack.c.l.b16 %v133
  %v890 = vunpack.c.h.b16 %v133
  %v891 = vunpack.c.l.b16 %v134
  %v892 = vunpack.c.h.b16 %v134
  %v893 = vunpack.c.l.b16 %v135
  %v894 = vunpack.c.h.b16 %v135
  %v895 = vunpack.c.l.b16 %v136
  %v896 = vunpack.c.h.b16 %v136
  %v897 = vunpack.c.l.b16 %v137
  %v898 = vunpack.c.h.b16 %v137
  %v899 = vunpack.c.l.b16 %v138
  %v900 = vunpack.c.h.b16 %v138
  %v901 = vunpack.c.l.b16 %v139
  %v902 = vunpack.c.h.b16 %v139
  %v903 = vunpack.c.l.b16 %v140
  %v904 = vunpack.c.h.b16 %v140
  %v905 = vunpack.c.l.b16 %v141
  %v906 = vunpack.c.h.b16 %v141
  %v907 = vunpack.c.l.b16 %v142
  %v908 = vunpack.c.h.b16 %v142
  %v909 = vunpack.c.l.b16 %v143
  %v910 = vunpack.c.h.b16 %v143
  %v911 = vunpack.c.l.b16 %v144
  %v912 = vunpack.c.h.b16 %v144
  %v913 = vunpack.c.l.b16 %v145
  %v914 = vunpack.c.h.b16 %v145
  %v915 = vunpack.c.l.b16 %v146
  %v916 = vunpack.c.h.b16 %v146
  %v917 = vunpack.c.l.b16 %v147
  %v918 = vunpack.c.h.b16 %v147
  %v919 = vunpack.c.l.b16 %v148
  %v920 = vunpack.c.h.b16 %v148
  %v921 = vunpack.c.l.b16 %v149
  %v922 = vunpack.c.h.b16 %v149
  %v923 = vunpack.c.l.b16 %v150
  %v924 = vunpack.c.h.b16 %v150
  %v925 = vunpack.c.l.b16 %v151
  %v926 = vunpack.c.h.b16 %v151
  %v927 = vunpack.c.l.b16 %v152
  %v928 = vunpack.c.h.b16 %v152
  %v929 = vunpack.c.l.b16 %v153
  %v930 = vunpack.c.h.b16 %v153
  %v931 = vunpack.c.l.b16 %v154
  %v932 = vunpack.c.h.b16 %v154
  %v933 = vunpack.c.l.b16 %v155
  %v934 = vunpack.c.h.b16 %v155
  %v935 = vunpack.c.l.b16 %v156
  %v936 = vunpack.c.h.b16 %v156
  %v937 = vunpack.c.l.b16 %v157
  %v938 = vunpack.c.h.b16 %v157
  %v939 = vunpack.c.l.b16 %v158
  %v940 = vunpack.c.h.b16 %v158
  %v941 = vunpack.c.l.b16 %v159
  %v942 = vunpack.c.h.b16 %v159
  %v943 = vunpack.c.l.b16 %v160
  %v944 = vunpack.c.h.b16 %v160
  %v945 = vunpack.c.l.b16 %v161
  %v946 = vunpack.c.h.b16 %v161
  %v947 = vunpack.c.l.b16 %v162
  %v948 = vunpack.c.h.b16 %v162
  %v949 = vunpack.c.l.b16 %v163
  %v950 = vunpack.c.h.b16 %v163
  %v951 = vunpack.c.l.b16 %v164
  %v952 = vunpack.c.h.b16 %v164
  %v953 = vunpack.c.l.b16 %v165
  %v954 = vunpack.c.h.b16 %v165
  %v955 = vunpack.c.l.b16 %v166
  %v956 = vunpack.c.h.b16 %v166
  %v957 = vunpack.c.l.b16 %v167
  %v958 = vunpack.c.h.b16 %v167
  %v959 = vunpack.c.l.b16 %v168
  %v960 = vunpack.c.h.b16 %v168
  %v961 = vunpack.c.l.b16 %v169
  %v962 = vunpack.c.h.b16 %v169
  %v963 = vunpack.c.l.b16 %v170
  %v964 = vunpack.c.h.b16 %v170
  %v965 = vunpack.c.l.b16 %v171
  %v966 = vunpack.c.h.b16 %v171
  %v967 = vunpack.c.l.b16 %v172
  %v968 = vunpack.c.h.b16 %v172
  %v969 = vunpack.c.l.b16 %v173
  %v970 = vunpack.c.h.b16 %v173
  %v971 = vunpack.c.l.b16 %v174
  %v972 = vunpack.c.h.b16 %v174
  %v973 = vunpack.c.l.b16 %v175
  %v974 = vunpack.c.h.b16 %v175
  %v975 = vunpack.c.l.b16 %v176
  %v976 = vunpack.c.h.b16 %v176
  %v977 = vunpack.c.l.b16 %v177
  %v978 = vunpack.c.h.b16 %v177
  %v979 = vunpack.c.l.b16 %v178
  %v980 = vunpack.c.h.b16 %v178
  %v981 = vunpack.c.l.b16 %v179
  %v982 = vunpack.c.h.b16 %v179
  %v983 = vunpack.c.l.b16 %v180
  %v984 = vunpack.c.h.b16 %v180
  %v985 = vunpack.c.l.b16 %v181
  %v986 = vunpack.c.h.b16 %v181
  %v987 = vunpack.c.l.b16 %v182
  %v988 = vunpack.c.h.b16 %v182
  %v989 = vunpack.c.l.b16 %v183
  %v990 = vunpack.c.h.b16 %v183
  %v991 = vunpack.c.l.b16 %v184
  %v992 = vunpack.c.h.b16 %v184
  %v993 = vunpack.c.l.b16 %v185
  %v994 = vunpack.c.h.b16 %v185
  %v995 = vunpack.c.l.b16 %v186
  %v996 = vunpack.c.h.b16 %v186
  %v997 = vunpack.c.l.b16 %v187
  %v998 = vunpack.c.h.b16 %v187
  %v999 = vunpack.c.l.b16 %v188
  %v1000 = vunpack.c.h.b16 %v188
  %v1001 = vunpack.c.l.b16 %v189
  %v1002 = vunpack.c.h.b16 %v189
  %v1003 = vunpack.c.l.b16 %v190
  %v1004 = vunpack.c.h.b16 %v190
  %v1005 = vunpack.c.l.b16 %v191
  %v1006 = vunpack.c.h.b16 %v191
  %v1007 = vunpack.c.l.b16 %v192
  %v1008 = vunpack.c.h.b16 %v192
  %v1009 = vunpack.c.l.b16 %v193
  %v1010 = vunpack.c.h.b16 %v193
  %v1011 = vunpack.c.l.b16 %v194
  %v1012 = vunpack.c.h.b16 %v194
  %v1013 = vunpack.c.l.b16 %v195
  %v1014 = vunpack.c.h.b16 %v195
  %v1015 = vunpack.c.l.b16 %v196
  %v1016 = vunpack.c.h.b16 %v196
  %v1017 = vunpack.c.l.b16 %v197
  %v1018 = vunpack.c.h.b16 %v197
  %v1019 = vunpack.c.l.b16 %v198
  %v1020 = vunpack.c.h.b16 %v198
  %v1021 = vunpack.c.l.b16 %v199
  %v1022 = vunpack.c.h.b16 %v199
  %v1023 = vunpack.c.l.b16 %v200
  %v1024 = vunpack.c.h.b16 %v200
  %v1025 = vunpack.c.l.b16 %v201
  %v1026 = vunpack.c.h.b16 %v201
  %v1027 = vunpack.c.l.b16 %v202
  %v1028 = vunpack.c.h.b16 %v202
  %v1029 = vunpack.c.l.b16 %v203
  %v1030 = vunpack.c.h.b16 %v203
  %v1031 = vunpack.c.l.b16 %v204
  %v1032 = vunpack.c.h.b16 %v204
  %v1033 = vunpack.c.l.b16 %v205
  %v1034 = vunpack.c.h.b16 %v205
  %v1035 = vunpack.c.l.b16 %v206
  %v1036 = vunpack.c.h.b16 %v206
  %v1037 = vunpack.c.l.b16 %v207
  %v1038 = vunpack.c.h.b16 %v207
  %v1039 = vunpack.c.l.b16 %v208
  %v1040 = vunpack.c.h.b16 %v208
  %v1041 = vunpack.c.l.b16 %v209
  %v1042 = vunpack.c.h.b16 %v209
  %v1043 = vunpack.c.l.b16 %v210
  %v1044 = vunpack.c.h.b16 %v210
  %v1045 = vunpack.c.l.b16 %v211
  %v1046 = vunpack.c.h.b16 %v211
  %v1047 = vunpack.c.l.b16 %v212
  %v1048 = vunpack.c.h.b16 %v212
  %v1049 = vunpack.c.l.b16 %v213
  %v1050 = vunpack.c.h.b16 %v213
  %v1051 = vunpack.c.l.b16 %v214
  %v1052 = vunpack.c.h.b16 %v214
  %v1053 = vunpack.c.l.b16 %v215
  %v1054 = vunpack.c.h.b16 %v215
  %v1055 = vunpack.c.l.b16 %v216
  %v1056 = vunpack.c.h.b16 %v216
  %v1057 = vunpack.c.l.b16 %v217
  %v1058 = vunpack.c.h.b16 %v217
  %v1059 = vunpack.c.l.b16 %v218
  %v1060 = vunpack.c.h.b16 %v218
  %v1061 = vunpack.c.l.b16 %v219
  %v1062 = vunpack.c.h.b16 %v219
  %v1063 = vunpack.c.l.b16 %v220
  %v1064 = vunpack.c.h.b16 %v220
  %v1065 = vunpack.c.l.b16 %v221
  %v1066 = vunpack.c.h.b16 %v221
  %v1067 = vunpack.c.l.b16 %v222
  %v1068 = vunpack.c.h.b16 %v222
  %v1069 = vunpack.c.l.b16 %v223
  %v1070 = vunpack.c.h.b16 %v223
  %v1071 = vunpack.c.l.b16 %v224
  %v1072 = vunpack.c.h.b16 %v224
  %v1073 = vunpack.c.l.b16 %v225
  %v1074 = vunpack.c.h.b16 %v225
  %v1075 = vunpack.c.l.b16 %v226
  %v1076 = vunpack.c.h.b16 %v226
  %v1077 = vunpack.c.l.b16 %v227
  %v1078 = vunpack.c.h.b16 %v227
  %v1079 = vunpack.c.l.b16 %v228
  %v1080 = vunpack.c.h.b16 %v228
  %v1081 = vunpack.c.l.b16 %v229
  %v1082 = vunpack.c.h.b16 %v229
  %v1083 = vunpack.c.l.b16 %v230
  %v1084 = vunpack.c.h.b16 %v230
  %v1085 = vunpack.c.l.b16 %v231
  %v1086 = vunpack.c.h.b16 %v231
  %v1087 = vunpack.c.l.b16 %v232
  %v1088 = vunpack.c.h.b16 %v232
  %v1089 = vunpack.c.l.b16 %v233
  %v1090 = vunpack.c.h.b16 %v233
  %v1091 = vunpack.c.l.b16 %v234
  %v1092 = vunpack.c.h.b16 %v234
  %v1093 = vunpack.c.l.b16 %v235
  %v1094 = vunpack.c.h.b16 %v235
  %v1095 = vunpack.c.l.b16 %v236
  %v1096 = vunpack.c.h.b16 %v236
  %v1097 = vunpack.c.l.b16 %v237
  %v1098 = vunpack.c.h.b16 %v237
  %v1099 = vunpack.c.l.b16 %v238
  %v1100 = vunpack.c.h.b16 %v238
  %v1101 = vunpack.c.l.b16 %v239
  %v1102 = vunpack.c.h.b16 %v239
  %v1103 = vunpack.c.l.b16 %v240
  %v1104 = vunpack.c.h.b16 %v240
  %v1105 = vunpack.c.l.b16 %v241
  %v1106 = vunpack.c.h.b16 %v241
  %v1107 = vunpack.c.l.b16 %v242
  %v1108 = vunpack.c.h.b16 %v242
  %v1109 = vunpack.c.l.b16 %v243
  %v1110 = vunpack.c.h.b16 %v243
  %v1111 = vunpack.c.l.b16 %v244
  %v1112 = vunpack.c.h.b16 %v244
  %v1113 = vunpack.c.l.b16 %v245
  %v1114 = vunpack.c.h.b16 %v245
  %v1115 = vunpack.c.l.b16 %v246
  %v1116 = vunpack.c.h.b16 %v246
  %v1117 = vunpack.c.l.b16 %v247
  %v1118 = vunpack.c.h.b16 %v247
  %v1119 = vunpack.c.l.b16 %v248
  %v1120 = vunpack.c.h.b16 %v248
  %v1121 = vunpack.c.l.b16 %v249
  %v1122 = vunpack.c.h.b16 %v249
  %v1123 = vunpack.c.l.b16 %v250
  %v1124 = vunpack.c.h.b16 %v250
  %v1125 = vunpack.c.l.b16 %v251
  %v1126 = vunpack.c.h.b16 %v251
  %v1127 = vunpack.c.l.b16 %v252
  %v1128 = vunpack.c.h.b16 %v252
  %v1129 = vunpack.c.l.b16 %v253
  %v1130 = vunpack.c.h.b16 %v253
  %v1131 = vunpack.c.l.b16 %v254
  %v1132 = vunpack.c.h.b16 %v254
  %v1133 = vunpack.c.l.b16 %v255
  %v1134 = vunpack.c.h.b16 %v255
  %v1135 = vunpack.c.l.b16 %v256
  %v1136 = vunpack.c.h.b16 %v256
  %v1137 = vunpack.c.l.b16 %v257
  %v1138 = vunpack.c.h.b16 %v257
  %v1139 = vunpack.c.l.b16 %v258
  %v1140 = vunpack.c.h.b16 %v258
  %v1141 = vunpack.c.l.b16 %v259
  %v1142 = vunpack.c.h.b16 %v259
  %v1143 = vunpack.c.l.b16 %v260
  %v1144 = vunpack.c.h.b16 %v260
  %v1145 = vunpack.c.l.b16 %v261
  %v1146 = vunpack.c.h.b16 %v261
  %v1147 = vunpack.c.l.b16 %v262
  %v1148 = vunpack.c.h.b16 %v262
  %v1149 = vunpack.c.l.b16 %v263
  %v1150 = vunpack.c.h.b16 %v263
  %v1151 = vunpack.c.l.b16 %v264
  %v1152 = vunpack.c.h.b16 %v264
  %v1153 = vunpack.c.l.b16 %v265
  %v1154 = vunpack.c.h.b16 %v265
  %v1155 = vunpack.c.l.b16 %v266
  %v1156 = vunpack.c.h.b16 %v266
  %v1157 = vunpack.c.l.b16 %v267
  %v1158 = vunpack.c.h.b16 %v267
  %v1159 = vunpack.c.l.b16 %v268
  %v1160 = vunpack.c.h.b16 %v268
  %v1161 = vunpack.c.l.b16 %v269
  %v1162 = vunpack.c.h.b16 %v269
  %v1163 = vunpack.c.l.b16 %v270
  %v1164 = vunpack.c.h.b16 %v270
  %v1165 = vunpack.c.l.b16 %v271
  %v1166 = vunpack.c.h.b16 %v271
  %v1167 = vunpack.c.l.b16 %v272
  %v1168 = vunpack.c.h.b16 %v272
  %v1169 = vunpack.c.l.b16 %v273
  %v1170 = vunpack.c.h.b16 %v273
  %v1171 = vunpack.c.l.b16 %v274
  %v1172 = vunpack.c.h.b16 %v274
  %v1173 = vunpack.c.l.b16 %v275
  %v1174 = vunpack.c.h.b16 %v275
  %v1175 = vunpack.c.l.b16 %v276
  %v1176 = vunpack.c.h.b16 %v276
  %v1177 = vunpack.c.l.b16 %v277
  %v1178 = vunpack.c.h.b16 %v277
  %v1179 = vunpack.c.l.b16 %v278
  %v1180 = vunpack.c.h.b16 %v278
  %v1181 = vunpack.c.l.b16 %v279
  %v1182 = vunpack.c.h.b16 %v279
  %v1183 = vunpack.c.l.b16 %v280
  %v1184 = vunpack.c.h.b16 %v280
  %v1185 = vunpack.c.l.b16 %v281
  %v1186 = vunpack.c.h.b16 %v281
  %v1187 = vunpack.c.l.b16 %v282
  %v1188 = vunpack.c.h.b16 %v282
  %v1189 = vunpack.c.l.b16 %v283
  %v1190 = vunpack.c.h.b16 %v283
  %v1191 = vunpack.c.l.b16 %v284
  %v1192 = vunpack.c.h.b16 %v284
  %v1193 = vunpack.c.l.b16 %v285
  %v1194 = vunpack.c.h.b16 %v285
  %v1195 = vunpack.c.l.b16 %v286
  %v1196 = vunpack.c.h.b16 %v286
  %v1197 = vunpack.c.l.b16 %v287
  %v1198 = vunpack.c.h.b16 %v287
  %v1199 = vunpack.c.l.b16 %v288
  %v1200 = vunpack.c.h.b16 %v288
  %v1201 = vunpack.c.l.b16 %v289
  %v1202 = vunpack.c.h.b16 %v289
  %v1203 = vunpack.c.l.b16 %v290
  %v1204 = vunpack.c.h.b16 %v290
  %v1205 = vunpack.c.l.b16 %v291
  %v1206 = vunpack.c.h.b16 %v291
  %v1207 = vunpack.c.l.b16 %v292
  %v1208 = vunpack.c.h.b16 %v292
  %v1209 = vunpack.c.l.b16 %v293
  %v1210 = vunpack.c.h.b16 %v293
  %v1211 = vunpack.c.l.b16 %v294
  %v1212 = vunpack.c.h.b16 %v294
  %v1213 = vunpack.c.l.b16 %v295
  %v1214 = vunpack.c.h.b16 %v295
  %v1215 = vunpack.c.l.b16 %v296
  %v1216 = vunpack.c.h.b16 %v296
  %v1217 = vunpack.c.l.b16 %v297
  %v1218 = vunpack.c.h.b16 %v297
  %v1219 = vunpack.c.l.b16 %v298
  %v1220 = vunpack.c.h.b16 %v298
  %v1221 = vunpack.c.l.b16 %v299
  %v1222 = vunpack.c.h.b16 %v299
  %v1223 = vunpack.c.l.b16 %v300
  %v1224 = vunpack.c.h.b16 %v300
  %v1225 = vunpack.c.l.b16 %v301
  %v1226 = vunpack.c.h.b16 %v301
  %v1227 = vunpack.c.l.b16 %v302
  %v1228 = vunpack.c.h.b16 %v302
  %v1229 = vunpack.c.l.b16 %v303
  %v1230 = vunpack.c.h.b16 %v303
  %v1231 = vunpack.c.l.b16 %v304
  %v1232 = vunpack.c.h.b16 %v304
  %v1233 = vpack.c.b16 %v723, %v721
  %v1234 = vpack.c.b16 %v724, %v722
  %v1235 = vpack.c.b16 %v727, %v725
  %v1236 = vpack.c.b16 %v728, %v726
  %v1237 = vpack.c.b16 %v731, %v729
  %v1238 = vpack.c.b16 %v732, %v730
  %v1239 = vpack.c.b16 %v735, %v733
  %v1240 = vpack.c.b16 %v736, %v734
  %v1241 = vpack.c.b16 %v739, %v737
  %v1242 = vpack.c.b16 %v740, %v738
  %v1243 = vpack.c.b16 %v743, %v741
  %v1244 = vpack.c.b16 %v744, %v742
  %v1245 = vpack.c.b16 %v747, %v745
  %v1246 = vpack.c.b16 %v748, %v746
  %v1247 = vpack.c.b16 %v751, %v749
  %v1248 = vpack.c.b16 %v752, %v750
  %v1249 = vpack.c.b16 %v755, %v753
  %v1250 = vpack.c.b16 %v756, %v754
  %v1251 = vpack.c.b16 %v759, %v757
  %v1252 = vpack.c.b16 %v760, %v758
  %v1253 = vpack.c.b16 %v763, %v761
  %v1254 = vpack.c.b16 %v764, %v762
  %v1255 = vpack.c.b16 %v767, %v765
  %v1256 = vpack.c.b16 %v768, %v766
  %v1257 = vpack.c.b16 %v771, %v769
  %v1258 = vpack.c.b16 %v772, %v770
  %v1259 = vpack.c.b16 %v775, %v773
  %v1260 = vpack.c.b16 %v776, %v774
  %v1261 = vpack.c.b16 %v779, %v777
  %v1262 = vpack.c.b16 %v780, %v778
  %v1263 = vpack.c.b16 %v783, %v781
  %v1264 = vpack.c.b16 %v784, %v782
  %v1265 = vpack.c.b16 %v787, %v785
  %v1266 = vpack.c.b16 %v788, %v786
  %v1267 = vpack.c.b16 %v791, %v789
  %v1268 = vpack.c.b16 %v792, %v790
  %v1269 = vpack.c.b16 %v795, %v793
  %v1270 = vpack.c.b16 %v796, %v794
  %v1271 = vpack.c.b16 %v799, %v797
  %v1272 = vpack.c.b16 %v800, %v798
  %v1273 = vpack.c.b16 %v803, %v801
  %v1274 = vpack.c.b16 %v804, %v802
  %v1275 = vpack.c.b16 %v807, %v805
  %v1276 = vpack.c.b16 %v808, %v806
  %v1277 = vpack.c.b16 %v811, %v809
  %v1278 = vpack.c.b16 %v812, %v810
  %v1279 = vpack.c.b16 %v815, %v813
  %v1280 = vpack.c.b16 %v816, %v814
  %v1281 = vpack.c.b16 %v819, %v817
  %v1282 = vpack.c.b16 %v820, %v818
  %v1283 = vpack.c.b16 %v823, %v821
  %v1284 = vpack.c.b16 %v824, %v822
  %v1285 = vpack.c.b16 %v827, %v825
  %v1286 = vpack.c.b16 %v828, %v826
  %v1287 = vpack.c.b16 %v831, %v829
  %v1288 = vpack.c.b16 %v832, %v830
  %v1289 = vpack.c.b16 %v835, %v833
  %v1290 = vpack.c.b16 %v836, %v834
  %v1291 = vpack.c.b16 %v839, %v837
  %v1292 = vpack.c.b16 %v840, %v838
  %v1293 = vpack.c.b16 %v843, %v841
  %v1294 = vpack.c.b16 %v844, %v842
  %v1295 = vpack.c.b16 %v847, %v845
  %v1296 = vpack.c.b16 %v848, %v846
  %v1297 = vpack.c.b16 %v851, %v849
  %v1298 = vpack.c.b16 %v852, %v850
  %v1299 = vpack.c.b16 %v855, %v853
  %v1300 = vpack.c.b16 %v856, %v854
  %v1301 = vpack.c.b16 %v859, %v857
  %v1302 = vpack.c.b16 %v860, %v858
  %v1303 = vpack.c.b16 %v863, %v861
  %v1304 = vpack.c.b16 %v864, %v862
  %v1305 = vpack.c.b16 %v867, %v865
  %v1306 = vpack.c.b16 %v868, %v866
  %v1307 = vpack.c.b16 %v871, %v869
  %v1308 = vpack.c.b16 %v872, %v870
  %v1309 = vpack.c.b16 %v875, %v873
  %v1310 = vpack.c.b16 %v876, %v874
  %v1311 = vpack.c.b16 %v879, %v877
  %v1312 = vpack.c.b16 %v880, %v878
  %v1313 = vpack.c.b16 %v883, %v881
  %v1314 = vpack.c.b16 %v884, %v882
  %v1315 = vpack.c.b16 %v887, %v885
  %v1316 = vpack.c.b16 %v888, %v886
  %v1317 = vpack.c.b16 %v891, %v889
  %v1318 = vpack.c.b16 %v892, %v890
  %v1319 = vpack.c.b16 %v895, %v893
  %v1320 = vpack.c.b16 %v896, %v894
  %v1321 = vpack.c.b16 %v899, %v897
  %v1322 = vpack.c.b16 %v900, %v898
  %v1323 = vpack.c.b16 %v903, %v901
  %v1324 = vpack.c.b16 %v904, %v902
  %v1325 = vpack.c.b16 %v907, %v905
  %v1326 = vpack.c.b16 %v908, %v906
  %v1327 = vpack.c.b16 %v911, %v909
  %v1328 = vpack.c.b16 %v912, %v910
  %v1329 = vpack.c.b16 %v915, %v913
  %v1330 = vpack.c.b16 %v916, %v914
  %v1331 = vpack.c.b16 %v919, %v917
  %v1332 = vpack.c.b16 %v920, %v918
  %v1333 = vpack.c.b16 %v923, %v921
  %v1334 = vpack.c.b16 %v924, %v922
  %v1335 = vpack.c.b16 %v927, %v925
  %v1336 = vpack.c.b16 %v928, %v926
  %v1337 = vpack.c.b16 %v931, %v929
  %v1338 = vpack.c.b16 %v932, %v930
  %v1339 = vpack.c.b16 %v935, %v933
  %v1340 = vpack.c.b16 %v936, %v934
  %v1341 = vpack.c.b16 %v939, %v937
  %v1342 = vpack.c.b16 %v940, %v938
  %v1343 = vpack.c.b16 %v943, %v941
  %v1344 = vpack.c.b16 %v944, %v942
  %v1345 = vpack.c.b16 %v947, %v945
  %v1346 = vpack.c.b16 %v948, %v946
  %v1347 = vpack.c.b16 %v951, %v949
  %v1348 = vpack.c.b16 %v952, %v950
  %v1349 = vpack.c.b16 %v955, %v953
  %v1350 = vpack.c.b16 %v956, %v954
  %v1351 = vpack.c.b16 %v959, %v957
  %v1352 = vpack.c.b16 %v960, %v958
  %v1353 = vpack.c.b16 %v963, %v961
  %v1354 = vpack.c.b16 %v964, %v962
  %v1355 = vpack.c.b16 %v967, %v965
  %v1356 = vpack.c.b16 %v968, %v966
  %v1357 = vpack.c.b16 %v971, %v969
  %v1358 = vpack.c.b16 %v972, %v970
  %v1359 = vpack.c.b16 %v975, %v973
  %v1360 = vpack.c.b16 %v976, %v974
  %v1361 = vpack.c.b16 %v979, %v977
  %v1362 = vpack.c.b16 %v980, %v978
  %v1363 = vpack.c.b16 %v983, %v981
  %v1364 = vpack.c.b16 %v984, %v982
  %v1365 = vpack.c.b16 %v987, %v985
  %v1366 = vpack.c.b16 %v988, %v986
  %v1367 = vpack.c.b16 %v991, %v989
  %v1368 = vpack.c.b16 %v992, %v990
  %v1369 = vpack.c.b16 %v995, %v993
  %v1370 = vpack.c.b16 %v996, %v994
  %v1371 = vpack.c.b16 %v999, %v997
  %v1372 = vpack.c.b16 %v1000, %v998
  %v1373 = vpack.c.b16 %v1003, %v1001
  %v1374 = vpack.c.b16 %v1004, %v1002
  %v1375 = vpack.c.b16 %v1007, %v1005
  %v1376 = vpack.c.b16 %v1008, %v1006
  %v1377 = vpack.c.b16 %v1011, %v1009
  %v1378 = vpack.c.b16 %v1012, %v1010
  %v1379 = vpack.c.b16 %v1015, %v1013
  %v1380 = vpack.c.b16 %v1016, %v1014
  %v1381 = vpack.c.b16 %v1019, %v1017
  %v1382 = vpack.c.b16 %v1020, %v1018
  %v1383 = vpack.c.b16 %v1023, %v1021
  %v1384 = vpack.c.b16 %v1024, %v1022
  %v1385 = vpack.c.b16 %v1027, %v1025
  %v1386 = vpack.c.b16 %v1028, %v1026
  %v1387 = vpack.c.b16 %v1031, %v1029
  %v1388 = vpack.c.b16 %v1032, %v1030
  %v1389 = vpack.c.b16 %v1035, %v1033
  %v1390 = vpack.c.b16 %v1036, %v1034
  %v1391 = vpack.c.b16 %v1039, %v1037
  %v1392 = vpack.c.b16 %v1040, %v1038
  %v1393 = vpack.c.b16 %v1043, %v1041
  %v1394 = vpack.c.b16 %v1044, %v1042
  %v1395 = vpack.c.b16 %v1047, %v1045
  %v1396 = vpack.c.b16 %v1048, %v1046
  %v1397 = vpack.c.b16 %v1051, %v1049
  %v1398 = vpack.c.b16 %v1052, %v1050
  %v1399 = vpack.c.b16 %v1055, %v1053
  %v1400 = vpack.c.b16 %v1056, %v1054
  %v1401 = vpack.c.b16 %v1059, %v1057
  %v1402 = vpack.c.b16 %v1060, %v1058
  %v1403 = vpack.c.b16 %v1063, %v1061
  %v1404 = vpack.c.b16 %v1064, %v1062
  %v1405 = vpack.c.b16 %v1067, %v1065
  %v1406 = vpack.c.b16 %v1068, %v1066
  %v1407 = vpack.c.b16 %v1071, %v1069
  %v1408 = vpack.c.b16 %v1072, %v1070
  %v1409 = vpack.c.b16 %v1075, %v1073
  %v1410 = vpack.c.b16 %v1076, %v1074
  %v1411 = vpack.c.b16 %v1079, %v1077
  %v1412 = vpack.c.b16 %v1080, %v1078
  %v1413 = vpack.c.b16 %v1083, %v1081
  %v1414 = vpack.c.b16 %v1084, %v1082
  %v1415 = vpack.c.b16 %v1087, %v1085
  %v1416 = vpack.c.b16 %v1088, %v1086
  %v1417 = vpack.c.b16 %v1091, %v1089
  %v1418 = vpack.c.b16 %v1092, %v1090
  %v1419 = vpack.c.b16 %v1095, %v1093
  %v1420 = vpack.c.b16 %v1096, %v1094
  %v1421 = vpack.c.b16 %v1099, %v1097
  %v1422 = vpack.c.b16 %v1100, %v1098
  %v1423 = vpack.c.b16 %v1103, %v1101
  %v1424 = vpack.c.b16 %v1104, %v1102
  %v1425 = vpack.c.b16 %v1107, %v1105
  %v1426 = vpack.c.b16 %v1108, %v1106
  %v1427 = vpack.c.b16 %v1111, %v1109
  %v1428 = vpack.c.b16 %v1112, %v1110
  %v1429 = vpack.c.b16 %v1115, %v1113
  %v1430 = vpack.c.b16 %v1116, %v1114
  %v1431 = vpack.c.b16 %v1119, %v1117
  %v1432 = vpack.c.b16 %v1120, %v1118
  %v1433 = vpack.c.b16 %v1123, %v1121
  %v1434 = vpack.c.b16 %v1124, %v1122
  %v1435 = vpack.c.b16 %v1127, %v1125
  %v1436 = vpack.c.b16 %v1128, %v1126
  %v1437 = vpack.c.b16 %v1131, %v1129
  %v1438 = vpack.c.b16 %v1132, %v1130
  %v1439 = vpack.c.b16 %v1135, %v1133
  %v1440 = vpack.c.b16 %v1136, %v1134
  %v1441 = vpack.c.b16 %v1139, %v1137
  %v1442 = vpack.c.b16 %v1140, %v1138
  %v1443 = vpack.c.b16 %v1143, %v1141
  %v1444 = vpack.c.b16 %v1144, %v1142
  %v1445 = vpack.c.b16 %v1147, %v1145
  %v1446 = vpack.c.b16 %v1148, %v1146
  %v1447 = vpack.c.b16 %v1151, %v1149
  %v1448 = vpack.c.b16 %v1152, %v1150
  %v1449 = vpack.c.b16 %v1155, %v1153
  %v1450 = vpack.c.b16 %v1156, %v1154
  %v1451 = vpack.c.b16 %v1159, %v1157
  %v1452 = vpack.c.b16 %v1160, %v1158
  %v1453 = vpack.c.b16 %v1163, %v1161
  %v1454 = vpack.c.b16 %v1164, %v1162
  %v1455 = vpack.c.b16 %v1167, %v1165
  %v1456 = vpack.c.b16 %v1168, %v1166
  %v1457 = vpack.c.b16 %v1171, %v1169
  %v1458 = vpack.c.b16 %v1172, %v1170
  %v1459 = vpack.c.b16 %v1175, %v1173
  %v1460 = vpack.c.b16 %v1176, %v1174
  %v1461 = vpack.c.b16 %v1179, %v1177
  %v1462 = vpack.c.b16 %v1180, %v1178
  %v1463 = vpack.c.b16 %v1183, %v1181
  %v1464 = vpack.c.b16 %v1184, %v1182
  %v1465 = vpack.c.b16 %v1187, %v1185
  %v1466 = vpack.c.b16 %v1188, %v1186
  %v1467 = vpack.c.b16 %v1191, %v1189
  %v1468 = vpack.c.b16 %v1192, %v1190
  %v1469 = vpack.c.b16 %v1195, %v1193
  %v1470 = vpack.c.b16 %v1196, %v1194
  %v1471 = vpack.c.b16 %v1199, %v1197
  %v1472 = vpack.c.b16 %v1200, %v1198
  %v1473 = vpack.c.b16 %v1203, %v1201
  %v1474 = vpack.c.b16 %v1204, %v1202
  %v1475 = vpack.c.b16 %v1207, %v1205
  %v1476 = vpack.c.b16 %v1208, %v1206
  %v1477 = vpack.c.b16 %v1211, %v1209
  %v1478 = vpack.c.b16 %v1212, %v1210
  %v1479 = vpack.c.b16 %v1215, %v1213
  %v1480 = vpack.c.b16 %v1216, %v1214
  %v1481 = vpack.c.b16 %v1219, %v1217
  %v1482 = vpack.c.b16 %v1220, %v1218
  %v1483 = vpack.c.b16 %v1223, %v1221
  %v1484 = vpack.c.b16 %v1224, %v1222
  %v1485 = vpack.c.b16 %v1227, %v1225
  %v1486 = vpack.c.b16 %v1228, %v1226
  %v1487 = vpack.c.b16 %v1231, %v1229
  %v1488 = vpack.c.b16 %v1232, %v1230
  %1745 = vmatpush.bf16.msra.mxu0 %v1247
  %1746 = vmatpush.bf16.msra.mxu0 %v1245
  %1747 = vmatpush.bf16.msra.mxu0 %v1243
  %1748 = vmatpush.bf16.msra.mxu0 %v1241
  %1749 = vmatpush.bf16.msra.mxu0 %v1239
  %1750 = vmatpush.bf16.msra.mxu0 %v1237
  %1751 = vmatpush.bf16.msra.mxu0 %v1235
  %1752 = vmatpush.bf16.msra.mxu0 %v1233
  %1753 = vmatmul.bf16.gmra.mxu0 %v401
  %v1754 = vpop.f32.mrf.mxu0
  %v1755 = vadd.f32 0.0, %v1754
  %v1756 = vpop.f32.mrf.mxu0
  %v1757 = vadd.f32 0.0, %v1756
  %1758 = vmatmul.bf16.gmra.mxu0 %v417
  %v1759 = vpop.f32.mrf.mxu0
  %v1760 = vadd.f32 0.0, %v1759
  %v1761 = vpop.f32.mrf.mxu0
  %v1762 = vadd.f32 0.0, %v1761
  %1763 = vdwg.mxu0
  %1764 = vmatpush.bf16.msra.mxu0 %v1263
  %1765 = vmatpush.bf16.msra.mxu0 %v1261
  %1766 = vmatpush.bf16.msra.mxu0 %v1259
  %1767 = vmatpush.bf16.msra.mxu0 %v1257
  %1768 = vmatpush.bf16.msra.mxu0 %v1255
  %1769 = vmatpush.bf16.msra.mxu0 %v1253
  %1770 = vmatpush.bf16.msra.mxu0 %v1251
  %1771 = vmatpush.bf16.msra.mxu0 %v1249
  %1772 = vmatmul.bf16.gmra.mxu0 %v402
  %v1773 = vpop.f32.mrf.mxu0
  %v1774 = vadd.f32 %v1755, %v1773
  %v1775 = vpop.f32.mrf.mxu0
  %v1776 = vadd.f32 %v1757, %v1775
  %1777 = vmatmul.bf16.gmra.mxu0 %v418
  %v1778 = vpop.f32.mrf.mxu0
  %v1779 = vadd.f32 %v1760, %v1778
  %v1780 = vpop.f32.mrf.mxu0
  %v1781 = vadd.f32 %v1762, %v1780
  %1782 = vdwg.mxu0
  %1783 = vmatpush.bf16.msra.mxu0 %v1279
  %1784 = vmatpush.bf16.msra.mxu0 %v1277
  %1785 = vmatpush.bf16.msra.mxu0 %v1275
  %1786 = vmatpush.bf16.msra.mxu0 %v1273
  %1787 = vmatpush.bf16.msra.mxu0 %v1271
  %1788 = vmatpush.bf16.msra.mxu0 %v1269
  %1789 = vmatpush.bf16.msra.mxu0 %v1267
  %1790 = vmatpush.bf16.msra.mxu0 %v1265
  %1791 = vmatmul.bf16.gmra.mxu0 %v403
  %v1792 = vpop.f32.mrf.mxu0
  %v1793 = vadd.f32 %v1774, %v1792
  %v1794 = vpop.f32.mrf.mxu0
  %v1795 = vadd.f32 %v1776, %v1794
  %1796 = vmatmul.bf16.gmra.mxu0 %v419
  %v1797 = vpop.f32.mrf.mxu0
  %v1798 = vadd.f32 %v1779, %v1797
  %v1799 = vpop.f32.mrf.mxu0
  %v1800 = vadd.f32 %v1781, %v1799
  %1801 = vdwg.mxu0
  %1802 = vmatpush.bf16.msra.mxu0 %v1295
  %1803 = vmatpush.bf16.msra.mxu0 %v1293
  %1804 = vmatpush.bf16.msra.mxu0 %v1291
  %1805 = vmatpush.bf16.msra.mxu0 %v1289
  %1806 = vmatpush.bf16.msra.mxu0 %v1287
  %1807 = vmatpush.bf16.msra.mxu0 %v1285
  %1808 = vmatpush.bf16.msra.mxu0 %v1283
  %1809 = vmatpush.bf16.msra.mxu0 %v1281
  %1810 = vmatmul.bf16.gmra.mxu0 %v404
  %v1811 = vpop.f32.mrf.mxu0
  %v1812 = vadd.f32 %v1793, %v1811
  %v1813 = vpop.f32.mrf.mxu0
  %v1814 = vadd.f32 %v1795, %v1813
  %1815 = vmatmul.bf16.gmra.mxu0 %v420
  %v1816 = vpop.f32.mrf.mxu0
  %v1817 = vadd.f32 %v1798, %v1816
  %v1818 = vpop.f32.mrf.mxu0
  %v1819 = vadd.f32 %v1800, %v1818
  %1820 = vdwg.mxu0
  %1821 = vmatpush.bf16.msra.mxu0 %v1311
  %1822 = vmatpush.bf16.msra.mxu0 %v1309
  %1823 = vmatpush.bf16.msra.mxu0 %v1307
  %1824 = vmatpush.bf16.msra.mxu0 %v1305
  %1825 = vmatpush.bf16.msra.mxu0 %v1303
  %1826 = vmatpush.bf16.msra.mxu0 %v1301
  %1827 = vmatpush.bf16.msra.mxu0 %v1299
  %1828 = vmatpush.bf16.msra.mxu0 %v1297
  %1829 = vmatmul.bf16.gmra.mxu0 %v405
  %v1830 = vpop.f32.mrf.mxu0
  %v1831 = vadd.f32 %v1812, %v1830
  %v1832 = vpop.f32.mrf.mxu0
  %v1833 = vadd.f32 %v1814, %v1832
  %1834 = vmatmul.bf16.gmra.mxu0 %v421
  %v1835 = vpop.f32.mrf.mxu0
  %v1836 = vadd.f32 %v1817, %v1835
  %v1837 = vpop.f32.mrf.mxu0
  %v1838 = vadd.f32 %v1819, %v1837
  %1839 = vdwg.mxu0
  %1840 = vmatpush.bf16.msra.mxu0 %v1327
  %1841 = vmatpush.bf16.msra.mxu0 %v1325
  %1842 = vmatpush.bf16.msra.mxu0 %v1323
  %1843 = vmatpush.bf16.msra.mxu0 %v1321
  %1844 = vmatpush.bf16.msra.mxu0 %v1319
  %1845 = vmatpush.bf16.msra.mxu0 %v1317
  %1846 = vmatpush.bf16.msra.mxu0 %v1315
  %1847 = vmatpush.bf16.msra.mxu0 %v1313
  %1848 = vmatmul.bf16.gmra.mxu0 %v406
  %v1849 = vpop.f32.mrf.mxu0
  %v1850 = vadd.f32 %v1831, %v1849
  %v1851 = vpop.f32.mrf.mxu0
  %v1852 = vadd.f32 %v1833, %v1851
  %1853 = vmatmul.bf16.gmra.mxu0 %v422
  %v1854 = vpop.f32.mrf.mxu0
  %v1855 = vadd.f32 %v1836, %v1854
  %v1856 = vpop.f32.mrf.mxu0
  %v1857 = vadd.f32 %v1838, %v1856
  %1858 = vdwg.mxu0
  %1859 = vmatpush.bf16.msra.mxu0 %v1343
  %1860 = vmatpush.bf16.msra.mxu0 %v1341
  %1861 = vmatpush.bf16.msra.mxu0 %v1339
  %1862 = vmatpush.bf16.msra.mxu0 %v1337
  %1863 = vmatpush.bf16.msra.mxu0 %v1335
  %1864 = vmatpush.bf16.msra.mxu0 %v1333
  %1865 = vmatpush.bf16.msra.mxu0 %v1331
  %1866 = vmatpush.bf16.msra.mxu0 %v1329
  %1867 = vmatmul.bf16.gmra.mxu0 %v407
  %v1868 = vpop.f32.mrf.mxu0
  %v1869 = vadd.f32 %v1850, %v1868
  %v1870 = vpop.f32.mrf.mxu0
  %v1871 = vadd.f32 %v1852, %v1870
  %1872 = vmatmul.bf16.gmra.mxu0 %v423
  %v1873 = vpop.f32.mrf.mxu0
  %v1874 = vadd.f32 %v1855, %v1873
  %v1875 = vpop.f32.mrf.mxu0
  %v1876 = vadd.f32 %v1857, %v1875
  %1877 = vdwg.mxu0
  %1878 = vmatpush.bf16.msra.mxu0 %v1359
  %1879 = vmatpush.bf16.msra.mxu0 %v1357
  %1880 = vmatpush.bf16.msra.mxu0 %v1355
  %1881 = vmatpush.bf16.msra.mxu0 %v1353
  %1882 = vmatpush.bf16.msra.mxu0 %v1351
  %1883 = vmatpush.bf16.msra.mxu0 %v1349
  %1884 = vmatpush.bf16.msra.mxu0 %v1347
  %1885 = vmatpush.bf16.msra.mxu0 %v1345
  %1886 = vmatmul.bf16.gmra.mxu0 %v408
  %v1887 = vpop.f32.mrf.mxu0
  %v1888 = vadd.f32 %v1869, %v1887
  %v1889 = vpop.f32.mrf.mxu0
  %v1890 = vadd.f32 %v1871, %v1889
  %1891 = vmatmul.bf16.gmra.mxu0 %v424
  %v1892 = vpop.f32.mrf.mxu0
  %v1893 = vadd.f32 %v1874, %v1892
  %v1894 = vpop.f32.mrf.mxu0
  %v1895 = vadd.f32 %v1876, %v1894
  %1896 = vdwg.mxu0
  %1897 = vmatpush.bf16.msra.mxu0 %v1375
  %1898 = vmatpush.bf16.msra.mxu0 %v1373
  %1899 = vmatpush.bf16.msra.mxu0 %v1371
  %1900 = vmatpush.bf16.msra.mxu0 %v1369
  %1901 = vmatpush.bf16.msra.mxu0 %v1367
  %1902 = vmatpush.bf16.msra.mxu0 %v1365
  %1903 = vmatpush.bf16.msra.mxu0 %v1363
  %1904 = vmatpush.bf16.msra.mxu0 %v1361
  %1905 = vmatmul.bf16.gmra.mxu0 %v409
  %v1906 = vpop.f32.mrf.mxu0
  %v1907 = vadd.f32 %v1888, %v1906
  %v1908 = vpop.f32.mrf.mxu0
  %v1909 = vadd.f32 %v1890, %v1908
  %1910 = vmatmul.bf16.gmra.mxu0 %v425
  %v1911 = vpop.f32.mrf.mxu0
  %v1912 = vadd.f32 %v1893, %v1911
  %v1913 = vpop.f32.mrf.mxu0
  %v1914 = vadd.f32 %v1895, %v1913
  %1915 = vdwg.mxu0
  %1916 = vmatpush.bf16.msra.mxu0 %v1391
  %1917 = vmatpush.bf16.msra.mxu0 %v1389
  %1918 = vmatpush.bf16.msra.mxu0 %v1387
  %1919 = vmatpush.bf16.msra.mxu0 %v1385
  %1920 = vmatpush.bf16.msra.mxu0 %v1383
  %1921 = vmatpush.bf16.msra.mxu0 %v1381
  %1922 = vmatpush.bf16.msra.mxu0 %v1379
  %1923 = vmatpush.bf16.msra.mxu0 %v1377
  %1924 = vmatmul.bf16.gmra.mxu0 %v410
  %v1925 = vpop.f32.mrf.mxu0
  %v1926 = vadd.f32 %v1907, %v1925
  %v1927 = vpop.f32.mrf.mxu0
  %v1928 = vadd.f32 %v1909, %v1927
  %1929 = vmatmul.bf16.gmra.mxu0 %v426
  %v1930 = vpop.f32.mrf.mxu0
  %v1931 = vadd.f32 %v1912, %v1930
  %v1932 = vpop.f32.mrf.mxu0
  %v1933 = vadd.f32 %v1914, %v1932
  %1934 = vdwg.mxu0
  %1935 = vmatpush.bf16.msra.mxu0 %v1407
  %1936 = vmatpush.bf16.msra.mxu0 %v1405
  %1937 = vmatpush.bf16.msra.mxu0 %v1403
  %1938 = vmatpush.bf16.msra.mxu0 %v1401
  %1939 = vmatpush.bf16.msra.mxu0 %v1399
  %1940 = vmatpush.bf16.msra.mxu0 %v1397
  %1941 = vmatpush.bf16.msra.mxu0 %v1395
  %1942 = vmatpush.bf16.msra.mxu0 %v1393
  %1943 = vmatmul.bf16.gmra.mxu0 %v411
  %v1944 = vpop.f32.mrf.mxu0
  %v1945 = vadd.f32 %v1926, %v1944
  %v1946 = vpop.f32.mrf.mxu0
  %v1947 = vadd.f32 %v1928, %v1946
  %1948 = vmatmul.bf16.gmra.mxu0 %v427
  %v1949 = vpop.f32.mrf.mxu0
  %v1950 = vadd.f32 %v1931, %v1949
  %v1951 = vpop.f32.mrf.mxu0
  %v1952 = vadd.f32 %v1933, %v1951
  %1953 = vdwg.mxu0
  %1954 = vmatpush.bf16.msra.mxu0 %v1423
  %1955 = vmatpush.bf16.msra.mxu0 %v1421
  %1956 = vmatpush.bf16.msra.mxu0 %v1419
  %1957 = vmatpush.bf16.msra.mxu0 %v1417
  %1958 = vmatpush.bf16.msra.mxu0 %v1415
  %1959 = vmatpush.bf16.msra.mxu0 %v1413
  %1960 = vmatpush.bf16.msra.mxu0 %v1411
  %1961 = vmatpush.bf16.msra.mxu0 %v1409
  %1962 = vmatmul.bf16.gmra.mxu0 %v412
  %v1963 = vpop.f32.mrf.mxu0
  %v1964 = vadd.f32 %v1945, %v1963
  %v1965 = vpop.f32.mrf.mxu0
  %v1966 = vadd.f32 %v1947, %v1965
  %1967 = vmatmul.bf16.gmra.mxu0 %v428
  %v1968 = vpop.f32.mrf.mxu0
  %v1969 = vadd.f32 %v1950, %v1968
  %v1970 = vpop.f32.mrf.mxu0
  %v1971 = vadd.f32 %v1952, %v1970
  %1972 = vdwg.mxu0
  %1973 = vmatpush.bf16.msra.mxu0 %v1439
  %1974 = vmatpush.bf16.msra.mxu0 %v1437
  %1975 = vmatpush.bf16.msra.mxu0 %v1435
  %1976 = vmatpush.bf16.msra.mxu0 %v1433
  %1977 = vmatpush.bf16.msra.mxu0 %v1431
  %1978 = vmatpush.bf16.msra.mxu0 %v1429
  %1979 = vmatpush.bf16.msra.mxu0 %v1427
  %1980 = vmatpush.bf16.msra.mxu0 %v1425
  %1981 = vmatmul.bf16.gmra.mxu0 %v413
  %v1982 = vpop.f32.mrf.mxu0
  %v1983 = vadd.f32 %v1964, %v1982
  %v1984 = vpop.f32.mrf.mxu0
  %v1985 = vadd.f32 %v1966, %v1984
  %1986 = vmatmul.bf16.gmra.mxu0 %v429
  %v1987 = vpop.f32.mrf.mxu0
  %v1988 = vadd.f32 %v1969, %v1987
  %v1989 = vpop.f32.mrf.mxu0
  %v1990 = vadd.f32 %v1971, %v1989
  %1991 = vdwg.mxu0
  %1992 = vmatpush.bf16.msra.mxu0 %v1455
  %1993 = vmatpush.bf16.msra.mxu0 %v1453
  %1994 = vmatpush.bf16.msra.mxu0 %v1451
  %1995 = vmatpush.bf16.msra.mxu0 %v1449
  %1996 = vmatpush.bf16.msra.mxu0 %v1447
  %1997 = vmatpush.bf16.msra.mxu0 %v1445
  %1998 = vmatpush.bf16.msra.mxu0 %v1443
  %1999 = vmatpush.bf16.msra.mxu0 %v1441
  %2000 = vmatmul.bf16.gmra.mxu0 %v414
  %v2001 = vpop.f32.mrf.mxu0
  %v2002 = vadd.f32 %v1983, %v2001
  %v2003 = vpop.f32.mrf.mxu0
  %v2004 = vadd.f32 %v1985, %v2003
  %2005 = vmatmul.bf16.gmra.mxu0 %v430
  %v2006 = vpop.f32.mrf.mxu0
  %v2007 = vadd.f32 %v1988, %v2006
  %v2008 = vpop.f32.mrf.mxu0
  %v2009 = vadd.f32 %v1990, %v2008
  %2010 = vdwg.mxu0
  %2011 = vmatpush.bf16.msra.mxu0 %v1471
  %2012 = vmatpush.bf16.msra.mxu0 %v1469
  %2013 = vmatpush.bf16.msra.mxu0 %v1467
  %2014 = vmatpush.bf16.msra.mxu0 %v1465
  %2015 = vmatpush.bf16.msra.mxu0 %v1463
  %2016 = vmatpush.bf16.msra.mxu0 %v1461
  %2017 = vmatpush.bf16.msra.mxu0 %v1459
  %2018 = vmatpush.bf16.msra.mxu0 %v1457
  %2019 = vmatmul.bf16.gmra.mxu0 %v415
  %v2020 = vpop.f32.mrf.mxu0
  %v2021 = vadd.f32 %v2002, %v2020
  %v2022 = vpop.f32.mrf.mxu0
  %v2023 = vadd.f32 %v2004, %v2022
  %2024 = vmatmul.bf16.gmra.mxu0 %v431
  %v2025 = vpop.f32.mrf.mxu0
  %v2026 = vadd.f32 %v2007, %v2025
  %v2027 = vpop.f32.mrf.mxu0
  %v2028 = vadd.f32 %v2009, %v2027
  %2029 = vdwg.mxu0
  %2030 = vmatpush.bf16.msra.mxu0 %v1487
  %2031 = vmatpush.bf16.msra.mxu0 %v1485
  %2032 = vmatpush.bf16.msra.mxu0 %v1483
  %2033 = vmatpush.bf16.msra.mxu0 %v1481
  %2034 = vmatpush.bf16.msra.mxu0 %v1479
  %2035 = vmatpush.bf16.msra.mxu0 %v1477
  %2036 = vmatpush.bf16.msra.mxu0 %v1475
  %2037 = vmatpush.bf16.msra.mxu0 %v1473
  %2038 = vmatmul.bf16.gmra.mxu0 %v416
  %v2039 = vpop.f32.mrf.mxu0
  %v2040 = vadd.f32 %v2021, %v2039
  %v2041 = vpop.f32.mrf.mxu0
  %v2042 = vadd.f32 %v2023, %v2041
  %2043 = vmatmul.bf16.gmra.mxu0 %v432
  %v2044 = vpop.f32.mrf.mxu0
  %v2045 = vadd.f32 %v2026, %v2044
  %v2046 = vpop.f32.mrf.mxu0
  %v2047 = vadd.f32 %v2028, %v2046
  %2048 = vdwg.mxu0
  %2049 = vmatpush.bf16.msra.mxu0 %v1248
  %2050 = vmatpush.bf16.msra.mxu0 %v1246
  %2051 = vmatpush.bf16.msra.mxu0 %v1244
  %2052 = vmatpush.bf16.msra.mxu0 %v1242
  %2053 = vmatpush.bf16.msra.mxu0 %v1240
  %2054 = vmatpush.bf16.msra.mxu0 %v1238
  %2055 = vmatpush.bf16.msra.mxu0 %v1236
  %2056 = vmatpush.bf16.msra.mxu0 %v1234
  %2057 = vmatmul.bf16.gmra.mxu0 %v401
  %v2058 = vpop.f32.mrf.mxu0
  %v2059 = vadd.f32 0.0, %v2058
  %v2060 = vpop.f32.mrf.mxu0
  %v2061 = vadd.f32 0.0, %v2060
  %2062 = vmatmul.bf16.gmra.mxu0 %v417
  %v2063 = vpop.f32.mrf.mxu0
  %v2064 = vadd.f32 0.0, %v2063
  %v2065 = vpop.f32.mrf.mxu0
  %v2066 = vadd.f32 0.0, %v2065
  %2067 = vdwg.mxu0
  %2068 = vmatpush.bf16.msra.mxu0 %v1264
  %2069 = vmatpush.bf16.msra.mxu0 %v1262
  %2070 = vmatpush.bf16.msra.mxu0 %v1260
  %2071 = vmatpush.bf16.msra.mxu0 %v1258
  %2072 = vmatpush.bf16.msra.mxu0 %v1256
  %2073 = vmatpush.bf16.msra.mxu0 %v1254
  %2074 = vmatpush.bf16.msra.mxu0 %v1252
  %2075 = vmatpush.bf16.msra.mxu0 %v1250
  %2076 = vmatmul.bf16.gmra.mxu0 %v402
  %v2077 = vpop.f32.mrf.mxu0
  %v2078 = vadd.f32 %v2059, %v2077
  %v2079 = vpop.f32.mrf.mxu0
  %v2080 = vadd.f32 %v2061, %v2079
  %2081 = vmatmul.bf16.gmra.mxu0 %v418
  %v2082 = vpop.f32.mrf.mxu0
  %v2083 = vadd.f32 %v2064, %v2082
  %v2084 = vpop.f32.mrf.mxu0
  %v2085 = vadd.f32 %v2066, %v2084
  %2086 = vdwg.mxu0
  %2087 = vmatpush.bf16.msra.mxu0 %v1280
  %2088 = vmatpush.bf16.msra.mxu0 %v1278
  %2089 = vmatpush.bf16.msra.mxu0 %v1276
  %2090 = vmatpush.bf16.msra.mxu0 %v1274
  %2091 = vmatpush.bf16.msra.mxu0 %v1272
  %2092 = vmatpush.bf16.msra.mxu0 %v1270
  %2093 = vmatpush.bf16.msra.mxu0 %v1268
  %2094 = vmatpush.bf16.msra.mxu0 %v1266
  %2095 = vmatmul.bf16.gmra.mxu0 %v403
  %v2096 = vpop.f32.mrf.mxu0
  %v2097 = vadd.f32 %v2078, %v2096
  %v2098 = vpop.f32.mrf.mxu0
  %v2099 = vadd.f32 %v2080, %v2098
  %2100 = vmatmul.bf16.gmra.mxu0 %v419
  %v2101 = vpop.f32.mrf.mxu0
  %v2102 = vadd.f32 %v2083, %v2101
  %v2103 = vpop.f32.mrf.mxu0
  %v2104 = vadd.f32 %v2085, %v2103
  %2105 = vdwg.mxu0
  %2106 = vmatpush.bf16.msra.mxu0 %v1296
  %2107 = vmatpush.bf16.msra.mxu0 %v1294
  %2108 = vmatpush.bf16.msra.mxu0 %v1292
  %2109 = vmatpush.bf16.msra.mxu0 %v1290
  %2110 = vmatpush.bf16.msra.mxu0 %v1288
  %2111 = vmatpush.bf16.msra.mxu0 %v1286
  %2112 = vmatpush.bf16.msra.mxu0 %v1284
  %2113 = vmatpush.bf16.msra.mxu0 %v1282
  %2114 = vmatmul.bf16.gmra.mxu0 %v404
  %v2115 = vpop.f32.mrf.mxu0
  %v2116 = vadd.f32 %v2097, %v2115
  %v2117 = vpop.f32.mrf.mxu0
  %v2118 = vadd.f32 %v2099, %v2117
  %2119 = vmatmul.bf16.gmra.mxu0 %v420
  %v2120 = vpop.f32.mrf.mxu0
  %v2121 = vadd.f32 %v2102, %v2120
  %v2122 = vpop.f32.mrf.mxu0
  %v2123 = vadd.f32 %v2104, %v2122
  %2124 = vdwg.mxu0
  %2125 = vmatpush.bf16.msra.mxu0 %v1312
  %2126 = vmatpush.bf16.msra.mxu0 %v1310
  %2127 = vmatpush.bf16.msra.mxu0 %v1308
  %2128 = vmatpush.bf16.msra.mxu0 %v1306
  %2129 = vmatpush.bf16.msra.mxu0 %v1304
  %2130 = vmatpush.bf16.msra.mxu0 %v1302
  %2131 = vmatpush.bf16.msra.mxu0 %v1300
  %2132 = vmatpush.bf16.msra.mxu0 %v1298
  %2133 = vmatmul.bf16.gmra.mxu0 %v405
  %v2134 = vpop.f32.mrf.mxu0
  %v2135 = vadd.f32 %v2116, %v2134
  %v2136 = vpop.f32.mrf.mxu0
  %v2137 = vadd.f32 %v2118, %v2136
  %2138 = vmatmul.bf16.gmra.mxu0 %v421
  %v2139 = vpop.f32.mrf.mxu0
  %v2140 = vadd.f32 %v2121, %v2139
  %v2141 = vpop.f32.mrf.mxu0
  %v2142 = vadd.f32 %v2123, %v2141
  %2143 = vdwg.mxu0
  %2144 = vmatpush.bf16.msra.mxu0 %v1328
  %2145 = vmatpush.bf16.msra.mxu0 %v1326
  %2146 = vmatpush.bf16.msra.mxu0 %v1324
  %2147 = vmatpush.bf16.msra.mxu0 %v1322
  %2148 = vmatpush.bf16.msra.mxu0 %v1320
  %2149 = vmatpush.bf16.msra.mxu0 %v1318
  %2150 = vmatpush.bf16.msra.mxu0 %v1316
  %2151 = vmatpush.bf16.msra.mxu0 %v1314
  %2152 = vmatmul.bf16.gmra.mxu0 %v406
  %v2153 = vpop.f32.mrf.mxu0
  %v2154 = vadd.f32 %v2135, %v2153
  %v2155 = vpop.f32.mrf.mxu0
  %v2156 = vadd.f32 %v2137, %v2155
  %2157 = vmatmul.bf16.gmra.mxu0 %v422
  %v2158 = vpop.f32.mrf.mxu0
  %v2159 = vadd.f32 %v2140, %v2158
  %v2160 = vpop.f32.mrf.mxu0
  %v2161 = vadd.f32 %v2142, %v2160
  %2162 = vdwg.mxu0
  %2163 = vmatpush.bf16.msra.mxu0 %v1344
  %2164 = vmatpush.bf16.msra.mxu0 %v1342
  %2165 = vmatpush.bf16.msra.mxu0 %v1340
  %2166 = vmatpush.bf16.msra.mxu0 %v1338
  %2167 = vmatpush.bf16.msra.mxu0 %v1336
  %2168 = vmatpush.bf16.msra.mxu0 %v1334
  %2169 = vmatpush.bf16.msra.mxu0 %v1332
  %2170 = vmatpush.bf16.msra.mxu0 %v1330
  %2171 = vmatmul.bf16.gmra.mxu0 %v407
  %v2172 = vpop.f32.mrf.mxu0
  %v2173 = vadd.f32 %v2154, %v2172
  %v2174 = vpop.f32.mrf.mxu0
  %v2175 = vadd.f32 %v2156, %v2174
  %2176 = vmatmul.bf16.gmra.mxu0 %v423
  %v2177 = vpop.f32.mrf.mxu0
  %v2178 = vadd.f32 %v2159, %v2177
  %v2179 = vpop.f32.mrf.mxu0
  %v2180 = vadd.f32 %v2161, %v2179
  %2181 = vdwg.mxu0
  %2182 = vmatpush.bf16.msra.mxu0 %v1360
  %2183 = vmatpush.bf16.msra.mxu0 %v1358
  %2184 = vmatpush.bf16.msra.mxu0 %v1356
  %2185 = vmatpush.bf16.msra.mxu0 %v1354
  %2186 = vmatpush.bf16.msra.mxu0 %v1352
  %2187 = vmatpush.bf16.msra.mxu0 %v1350
  %2188 = vmatpush.bf16.msra.mxu0 %v1348
  %2189 = vmatpush.bf16.msra.mxu0 %v1346
  %2190 = vmatmul.bf16.gmra.mxu0 %v408
  %v2191 = vpop.f32.mrf.mxu0
  %v2192 = vadd.f32 %v2173, %v2191
  %v2193 = vpop.f32.mrf.mxu0
  %v2194 = vadd.f32 %v2175, %v2193
  %2195 = vmatmul.bf16.gmra.mxu0 %v424
  %v2196 = vpop.f32.mrf.mxu0
  %v2197 = vadd.f32 %v2178, %v2196
  %v2198 = vpop.f32.mrf.mxu0
  %v2199 = vadd.f32 %v2180, %v2198
  %2200 = vdwg.mxu0
  %2201 = vmatpush.bf16.msra.mxu0 %v1376
  %2202 = vmatpush.bf16.msra.mxu0 %v1374
  %2203 = vmatpush.bf16.msra.mxu0 %v1372
  %2204 = vmatpush.bf16.msra.mxu0 %v1370
  %2205 = vmatpush.bf16.msra.mxu0 %v1368
  %2206 = vmatpush.bf16.msra.mxu0 %v1366
  %2207 = vmatpush.bf16.msra.mxu0 %v1364
  %2208 = vmatpush.bf16.msra.mxu0 %v1362
  %2209 = vmatmul.bf16.gmra.mxu0 %v409
  %v2210 = vpop.f32.mrf.mxu0
  %v2211 = vadd.f32 %v2192, %v2210
  %v2212 = vpop.f32.mrf.mxu0
  %v2213 = vadd.f32 %v2194, %v2212
  %2214 = vmatmul.bf16.gmra.mxu0 %v425
  %v2215 = vpop.f32.mrf.mxu0
  %v2216 = vadd.f32 %v2197, %v2215
  %v2217 = vpop.f32.mrf.mxu0
  %v2218 = vadd.f32 %v2199, %v2217
  %2219 = vdwg.mxu0
  %2220 = vmatpush.bf16.msra.mxu0 %v1392
  %2221 = vmatpush.bf16.msra.mxu0 %v1390
  %2222 = vmatpush.bf16.msra.mxu0 %v1388
  %2223 = vmatpush.bf16.msra.mxu0 %v1386
  %2224 = vmatpush.bf16.msra.mxu0 %v1384
  %2225 = vmatpush.bf16.msra.mxu0 %v1382
  %2226 = vmatpush.bf16.msra.mxu0 %v1380
  %2227 = vmatpush.bf16.msra.mxu0 %v1378
  %2228 = vmatmul.bf16.gmra.mxu0 %v410
  %v2229 = vpop.f32.mrf.mxu0
  %v2230 = vadd.f32 %v2211, %v2229
  %v2231 = vpop.f32.mrf.mxu0
  %v2232 = vadd.f32 %v2213, %v2231
  %2233 = vmatmul.bf16.gmra.mxu0 %v426
  %v2234 = vpop.f32.mrf.mxu0
  %v2235 = vadd.f32 %v2216, %v2234
  %v2236 = vpop.f32.mrf.mxu0
  %v2237 = vadd.f32 %v2218, %v2236
  %2238 = vdwg.mxu0
  %2239 = vmatpush.bf16.msra.mxu0 %v1408
  %2240 = vmatpush.bf16.msra.mxu0 %v1406
  %2241 = vmatpush.bf16.msra.mxu0 %v1404
  %2242 = vmatpush.bf16.msra.mxu0 %v1402
  %2243 = vmatpush.bf16.msra.mxu0 %v1400
  %2244 = vmatpush.bf16.msra.mxu0 %v1398
  %2245 = vmatpush.bf16.msra.mxu0 %v1396
  %2246 = vmatpush.bf16.msra.mxu0 %v1394
  %2247 = vmatmul.bf16.gmra.mxu0 %v411
  %v2248 = vpop.f32.mrf.mxu0
  %v2249 = vadd.f32 %v2230, %v2248
  %v2250 = vpop.f32.mrf.mxu0
  %v2251 = vadd.f32 %v2232, %v2250
  %2252 = vmatmul.bf16.gmra.mxu0 %v427
  %v2253 = vpop.f32.mrf.mxu0
  %v2254 = vadd.f32 %v2235, %v2253
  %v2255 = vpop.f32.mrf.mxu0
  %v2256 = vadd.f32 %v2237, %v2255
  %2257 = vdwg.mxu0
  %2258 = vmatpush.bf16.msra.mxu0 %v1424
  %2259 = vmatpush.bf16.msra.mxu0 %v1422
  %2260 = vmatpush.bf16.msra.mxu0 %v1420
  %2261 = vmatpush.bf16.msra.mxu0 %v1418
  %2262 = vmatpush.bf16.msra.mxu0 %v1416
  %2263 = vmatpush.bf16.msra.mxu0 %v1414
  %2264 = vmatpush.bf16.msra.mxu0 %v1412
  %2265 = vmatpush.bf16.msra.mxu0 %v1410
  %2266 = vmatmul.bf16.gmra.mxu0 %v412
  %v2267 = vpop.f32.mrf.mxu0
  %v2268 = vadd.f32 %v2249, %v2267
  %v2269 = vpop.f32.mrf.mxu0
  %v2270 = vadd.f32 %v2251, %v2269
  %2271 = vmatmul.bf16.gmra.mxu0 %v428
  %v2272 = vpop.f32.mrf.mxu0
  %v2273 = vadd.f32 %v2254, %v2272
  %v2274 = vpop.f32.mrf.mxu0
  %v2275 = vadd.f32 %v2256, %v2274
  %2276 = vdwg.mxu0
  %2277 = vmatpush.bf16.msra.mxu0 %v1440
  %2278 = vmatpush.bf16.msra.mxu0 %v1438
  %2279 = vmatpush.bf16.msra.mxu0 %v1436
  %2280 = vmatpush.bf16.msra.mxu0 %v1434
  %2281 = vmatpush.bf16.msra.mxu0 %v1432
  %2282 = vmatpush.bf16.msra.mxu0 %v1430
  %2283 = vmatpush.bf16.msra.mxu0 %v1428
  %2284 = vmatpush.bf16.msra.mxu0 %v1426
  %2285 = vmatmul.bf16.gmra.mxu0 %v413
  %v2286 = vpop.f32.mrf.mxu0
  %v2287 = vadd.f32 %v2268, %v2286
  %v2288 = vpop.f32.mrf.mxu0
  %v2289 = vadd.f32 %v2270, %v2288
  %2290 = vmatmul.bf16.gmra.mxu0 %v429
  %v2291 = vpop.f32.mrf.mxu0
  %v2292 = vadd.f32 %v2273, %v2291
  %v2293 = vpop.f32.mrf.mxu0
  %v2294 = vadd.f32 %v2275, %v2293
  %2295 = vdwg.mxu0
  %2296 = vmatpush.bf16.msra.mxu0 %v1456
  %2297 = vmatpush.bf16.msra.mxu0 %v1454
  %2298 = vmatpush.bf16.msra.mxu0 %v1452
  %2299 = vmatpush.bf16.msra.mxu0 %v1450
  %2300 = vmatpush.bf16.msra.mxu0 %v1448
  %2301 = vmatpush.bf16.msra.mxu0 %v1446
  %2302 = vmatpush.bf16.msra.mxu0 %v1444
  %2303 = vmatpush.bf16.msra.mxu0 %v1442
  %2304 = vmatmul.bf16.gmra.mxu0 %v414
  %v2305 = vpop.f32.mrf.mxu0
  %v2306 = vadd.f32 %v2287, %v2305
  %v2307 = vpop.f32.mrf.mxu0
  %v2308 = vadd.f32 %v2289, %v2307
  %2309 = vmatmul.bf16.gmra.mxu0 %v430
  %v2310 = vpop.f32.mrf.mxu0
  %v2311 = vadd.f32 %v2292, %v2310
  %v2312 = vpop.f32.mrf.mxu0
  %v2313 = vadd.f32 %v2294, %v2312
  %2314 = vdwg.mxu0
  %2315 = vmatpush.bf16.msra.mxu0 %v1472
  %2316 = vmatpush.bf16.msra.mxu0 %v1470
  %2317 = vmatpush.bf16.msra.mxu0 %v1468
  %2318 = vmatpush.bf16.msra.mxu0 %v1466
  %2319 = vmatpush.bf16.msra.mxu0 %v1464
  %2320 = vmatpush.bf16.msra.mxu0 %v1462
  %2321 = vmatpush.bf16.msra.mxu0 %v1460
  %2322 = vmatpush.bf16.msra.mxu0 %v1458
  %2323 = vmatmul.bf16.gmra.mxu0 %v415
  %v2324 = vpop.f32.mrf.mxu0
  %v2325 = vadd.f32 %v2306, %v2324
  %v2326 = vpop.f32.mrf.mxu0
  %v2327 = vadd.f32 %v2308, %v2326
  %2328 = vmatmul.bf16.gmra.mxu0 %v431
  %v2329 = vpop.f32.mrf.mxu0
  %v2330 = vadd.f32 %v2311, %v2329
  %v2331 = vpop.f32.mrf.mxu0
  %v2332 = vadd.f32 %v2313, %v2331
  %2333 = vdwg.mxu0
  %2334 = vmatpush.bf16.msra.mxu0 %v1488
  %2335 = vmatpush.bf16.msra.mxu0 %v1486
  %2336 = vmatpush.bf16.msra.mxu0 %v1484
  %2337 = vmatpush.bf16.msra.mxu0 %v1482
  %2338 = vmatpush.bf16.msra.mxu0 %v1480
  %2339 = vmatpush.bf16.msra.mxu0 %v1478
  %2340 = vmatpush.bf16.msra.mxu0 %v1476
  %2341 = vmatpush.bf16.msra.mxu0 %v1474
  %2342 = vmatmul.bf16.gmra.mxu0 %v416
  %v2343 = vpop.f32.mrf.mxu0
  %v2344 = vadd.f32 %v2325, %v2343
  %v2345 = vpop.f32.mrf.mxu0
  %v2346 = vadd.f32 %v2327, %v2345
  %2347 = vmatmul.bf16.gmra.mxu0 %v432
  %v2348 = vpop.f32.mrf.mxu0
  %v2349 = vadd.f32 %v2330, %v2348
  %v2350 = vpop.f32.mrf.mxu0
  %v2351 = vadd.f32 %v2332, %v2350
  %2352 = vdwg.mxu0
  %v2353 = vadd.f32 %v2040, %v2042
  %v2354 = vadd.f32 %v2353, %v2045
  %v2355 = vadd.f32 %v2354, %v2047
  %v2356 = vrot.slane %v2355, 4
  %v2357 = vadd.f32 %v2355, %v2356
  %v2358 = vrot.slane %v2357, 2
  %v2359 = vadd.f32 %v2357, %v2358
  %v2360 = vrot.slane %v2359, 1
  %v2361 = vadd.f32 %v2359, %v2360
  %v2362 = vadd.f32 %v2344, %v2346
  %v2363 = vadd.f32 %v2362, %v2349
  %v2364 = vadd.f32 %v2363, %v2351
  %v2365 = vrot.slane %v2364, 4
  %v2366 = vadd.f32 %v2364, %v2365
  %v2367 = vrot.slane %v2366, 2
  %v2368 = vadd.f32 %v2366, %v2367
  %v2369 = vrot.slane %v2368, 1
  %v2370 = vadd.f32 %v2368, %v2369
  %v2371 = vmul.f32 %v2361, 0.03125
  %v2372 = vmul.f32 %v2370, 0.03125
  %v2373 = vsub.f32 %v2040, %v2371
  %v2374 = vsub.f32 %v2344, %v2372
  %v2375 = vsub.f32 %v2042, %v2371
  %v2376 = vsub.f32 %v2346, %v2372
  %v2377 = vsub.f32 %v2045, %v2371
  %v2378 = vsub.f32 %v2349, %v2372
  %v2379 = vsub.f32 %v2047, %v2371
  %v2380 = vsub.f32 %v2351, %v2372
  %v2381 = vmul.f32 %v2373, %v2373
  %v2382 = vmul.f32 %v2374, %v2374
  %v2383 = vmul.f32 %v2375, %v2375
  %v2384 = vmul.f32 %v2376, %v2376
  %v2385 = vmul.f32 %v2377, %v2377
  %v2386 = vmul.f32 %v2378, %v2378
  %v2387 = vmul.f32 %v2379, %v2379
  %v2388 = vmul.f32 %v2380, %v2380
  %v2389 = vadd.f32 %v2381, %v2383
  %v2390 = vadd.f32 %v2389, %v2385
  %v2391 = vadd.f32 %v2390, %v2387
  %v2392 = vrot.slane %v2391, 4
  %v2393 = vadd.f32 %v2391, %v2392
  %v2394 = vrot.slane %v2393, 2
  %v2395 = vadd.f32 %v2393, %v2394
  %v2396 = vrot.slane %v2395, 1
  %v2397 = vadd.f32 %v2395, %v2396
  %v2398 = vadd.f32 %v2382, %v2384
  %v2399 = vadd.f32 %v2398, %v2386
  %v2400 = vadd.f32 %v2399, %v2388
  %v2401 = vrot.slane %v2400, 4
  %v2402 = vadd.f32 %v2400, %v2401
  %v2403 = vrot.slane %v2402, 2
  %v2404 = vadd.f32 %v2402, %v2403
  %v2405 = vrot.slane %v2404, 1
  %v2406 = vadd.f32 %v2404, %v2405
  %v2407 = vmul.f32 %v2397, 0.03125
  %v2408 = vmul.f32 %v2406, 0.03125
  %v2409 = vld [vmem:[%s2] sm:$0x3]
  %v2410 = vadd.f32 %v2407, 1e-05
  %v2411 = vadd.f32 %v2408, 1e-05
  %v2412 = vrsqrt.pop %v2410
  %v2413 = vmul.f32 %v2412, %v2410
  %v2414 = vmul.f32 %v2413, %v2412
  %v2415 = vmul.f32 0.5, %v2414
  %v2416 = vsub.f32 1.5, %v2415
  %v2417 = vmul.f32 %v2412, %v2416
  %vm2418 = vweird.f32 %v2410
  %vm2419 = vweird.f32 %v2412
  %vm2420 = vmor %vm2418, %vm2419
  %v2421 = vsel %vm2420, %v2412, %v2417
  %v2422 = vrsqrt.pop %v2411
  %v2423 = vmul.f32 %v2422, %v2411
  %v2424 = vmul.f32 %v2423, %v2422
  %v2425 = vmul.f32 0.5, %v2424
  %v2426 = vsub.f32 1.5, %v2425
  %v2427 = vmul.f32 %v2422, %v2426
  %vm2428 = vweird.f32 %v2411
  %vm2429 = vweird.f32 %v2422
  %vm2430 = vmor %vm2428, %vm2429
  %v2431 = vsel %vm2430, %v2422, %v2427
  %v2434 = vrot.slane %v2431, 7
  %vm2435 = vcmask 1040384
  %v2436 = vsel %vm2435, %v2421, %v2434
  %v2438 = vmul.f32 %v2409, %v2436
  %v2439 = vld [vmem:[%s3] sm:$0x3]
  %v2441 = vperm.slane %v2438, 0
  %v2442 = vperm.slane %v2438, 1
  %v2445 = vmul.f32 %v2371, %v2441
  %v2446 = vmul.f32 %v2372, %v2442
  %v2449 = vrot.slane %v2446, 7
  %v2450 = vsel %vm2435, %v2445, %v2449
  %v2452 = vsub.f32 %v2439, %v2450
  %v2453 = vmul.f32 %v2040, %v2441
  %v2454 = vmul.f32 %v2344, %v2442
  %v2455 = vmul.f32 %v2042, %v2441
  %v2456 = vmul.f32 %v2346, %v2442
  %v2457 = vmul.f32 %v2045, %v2441
  %v2458 = vmul.f32 %v2349, %v2442
  %v2459 = vmul.f32 %v2047, %v2441
  %v2460 = vmul.f32 %v2351, %v2442
  %v2462 = vperm.slane %v2452, 0
  %v2463 = vperm.slane %v2452, 1
  %v2466 = vadd.f32 %v2453, %v2462
  %v2467 = vadd.f32 %v2454, %v2463
  %v2468 = vadd.f32 %v2455, %v2462
  %v2469 = vadd.f32 %v2456, %v2463
  %v2470 = vadd.f32 %v2457, %v2462
  %v2471 = vadd.f32 %v2458, %v2463
  %v2472 = vadd.f32 %v2459, %v2462
  %v2473 = vadd.f32 %v2460, %v2463
  %vm2474 = vcmp.gt.f32.partialorder %v2466, 0.0
  %vm2475 = vcmp.gt.f32.partialorder %v2467, 0.0
  %vm2476 = vcmp.gt.f32.partialorder %v2468, 0.0
  %vm2477 = vcmp.gt.f32.partialorder %v2469, 0.0
  %vm2478 = vcmp.gt.f32.partialorder %v2470, 0.0
  %vm2479 = vcmp.gt.f32.partialorder %v2471, 0.0
  %vm2480 = vcmp.gt.f32.partialorder %v2472, 0.0
  %vm2481 = vcmp.gt.f32.partialorder %v2473, 0.0
  %v2482 = vmul.f32 %v2466, 0.2
  %v2483 = vmul.f32 %v2467, 0.2
  %v2484 = vmul.f32 %v2468, 0.2
  %v2485 = vmul.f32 %v2469, 0.2
  %v2486 = vmul.f32 %v2470, 0.2
  %v2487 = vmul.f32 %v2471, 0.2
  %v2488 = vmul.f32 %v2472, 0.2
  %v2489 = vmul.f32 %v2473, 0.2
  %v2490 = vsel %vm2474, %v2466, %v2482
  %v2491 = vsel %vm2475, %v2467, %v2483
  %v2492 = vsel %vm2476, %v2468, %v2484
  %v2493 = vsel %vm2477, %v2469, %v2485
  %v2494 = vsel %vm2478, %v2470, %v2486
  %v2495 = vsel %vm2479, %v2471, %v2487
  %v2496 = vsel %vm2480, %v2472, %v2488
  %v2497 = vsel %vm2481, %v2473, %v2489
  %v2498 = vpack.c.bf16 %v2491, %v2490
  %v2499 = vpack.c.bf16 %v2493, %v2492
  %v2500 = vpack.c.bf16 %v2495, %v2494
  %v2501 = vpack.c.bf16 %v2497, %v2496
  %2502 = vst [vmem:[%s4] sm:$0xff] %v2498
  %2503 = vst [vmem:[%s4 + $0x8] sm:$0xff] %v2499
  %2504 = vst [vmem:[%s4 + $0x10] sm:$0xff] %v2500
  %2505 = vst [vmem:[%s4 + $0x18] sm:$0xff] %v2501
  // Predicated region
  $region18: #{_lambda_.7} parent=0 // pred_check
    _
  $region19: #{_lambda_.7} parent=0 // pred_check_branch
    %2507 = sbr.rel (0) target = $region21
  $region20: #{_lambda_.7} parent=0 // pred_region
    _
  $region21: #{_lambda_.7} parent=0 // pred_fallthru
    _
  // Predicated region
  $region22: #{_lambda_.7} parent=0 // pred_check
    _
  $region23: #{_lambda_.7} parent=0 // pred_check_branch
    %2509 = sbr.rel (0) target = $region25
  $region24: #{_lambda_.7} parent=0 // pred_region
    _
  $region25: #{_lambda_.7} parent=0 // pred_fallthru
    _

// kernel: _lambda_.9
$region0: #{_lambda_.9}
  #allocation0 [shape = 'u32[]', space=smem, size = 0x4, offset = 0x4, fixed_abs, tag = 'smem constant byte address 0x4 - core index']
  #allocation1 [shape = 'u32[72,128]{1,0:T(1,128)}', space=vmem, size = 0x9000, scoped, tag = 'internal scratch']
  #allocation2 [shape = 'f32[1,1]{1,0:T(1,128)S(1)}', space=vmem, size = 0x200, scoped, tag = 'scoped memory for _lambda_.9']
  %s0 = inlined_call_operand.vmem [shape: bf16[8,8192], index: 0, kind: input, shape index: {}]
  %s1 = inlined_call_operand.vmem [shape: bf16[1,8192], index: 1, kind: input, shape index: {}]
  %s2 = inlined_call_operand.<no memory space> [shape: f32[1,1], index: 2, kind: input, shape index: {}]
  %s3 = inlined_call_operand.vmem [shape: f32[8,1], index: 3, kind: output, shape index: {}]
  %s4 = sld [smem:[#allocation0]]
  $region22: #{_lambda_.9} parent=0
    _
  %s6 = ssub.s32 1, %s4
  %s7 = scalar_select 0, %s6, %s4
  %v8 = vstv %s2
  %9 = vst [vmem:[#allocation2] sm:$0x1] %v8
  // Predicated region
  $region2: #{_lambda_.9} parent=0 // pred_check
    _
  $region3: #{_lambda_.9} parent=0 // pred_check_branch
    %11 = sbr.rel (0) target = $region5
  $region4: #{_lambda_.9} parent=0 // pred_region
    _
  $region5: #{_lambda_.9} parent=0 // pred_fallthru
    _
  // Predicated region
  $region6: #{_lambda_.9} parent=0 // pred_check
    _
  $region7: #{_lambda_.9} parent=0 // pred_check_branch
    %13 = sbr.rel (0) target = $region9
  $region8: #{_lambda_.9} parent=0 // pred_region
    _
  $region9: #{_lambda_.9} parent=0 // pred_fallthru
    _
  // Predicated region
  $region10: #{_lambda_.9} parent=0 // pred_check
    _
  $region11: #{_lambda_.9} parent=0 // pred_check_branch
    %15 = sbr.rel (0) target = $region13
  $region12: #{_lambda_.9} parent=0 // pred_region
    _
  $region13: #{_lambda_.9} parent=0 // pred_fallthru
    _
  %v16 = vld [vmem:[%s0] sm:$0xff]
  %v17 = vld [vmem:[%s0 + $0x8] sm:$0xff]
  %v18 = vld [vmem:[%s0 + $0x10] sm:$0xff]
  %v19 = vld [vmem:[%s0 + $0x18] sm:$0xff]
  %v20 = vld [vmem:[%s0 + $0x20] sm:$0xff]
  %v21 = vld [vmem:[%s0 + $0x28] sm:$0xff]
  %v22 = vld [vmem:[%s0 + $0x30] sm:$0xff]
  %v23 = vld [vmem:[%s0 + $0x38] sm:$0xff]
  %v24 = vld [vmem:[%s0 + $0x40] sm:$0xff]
  %v25 = vld [vmem:[%s0 + $0x48] sm:$0xff]
  %v26 = vld [vmem:[%s0 + $0x50] sm:$0xff]
  %v27 = vld [vmem:[%s0 + $0x58] sm:$0xff]
  %v28 = vld [vmem:[%s0 + $0x60] sm:$0xff]
  %v29 = vld [vmem:[%s0 + $0x68] sm:$0xff]
  %v30 = vld [vmem:[%s0 + $0x70] sm:$0xff]
  %v31 = vld [vmem:[%s0 + $0x78] sm:$0xff]
  %v32 = vld [vmem:[%s0 + $0x80] sm:$0xff]
  %v33 = vld [vmem:[%s0 + $0x88] sm:$0xff]
  %v34 = vld [vmem:[%s0 + $0x90] sm:$0xff]
  %v35 = vld [vmem:[%s0 + $0x98] sm:$0xff]
  %v36 = vld [vmem:[%s0 + $0xa0] sm:$0xff]
  %v37 = vld [vmem:[%s0 + $0xa8] sm:$0xff]
  %v38 = vld [vmem:[%s0 + $0xb0] sm:$0xff]
  %v39 = vld [vmem:[%s0 + $0xb8] sm:$0xff]
  %v40 = vld [vmem:[%s0 + $0xc0] sm:$0xff]
  %v41 = vld [vmem:[%s0 + $0xc8] sm:$0xff]
  %v42 = vld [vmem:[%s0 + $0xd0] sm:$0xff]
  %v43 = vld [vmem:[%s0 + $0xd8] sm:$0xff]
  %v44 = vld [vmem:[%s0 + $0xe0] sm:$0xff]
  %v45 = vld [vmem:[%s0 + $0xe8] sm:$0xff]
  %v46 = vld [vmem:[%s0 + $0xf0] sm:$0xff]
  %v47 = vld [vmem:[%s0 + $0xf8] sm:$0xff]
  %v48 = vunpack.c.l.bf16 %v16
  %v49 = vunpack.c.h.bf16 %v16
  %v50 = vunpack.c.l.bf16 %v17
  %v51 = vunpack.c.h.bf16 %v17
  %v52 = vunpack.c.l.bf16 %v18
  %v53 = vunpack.c.h.bf16 %v18
  %v54 = vunpack.c.l.bf16 %v19
  %v55 = vunpack.c.h.bf16 %v19
  %v56 = vunpack.c.l.bf16 %v20
  %v57 = vunpack.c.h.bf16 %v20
  %v58 = vunpack.c.l.bf16 %v21
  %v59 = vunpack.c.h.bf16 %v21
  %v60 = vunpack.c.l.bf16 %v22
  %v61 = vunpack.c.h.bf16 %v22
  %v62 = vunpack.c.l.bf16 %v23
  %v63 = vunpack.c.h.bf16 %v23
  %v64 = vunpack.c.l.bf16 %v24
  %v65 = vunpack.c.h.bf16 %v24
  %v66 = vunpack.c.l.bf16 %v25
  %v67 = vunpack.c.h.bf16 %v25
  %v68 = vunpack.c.l.bf16 %v26
  %v69 = vunpack.c.h.bf16 %v26
  %v70 = vunpack.c.l.bf16 %v27
  %v71 = vunpack.c.h.bf16 %v27
  %v72 = vunpack.c.l.bf16 %v28
  %v73 = vunpack.c.h.bf16 %v28
  %v74 = vunpack.c.l.bf16 %v29
  %v75 = vunpack.c.h.bf16 %v29
  %v76 = vunpack.c.l.bf16 %v30
  %v77 = vunpack.c.h.bf16 %v30
  %v78 = vunpack.c.l.bf16 %v31
  %v79 = vunpack.c.h.bf16 %v31
  %v80 = vunpack.c.l.bf16 %v32
  %v81 = vunpack.c.h.bf16 %v32
  %v82 = vunpack.c.l.bf16 %v33
  %v83 = vunpack.c.h.bf16 %v33
  %v84 = vunpack.c.l.bf16 %v34
  %v85 = vunpack.c.h.bf16 %v34
  %v86 = vunpack.c.l.bf16 %v35
  %v87 = vunpack.c.h.bf16 %v35
  %v88 = vunpack.c.l.bf16 %v36
  %v89 = vunpack.c.h.bf16 %v36
  %v90 = vunpack.c.l.bf16 %v37
  %v91 = vunpack.c.h.bf16 %v37
  %v92 = vunpack.c.l.bf16 %v38
  %v93 = vunpack.c.h.bf16 %v38
  %v94 = vunpack.c.l.bf16 %v39
  %v95 = vunpack.c.h.bf16 %v39
  %v96 = vunpack.c.l.bf16 %v40
  %v97 = vunpack.c.h.bf16 %v40
  %v98 = vunpack.c.l.bf16 %v41
  %v99 = vunpack.c.h.bf16 %v41
  %v100 = vunpack.c.l.bf16 %v42
  %v101 = vunpack.c.h.bf16 %v42
  %v102 = vunpack.c.l.bf16 %v43
  %v103 = vunpack.c.h.bf16 %v43
  %v104 = vunpack.c.l.bf16 %v44
  %v105 = vunpack.c.h.bf16 %v44
  %v106 = vunpack.c.l.bf16 %v45
  %v107 = vunpack.c.h.bf16 %v45
  %v108 = vunpack.c.l.bf16 %v46
  %v109 = vunpack.c.h.bf16 %v46
  %v110 = vunpack.c.l.bf16 %v47
  %v111 = vunpack.c.h.bf16 %v47
  %v112 = vld [vmem:[%s1] sm:$0xff]
  %v113 = vld [vmem:[%s1 + $0x8] sm:$0xff]
  %v114 = vld [vmem:[%s1 + $0x10] sm:$0xff]
  %v115 = vld [vmem:[%s1 + $0x18] sm:$0xff]
  %v116 = vld [vmem:[%s1 + $0x20] sm:$0xff]
  %v117 = vld [vmem:[%s1 + $0x28] sm:$0xff]
  %v118 = vld [vmem:[%s1 + $0x30] sm:$0xff]
  %v119 = vld [vmem:[%s1 + $0x38] sm:$0xff]
  %v120 = vunpack.c.l.bf16 %v112
  %v121 = vunpack.c.h.bf16 %v112
  %v122 = vunpack.c.l.bf16 %v113
  %v123 = vunpack.c.h.bf16 %v113
  %v124 = vunpack.c.l.bf16 %v114
  %v125 = vunpack.c.h.bf16 %v114
  %v126 = vunpack.c.l.bf16 %v115
  %v127 = vunpack.c.h.bf16 %v115
  %v128 = vunpack.c.l.bf16 %v116
  %v129 = vunpack.c.h.bf16 %v116
  %v130 = vunpack.c.l.bf16 %v117
  %v131 = vunpack.c.h.bf16 %v117
  %v132 = vunpack.c.l.bf16 %v118
  %v133 = vunpack.c.h.bf16 %v118
  %v134 = vunpack.c.l.bf16 %v119
  %v135 = vunpack.c.h.bf16 %v119
  %v152 = vperm.slane %v120, 0
  %v153 = vperm.slane %v120, 2
  %v154 = vperm.slane %v120, 4
  %v155 = vperm.slane %v120, 6
  %v156 = vperm.slane %v121, 0
  %v157 = vperm.slane %v121, 2
  %v158 = vperm.slane %v121, 4
  %v159 = vperm.slane %v121, 6
  %v160 = vperm.slane %v122, 0
  %v161 = vperm.slane %v122, 2
  %v162 = vperm.slane %v122, 4
  %v163 = vperm.slane %v122, 6
  %v164 = vperm.slane %v123, 0
  %v165 = vperm.slane %v123, 2
  %v166 = vperm.slane %v123, 4
  %v167 = vperm.slane %v123, 6
  %v168 = vperm.slane %v124, 0
  %v169 = vperm.slane %v124, 2
  %v170 = vperm.slane %v124, 4
  %v171 = vperm.slane %v124, 6
  %v172 = vperm.slane %v125, 0
  %v173 = vperm.slane %v125, 2
  %v174 = vperm.slane %v125, 4
  %v175 = vperm.slane %v125, 6
  %v176 = vperm.slane %v126, 0
  %v177 = vperm.slane %v126, 2
  %v178 = vperm.slane %v126, 4
  %v179 = vperm.slane %v126, 6
  %v180 = vperm.slane %v127, 0
  %v181 = vperm.slane %v127, 2
  %v182 = vperm.slane %v127, 4
  %v183 = vperm.slane %v127, 6
  %v184 = vperm.slane %v128, 0
  %v185 = vperm.slane %v128, 2
  %v186 = vperm.slane %v128, 4
  %v187 = vperm.slane %v128, 6
  %v188 = vperm.slane %v129, 0
  %v189 = vperm.slane %v129, 2
  %v190 = vperm.slane %v129, 4
  %v191 = vperm.slane %v129, 6
  %v192 = vperm.slane %v130, 0
  %v193 = vperm.slane %v130, 2
  %v194 = vperm.slane %v130, 4
  %v195 = vperm.slane %v130, 6
  %v196 = vperm.slane %v131, 0
  %v197 = vperm.slane %v131, 2
  %v198 = vperm.slane %v131, 4
  %v199 = vperm.slane %v131, 6
  %v200 = vperm.slane %v132, 0
  %v201 = vperm.slane %v132, 2
  %v202 = vperm.slane %v132, 4
  %v203 = vperm.slane %v132, 6
  %v204 = vperm.slane %v133, 0
  %v205 = vperm.slane %v133, 2
  %v206 = vperm.slane %v133, 4
  %v207 = vperm.slane %v133, 6
  %v208 = vperm.slane %v134, 0
  %v209 = vperm.slane %v134, 2
  %v210 = vperm.slane %v134, 4
  %v211 = vperm.slane %v134, 6
  %v212 = vperm.slane %v135, 0
  %v213 = vperm.slane %v135, 2
  %v214 = vperm.slane %v135, 4
  %v215 = vperm.slane %v135, 6
  %v280 = vperm.slane %v152, 0
  %v281 = vperm.slane %v153, 0
  %v282 = vperm.slane %v154, 0
  %v283 = vperm.slane %v155, 0
  %v284 = vperm.slane %v156, 0
  %v285 = vperm.slane %v157, 0
  %v286 = vperm.slane %v158, 0
  %v287 = vperm.slane %v159, 0
  %v288 = vperm.slane %v160, 0
  %v289 = vperm.slane %v161, 0
  %v290 = vperm.slane %v162, 0
  %v291 = vperm.slane %v163, 0
  %v292 = vperm.slane %v164, 0
  %v293 = vperm.slane %v165, 0
  %v294 = vperm.slane %v166, 0
  %v295 = vperm.slane %v167, 0
  %v296 = vperm.slane %v168, 0
  %v297 = vperm.slane %v169, 0
  %v298 = vperm.slane %v170, 0
  %v299 = vperm.slane %v171, 0
  %v300 = vperm.slane %v172, 0
  %v301 = vperm.slane %v173, 0
  %v302 = vperm.slane %v174, 0
  %v303 = vperm.slane %v175, 0
  %v304 = vperm.slane %v176, 0
  %v305 = vperm.slane %v177, 0
  %v306 = vperm.slane %v178, 0
  %v307 = vperm.slane %v179, 0
  %v308 = vperm.slane %v180, 0
  %v309 = vperm.slane %v181, 0
  %v310 = vperm.slane %v182, 0
  %v311 = vperm.slane %v183, 0
  %v312 = vperm.slane %v184, 0
  %v313 = vperm.slane %v185, 0
  %v314 = vperm.slane %v186, 0
  %v315 = vperm.slane %v187, 0
  %v316 = vperm.slane %v188, 0
  %v317 = vperm.slane %v189, 0
  %v318 = vperm.slane %v190, 0
  %v319 = vperm.slane %v191, 0
  %v320 = vperm.slane %v192, 0
  %v321 = vperm.slane %v193, 0
  %v322 = vperm.slane %v194, 0
  %v323 = vperm.slane %v195, 0
  %v324 = vperm.slane %v196, 0
  %v325 = vperm.slane %v197, 0
  %v326 = vperm.slane %v198, 0
  %v327 = vperm.slane %v199, 0
  %v328 = vperm.slane %v200, 0
  %v329 = vperm.slane %v201, 0
  %v330 = vperm.slane %v202, 0
  %v331 = vperm.slane %v203, 0
  %v332 = vperm.slane %v204, 0
  %v333 = vperm.slane %v205, 0
  %v334 = vperm.slane %v206, 0
  %v335 = vperm.slane %v207, 0
  %v336 = vperm.slane %v208, 0
  %v337 = vperm.slane %v209, 0
  %v338 = vperm.slane %v210, 0
  %v339 = vperm.slane %v211, 0
  %v340 = vperm.slane %v212, 0
  %v341 = vperm.slane %v213, 0
  %v342 = vperm.slane %v214, 0
  %v343 = vperm.slane %v215, 0
  %v344 = vmul.f32 %v48, %v280
  %v345 = vmul.f32 %v49, %v281
  %v346 = vmul.f32 %v50, %v282
  %v347 = vmul.f32 %v51, %v283
  %v348 = vmul.f32 %v52, %v284
  %v349 = vmul.f32 %v53, %v285
  %v350 = vmul.f32 %v54, %v286
  %v351 = vmul.f32 %v55, %v287
  %v352 = vmul.f32 %v56, %v288
  %v353 = vmul.f32 %v57, %v289
  %v354 = vmul.f32 %v58, %v290
  %v355 = vmul.f32 %v59, %v291
  %v356 = vmul.f32 %v60, %v292
  %v357 = vmul.f32 %v61, %v293
  %v358 = vmul.f32 %v62, %v294
  %v359 = vmul.f32 %v63, %v295
  %v360 = vmul.f32 %v64, %v296
  %v361 = vmul.f32 %v65, %v297
  %v362 = vmul.f32 %v66, %v298
  %v363 = vmul.f32 %v67, %v299
  %v364 = vmul.f32 %v68, %v300
  %v365 = vmul.f32 %v69, %v301
  %v366 = vmul.f32 %v70, %v302
  %v367 = vmul.f32 %v71, %v303
  %v368 = vmul.f32 %v72, %v304
  %v369 = vmul.f32 %v73, %v305
  %v370 = vmul.f32 %v74, %v306
  %v371 = vmul.f32 %v75, %v307
  %v372 = vmul.f32 %v76, %v308
  %v373 = vmul.f32 %v77, %v309
  %v374 = vmul.f32 %v78, %v310
  %v375 = vmul.f32 %v79, %v311
  %v376 = vmul.f32 %v80, %v312
  %v377 = vmul.f32 %v81, %v313
  %v378 = vmul.f32 %v82, %v314
  %v379 = vmul.f32 %v83, %v315
  %v380 = vmul.f32 %v84, %v316
  %v381 = vmul.f32 %v85, %v317
  %v382 = vmul.f32 %v86, %v318
  %v383 = vmul.f32 %v87, %v319
  %v384 = vmul.f32 %v88, %v320
  %v385 = vmul.f32 %v89, %v321
  %v386 = vmul.f32 %v90, %v322
  %v387 = vmul.f32 %v91, %v323
  %v388 = vmul.f32 %v92, %v324
  %v389 = vmul.f32 %v93, %v325
  %v390 = vmul.f32 %v94, %v326
  %v391 = vmul.f32 %v95, %v327
  %v392 = vmul.f32 %v96, %v328
  %v393 = vmul.f32 %v97, %v329
  %v394 = vmul.f32 %v98, %v330
  %v395 = vmul.f32 %v99, %v331
  %v396 = vmul.f32 %v100, %v332
  %v397 = vmul.f32 %v101, %v333
  %v398 = vmul.f32 %v102, %v334
  %v399 = vmul.f32 %v103, %v335
  %v400 = vmul.f32 %v104, %v336
  %v401 = vmul.f32 %v105, %v337
  %v402 = vmul.f32 %v106, %v338
  %v403 = vmul.f32 %v107, %v339
  %v404 = vmul.f32 %v108, %v340
  %v405 = vmul.f32 %v109, %v341
  %v406 = vmul.f32 %v110, %v342
  %v407 = vmul.f32 %v111, %v343
  %v408 = vadd.f32 %v344, %v345
  %v409 = vadd.f32 %v408, %v346
  %v410 = vadd.f32 %v409, %v347
  %v411 = vadd.f32 %v410, %v348
  %v412 = vadd.f32 %v411, %v349
  %v413 = vadd.f32 %v412, %v350
  %v414 = vadd.f32 %v413, %v351
  %v415 = vadd.f32 %v414, %v352
  %v416 = vadd.f32 %v415, %v353
  %v417 = vadd.f32 %v416, %v354
  %v418 = vadd.f32 %v417, %v355
  %v419 = vadd.f32 %v418, %v356
  %v420 = vadd.f32 %v419, %v357
  %v421 = vadd.f32 %v420, %v358
  %v422 = vadd.f32 %v421, %v359
  %v423 = vadd.f32 %v422, %v360
  %v424 = vadd.f32 %v423, %v361
  %v425 = vadd.f32 %v424, %v362
  %v426 = vadd.f32 %v425, %v363
  %v427 = vadd.f32 %v426, %v364
  %v428 = vadd.f32 %v427, %v365
  %v429 = vadd.f32 %v428, %v366
  %v430 = vadd.f32 %v429, %v367
  %v431 = vadd.f32 %v430, %v368
  %v432 = vadd.f32 %v431, %v369
  %v433 = vadd.f32 %v432, %v370
  %v434 = vadd.f32 %v433, %v371
  %v435 = vadd.f32 %v434, %v372
  %v436 = vadd.f32 %v435, %v373
  %v437 = vadd.f32 %v436, %v374
  %v438 = vadd.f32 %v437, %v375
  %v439 = vadd.f32 %v438, %v376
  %v440 = vadd.f32 %v439, %v377
  %v441 = vadd.f32 %v440, %v378
  %v442 = vadd.f32 %v441, %v379
  %v443 = vadd.f32 %v442, %v380
  %v444 = vadd.f32 %v443, %v381
  %v445 = vadd.f32 %v444, %v382
  %v446 = vadd.f32 %v445, %v383
  %v447 = vadd.f32 %v446, %v384
  %v448 = vadd.f32 %v447, %v385
  %v449 = vadd.f32 %v448, %v386
  %v450 = vadd.f32 %v449, %v387
  %v451 = vadd.f32 %v450, %v388
  %v452 = vadd.f32 %v451, %v389
  %v453 = vadd.f32 %v452, %v390
  %v454 = vadd.f32 %v453, %v391
  %v455 = vadd.f32 %v454, %v392
  %v456 = vadd.f32 %v455, %v393
  %v457 = vadd.f32 %v456, %v394
  %v458 = vadd.f32 %v457, %v395
  %v459 = vadd.f32 %v458, %v396
  %v460 = vadd.f32 %v459, %v397
  %v461 = vadd.f32 %v460, %v398
  %v462 = vadd.f32 %v461, %v399
  %v463 = vadd.f32 %v462, %v400
  %v464 = vadd.f32 %v463, %v401
  %v465 = vadd.f32 %v464, %v402
  %v466 = vadd.f32 %v465, %v403
  %v467 = vadd.f32 %v466, %v404
  %v468 = vadd.f32 %v467, %v405
  %v469 = vadd.f32 %v468, %v406
  %v470 = vadd.f32 %v469, %v407
  %471 = vadd.xlane.f32.xlu0 %v470
  %v472 = vpop.xlane.xlu0 %471
  %v473 = vld [vmem:[#allocation2] sm:$0x1]
  %v475 = vperm.slane %v473, 0
  %v477 = vadd.f32 %v472, %v475
  %vm478 = vcmask 7168
  %479 = vst.msk [vmem:[%s3] sm:$0xff] %vm478, %v477
  // Predicated region
  $region14: #{_lambda_.9} parent=0 // pred_check
    _
  $region15: #{_lambda_.9} parent=0 // pred_check_branch
    %481 = sbr.rel (0) target = $region17
  $region16: #{_lambda_.9} parent=0 // pred_region
    _
  $region17: #{_lambda_.9} parent=0 // pred_fallthru
    _
  // Predicated region
  $region18: #{_lambda_.9} parent=0 // pred_check
    _
  $region19: #{_lambda_.9} parent=0 // pred_check_branch
    %483 = sbr.rel (0) target = $region21
  $region20: #{_lambda_.9} parent=0 // pred_region
    _
  $region21: #{_lambda_.9} parent=0 // pred_fallthru
    _

// kernel: _lambda_.8
$region0: #{_lambda_.8}
  #allocation0 [shape = 'u32[]', space=smem, size = 0x4, offset = 0x4, fixed_abs, tag = 'smem constant byte address 0x4 - core index']
  #allocation1 [shape = 'u32[72,128]{1,0:T(1,128)}', space=vmem, size = 0x9000, scoped, tag = 'internal scratch']
  %s0 = inlined_call_operand.vmem [shape: bf16[32,4096], index: 0, kind: input, shape index: {}]
  %s1 = inlined_call_operand.vmem [shape: bf16[4096,512], index: 1, kind: input, shape index: {}]
  %s2 = inlined_call_operand.vmem [shape: f32[1,512], index: 2, kind: input, shape index: {}]
  %s3 = inlined_call_operand.vmem [shape: f32[1,512], index: 3, kind: input, shape index: {}]
  %s4 = inlined_call_operand.vmem [shape: bf16[32,512], index: 4, kind: output, shape index: {}]
  %s5 = sld [smem:[#allocation0]]
  $region26: #{_lambda_.8} parent=0
    _
  %s7 = ssub.s32 1, %s5
  %s8 = scalar_select 0, %s7, %s5
  // Predicated region
  $region2: #{_lambda_.8} parent=0 // pred_check
    _
  $region3: #{_lambda_.8} parent=0 // pred_check_branch
    %10 = sbr.rel (0) target = $region5
  $region4: #{_lambda_.8} parent=0 // pred_region
    _
  $region5: #{_lambda_.8} parent=0 // pred_fallthru
    _
  // Predicated region
  $region6: #{_lambda_.8} parent=0 // pred_check
    _
  $region7: #{_lambda_.8} parent=0 // pred_check_branch
    %12 = sbr.rel (0) target = $region9
  $region8: #{_lambda_.8} parent=0 // pred_region
    _
  $region9: #{_lambda_.8} parent=0 // pred_fallthru
    _
  // Predicated region
  $region10: #{_lambda_.8} parent=0 // pred_check
    _
  $region11: #{_lambda_.8} parent=0 // pred_check_branch
    %14 = sbr.rel (0) target = $region13
  $region12: #{_lambda_.8} parent=0 // pred_region
    _
  $region13: #{_lambda_.8} parent=0 // pred_fallthru
    _
  // Predicated region
  $region14: #{_lambda_.8} parent=0 // pred_check
    _
  $region15: #{_lambda_.8} parent=0 // pred_check_branch
    %16 = sbr.rel (0) target = $region17
  $region16: #{_lambda_.8} parent=0 // pred_region
    _
  $region17: #{_lambda_.8} parent=0 // pred_fallthru
    _
  %v17 = vld [vmem:[%s0] sm:$0xff]
  %v18 = vld [vmem:[%s0 + $0x8] sm:$0xff]
  %v19 = vld [vmem:[%s0 + $0x10] sm:$0xff]
  %v20 = vld [vmem:[%s0 + $0x18] sm:$0xff]
  %v21 = vld [vmem:[%s0 + $0x20] sm:$0xff]
  %v22 = vld [vmem:[%s0 + $0x28] sm:$0xff]
  %v23 = vld [vmem:[%s0 + $0x30] sm:$0xff]
  %v24 = vld [vmem:[%s0 + $0x38] sm:$0xff]
  %v25 = vld [vmem:[%s0 + $0x40] sm:$0xff]
  %v26 = vld [vmem:[%s0 + $0x48] sm:$0xff]
  %v27 = vld [vmem:[%s0 + $0x50] sm:$0xff]
  %v28 = vld [vmem:[%s0 + $0x58] sm:$0xff]
  %v29 = vld [vmem:[%s0 + $0x60] sm:$0xff]
  %v30 = vld [vmem:[%s0 + $0x68] sm:$0xff]
  %v31 = vld [vmem:[%s0 + $0x70] sm:$0xff]
  %v32 = vld [vmem:[%s0 + $0x78] sm:$0xff]
  %v33 = vld [vmem:[%s0 + $0x80] sm:$0xff]
  %v34 = vld [vmem:[%s0 + $0x88] sm:$0xff]
  %v35 = vld [vmem:[%s0 + $0x90] sm:$0xff]
  %v36 = vld [vmem:[%s0 + $0x98] sm:$0xff]
  %v37 = vld [vmem:[%s0 + $0xa0] sm:$0xff]
  %v38 = vld [vmem:[%s0 + $0xa8] sm:$0xff]
  %v39 = vld [vmem:[%s0 + $0xb0] sm:$0xff]
  %v40 = vld [vmem:[%s0 + $0xb8] sm:$0xff]
  %v41 = vld [vmem:[%s0 + $0xc0] sm:$0xff]
  %v42 = vld [vmem:[%s0 + $0xc8] sm:$0xff]
  %v43 = vld [vmem:[%s0 + $0xd0] sm:$0xff]
  %v44 = vld [vmem:[%s0 + $0xd8] sm:$0xff]
  %v45 = vld [vmem:[%s0 + $0xe0] sm:$0xff]
  %v46 = vld [vmem:[%s0 + $0xe8] sm:$0xff]
  %v47 = vld [vmem:[%s0 + $0xf0] sm:$0xff]
  %v48 = vld [vmem:[%s0 + $0xf8] sm:$0xff]
  %v49 = vld [vmem:[%s0 + $0x100] sm:$0xff]
  %v50 = vld [vmem:[%s0 + $0x108] sm:$0xff]
  %v51 = vld [vmem:[%s0 + $0x110] sm:$0xff]
  %v52 = vld [vmem:[%s0 + $0x118] sm:$0xff]
  %v53 = vld [vmem:[%s0 + $0x120] sm:$0xff]
  %v54 = vld [vmem:[%s0 + $0x128] sm:$0xff]
  %v55 = vld [vmem:[%s0 + $0x130] sm:$0xff]
  %v56 = vld [vmem:[%s0 + $0x138] sm:$0xff]
  %v57 = vld [vmem:[%s0 + $0x140] sm:$0xff]
  %v58 = vld [vmem:[%s0 + $0x148] sm:$0xff]
  %v59 = vld [vmem:[%s0 + $0x150] sm:$0xff]
  %v60 = vld [vmem:[%s0 + $0x158] sm:$0xff]
  %v61 = vld [vmem:[%s0 + $0x160] sm:$0xff]
  %v62 = vld [vmem:[%s0 + $0x168] sm:$0xff]
  %v63 = vld [vmem:[%s0 + $0x170] sm:$0xff]
  %v64 = vld [vmem:[%s0 + $0x178] sm:$0xff]
  %v65 = vld [vmem:[%s0 + $0x180] sm:$0xff]
  %v66 = vld [vmem:[%s0 + $0x188] sm:$0xff]
  %v67 = vld [vmem:[%s0 + $0x190] sm:$0xff]
  %v68 = vld [vmem:[%s0 + $0x198] sm:$0xff]
  %v69 = vld [vmem:[%s0 + $0x1a0] sm:$0xff]
  %v70 = vld [vmem:[%s0 + $0x1a8] sm:$0xff]
  %v71 = vld [vmem:[%s0 + $0x1b0] sm:$0xff]
  %v72 = vld [vmem:[%s0 + $0x1b8] sm:$0xff]
  %v73 = vld [vmem:[%s0 + $0x1c0] sm:$0xff]
  %v74 = vld [vmem:[%s0 + $0x1c8] sm:$0xff]
  %v75 = vld [vmem:[%s0 + $0x1d0] sm:$0xff]
  %v76 = vld [vmem:[%s0 + $0x1d8] sm:$0xff]
  %v77 = vld [vmem:[%s0 + $0x1e0] sm:$0xff]
  %v78 = vld [vmem:[%s0 + $0x1e8] sm:$0xff]
  %v79 = vld [vmem:[%s0 + $0x1f0] sm:$0xff]
  %v80 = vld [vmem:[%s0 + $0x1f8] sm:$0xff]
  %v81 = vld [vmem:[%s1] sm:$0xff]
  %v82 = vld [vmem:[%s1 + $0x8] sm:$0xff]
  %v83 = vld [vmem:[%s1 + $0x10] sm:$0xff]
  %v84 = vld [vmem:[%s1 + $0x18] sm:$0xff]
  %v85 = vld [vmem:[%s1 + $0x20] sm:$0xff]
  %v86 = vld [vmem:[%s1 + $0x28] sm:$0xff]
  %v87 = vld [vmem:[%s1 + $0x30] sm:$0xff]
  %v88 = vld [vmem:[%s1 + $0x38] sm:$0xff]
  %v89 = vld [vmem:[%s1 + $0x40] sm:$0xff]
  %v90 = vld [vmem:[%s1 + $0x48] sm:$0xff]
  %v91 = vld [vmem:[%s1 + $0x50] sm:$0xff]
  %v92 = vld [vmem:[%s1 + $0x58] sm:$0xff]
  %v93 = vld [vmem:[%s1 + $0x60] sm:$0xff]
  %v94 = vld [vmem:[%s1 + $0x68] sm:$0xff]
  %v95 = vld [vmem:[%s1 + $0x70] sm:$0xff]
  %v96 = vld [vmem:[%s1 + $0x78] sm:$0xff]
  %v97 = vld [vmem:[%s1 + $0x80] sm:$0xff]
  %v98 = vld [vmem:[%s1 + $0x88] sm:$0xff]
  %v99 = vld [vmem:[%s1 + $0x90] sm:$0xff]
  %v100 = vld [vmem:[%s1 + $0x98] sm:$0xff]
  %v101 = vld [vmem:[%s1 + $0xa0] sm:$0xff]
  %v102 = vld [vmem:[%s1 + $0xa8] sm:$0xff]
  %v103 = vld [vmem:[%s1 + $0xb0] sm:$0xff]
  %v104 = vld [vmem:[%s1 + $0xb8] sm:$0xff]
  %v105 = vld [vmem:[%s1 + $0xc0] sm:$0xff]
  %v106 = vld [vmem:[%s1 + $0xc8] sm:$0xff]
  %v107 = vld [vmem:[%s1 + $0xd0] sm:$0xff]
  %v108 = vld [vmem:[%s1 + $0xd8] sm:$0xff]
  %v109 = vld [vmem:[%s1 + $0xe0] sm:$0xff]
  %v110 = vld [vmem:[%s1 + $0xe8] sm:$0xff]
  %v111 = vld [vmem:[%s1 + $0xf0] sm:$0xff]
  %v112 = vld [vmem:[%s1 + $0xf8] sm:$0xff]
  %v113 = vld [vmem:[%s1 + $0x100] sm:$0xff]
  %v114 = vld [vmem:[%s1 + $0x108] sm:$0xff]
  %v115 = vld [vmem:[%s1 + $0x110] sm:$0xff]
  %v116 = vld [vmem:[%s1 + $0x118] sm:$0xff]
  %v117 = vld [vmem:[%s1 + $0x120] sm:$0xff]
  %v118 = vld [vmem:[%s1 + $0x128] sm:$0xff]
  %v119 = vld [vmem:[%s1 + $0x130] sm:$0xff]
  %v120 = vld [vmem:[%s1 + $0x138] sm:$0xff]
  %v121 = vld [vmem:[%s1 + $0x140] sm:$0xff]
  %v122 = vld [vmem:[%s1 + $0x148] sm:$0xff]
  %v123 = vld [vmem:[%s1 + $0x150] sm:$0xff]
  %v124 = vld [vmem:[%s1 + $0x158] sm:$0xff]
  %v125 = vld [vmem:[%s1 + $0x160] sm:$0xff]
  %v126 = vld [vmem:[%s1 + $0x168] sm:$0xff]
  %v127 = vld [vmem:[%s1 + $0x170] sm:$0xff]
  %v128 = vld [vmem:[%s1 + $0x178] sm:$0xff]
  %v129 = vld [vmem:[%s1 + $0x180] sm:$0xff]
  %v130 = vld [vmem:[%s1 + $0x188] sm:$0xff]
  %v131 = vld [vmem:[%s1 + $0x190] sm:$0xff]
  %v132 = vld [vmem:[%s1 + $0x198] sm:$0xff]
  %v133 = vld [vmem:[%s1 + $0x1a0] sm:$0xff]
  %v134 = vld [vmem:[%s1 + $0x1a8] sm:$0xff]
  %v135 = vld [vmem:[%s1 + $0x1b0] sm:$0xff]
  %v136 = vld [vmem:[%s1 + $0x1b8] sm:$0xff]
  %v137 = vld [vmem:[%s1 + $0x1c0] sm:$0xff]
  %v138 = vld [vmem:[%s1 + $0x1c8] sm:$0xff]
  %v139 = vld [vmem:[%s1 + $0x1d0] sm:$0xff]
  %v140 = vld [vmem:[%s1 + $0x1d8] sm:$0xff]
  %v141 = vld [vmem:[%s1 + $0x1e0] sm:$0xff]
  %v142 = vld [vmem:[%s1 + $0x1e8] sm:$0xff]
  %v143 = vld [vmem:[%s1 + $0x1f0] sm:$0xff]
  %v144 = vld [vmem:[%s1 + $0x1f8] sm:$0xff]
  %v145 = vld [vmem:[%s1 + $0x200] sm:$0xff]
  %v146 = vld [vmem:[%s1 + $0x208] sm:$0xff]
  %v147 = vld [vmem:[%s1 + $0x210] sm:$0xff]
  %v148 = vld [vmem:[%s1 + $0x218] sm:$0xff]
  %v149 = vld [vmem:[%s1 + $0x220] sm:$0xff]
  %v150 = vld [vmem:[%s1 + $0x228] sm:$0xff]
  %v151 = vld [vmem:[%s1 + $0x230] sm:$0xff]
  %v152 = vld [vmem:[%s1 + $0x238] sm:$0xff]
  %v153 = vld [vmem:[%s1 + $0x240] sm:$0xff]
  %v154 = vld [vmem:[%s1 + $0x248] sm:$0xff]
  %v155 = vld [vmem:[%s1 + $0x250] sm:$0xff]
  %v156 = vld [vmem:[%s1 + $0x258] sm:$0xff]
  %v157 = vld [vmem:[%s1 + $0x260] sm:$0xff]
  %v158 = vld [vmem:[%s1 + $0x268] sm:$0xff]
  %v159 = vld [vmem:[%s1 + $0x270] sm:$0xff]
  %v160 = vld [vmem:[%s1 + $0x278] sm:$0xff]
  %v161 = vld [vmem:[%s1 + $0x280] sm:$0xff]
  %v162 = vld [vmem:[%s1 + $0x288] sm:$0xff]
  %v163 = vld [vmem:[%s1 + $0x290] sm:$0xff]
  %v164 = vld [vmem:[%s1 + $0x298] sm:$0xff]
  %v165 = vld [vmem:[%s1 + $0x2a0] sm:$0xff]
  %v166 = vld [vmem:[%s1 + $0x2a8] sm:$0xff]
  %v167 = vld [vmem:[%s1 + $0x2b0] sm:$0xff]
  %v168 = vld [vmem:[%s1 + $0x2b8] sm:$0xff]
  %v169 = vld [vmem:[%s1 + $0x2c0] sm:$0xff]
  %v170 = vld [vmem:[%s1 + $0x2c8] sm:$0xff]
  %v171 = vld [vmem:[%s1 + $0x2d0] sm:$0xff]
  %v172 = vld [vmem:[%s1 + $0x2d8] sm:$0xff]
  %v173 = vld [vmem:[%s1 + $0x2e0] sm:$0xff]
  %v174 = vld [vmem:[%s1 + $0x2e8] sm:$0xff]
  %v175 = vld [vmem:[%s1 + $0x2f0] sm:$0xff]
  %v176 = vld [vmem:[%s1 + $0x2f8] sm:$0xff]
  %v177 = vld [vmem:[%s1 + $0x300] sm:$0xff]
  %v178 = vld [vmem:[%s1 + $0x308] sm:$0xff]
  %v179 = vld [vmem:[%s1 + $0x310] sm:$0xff]
  %v180 = vld [vmem:[%s1 + $0x318] sm:$0xff]
  %v181 = vld [vmem:[%s1 + $0x320] sm:$0xff]
  %v182 = vld [vmem:[%s1 + $0x328] sm:$0xff]
  %v183 = vld [vmem:[%s1 + $0x330] sm:$0xff]
  %v184 = vld [vmem:[%s1 + $0x338] sm:$0xff]
  %v185 = vld [vmem:[%s1 + $0x340] sm:$0xff]
  %v186 = vld [vmem:[%s1 + $0x348] sm:$0xff]
  %v187 = vld [vmem:[%s1 + $0x350] sm:$0xff]
  %v188 = vld [vmem:[%s1 + $0x358] sm:$0xff]
  %v189 = vld [vmem:[%s1 + $0x360] sm:$0xff]
  %v190 = vld [vmem:[%s1 + $0x368] sm:$0xff]
  %v191 = vld [vmem:[%s1 + $0x370] sm:$0xff]
  %v192 = vld [vmem:[%s1 + $0x378] sm:$0xff]
  %v193 = vld [vmem:[%s1 + $0x380] sm:$0xff]
  %v194 = vld [vmem:[%s1 + $0x388] sm:$0xff]
  %v195 = vld [vmem:[%s1 + $0x390] sm:$0xff]
  %v196 = vld [vmem:[%s1 + $0x398] sm:$0xff]
  %v197 = vld [vmem:[%s1 + $0x3a0] sm:$0xff]
  %v198 = vld [vmem:[%s1 + $0x3a8] sm:$0xff]
  %v199 = vld [vmem:[%s1 + $0x3b0] sm:$0xff]
  %v200 = vld [vmem:[%s1 + $0x3b8] sm:$0xff]
  %v201 = vld [vmem:[%s1 + $0x3c0] sm:$0xff]
  %v202 = vld [vmem:[%s1 + $0x3c8] sm:$0xff]
  %v203 = vld [vmem:[%s1 + $0x3d0] sm:$0xff]
  %v204 = vld [vmem:[%s1 + $0x3d8] sm:$0xff]
  %v205 = vld [vmem:[%s1 + $0x3e0] sm:$0xff]
  %v206 = vld [vmem:[%s1 + $0x3e8] sm:$0xff]
  %v207 = vld [vmem:[%s1 + $0x3f0] sm:$0xff]
  %v208 = vld [vmem:[%s1 + $0x3f8] sm:$0xff]
  %v209 = vld [vmem:[%s1 + $0x400] sm:$0xff]
  %v210 = vld [vmem:[%s1 + $0x408] sm:$0xff]
  %v211 = vld [vmem:[%s1 + $0x410] sm:$0xff]
  %v212 = vld [vmem:[%s1 + $0x418] sm:$0xff]
  %v213 = vld [vmem:[%s1 + $0x420] sm:$0xff]
  %v214 = vld [vmem:[%s1 + $0x428] sm:$0xff]
  %v215 = vld [vmem:[%s1 + $0x430] sm:$0xff]
  %v216 = vld [vmem:[%s1 + $0x438] sm:$0xff]
  %v217 = vld [vmem:[%s1 + $0x440] sm:$0xff]
  %v218 = vld [vmem:[%s1 + $0x448] sm:$0xff]
  %v219 = vld [vmem:[%s1 + $0x450] sm:$0xff]
  %v220 = vld [vmem:[%s1 + $0x458] sm:$0xff]
  %v221 = vld [vmem:[%s1 + $0x460] sm:$0xff]
  %v222 = vld [vmem:[%s1 + $0x468] sm:$0xff]
  %v223 = vld [vmem:[%s1 + $0x470] sm:$0xff]
  %v224 = vld [vmem:[%s1 + $0x478] sm:$0xff]
  %v225 = vld [vmem:[%s1 + $0x480] sm:$0xff]
  %v226 = vld [vmem:[%s1 + $0x488] sm:$0xff]
  %v227 = vld [vmem:[%s1 + $0x490] sm:$0xff]
  %v228 = vld [vmem:[%s1 + $0x498] sm:$0xff]
  %v229 = vld [vmem:[%s1 + $0x4a0] sm:$0xff]
  %v230 = vld [vmem:[%s1 + $0x4a8] sm:$0xff]
  %v231 = vld [vmem:[%s1 + $0x4b0] sm:$0xff]
  %v232 = vld [vmem:[%s1 + $0x4b8] sm:$0xff]
  %v233 = vld [vmem:[%s1 + $0x4c0] sm:$0xff]
  %v234 = vld [vmem:[%s1 + $0x4c8] sm:$0xff]
  %v235 = vld [vmem:[%s1 + $0x4d0] sm:$0xff]
  %v236 = vld [vmem:[%s1 + $0x4d8] sm:$0xff]
  %v237 = vld [vmem:[%s1 + $0x4e0] sm:$0xff]
  %v238 = vld [vmem:[%s1 + $0x4e8] sm:$0xff]
  %v239 = vld [vmem:[%s1 + $0x4f0] sm:$0xff]
  %v240 = vld [vmem:[%s1 + $0x4f8] sm:$0xff]
  %v241 = vld [vmem:[%s1 + $0x500] sm:$0xff]
  %v242 = vld [vmem:[%s1 + $0x508] sm:$0xff]
  %v243 = vld [vmem:[%s1 + $0x510] sm:$0xff]
  %v244 = vld [vmem:[%s1 + $0x518] sm:$0xff]
  %v245 = vld [vmem:[%s1 + $0x520] sm:$0xff]
  %v246 = vld [vmem:[%s1 + $0x528] sm:$0xff]
  %v247 = vld [vmem:[%s1 + $0x530] sm:$0xff]
  %v248 = vld [vmem:[%s1 + $0x538] sm:$0xff]
  %v249 = vld [vmem:[%s1 + $0x540] sm:$0xff]
  %v250 = vld [vmem:[%s1 + $0x548] sm:$0xff]
  %v251 = vld [vmem:[%s1 + $0x550] sm:$0xff]
  %v252 = vld [vmem:[%s1 + $0x558] sm:$0xff]
  %v253 = vld [vmem:[%s1 + $0x560] sm:$0xff]
  %v254 = vld [vmem:[%s1 + $0x568] sm:$0xff]
  %v255 = vld [vmem:[%s1 + $0x570] sm:$0xff]
  %v256 = vld [vmem:[%s1 + $0x578] sm:$0xff]
  %v257 = vld [vmem:[%s1 + $0x580] sm:$0xff]
  %v258 = vld [vmem:[%s1 + $0x588] sm:$0xff]
  %v259 = vld [vmem:[%s1 + $0x590] sm:$0xff]
  %v260 = vld [vmem:[%s1 + $0x598] sm:$0xff]
  %v261 = vld [vmem:[%s1 + $0x5a0] sm:$0xff]
  %v262 = vld [vmem:[%s1 + $0x5a8] sm:$0xff]
  %v263 = vld [vmem:[%s1 + $0x5b0] sm:$0xff]
  %v264 = vld [vmem:[%s1 + $0x5b8] sm:$0xff]
  %v265 = vld [vmem:[%s1 + $0x5c0] sm:$0xff]
  %v266 = vld [vmem:[%s1 + $0x5c8] sm:$0xff]
  %v267 = vld [vmem:[%s1 + $0x5d0] sm:$0xff]
  %v268 = vld [vmem:[%s1 + $0x5d8] sm:$0xff]
  %v269 = vld [vmem:[%s1 + $0x5e0] sm:$0xff]
  %v270 = vld [vmem:[%s1 + $0x5e8] sm:$0xff]
  %v271 = vld [vmem:[%s1 + $0x5f0] sm:$0xff]
  %v272 = vld [vmem:[%s1 + $0x5f8] sm:$0xff]
  %v273 = vld [vmem:[%s1 + $0x600] sm:$0xff]
  %v274 = vld [vmem:[%s1 + $0x608] sm:$0xff]
  %v275 = vld [vmem:[%s1 + $0x610] sm:$0xff]
  %v276 = vld [vmem:[%s1 + $0x618] sm:$0xff]
  %v277 = vld [vmem:[%s1 + $0x620] sm:$0xff]
  %v278 = vld [vmem:[%s1 + $0x628] sm:$0xff]
  %v279 = vld [vmem:[%s1 + $0x630] sm:$0xff]
  %v280 = vld [vmem:[%s1 + $0x638] sm:$0xff]
  %v281 = vld [vmem:[%s1 + $0x640] sm:$0xff]
  %v282 = vld [vmem:[%s1 + $0x648] sm:$0xff]
  %v283 = vld [vmem:[%s1 + $0x650] sm:$0xff]
  %v284 = vld [vmem:[%s1 + $0x658] sm:$0xff]
  %v285 = vld [vmem:[%s1 + $0x660] sm:$0xff]
  %v286 = vld [vmem:[%s1 + $0x668] sm:$0xff]
  %v287 = vld [vmem:[%s1 + $0x670] sm:$0xff]
  %v288 = vld [vmem:[%s1 + $0x678] sm:$0xff]
  %v289 = vld [vmem:[%s1 + $0x680] sm:$0xff]
  %v290 = vld [vmem:[%s1 + $0x688] sm:$0xff]
  %v291 = vld [vmem:[%s1 + $0x690] sm:$0xff]
  %v292 = vld [vmem:[%s1 + $0x698] sm:$0xff]
  %v293 = vld [vmem:[%s1 + $0x6a0] sm:$0xff]
  %v294 = vld [vmem:[%s1 + $0x6a8] sm:$0xff]
  %v295 = vld [vmem:[%s1 + $0x6b0] sm:$0xff]
  %v296 = vld [vmem:[%s1 + $0x6b8] sm:$0xff]
  %v297 = vld [vmem:[%s1 + $0x6c0] sm:$0xff]
  %v298 = vld [vmem:[%s1 + $0x6c8] sm:$0xff]
  %v299 = vld [vmem:[%s1 + $0x6d0] sm:$0xff]
  %v300 = vld [vmem:[%s1 + $0x6d8] sm:$0xff]
  %v301 = vld [vmem:[%s1 + $0x6e0] sm:$0xff]
  %v302 = vld [vmem:[%s1 + $0x6e8] sm:$0xff]
  %v303 = vld [vmem:[%s1 + $0x6f0] sm:$0xff]
  %v304 = vld [vmem:[%s1 + $0x6f8] sm:$0xff]
  %v305 = vld [vmem:[%s1 + $0x700] sm:$0xff]
  %v306 = vld [vmem:[%s1 + $0x708] sm:$0xff]
  %v307 = vld [vmem:[%s1 + $0x710] sm:$0xff]
  %v308 = vld [vmem:[%s1 + $0x718] sm:$0xff]
  %v309 = vld [vmem:[%s1 + $0x720] sm:$0xff]
  %v310 = vld [vmem:[%s1 + $0x728] sm:$0xff]
  %v311 = vld [vmem:[%s1 + $0x730] sm:$0xff]
  %v312 = vld [vmem:[%s1 + $0x738] sm:$0xff]
  %v313 = vld [vmem:[%s1 + $0x740] sm:$0xff]
  %v314 = vld [vmem:[%s1 + $0x748] sm:$0xff]
  %v315 = vld [vmem:[%s1 + $0x750] sm:$0xff]
  %v316 = vld [vmem:[%s1 + $0x758] sm:$0xff]
  %v317 = vld [vmem:[%s1 + $0x760] sm:$0xff]
  %v318 = vld [vmem:[%s1 + $0x768] sm:$0xff]
  %v319 = vld [vmem:[%s1 + $0x770] sm:$0xff]
  %v320 = vld [vmem:[%s1 + $0x778] sm:$0xff]
  %v321 = vld [vmem:[%s1 + $0x780] sm:$0xff]
  %v322 = vld [vmem:[%s1 + $0x788] sm:$0xff]
  %v323 = vld [vmem:[%s1 + $0x790] sm:$0xff]
  %v324 = vld [vmem:[%s1 + $0x798] sm:$0xff]
  %v325 = vld [vmem:[%s1 + $0x7a0] sm:$0xff]
  %v326 = vld [vmem:[%s1 + $0x7a8] sm:$0xff]
  %v327 = vld [vmem:[%s1 + $0x7b0] sm:$0xff]
  %v328 = vld [vmem:[%s1 + $0x7b8] sm:$0xff]
  %v329 = vld [vmem:[%s1 + $0x7c0] sm:$0xff]
  %v330 = vld [vmem:[%s1 + $0x7c8] sm:$0xff]
  %v331 = vld [vmem:[%s1 + $0x7d0] sm:$0xff]
  %v332 = vld [vmem:[%s1 + $0x7d8] sm:$0xff]
  %v333 = vld [vmem:[%s1 + $0x7e0] sm:$0xff]
  %v334 = vld [vmem:[%s1 + $0x7e8] sm:$0xff]
  %v335 = vld [vmem:[%s1 + $0x7f0] sm:$0xff]
  %v336 = vld [vmem:[%s1 + $0x7f8] sm:$0xff]
  %v337 = vld [vmem:[%s1 + $0x800] sm:$0xff]
  %v338 = vld [vmem:[%s1 + $0x808] sm:$0xff]
  %v339 = vld [vmem:[%s1 + $0x810] sm:$0xff]
  %v340 = vld [vmem:[%s1 + $0x818] sm:$0xff]
  %v341 = vld [vmem:[%s1 + $0x820] sm:$0xff]
  %v342 = vld [vmem:[%s1 + $0x828] sm:$0xff]
  %v343 = vld [vmem:[%s1 + $0x830] sm:$0xff]
  %v344 = vld [vmem:[%s1 + $0x838] sm:$0xff]
  %v345 = vld [vmem:[%s1 + $0x840] sm:$0xff]
  %v346 = vld [vmem:[%s1 + $0x848] sm:$0xff]
  %v347 = vld [vmem:[%s1 + $0x850] sm:$0xff]
  %v348 = vld [vmem:[%s1 + $0x858] sm:$0xff]
  %v349 = vld [vmem:[%s1 + $0x860] sm:$0xff]
  %v350 = vld [vmem:[%s1 + $0x868] sm:$0xff]
  %v351 = vld [vmem:[%s1 + $0x870] sm:$0xff]
  %v352 = vld [vmem:[%s1 + $0x878] sm:$0xff]
  %v353 = vld [vmem:[%s1 + $0x880] sm:$0xff]
  %v354 = vld [vmem:[%s1 + $0x888] sm:$0xff]
  %v355 = vld [vmem:[%s1 + $0x890] sm:$0xff]
  %v356 = vld [vmem:[%s1 + $0x898] sm:$0xff]
  %v357 = vld [vmem:[%s1 + $0x8a0] sm:$0xff]
  %v358 = vld [vmem:[%s1 + $0x8a8] sm:$0xff]
  %v359 = vld [vmem:[%s1 + $0x8b0] sm:$0xff]
  %v360 = vld [vmem:[%s1 + $0x8b8] sm:$0xff]
  %v361 = vld [vmem:[%s1 + $0x8c0] sm:$0xff]
  %v362 = vld [vmem:[%s1 + $0x8c8] sm:$0xff]
  %v363 = vld [vmem:[%s1 + $0x8d0] sm:$0xff]
  %v364 = vld [vmem:[%s1 + $0x8d8] sm:$0xff]
  %v365 = vld [vmem:[%s1 + $0x8e0] sm:$0xff]
  %v366 = vld [vmem:[%s1 + $0x8e8] sm:$0xff]
  %v367 = vld [vmem:[%s1 + $0x8f0] sm:$0xff]
  %v368 = vld [vmem:[%s1 + $0x8f8] sm:$0xff]
  %v369 = vld [vmem:[%s1 + $0x900] sm:$0xff]
  %v370 = vld [vmem:[%s1 + $0x908] sm:$0xff]
  %v371 = vld [vmem:[%s1 + $0x910] sm:$0xff]
  %v372 = vld [vmem:[%s1 + $0x918] sm:$0xff]
  %v373 = vld [vmem:[%s1 + $0x920] sm:$0xff]
  %v374 = vld [vmem:[%s1 + $0x928] sm:$0xff]
  %v375 = vld [vmem:[%s1 + $0x930] sm:$0xff]
  %v376 = vld [vmem:[%s1 + $0x938] sm:$0xff]
  %v377 = vld [vmem:[%s1 + $0x940] sm:$0xff]
  %v378 = vld [vmem:[%s1 + $0x948] sm:$0xff]
  %v379 = vld [vmem:[%s1 + $0x950] sm:$0xff]
  %v380 = vld [vmem:[%s1 + $0x958] sm:$0xff]
  %v381 = vld [vmem:[%s1 + $0x960] sm:$0xff]
  %v382 = vld [vmem:[%s1 + $0x968] sm:$0xff]
  %v383 = vld [vmem:[%s1 + $0x970] sm:$0xff]
  %v384 = vld [vmem:[%s1 + $0x978] sm:$0xff]
  %v385 = vld [vmem:[%s1 + $0x980] sm:$0xff]
  %v386 = vld [vmem:[%s1 + $0x988] sm:$0xff]
  %v387 = vld [vmem:[%s1 + $0x990] sm:$0xff]
  %v388 = vld [vmem:[%s1 + $0x998] sm:$0xff]
  %v389 = vld [vmem:[%s1 + $0x9a0] sm:$0xff]
  %v390 = vld [vmem:[%s1 + $0x9a8] sm:$0xff]
  %v391 = vld [vmem:[%s1 + $0x9b0] sm:$0xff]
  %v392 = vld [vmem:[%s1 + $0x9b8] sm:$0xff]
  %v393 = vld [vmem:[%s1 + $0x9c0] sm:$0xff]
  %v394 = vld [vmem:[%s1 + $0x9c8] sm:$0xff]
  %v395 = vld [vmem:[%s1 + $0x9d0] sm:$0xff]
  %v396 = vld [vmem:[%s1 + $0x9d8] sm:$0xff]
  %v397 = vld [vmem:[%s1 + $0x9e0] sm:$0xff]
  %v398 = vld [vmem:[%s1 + $0x9e8] sm:$0xff]
  %v399 = vld [vmem:[%s1 + $0x9f0] sm:$0xff]
  %v400 = vld [vmem:[%s1 + $0x9f8] sm:$0xff]
  %v401 = vld [vmem:[%s1 + $0xa00] sm:$0xff]
  %v402 = vld [vmem:[%s1 + $0xa08] sm:$0xff]
  %v403 = vld [vmem:[%s1 + $0xa10] sm:$0xff]
  %v404 = vld [vmem:[%s1 + $0xa18] sm:$0xff]
  %v405 = vld [vmem:[%s1 + $0xa20] sm:$0xff]
  %v406 = vld [vmem:[%s1 + $0xa28] sm:$0xff]
  %v407 = vld [vmem:[%s1 + $0xa30] sm:$0xff]
  %v408 = vld [vmem:[%s1 + $0xa38] sm:$0xff]
  %v409 = vld [vmem:[%s1 + $0xa40] sm:$0xff]
  %v410 = vld [vmem:[%s1 + $0xa48] sm:$0xff]
  %v411 = vld [vmem:[%s1 + $0xa50] sm:$0xff]
  %v412 = vld [vmem:[%s1 + $0xa58] sm:$0xff]
  %v413 = vld [vmem:[%s1 + $0xa60] sm:$0xff]
  %v414 = vld [vmem:[%s1 + $0xa68] sm:$0xff]
  %v415 = vld [vmem:[%s1 + $0xa70] sm:$0xff]
  %v416 = vld [vmem:[%s1 + $0xa78] sm:$0xff]
  %v417 = vld [vmem:[%s1 + $0xa80] sm:$0xff]
  %v418 = vld [vmem:[%s1 + $0xa88] sm:$0xff]
  %v419 = vld [vmem:[%s1 + $0xa90] sm:$0xff]
  %v420 = vld [vmem:[%s1 + $0xa98] sm:$0xff]
  %v421 = vld [vmem:[%s1 + $0xaa0] sm:$0xff]
  %v422 = vld [vmem:[%s1 + $0xaa8] sm:$0xff]
  %v423 = vld [vmem:[%s1 + $0xab0] sm:$0xff]
  %v424 = vld [vmem:[%s1 + $0xab8] sm:$0xff]
  %v425 = vld [vmem:[%s1 + $0xac0] sm:$0xff]
  %v426 = vld [vmem:[%s1 + $0xac8] sm:$0xff]
  %v427 = vld [vmem:[%s1 + $0xad0] sm:$0xff]
  %v428 = vld [vmem:[%s1 + $0xad8] sm:$0xff]
  %v429 = vld [vmem:[%s1 + $0xae0] sm:$0xff]
  %v430 = vld [vmem:[%s1 + $0xae8] sm:$0xff]
  %v431 = vld [vmem:[%s1 + $0xaf0] sm:$0xff]
  %v432 = vld [vmem:[%s1 + $0xaf8] sm:$0xff]
  %v433 = vld [vmem:[%s1 + $0xb00] sm:$0xff]
  %v434 = vld [vmem:[%s1 + $0xb08] sm:$0xff]
  %v435 = vld [vmem:[%s1 + $0xb10] sm:$0xff]
  %v436 = vld [vmem:[%s1 + $0xb18] sm:$0xff]
  %v437 = vld [vmem:[%s1 + $0xb20] sm:$0xff]
  %v438 = vld [vmem:[%s1 + $0xb28] sm:$0xff]
  %v439 = vld [vmem:[%s1 + $0xb30] sm:$0xff]
  %v440 = vld [vmem:[%s1 + $0xb38] sm:$0xff]
  %v441 = vld [vmem:[%s1 + $0xb40] sm:$0xff]
  %v442 = vld [vmem:[%s1 + $0xb48] sm:$0xff]
  %v443 = vld [vmem:[%s1 + $0xb50] sm:$0xff]
  %v444 = vld [vmem:[%s1 + $0xb58] sm:$0xff]
  %v445 = vld [vmem:[%s1 + $0xb60] sm:$0xff]
  %v446 = vld [vmem:[%s1 + $0xb68] sm:$0xff]
  %v447 = vld [vmem:[%s1 + $0xb70] sm:$0xff]
  %v448 = vld [vmem:[%s1 + $0xb78] sm:$0xff]
  %v449 = vld [vmem:[%s1 + $0xb80] sm:$0xff]
  %v450 = vld [vmem:[%s1 + $0xb88] sm:$0xff]
  %v451 = vld [vmem:[%s1 + $0xb90] sm:$0xff]
  %v452 = vld [vmem:[%s1 + $0xb98] sm:$0xff]
  %v453 = vld [vmem:[%s1 + $0xba0] sm:$0xff]
  %v454 = vld [vmem:[%s1 + $0xba8] sm:$0xff]
  %v455 = vld [vmem:[%s1 + $0xbb0] sm:$0xff]
  %v456 = vld [vmem:[%s1 + $0xbb8] sm:$0xff]
  %v457 = vld [vmem:[%s1 + $0xbc0] sm:$0xff]
  %v458 = vld [vmem:[%s1 + $0xbc8] sm:$0xff]
  %v459 = vld [vmem:[%s1 + $0xbd0] sm:$0xff]
  %v460 = vld [vmem:[%s1 + $0xbd8] sm:$0xff]
  %v461 = vld [vmem:[%s1 + $0xbe0] sm:$0xff]
  %v462 = vld [vmem:[%s1 + $0xbe8] sm:$0xff]
  %v463 = vld [vmem:[%s1 + $0xbf0] sm:$0xff]
  %v464 = vld [vmem:[%s1 + $0xbf8] sm:$0xff]
  %v465 = vld [vmem:[%s1 + $0xc00] sm:$0xff]
  %v466 = vld [vmem:[%s1 + $0xc08] sm:$0xff]
  %v467 = vld [vmem:[%s1 + $0xc10] sm:$0xff]
  %v468 = vld [vmem:[%s1 + $0xc18] sm:$0xff]
  %v469 = vld [vmem:[%s1 + $0xc20] sm:$0xff]
  %v470 = vld [vmem:[%s1 + $0xc28] sm:$0xff]
  %v471 = vld [vmem:[%s1 + $0xc30] sm:$0xff]
  %v472 = vld [vmem:[%s1 + $0xc38] sm:$0xff]
  %v473 = vld [vmem:[%s1 + $0xc40] sm:$0xff]
  %v474 = vld [vmem:[%s1 + $0xc48] sm:$0xff]
  %v475 = vld [vmem:[%s1 + $0xc50] sm:$0xff]
  %v476 = vld [vmem:[%s1 + $0xc58] sm:$0xff]
  %v477 = vld [vmem:[%s1 + $0xc60] sm:$0xff]
  %v478 = vld [vmem:[%s1 + $0xc68] sm:$0xff]
  %v479 = vld [vmem:[%s1 + $0xc70] sm:$0xff]
  %v480 = vld [vmem:[%s1 + $0xc78] sm:$0xff]
  %v481 = vld [vmem:[%s1 + $0xc80] sm:$0xff]
  %v482 = vld [vmem:[%s1 + $0xc88] sm:$0xff]
  %v483 = vld [vmem:[%s1 + $0xc90] sm:$0xff]
  %v484 = vld [vmem:[%s1 + $0xc98] sm:$0xff]
  %v485 = vld [vmem:[%s1 + $0xca0] sm:$0xff]
  %v486 = vld [vmem:[%s1 + $0xca8] sm:$0xff]
  %v487 = vld [vmem:[%s1 + $0xcb0] sm:$0xff]
  %v488 = vld [vmem:[%s1 + $0xcb8] sm:$0xff]
  %v489 = vld [vmem:[%s1 + $0xcc0] sm:$0xff]
  %v490 = vld [vmem:[%s1 + $0xcc8] sm:$0xff]
  %v491 = vld [vmem:[%s1 + $0xcd0] sm:$0xff]
  %v492 = vld [vmem:[%s1 + $0xcd8] sm:$0xff]
  %v493 = vld [vmem:[%s1 + $0xce0] sm:$0xff]
  %v494 = vld [vmem:[%s1 + $0xce8] sm:$0xff]
  %v495 = vld [vmem:[%s1 + $0xcf0] sm:$0xff]
  %v496 = vld [vmem:[%s1 + $0xcf8] sm:$0xff]
  %v497 = vld [vmem:[%s1 + $0xd00] sm:$0xff]
  %v498 = vld [vmem:[%s1 + $0xd08] sm:$0xff]
  %v499 = vld [vmem:[%s1 + $0xd10] sm:$0xff]
  %v500 = vld [vmem:[%s1 + $0xd18] sm:$0xff]
  %v501 = vld [vmem:[%s1 + $0xd20] sm:$0xff]
  %v502 = vld [vmem:[%s1 + $0xd28] sm:$0xff]
  %v503 = vld [vmem:[%s1 + $0xd30] sm:$0xff]
  %v504 = vld [vmem:[%s1 + $0xd38] sm:$0xff]
  %v505 = vld [vmem:[%s1 + $0xd40] sm:$0xff]
  %v506 = vld [vmem:[%s1 + $0xd48] sm:$0xff]
  %v507 = vld [vmem:[%s1 + $0xd50] sm:$0xff]
  %v508 = vld [vmem:[%s1 + $0xd58] sm:$0xff]
  %v509 = vld [vmem:[%s1 + $0xd60] sm:$0xff]
  %v510 = vld [vmem:[%s1 + $0xd68] sm:$0xff]
  %v511 = vld [vmem:[%s1 + $0xd70] sm:$0xff]
  %v512 = vld [vmem:[%s1 + $0xd78] sm:$0xff]
  %v513 = vld [vmem:[%s1 + $0xd80] sm:$0xff]
  %v514 = vld [vmem:[%s1 + $0xd88] sm:$0xff]
  %v515 = vld [vmem:[%s1 + $0xd90] sm:$0xff]
  %v516 = vld [vmem:[%s1 + $0xd98] sm:$0xff]
  %v517 = vld [vmem:[%s1 + $0xda0] sm:$0xff]
  %v518 = vld [vmem:[%s1 + $0xda8] sm:$0xff]
  %v519 = vld [vmem:[%s1 + $0xdb0] sm:$0xff]
  %v520 = vld [vmem:[%s1 + $0xdb8] sm:$0xff]
  %v521 = vld [vmem:[%s1 + $0xdc0] sm:$0xff]
  %v522 = vld [vmem:[%s1 + $0xdc8] sm:$0xff]
  %v523 = vld [vmem:[%s1 + $0xdd0] sm:$0xff]
  %v524 = vld [vmem:[%s1 + $0xdd8] sm:$0xff]
  %v525 = vld [vmem:[%s1 + $0xde0] sm:$0xff]
  %v526 = vld [vmem:[%s1 + $0xde8] sm:$0xff]
  %v527 = vld [vmem:[%s1 + $0xdf0] sm:$0xff]
  %v528 = vld [vmem:[%s1 + $0xdf8] sm:$0xff]
  %v529 = vld [vmem:[%s1 + $0xe00] sm:$0xff]
  %v530 = vld [vmem:[%s1 + $0xe08] sm:$0xff]
  %v531 = vld [vmem:[%s1 + $0xe10] sm:$0xff]
  %v532 = vld [vmem:[%s1 + $0xe18] sm:$0xff]
  %v533 = vld [vmem:[%s1 + $0xe20] sm:$0xff]
  %v534 = vld [vmem:[%s1 + $0xe28] sm:$0xff]
  %v535 = vld [vmem:[%s1 + $0xe30] sm:$0xff]
  %v536 = vld [vmem:[%s1 + $0xe38] sm:$0xff]
  %v537 = vld [vmem:[%s1 + $0xe40] sm:$0xff]
  %v538 = vld [vmem:[%s1 + $0xe48] sm:$0xff]
  %v539 = vld [vmem:[%s1 + $0xe50] sm:$0xff]
  %v540 = vld [vmem:[%s1 + $0xe58] sm:$0xff]
  %v541 = vld [vmem:[%s1 + $0xe60] sm:$0xff]
  %v542 = vld [vmem:[%s1 + $0xe68] sm:$0xff]
  %v543 = vld [vmem:[%s1 + $0xe70] sm:$0xff]
  %v544 = vld [vmem:[%s1 + $0xe78] sm:$0xff]
  %v545 = vld [vmem:[%s1 + $0xe80] sm:$0xff]
  %v546 = vld [vmem:[%s1 + $0xe88] sm:$0xff]
  %v547 = vld [vmem:[%s1 + $0xe90] sm:$0xff]
  %v548 = vld [vmem:[%s1 + $0xe98] sm:$0xff]
  %v549 = vld [vmem:[%s1 + $0xea0] sm:$0xff]
  %v550 = vld [vmem:[%s1 + $0xea8] sm:$0xff]
  %v551 = vld [vmem:[%s1 + $0xeb0] sm:$0xff]
  %v552 = vld [vmem:[%s1 + $0xeb8] sm:$0xff]
  %v553 = vld [vmem:[%s1 + $0xec0] sm:$0xff]
  %v554 = vld [vmem:[%s1 + $0xec8] sm:$0xff]
  %v555 = vld [vmem:[%s1 + $0xed0] sm:$0xff]
  %v556 = vld [vmem:[%s1 + $0xed8] sm:$0xff]
  %v557 = vld [vmem:[%s1 + $0xee0] sm:$0xff]
  %v558 = vld [vmem:[%s1 + $0xee8] sm:$0xff]
  %v559 = vld [vmem:[%s1 + $0xef0] sm:$0xff]
  %v560 = vld [vmem:[%s1 + $0xef8] sm:$0xff]
  %v561 = vld [vmem:[%s1 + $0xf00] sm:$0xff]
  %v562 = vld [vmem:[%s1 + $0xf08] sm:$0xff]
  %v563 = vld [vmem:[%s1 + $0xf10] sm:$0xff]
  %v564 = vld [vmem:[%s1 + $0xf18] sm:$0xff]
  %v565 = vld [vmem:[%s1 + $0xf20] sm:$0xff]
  %v566 = vld [vmem:[%s1 + $0xf28] sm:$0xff]
  %v567 = vld [vmem:[%s1 + $0xf30] sm:$0xff]
  %v568 = vld [vmem:[%s1 + $0xf38] sm:$0xff]
  %v569 = vld [vmem:[%s1 + $0xf40] sm:$0xff]
  %v570 = vld [vmem:[%s1 + $0xf48] sm:$0xff]
  %v571 = vld [vmem:[%s1 + $0xf50] sm:$0xff]
  %v572 = vld [vmem:[%s1 + $0xf58] sm:$0xff]
  %v573 = vld [vmem:[%s1 + $0xf60] sm:$0xff]
  %v574 = vld [vmem:[%s1 + $0xf68] sm:$0xff]
  %v575 = vld [vmem:[%s1 + $0xf70] sm:$0xff]
  %v576 = vld [vmem:[%s1 + $0xf78] sm:$0xff]
  %v577 = vld [vmem:[%s1 + $0xf80] sm:$0xff]
  %v578 = vld [vmem:[%s1 + $0xf88] sm:$0xff]
  %v579 = vld [vmem:[%s1 + $0xf90] sm:$0xff]
  %v580 = vld [vmem:[%s1 + $0xf98] sm:$0xff]
  %v581 = vld [vmem:[%s1 + $0xfa0] sm:$0xff]
  %v582 = vld [vmem:[%s1 + $0xfa8] sm:$0xff]
  %v583 = vld [vmem:[%s1 + $0xfb0] sm:$0xff]
  %v584 = vld [vmem:[%s1 + $0xfb8] sm:$0xff]
  %v585 = vld [vmem:[%s1 + $0xfc0] sm:$0xff]
  %v586 = vld [vmem:[%s1 + $0xfc8] sm:$0xff]
  %v587 = vld [vmem:[%s1 + $0xfd0] sm:$0xff]
  %v588 = vld [vmem:[%s1 + $0xfd8] sm:$0xff]
  %v589 = vld [vmem:[%s1 + $0xfe0] sm:$0xff]
  %v590 = vld [vmem:[%s1 + $0xfe8] sm:$0xff]
  %v591 = vld [vmem:[%s1 + $0xff0] sm:$0xff]
  %v592 = vld [vmem:[%s1 + $0xff8] sm:$0xff]
  %v593 = vld [vmem:[%s1 + $0x1000] sm:$0xff]
  %v594 = vld [vmem:[%s1 + $0x1008] sm:$0xff]
  %v595 = vld [vmem:[%s1 + $0x1010] sm:$0xff]
  %v596 = vld [vmem:[%s1 + $0x1018] sm:$0xff]
  %v597 = vld [vmem:[%s1 + $0x1020] sm:$0xff]
  %v598 = vld [vmem:[%s1 + $0x1028] sm:$0xff]
  %v599 = vld [vmem:[%s1 + $0x1030] sm:$0xff]
  %v600 = vld [vmem:[%s1 + $0x1038] sm:$0xff]
  %v601 = vld [vmem:[%s1 + $0x1040] sm:$0xff]
  %v602 = vld [vmem:[%s1 + $0x1048] sm:$0xff]
  %v603 = vld [vmem:[%s1 + $0x1050] sm:$0xff]
  %v604 = vld [vmem:[%s1 + $0x1058] sm:$0xff]
  %v605 = vld [vmem:[%s1 + $0x1060] sm:$0xff]
  %v606 = vld [vmem:[%s1 + $0x1068] sm:$0xff]
  %v607 = vld [vmem:[%s1 + $0x1070] sm:$0xff]
  %v608 = vld [vmem:[%s1 + $0x1078] sm:$0xff]
  %v609 = vld [vmem:[%s1 + $0x1080] sm:$0xff]
  %v610 = vld [vmem:[%s1 + $0x1088] sm:$0xff]
  %v611 = vld [vmem:[%s1 + $0x1090] sm:$0xff]
  %v612 = vld [vmem:[%s1 + $0x1098] sm:$0xff]
  %v613 = vld [vmem:[%s1 + $0x10a0] sm:$0xff]
  %v614 = vld [vmem:[%s1 + $0x10a8] sm:$0xff]
  %v615 = vld [vmem:[%s1 + $0x10b0] sm:$0xff]
  %v616 = vld [vmem:[%s1 + $0x10b8] sm:$0xff]
  %v617 = vld [vmem:[%s1 + $0x10c0] sm:$0xff]
  %v618 = vld [vmem:[%s1 + $0x10c8] sm:$0xff]
  %v619 = vld [vmem:[%s1 + $0x10d0] sm:$0xff]
  %v620 = vld [vmem:[%s1 + $0x10d8] sm:$0xff]
  %v621 = vld [vmem:[%s1 + $0x10e0] sm:$0xff]
  %v622 = vld [vmem:[%s1 + $0x10e8] sm:$0xff]
  %v623 = vld [vmem:[%s1 + $0x10f0] sm:$0xff]
  %v624 = vld [vmem:[%s1 + $0x10f8] sm:$0xff]
  %v625 = vld [vmem:[%s1 + $0x1100] sm:$0xff]
  %v626 = vld [vmem:[%s1 + $0x1108] sm:$0xff]
  %v627 = vld [vmem:[%s1 + $0x1110] sm:$0xff]
  %v628 = vld [vmem:[%s1 + $0x1118] sm:$0xff]
  %v629 = vld [vmem:[%s1 + $0x1120] sm:$0xff]
  %v630 = vld [vmem:[%s1 + $0x1128] sm:$0xff]
  %v631 = vld [vmem:[%s1 + $0x1130] sm:$0xff]
  %v632 = vld [vmem:[%s1 + $0x1138] sm:$0xff]
  %v633 = vld [vmem:[%s1 + $0x1140] sm:$0xff]
  %v634 = vld [vmem:[%s1 + $0x1148] sm:$0xff]
  %v635 = vld [vmem:[%s1 + $0x1150] sm:$0xff]
  %v636 = vld [vmem:[%s1 + $0x1158] sm:$0xff]
  %v637 = vld [vmem:[%s1 + $0x1160] sm:$0xff]
  %v638 = vld [vmem:[%s1 + $0x1168] sm:$0xff]
  %v639 = vld [vmem:[%s1 + $0x1170] sm:$0xff]
  %v640 = vld [vmem:[%s1 + $0x1178] sm:$0xff]
  %v641 = vld [vmem:[%s1 + $0x1180] sm:$0xff]
  %v642 = vld [vmem:[%s1 + $0x1188] sm:$0xff]
  %v643 = vld [vmem:[%s1 + $0x1190] sm:$0xff]
  %v644 = vld [vmem:[%s1 + $0x1198] sm:$0xff]
  %v645 = vld [vmem:[%s1 + $0x11a0] sm:$0xff]
  %v646 = vld [vmem:[%s1 + $0x11a8] sm:$0xff]
  %v647 = vld [vmem:[%s1 + $0x11b0] sm:$0xff]
  %v648 = vld [vmem:[%s1 + $0x11b8] sm:$0xff]
  %v649 = vld [vmem:[%s1 + $0x11c0] sm:$0xff]
  %v650 = vld [vmem:[%s1 + $0x11c8] sm:$0xff]
  %v651 = vld [vmem:[%s1 + $0x11d0] sm:$0xff]
  %v652 = vld [vmem:[%s1 + $0x11d8] sm:$0xff]
  %v653 = vld [vmem:[%s1 + $0x11e0] sm:$0xff]
  %v654 = vld [vmem:[%s1 + $0x11e8] sm:$0xff]
  %v655 = vld [vmem:[%s1 + $0x11f0] sm:$0xff]
  %v656 = vld [vmem:[%s1 + $0x11f8] sm:$0xff]
  %v657 = vld [vmem:[%s1 + $0x1200] sm:$0xff]
  %v658 = vld [vmem:[%s1 + $0x1208] sm:$0xff]
  %v659 = vld [vmem:[%s1 + $0x1210] sm:$0xff]
  %v660 = vld [vmem:[%s1 + $0x1218] sm:$0xff]
  %v661 = vld [vmem:[%s1 + $0x1220] sm:$0xff]
  %v662 = vld [vmem:[%s1 + $0x1228] sm:$0xff]
  %v663 = vld [vmem:[%s1 + $0x1230] sm:$0xff]
  %v664 = vld [vmem:[%s1 + $0x1238] sm:$0xff]
  %v665 = vld [vmem:[%s1 + $0x1240] sm:$0xff]
  %v666 = vld [vmem:[%s1 + $0x1248] sm:$0xff]
  %v667 = vld [vmem:[%s1 + $0x1250] sm:$0xff]
  %v668 = vld [vmem:[%s1 + $0x1258] sm:$0xff]
  %v669 = vld [vmem:[%s1 + $0x1260] sm:$0xff]
  %v670 = vld [vmem:[%s1 + $0x1268] sm:$0xff]
  %v671 = vld [vmem:[%s1 + $0x1270] sm:$0xff]
  %v672 = vld [vmem:[%s1 + $0x1278] sm:$0xff]
  %v673 = vld [vmem:[%s1 + $0x1280] sm:$0xff]
  %v674 = vld [vmem:[%s1 + $0x1288] sm:$0xff]
  %v675 = vld [vmem:[%s1 + $0x1290] sm:$0xff]
  %v676 = vld [vmem:[%s1 + $0x1298] sm:$0xff]
  %v677 = vld [vmem:[%s1 + $0x12a0] sm:$0xff]
  %v678 = vld [vmem:[%s1 + $0x12a8] sm:$0xff]
  %v679 = vld [vmem:[%s1 + $0x12b0] sm:$0xff]
  %v680 = vld [vmem:[%s1 + $0x12b8] sm:$0xff]
  %v681 = vld [vmem:[%s1 + $0x12c0] sm:$0xff]
  %v682 = vld [vmem:[%s1 + $0x12c8] sm:$0xff]
  %v683 = vld [vmem:[%s1 + $0x12d0] sm:$0xff]
  %v684 = vld [vmem:[%s1 + $0x12d8] sm:$0xff]
  %v685 = vld [vmem:[%s1 + $0x12e0] sm:$0xff]
  %v686 = vld [vmem:[%s1 + $0x12e8] sm:$0xff]
  %v687 = vld [vmem:[%s1 + $0x12f0] sm:$0xff]
  %v688 = vld [vmem:[%s1 + $0x12f8] sm:$0xff]
  %v689 = vld [vmem:[%s1 + $0x1300] sm:$0xff]
  %v690 = vld [vmem:[%s1 + $0x1308] sm:$0xff]
  %v691 = vld [vmem:[%s1 + $0x1310] sm:$0xff]
  %v692 = vld [vmem:[%s1 + $0x1318] sm:$0xff]
  %v693 = vld [vmem:[%s1 + $0x1320] sm:$0xff]
  %v694 = vld [vmem:[%s1 + $0x1328] sm:$0xff]
  %v695 = vld [vmem:[%s1 + $0x1330] sm:$0xff]
  %v696 = vld [vmem:[%s1 + $0x1338] sm:$0xff]
  %v697 = vld [vmem:[%s1 + $0x1340] sm:$0xff]
  %v698 = vld [vmem:[%s1 + $0x1348] sm:$0xff]
  %v699 = vld [vmem:[%s1 + $0x1350] sm:$0xff]
  %v700 = vld [vmem:[%s1 + $0x1358] sm:$0xff]
  %v701 = vld [vmem:[%s1 + $0x1360] sm:$0xff]
  %v702 = vld [vmem:[%s1 + $0x1368] sm:$0xff]
  %v703 = vld [vmem:[%s1 + $0x1370] sm:$0xff]
  %v704 = vld [vmem:[%s1 + $0x1378] sm:$0xff]
  %v705 = vld [vmem:[%s1 + $0x1380] sm:$0xff]
  %v706 = vld [vmem:[%s1 + $0x1388] sm:$0xff]
  %v707 = vld [vmem:[%s1 + $0x1390] sm:$0xff]
  %v708 = vld [vmem:[%s1 + $0x1398] sm:$0xff]
  %v709 = vld [vmem:[%s1 + $0x13a0] sm:$0xff]
  %v710 = vld [vmem:[%s1 + $0x13a8] sm:$0xff]
  %v711 = vld [vmem:[%s1 + $0x13b0] sm:$0xff]
  %v712 = vld [vmem:[%s1 + $0x13b8] sm:$0xff]
  %v713 = vld [vmem:[%s1 + $0x13c0] sm:$0xff]
  %v714 = vld [vmem:[%s1 + $0x13c8] sm:$0xff]
  %v715 = vld [vmem:[%s1 + $0x13d0] sm:$0xff]
  %v716 = vld [vmem:[%s1 + $0x13d8] sm:$0xff]
  %v717 = vld [vmem:[%s1 + $0x13e0] sm:$0xff]
  %v718 = vld [vmem:[%s1 + $0x13e8] sm:$0xff]
  %v719 = vld [vmem:[%s1 + $0x13f0] sm:$0xff]
  %v720 = vld [vmem:[%s1 + $0x13f8] sm:$0xff]
  %v721 = vld [vmem:[%s1 + $0x1400] sm:$0xff]
  %v722 = vld [vmem:[%s1 + $0x1408] sm:$0xff]
  %v723 = vld [vmem:[%s1 + $0x1410] sm:$0xff]
  %v724 = vld [vmem:[%s1 + $0x1418] sm:$0xff]
  %v725 = vld [vmem:[%s1 + $0x1420] sm:$0xff]
  %v726 = vld [vmem:[%s1 + $0x1428] sm:$0xff]
  %v727 = vld [vmem:[%s1 + $0x1430] sm:$0xff]
  %v728 = vld [vmem:[%s1 + $0x1438] sm:$0xff]
  %v729 = vld [vmem:[%s1 + $0x1440] sm:$0xff]
  %v730 = vld [vmem:[%s1 + $0x1448] sm:$0xff]
  %v731 = vld [vmem:[%s1 + $0x1450] sm:$0xff]
  %v732 = vld [vmem:[%s1 + $0x1458] sm:$0xff]
  %v733 = vld [vmem:[%s1 + $0x1460] sm:$0xff]
  %v734 = vld [vmem:[%s1 + $0x1468] sm:$0xff]
  %v735 = vld [vmem:[%s1 + $0x1470] sm:$0xff]
  %v736 = vld [vmem:[%s1 + $0x1478] sm:$0xff]
  %v737 = vld [vmem:[%s1 + $0x1480] sm:$0xff]
  %v738 = vld [vmem:[%s1 + $0x1488] sm:$0xff]
  %v739 = vld [vmem:[%s1 + $0x1490] sm:$0xff]
  %v740 = vld [vmem:[%s1 + $0x1498] sm:$0xff]
  %v741 = vld [vmem:[%s1 + $0x14a0] sm:$0xff]
  %v742 = vld [vmem:[%s1 + $0x14a8] sm:$0xff]
  %v743 = vld [vmem:[%s1 + $0x14b0] sm:$0xff]
  %v744 = vld [vmem:[%s1 + $0x14b8] sm:$0xff]
  %v745 = vld [vmem:[%s1 + $0x14c0] sm:$0xff]
  %v746 = vld [vmem:[%s1 + $0x14c8] sm:$0xff]
  %v747 = vld [vmem:[%s1 + $0x14d0] sm:$0xff]
  %v748 = vld [vmem:[%s1 + $0x14d8] sm:$0xff]
  %v749 = vld [vmem:[%s1 + $0x14e0] sm:$0xff]
  %v750 = vld [vmem:[%s1 + $0x14e8] sm:$0xff]
  %v751 = vld [vmem:[%s1 + $0x14f0] sm:$0xff]
  %v752 = vld [vmem:[%s1 + $0x14f8] sm:$0xff]
  %v753 = vld [vmem:[%s1 + $0x1500] sm:$0xff]
  %v754 = vld [vmem:[%s1 + $0x1508] sm:$0xff]
  %v755 = vld [vmem:[%s1 + $0x1510] sm:$0xff]
  %v756 = vld [vmem:[%s1 + $0x1518] sm:$0xff]
  %v757 = vld [vmem:[%s1 + $0x1520] sm:$0xff]
  %v758 = vld [vmem:[%s1 + $0x1528] sm:$0xff]
  %v759 = vld [vmem:[%s1 + $0x1530] sm:$0xff]
  %v760 = vld [vmem:[%s1 + $0x1538] sm:$0xff]
  %v761 = vld [vmem:[%s1 + $0x1540] sm:$0xff]
  %v762 = vld [vmem:[%s1 + $0x1548] sm:$0xff]
  %v763 = vld [vmem:[%s1 + $0x1550] sm:$0xff]
  %v764 = vld [vmem:[%s1 + $0x1558] sm:$0xff]
  %v765 = vld [vmem:[%s1 + $0x1560] sm:$0xff]
  %v766 = vld [vmem:[%s1 + $0x1568] sm:$0xff]
  %v767 = vld [vmem:[%s1 + $0x1570] sm:$0xff]
  %v768 = vld [vmem:[%s1 + $0x1578] sm:$0xff]
  %v769 = vld [vmem:[%s1 + $0x1580] sm:$0xff]
  %v770 = vld [vmem:[%s1 + $0x1588] sm:$0xff]
  %v771 = vld [vmem:[%s1 + $0x1590] sm:$0xff]
  %v772 = vld [vmem:[%s1 + $0x1598] sm:$0xff]
  %v773 = vld [vmem:[%s1 + $0x15a0] sm:$0xff]
  %v774 = vld [vmem:[%s1 + $0x15a8] sm:$0xff]
  %v775 = vld [vmem:[%s1 + $0x15b0] sm:$0xff]
  %v776 = vld [vmem:[%s1 + $0x15b8] sm:$0xff]
  %v777 = vld [vmem:[%s1 + $0x15c0] sm:$0xff]
  %v778 = vld [vmem:[%s1 + $0x15c8] sm:$0xff]
  %v779 = vld [vmem:[%s1 + $0x15d0] sm:$0xff]
  %v780 = vld [vmem:[%s1 + $0x15d8] sm:$0xff]
  %v781 = vld [vmem:[%s1 + $0x15e0] sm:$0xff]
  %v782 = vld [vmem:[%s1 + $0x15e8] sm:$0xff]
  %v783 = vld [vmem:[%s1 + $0x15f0] sm:$0xff]
  %v784 = vld [vmem:[%s1 + $0x15f8] sm:$0xff]
  %v785 = vld [vmem:[%s1 + $0x1600] sm:$0xff]
  %v786 = vld [vmem:[%s1 + $0x1608] sm:$0xff]
  %v787 = vld [vmem:[%s1 + $0x1610] sm:$0xff]
  %v788 = vld [vmem:[%s1 + $0x1618] sm:$0xff]
  %v789 = vld [vmem:[%s1 + $0x1620] sm:$0xff]
  %v790 = vld [vmem:[%s1 + $0x1628] sm:$0xff]
  %v791 = vld [vmem:[%s1 + $0x1630] sm:$0xff]
  %v792 = vld [vmem:[%s1 + $0x1638] sm:$0xff]
  %v793 = vld [vmem:[%s1 + $0x1640] sm:$0xff]
  %v794 = vld [vmem:[%s1 + $0x1648] sm:$0xff]
  %v795 = vld [vmem:[%s1 + $0x1650] sm:$0xff]
  %v796 = vld [vmem:[%s1 + $0x1658] sm:$0xff]
  %v797 = vld [vmem:[%s1 + $0x1660] sm:$0xff]
  %v798 = vld [vmem:[%s1 + $0x1668] sm:$0xff]
  %v799 = vld [vmem:[%s1 + $0x1670] sm:$0xff]
  %v800 = vld [vmem:[%s1 + $0x1678] sm:$0xff]
  %v801 = vld [vmem:[%s1 + $0x1680] sm:$0xff]
  %v802 = vld [vmem:[%s1 + $0x1688] sm:$0xff]
  %v803 = vld [vmem:[%s1 + $0x1690] sm:$0xff]
  %v804 = vld [vmem:[%s1 + $0x1698] sm:$0xff]
  %v805 = vld [vmem:[%s1 + $0x16a0] sm:$0xff]
  %v806 = vld [vmem:[%s1 + $0x16a8] sm:$0xff]
  %v807 = vld [vmem:[%s1 + $0x16b0] sm:$0xff]
  %v808 = vld [vmem:[%s1 + $0x16b8] sm:$0xff]
  %v809 = vld [vmem:[%s1 + $0x16c0] sm:$0xff]
  %v810 = vld [vmem:[%s1 + $0x16c8] sm:$0xff]
  %v811 = vld [vmem:[%s1 + $0x16d0] sm:$0xff]
  %v812 = vld [vmem:[%s1 + $0x16d8] sm:$0xff]
  %v813 = vld [vmem:[%s1 + $0x16e0] sm:$0xff]
  %v814 = vld [vmem:[%s1 + $0x16e8] sm:$0xff]
  %v815 = vld [vmem:[%s1 + $0x16f0] sm:$0xff]
  %v816 = vld [vmem:[%s1 + $0x16f8] sm:$0xff]
  %v817 = vld [vmem:[%s1 + $0x1700] sm:$0xff]
  %v818 = vld [vmem:[%s1 + $0x1708] sm:$0xff]
  %v819 = vld [vmem:[%s1 + $0x1710] sm:$0xff]
  %v820 = vld [vmem:[%s1 + $0x1718] sm:$0xff]
  %v821 = vld [vmem:[%s1 + $0x1720] sm:$0xff]
  %v822 = vld [vmem:[%s1 + $0x1728] sm:$0xff]
  %v823 = vld [vmem:[%s1 + $0x1730] sm:$0xff]
  %v824 = vld [vmem:[%s1 + $0x1738] sm:$0xff]
  %v825 = vld [vmem:[%s1 + $0x1740] sm:$0xff]
  %v826 = vld [vmem:[%s1 + $0x1748] sm:$0xff]
  %v827 = vld [vmem:[%s1 + $0x1750] sm:$0xff]
  %v828 = vld [vmem:[%s1 + $0x1758] sm:$0xff]
  %v829 = vld [vmem:[%s1 + $0x1760] sm:$0xff]
  %v830 = vld [vmem:[%s1 + $0x1768] sm:$0xff]
  %v831 = vld [vmem:[%s1 + $0x1770] sm:$0xff]
  %v832 = vld [vmem:[%s1 + $0x1778] sm:$0xff]
  %v833 = vld [vmem:[%s1 + $0x1780] sm:$0xff]
  %v834 = vld [vmem:[%s1 + $0x1788] sm:$0xff]
  %v835 = vld [vmem:[%s1 + $0x1790] sm:$0xff]
  %v836 = vld [vmem:[%s1 + $0x1798] sm:$0xff]
  %v837 = vld [vmem:[%s1 + $0x17a0] sm:$0xff]
  %v838 = vld [vmem:[%s1 + $0x17a8] sm:$0xff]
  %v839 = vld [vmem:[%s1 + $0x17b0] sm:$0xff]
  %v840 = vld [vmem:[%s1 + $0x17b8] sm:$0xff]
  %v841 = vld [vmem:[%s1 + $0x17c0] sm:$0xff]
  %v842 = vld [vmem:[%s1 + $0x17c8] sm:$0xff]
  %v843 = vld [vmem:[%s1 + $0x17d0] sm:$0xff]
  %v844 = vld [vmem:[%s1 + $0x17d8] sm:$0xff]
  %v845 = vld [vmem:[%s1 + $0x17e0] sm:$0xff]
  %v846 = vld [vmem:[%s1 + $0x17e8] sm:$0xff]
  %v847 = vld [vmem:[%s1 + $0x17f0] sm:$0xff]
  %v848 = vld [vmem:[%s1 + $0x17f8] sm:$0xff]
  %v849 = vld [vmem:[%s1 + $0x1800] sm:$0xff]
  %v850 = vld [vmem:[%s1 + $0x1808] sm:$0xff]
  %v851 = vld [vmem:[%s1 + $0x1810] sm:$0xff]
  %v852 = vld [vmem:[%s1 + $0x1818] sm:$0xff]
  %v853 = vld [vmem:[%s1 + $0x1820] sm:$0xff]
  %v854 = vld [vmem:[%s1 + $0x1828] sm:$0xff]
  %v855 = vld [vmem:[%s1 + $0x1830] sm:$0xff]
  %v856 = vld [vmem:[%s1 + $0x1838] sm:$0xff]
  %v857 = vld [vmem:[%s1 + $0x1840] sm:$0xff]
  %v858 = vld [vmem:[%s1 + $0x1848] sm:$0xff]
  %v859 = vld [vmem:[%s1 + $0x1850] sm:$0xff]
  %v860 = vld [vmem:[%s1 + $0x1858] sm:$0xff]
  %v861 = vld [vmem:[%s1 + $0x1860] sm:$0xff]
  %v862 = vld [vmem:[%s1 + $0x1868] sm:$0xff]
  %v863 = vld [vmem:[%s1 + $0x1870] sm:$0xff]
  %v864 = vld [vmem:[%s1 + $0x1878] sm:$0xff]
  %v865 = vld [vmem:[%s1 + $0x1880] sm:$0xff]
  %v866 = vld [vmem:[%s1 + $0x1888] sm:$0xff]
  %v867 = vld [vmem:[%s1 + $0x1890] sm:$0xff]
  %v868 = vld [vmem:[%s1 + $0x1898] sm:$0xff]
  %v869 = vld [vmem:[%s1 + $0x18a0] sm:$0xff]
  %v870 = vld [vmem:[%s1 + $0x18a8] sm:$0xff]
  %v871 = vld [vmem:[%s1 + $0x18b0] sm:$0xff]
  %v872 = vld [vmem:[%s1 + $0x18b8] sm:$0xff]
  %v873 = vld [vmem:[%s1 + $0x18c0] sm:$0xff]
  %v874 = vld [vmem:[%s1 + $0x18c8] sm:$0xff]
  %v875 = vld [vmem:[%s1 + $0x18d0] sm:$0xff]
  %v876 = vld [vmem:[%s1 + $0x18d8] sm:$0xff]
  %v877 = vld [vmem:[%s1 + $0x18e0] sm:$0xff]
  %v878 = vld [vmem:[%s1 + $0x18e8] sm:$0xff]
  %v879 = vld [vmem:[%s1 + $0x18f0] sm:$0xff]
  %v880 = vld [vmem:[%s1 + $0x18f8] sm:$0xff]
  %v881 = vld [vmem:[%s1 + $0x1900] sm:$0xff]
  %v882 = vld [vmem:[%s1 + $0x1908] sm:$0xff]
  %v883 = vld [vmem:[%s1 + $0x1910] sm:$0xff]
  %v884 = vld [vmem:[%s1 + $0x1918] sm:$0xff]
  %v885 = vld [vmem:[%s1 + $0x1920] sm:$0xff]
  %v886 = vld [vmem:[%s1 + $0x1928] sm:$0xff]
  %v887 = vld [vmem:[%s1 + $0x1930] sm:$0xff]
  %v888 = vld [vmem:[%s1 + $0x1938] sm:$0xff]
  %v889 = vld [vmem:[%s1 + $0x1940] sm:$0xff]
  %v890 = vld [vmem:[%s1 + $0x1948] sm:$0xff]
  %v891 = vld [vmem:[%s1 + $0x1950] sm:$0xff]
  %v892 = vld [vmem:[%s1 + $0x1958] sm:$0xff]
  %v893 = vld [vmem:[%s1 + $0x1960] sm:$0xff]
  %v894 = vld [vmem:[%s1 + $0x1968] sm:$0xff]
  %v895 = vld [vmem:[%s1 + $0x1970] sm:$0xff]
  %v896 = vld [vmem:[%s1 + $0x1978] sm:$0xff]
  %v897 = vld [vmem:[%s1 + $0x1980] sm:$0xff]
  %v898 = vld [vmem:[%s1 + $0x1988] sm:$0xff]
  %v899 = vld [vmem:[%s1 + $0x1990] sm:$0xff]
  %v900 = vld [vmem:[%s1 + $0x1998] sm:$0xff]
  %v901 = vld [vmem:[%s1 + $0x19a0] sm:$0xff]
  %v902 = vld [vmem:[%s1 + $0x19a8] sm:$0xff]
  %v903 = vld [vmem:[%s1 + $0x19b0] sm:$0xff]
  %v904 = vld [vmem:[%s1 + $0x19b8] sm:$0xff]
  %v905 = vld [vmem:[%s1 + $0x19c0] sm:$0xff]
  %v906 = vld [vmem:[%s1 + $0x19c8] sm:$0xff]
  %v907 = vld [vmem:[%s1 + $0x19d0] sm:$0xff]
  %v908 = vld [vmem:[%s1 + $0x19d8] sm:$0xff]
  %v909 = vld [vmem:[%s1 + $0x19e0] sm:$0xff]
  %v910 = vld [vmem:[%s1 + $0x19e8] sm:$0xff]
  %v911 = vld [vmem:[%s1 + $0x19f0] sm:$0xff]
  %v912 = vld [vmem:[%s1 + $0x19f8] sm:$0xff]
  %v913 = vld [vmem:[%s1 + $0x1a00] sm:$0xff]
  %v914 = vld [vmem:[%s1 + $0x1a08] sm:$0xff]
  %v915 = vld [vmem:[%s1 + $0x1a10] sm:$0xff]
  %v916 = vld [vmem:[%s1 + $0x1a18] sm:$0xff]
  %v917 = vld [vmem:[%s1 + $0x1a20] sm:$0xff]
  %v918 = vld [vmem:[%s1 + $0x1a28] sm:$0xff]
  %v919 = vld [vmem:[%s1 + $0x1a30] sm:$0xff]
  %v920 = vld [vmem:[%s1 + $0x1a38] sm:$0xff]
  %v921 = vld [vmem:[%s1 + $0x1a40] sm:$0xff]
  %v922 = vld [vmem:[%s1 + $0x1a48] sm:$0xff]
  %v923 = vld [vmem:[%s1 + $0x1a50] sm:$0xff]
  %v924 = vld [vmem:[%s1 + $0x1a58] sm:$0xff]
  %v925 = vld [vmem:[%s1 + $0x1a60] sm:$0xff]
  %v926 = vld [vmem:[%s1 + $0x1a68] sm:$0xff]
  %v927 = vld [vmem:[%s1 + $0x1a70] sm:$0xff]
  %v928 = vld [vmem:[%s1 + $0x1a78] sm:$0xff]
  %v929 = vld [vmem:[%s1 + $0x1a80] sm:$0xff]
  %v930 = vld [vmem:[%s1 + $0x1a88] sm:$0xff]
  %v931 = vld [vmem:[%s1 + $0x1a90] sm:$0xff]
  %v932 = vld [vmem:[%s1 + $0x1a98] sm:$0xff]
  %v933 = vld [vmem:[%s1 + $0x1aa0] sm:$0xff]
  %v934 = vld [vmem:[%s1 + $0x1aa8] sm:$0xff]
  %v935 = vld [vmem:[%s1 + $0x1ab0] sm:$0xff]
  %v936 = vld [vmem:[%s1 + $0x1ab8] sm:$0xff]
  %v937 = vld [vmem:[%s1 + $0x1ac0] sm:$0xff]
  %v938 = vld [vmem:[%s1 + $0x1ac8] sm:$0xff]
  %v939 = vld [vmem:[%s1 + $0x1ad0] sm:$0xff]
  %v940 = vld [vmem:[%s1 + $0x1ad8] sm:$0xff]
  %v941 = vld [vmem:[%s1 + $0x1ae0] sm:$0xff]
  %v942 = vld [vmem:[%s1 + $0x1ae8] sm:$0xff]
  %v943 = vld [vmem:[%s1 + $0x1af0] sm:$0xff]
  %v944 = vld [vmem:[%s1 + $0x1af8] sm:$0xff]
  %v945 = vld [vmem:[%s1 + $0x1b00] sm:$0xff]
  %v946 = vld [vmem:[%s1 + $0x1b08] sm:$0xff]
  %v947 = vld [vmem:[%s1 + $0x1b10] sm:$0xff]
  %v948 = vld [vmem:[%s1 + $0x1b18] sm:$0xff]
  %v949 = vld [vmem:[%s1 + $0x1b20] sm:$0xff]
  %v950 = vld [vmem:[%s1 + $0x1b28] sm:$0xff]
  %v951 = vld [vmem:[%s1 + $0x1b30] sm:$0xff]
  %v952 = vld [vmem:[%s1 + $0x1b38] sm:$0xff]
  %v953 = vld [vmem:[%s1 + $0x1b40] sm:$0xff]
  %v954 = vld [vmem:[%s1 + $0x1b48] sm:$0xff]
  %v955 = vld [vmem:[%s1 + $0x1b50] sm:$0xff]
  %v956 = vld [vmem:[%s1 + $0x1b58] sm:$0xff]
  %v957 = vld [vmem:[%s1 + $0x1b60] sm:$0xff]
  %v958 = vld [vmem:[%s1 + $0x1b68] sm:$0xff]
  %v959 = vld [vmem:[%s1 + $0x1b70] sm:$0xff]
  %v960 = vld [vmem:[%s1 + $0x1b78] sm:$0xff]
  %v961 = vld [vmem:[%s1 + $0x1b80] sm:$0xff]
  %v962 = vld [vmem:[%s1 + $0x1b88] sm:$0xff]
  %v963 = vld [vmem:[%s1 + $0x1b90] sm:$0xff]
  %v964 = vld [vmem:[%s1 + $0x1b98] sm:$0xff]
  %v965 = vld [vmem:[%s1 + $0x1ba0] sm:$0xff]
  %v966 = vld [vmem:[%s1 + $0x1ba8] sm:$0xff]
  %v967 = vld [vmem:[%s1 + $0x1bb0] sm:$0xff]
  %v968 = vld [vmem:[%s1 + $0x1bb8] sm:$0xff]
  %v969 = vld [vmem:[%s1 + $0x1bc0] sm:$0xff]
  %v970 = vld [vmem:[%s1 + $0x1bc8] sm:$0xff]
  %v971 = vld [vmem:[%s1 + $0x1bd0] sm:$0xff]
  %v972 = vld [vmem:[%s1 + $0x1bd8] sm:$0xff]
  %v973 = vld [vmem:[%s1 + $0x1be0] sm:$0xff]
  %v974 = vld [vmem:[%s1 + $0x1be8] sm:$0xff]
  %v975 = vld [vmem:[%s1 + $0x1bf0] sm:$0xff]
  %v976 = vld [vmem:[%s1 + $0x1bf8] sm:$0xff]
  %v977 = vld [vmem:[%s1 + $0x1c00] sm:$0xff]
  %v978 = vld [vmem:[%s1 + $0x1c08] sm:$0xff]
  %v979 = vld [vmem:[%s1 + $0x1c10] sm:$0xff]
  %v980 = vld [vmem:[%s1 + $0x1c18] sm:$0xff]
  %v981 = vld [vmem:[%s1 + $0x1c20] sm:$0xff]
  %v982 = vld [vmem:[%s1 + $0x1c28] sm:$0xff]
  %v983 = vld [vmem:[%s1 + $0x1c30] sm:$0xff]
  %v984 = vld [vmem:[%s1 + $0x1c38] sm:$0xff]
  %v985 = vld [vmem:[%s1 + $0x1c40] sm:$0xff]
  %v986 = vld [vmem:[%s1 + $0x1c48] sm:$0xff]
  %v987 = vld [vmem:[%s1 + $0x1c50] sm:$0xff]
  %v988 = vld [vmem:[%s1 + $0x1c58] sm:$0xff]
  %v989 = vld [vmem:[%s1 + $0x1c60] sm:$0xff]
  %v990 = vld [vmem:[%s1 + $0x1c68] sm:$0xff]
  %v991 = vld [vmem:[%s1 + $0x1c70] sm:$0xff]
  %v992 = vld [vmem:[%s1 + $0x1c78] sm:$0xff]
  %v993 = vld [vmem:[%s1 + $0x1c80] sm:$0xff]
  %v994 = vld [vmem:[%s1 + $0x1c88] sm:$0xff]
  %v995 = vld [vmem:[%s1 + $0x1c90] sm:$0xff]
  %v996 = vld [vmem:[%s1 + $0x1c98] sm:$0xff]
  %v997 = vld [vmem:[%s1 + $0x1ca0] sm:$0xff]
  %v998 = vld [vmem:[%s1 + $0x1ca8] sm:$0xff]
  %v999 = vld [vmem:[%s1 + $0x1cb0] sm:$0xff]
  %v1000 = vld [vmem:[%s1 + $0x1cb8] sm:$0xff]
  %v1001 = vld [vmem:[%s1 + $0x1cc0] sm:$0xff]
  %v1002 = vld [vmem:[%s1 + $0x1cc8] sm:$0xff]
  %v1003 = vld [vmem:[%s1 + $0x1cd0] sm:$0xff]
  %v1004 = vld [vmem:[%s1 + $0x1cd8] sm:$0xff]
  %v1005 = vld [vmem:[%s1 + $0x1ce0] sm:$0xff]
  %v1006 = vld [vmem:[%s1 + $0x1ce8] sm:$0xff]
  %v1007 = vld [vmem:[%s1 + $0x1cf0] sm:$0xff]
  %v1008 = vld [vmem:[%s1 + $0x1cf8] sm:$0xff]
  %v1009 = vld [vmem:[%s1 + $0x1d00] sm:$0xff]
  %v1010 = vld [vmem:[%s1 + $0x1d08] sm:$0xff]
  %v1011 = vld [vmem:[%s1 + $0x1d10] sm:$0xff]
  %v1012 = vld [vmem:[%s1 + $0x1d18] sm:$0xff]
  %v1013 = vld [vmem:[%s1 + $0x1d20] sm:$0xff]
  %v1014 = vld [vmem:[%s1 + $0x1d28] sm:$0xff]
  %v1015 = vld [vmem:[%s1 + $0x1d30] sm:$0xff]
  %v1016 = vld [vmem:[%s1 + $0x1d38] sm:$0xff]
  %v1017 = vld [vmem:[%s1 + $0x1d40] sm:$0xff]
  %v1018 = vld [vmem:[%s1 + $0x1d48] sm:$0xff]
  %v1019 = vld [vmem:[%s1 + $0x1d50] sm:$0xff]
  %v1020 = vld [vmem:[%s1 + $0x1d58] sm:$0xff]
  %v1021 = vld [vmem:[%s1 + $0x1d60] sm:$0xff]
  %v1022 = vld [vmem:[%s1 + $0x1d68] sm:$0xff]
  %v1023 = vld [vmem:[%s1 + $0x1d70] sm:$0xff]
  %v1024 = vld [vmem:[%s1 + $0x1d78] sm:$0xff]
  %v1025 = vld [vmem:[%s1 + $0x1d80] sm:$0xff]
  %v1026 = vld [vmem:[%s1 + $0x1d88] sm:$0xff]
  %v1027 = vld [vmem:[%s1 + $0x1d90] sm:$0xff]
  %v1028 = vld [vmem:[%s1 + $0x1d98] sm:$0xff]
  %v1029 = vld [vmem:[%s1 + $0x1da0] sm:$0xff]
  %v1030 = vld [vmem:[%s1 + $0x1da8] sm:$0xff]
  %v1031 = vld [vmem:[%s1 + $0x1db0] sm:$0xff]
  %v1032 = vld [vmem:[%s1 + $0x1db8] sm:$0xff]
  %v1033 = vld [vmem:[%s1 + $0x1dc0] sm:$0xff]
  %v1034 = vld [vmem:[%s1 + $0x1dc8] sm:$0xff]
  %v1035 = vld [vmem:[%s1 + $0x1dd0] sm:$0xff]
  %v1036 = vld [vmem:[%s1 + $0x1dd8] sm:$0xff]
  %v1037 = vld [vmem:[%s1 + $0x1de0] sm:$0xff]
  %v1038 = vld [vmem:[%s1 + $0x1de8] sm:$0xff]
  %v1039 = vld [vmem:[%s1 + $0x1df0] sm:$0xff]
  %v1040 = vld [vmem:[%s1 + $0x1df8] sm:$0xff]
  %v1041 = vld [vmem:[%s1 + $0x1e00] sm:$0xff]
  %v1042 = vld [vmem:[%s1 + $0x1e08] sm:$0xff]
  %v1043 = vld [vmem:[%s1 + $0x1e10] sm:$0xff]
  %v1044 = vld [vmem:[%s1 + $0x1e18] sm:$0xff]
  %v1045 = vld [vmem:[%s1 + $0x1e20] sm:$0xff]
  %v1046 = vld [vmem:[%s1 + $0x1e28] sm:$0xff]
  %v1047 = vld [vmem:[%s1 + $0x1e30] sm:$0xff]
  %v1048 = vld [vmem:[%s1 + $0x1e38] sm:$0xff]
  %v1049 = vld [vmem:[%s1 + $0x1e40] sm:$0xff]
  %v1050 = vld [vmem:[%s1 + $0x1e48] sm:$0xff]
  %v1051 = vld [vmem:[%s1 + $0x1e50] sm:$0xff]
  %v1052 = vld [vmem:[%s1 + $0x1e58] sm:$0xff]
  %v1053 = vld [vmem:[%s1 + $0x1e60] sm:$0xff]
  %v1054 = vld [vmem:[%s1 + $0x1e68] sm:$0xff]
  %v1055 = vld [vmem:[%s1 + $0x1e70] sm:$0xff]
  %v1056 = vld [vmem:[%s1 + $0x1e78] sm:$0xff]
  %v1057 = vld [vmem:[%s1 + $0x1e80] sm:$0xff]
  %v1058 = vld [vmem:[%s1 + $0x1e88] sm:$0xff]
  %v1059 = vld [vmem:[%s1 + $0x1e90] sm:$0xff]
  %v1060 = vld [vmem:[%s1 + $0x1e98] sm:$0xff]
  %v1061 = vld [vmem:[%s1 + $0x1ea0] sm:$0xff]
  %v1062 = vld [vmem:[%s1 + $0x1ea8] sm:$0xff]
  %v1063 = vld [vmem:[%s1 + $0x1eb0] sm:$0xff]
  %v1064 = vld [vmem:[%s1 + $0x1eb8] sm:$0xff]
  %v1065 = vld [vmem:[%s1 + $0x1ec0] sm:$0xff]
  %v1066 = vld [vmem:[%s1 + $0x1ec8] sm:$0xff]
  %v1067 = vld [vmem:[%s1 + $0x1ed0] sm:$0xff]
  %v1068 = vld [vmem:[%s1 + $0x1ed8] sm:$0xff]
  %v1069 = vld [vmem:[%s1 + $0x1ee0] sm:$0xff]
  %v1070 = vld [vmem:[%s1 + $0x1ee8] sm:$0xff]
  %v1071 = vld [vmem:[%s1 + $0x1ef0] sm:$0xff]
  %v1072 = vld [vmem:[%s1 + $0x1ef8] sm:$0xff]
  %v1073 = vld [vmem:[%s1 + $0x1f00] sm:$0xff]
  %v1074 = vld [vmem:[%s1 + $0x1f08] sm:$0xff]
  %v1075 = vld [vmem:[%s1 + $0x1f10] sm:$0xff]
  %v1076 = vld [vmem:[%s1 + $0x1f18] sm:$0xff]
  %v1077 = vld [vmem:[%s1 + $0x1f20] sm:$0xff]
  %v1078 = vld [vmem:[%s1 + $0x1f28] sm:$0xff]
  %v1079 = vld [vmem:[%s1 + $0x1f30] sm:$0xff]
  %v1080 = vld [vmem:[%s1 + $0x1f38] sm:$0xff]
  %v1081 = vld [vmem:[%s1 + $0x1f40] sm:$0xff]
  %v1082 = vld [vmem:[%s1 + $0x1f48] sm:$0xff]
  %v1083 = vld [vmem:[%s1 + $0x1f50] sm:$0xff]
  %v1084 = vld [vmem:[%s1 + $0x1f58] sm:$0xff]
  %v1085 = vld [vmem:[%s1 + $0x1f60] sm:$0xff]
  %v1086 = vld [vmem:[%s1 + $0x1f68] sm:$0xff]
  %v1087 = vld [vmem:[%s1 + $0x1f70] sm:$0xff]
  %v1088 = vld [vmem:[%s1 + $0x1f78] sm:$0xff]
  %v1089 = vld [vmem:[%s1 + $0x1f80] sm:$0xff]
  %v1090 = vld [vmem:[%s1 + $0x1f88] sm:$0xff]
  %v1091 = vld [vmem:[%s1 + $0x1f90] sm:$0xff]
  %v1092 = vld [vmem:[%s1 + $0x1f98] sm:$0xff]
  %v1093 = vld [vmem:[%s1 + $0x1fa0] sm:$0xff]
  %v1094 = vld [vmem:[%s1 + $0x1fa8] sm:$0xff]
  %v1095 = vld [vmem:[%s1 + $0x1fb0] sm:$0xff]
  %v1096 = vld [vmem:[%s1 + $0x1fb8] sm:$0xff]
  %v1097 = vld [vmem:[%s1 + $0x1fc0] sm:$0xff]
  %v1098 = vld [vmem:[%s1 + $0x1fc8] sm:$0xff]
  %v1099 = vld [vmem:[%s1 + $0x1fd0] sm:$0xff]
  %v1100 = vld [vmem:[%s1 + $0x1fd8] sm:$0xff]
  %v1101 = vld [vmem:[%s1 + $0x1fe0] sm:$0xff]
  %v1102 = vld [vmem:[%s1 + $0x1fe8] sm:$0xff]
  %v1103 = vld [vmem:[%s1 + $0x1ff0] sm:$0xff]
  %v1104 = vld [vmem:[%s1 + $0x1ff8] sm:$0xff]
  %v1169 = vunpack.c.l.b16 %v17
  %v1170 = vunpack.c.h.b16 %v17
  %v1171 = vunpack.c.l.b16 %v18
  %v1172 = vunpack.c.h.b16 %v18
  %v1173 = vunpack.c.l.b16 %v19
  %v1174 = vunpack.c.h.b16 %v19
  %v1175 = vunpack.c.l.b16 %v20
  %v1176 = vunpack.c.h.b16 %v20
  %v1177 = vunpack.c.l.b16 %v21
  %v1178 = vunpack.c.h.b16 %v21
  %v1179 = vunpack.c.l.b16 %v22
  %v1180 = vunpack.c.h.b16 %v22
  %v1181 = vunpack.c.l.b16 %v23
  %v1182 = vunpack.c.h.b16 %v23
  %v1183 = vunpack.c.l.b16 %v24
  %v1184 = vunpack.c.h.b16 %v24
  %v1185 = vunpack.c.l.b16 %v25
  %v1186 = vunpack.c.h.b16 %v25
  %v1187 = vunpack.c.l.b16 %v26
  %v1188 = vunpack.c.h.b16 %v26
  %v1189 = vunpack.c.l.b16 %v27
  %v1190 = vunpack.c.h.b16 %v27
  %v1191 = vunpack.c.l.b16 %v28
  %v1192 = vunpack.c.h.b16 %v28
  %v1193 = vunpack.c.l.b16 %v29
  %v1194 = vunpack.c.h.b16 %v29
  %v1195 = vunpack.c.l.b16 %v30
  %v1196 = vunpack.c.h.b16 %v30
  %v1197 = vunpack.c.l.b16 %v31
  %v1198 = vunpack.c.h.b16 %v31
  %v1199 = vunpack.c.l.b16 %v32
  %v1200 = vunpack.c.h.b16 %v32
  %v1201 = vunpack.c.l.b16 %v33
  %v1202 = vunpack.c.h.b16 %v33
  %v1203 = vunpack.c.l.b16 %v34
  %v1204 = vunpack.c.h.b16 %v34
  %v1205 = vunpack.c.l.b16 %v35
  %v1206 = vunpack.c.h.b16 %v35
  %v1207 = vunpack.c.l.b16 %v36
  %v1208 = vunpack.c.h.b16 %v36
  %v1209 = vunpack.c.l.b16 %v37
  %v1210 = vunpack.c.h.b16 %v37
  %v1211 = vunpack.c.l.b16 %v38
  %v1212 = vunpack.c.h.b16 %v38
  %v1213 = vunpack.c.l.b16 %v39
  %v1214 = vunpack.c.h.b16 %v39
  %v1215 = vunpack.c.l.b16 %v40
  %v1216 = vunpack.c.h.b16 %v40
  %v1217 = vunpack.c.l.b16 %v41
  %v1218 = vunpack.c.h.b16 %v41
  %v1219 = vunpack.c.l.b16 %v42
  %v1220 = vunpack.c.h.b16 %v42
  %v1221 = vunpack.c.l.b16 %v43
  %v1222 = vunpack.c.h.b16 %v43
  %v1223 = vunpack.c.l.b16 %v44
  %v1224 = vunpack.c.h.b16 %v44
  %v1225 = vunpack.c.l.b16 %v45
  %v1226 = vunpack.c.h.b16 %v45
  %v1227 = vunpack.c.l.b16 %v46
  %v1228 = vunpack.c.h.b16 %v46
  %v1229 = vunpack.c.l.b16 %v47
  %v1230 = vunpack.c.h.b16 %v47
  %v1231 = vunpack.c.l.b16 %v48
  %v1232 = vunpack.c.h.b16 %v48
  %v1233 = vunpack.c.l.b16 %v49
  %v1234 = vunpack.c.h.b16 %v49
  %v1235 = vunpack.c.l.b16 %v50
  %v1236 = vunpack.c.h.b16 %v50
  %v1237 = vunpack.c.l.b16 %v51
  %v1238 = vunpack.c.h.b16 %v51
  %v1239 = vunpack.c.l.b16 %v52
  %v1240 = vunpack.c.h.b16 %v52
  %v1241 = vunpack.c.l.b16 %v53
  %v1242 = vunpack.c.h.b16 %v53
  %v1243 = vunpack.c.l.b16 %v54
  %v1244 = vunpack.c.h.b16 %v54
  %v1245 = vunpack.c.l.b16 %v55
  %v1246 = vunpack.c.h.b16 %v55
  %v1247 = vunpack.c.l.b16 %v56
  %v1248 = vunpack.c.h.b16 %v56
  %v1249 = vunpack.c.l.b16 %v57
  %v1250 = vunpack.c.h.b16 %v57
  %v1251 = vunpack.c.l.b16 %v58
  %v1252 = vunpack.c.h.b16 %v58
  %v1253 = vunpack.c.l.b16 %v59
  %v1254 = vunpack.c.h.b16 %v59
  %v1255 = vunpack.c.l.b16 %v60
  %v1256 = vunpack.c.h.b16 %v60
  %v1257 = vunpack.c.l.b16 %v61
  %v1258 = vunpack.c.h.b16 %v61
  %v1259 = vunpack.c.l.b16 %v62
  %v1260 = vunpack.c.h.b16 %v62
  %v1261 = vunpack.c.l.b16 %v63
  %v1262 = vunpack.c.h.b16 %v63
  %v1263 = vunpack.c.l.b16 %v64
  %v1264 = vunpack.c.h.b16 %v64
  %v1265 = vunpack.c.l.b16 %v65
  %v1266 = vunpack.c.h.b16 %v65
  %v1267 = vunpack.c.l.b16 %v66
  %v1268 = vunpack.c.h.b16 %v66
  %v1269 = vunpack.c.l.b16 %v67
  %v1270 = vunpack.c.h.b16 %v67
  %v1271 = vunpack.c.l.b16 %v68
  %v1272 = vunpack.c.h.b16 %v68
  %v1273 = vunpack.c.l.b16 %v69
  %v1274 = vunpack.c.h.b16 %v69
  %v1275 = vunpack.c.l.b16 %v70
  %v1276 = vunpack.c.h.b16 %v70
  %v1277 = vunpack.c.l.b16 %v71
  %v1278 = vunpack.c.h.b16 %v71
  %v1279 = vunpack.c.l.b16 %v72
  %v1280 = vunpack.c.h.b16 %v72
  %v1281 = vunpack.c.l.b16 %v73
  %v1282 = vunpack.c.h.b16 %v73
  %v1283 = vunpack.c.l.b16 %v74
  %v1284 = vunpack.c.h.b16 %v74
  %v1285 = vunpack.c.l.b16 %v75
  %v1286 = vunpack.c.h.b16 %v75
  %v1287 = vunpack.c.l.b16 %v76
  %v1288 = vunpack.c.h.b16 %v76
  %v1289 = vunpack.c.l.b16 %v77
  %v1290 = vunpack.c.h.b16 %v77
  %v1291 = vunpack.c.l.b16 %v78
  %v1292 = vunpack.c.h.b16 %v78
  %v1293 = vunpack.c.l.b16 %v79
  %v1294 = vunpack.c.h.b16 %v79
  %v1295 = vunpack.c.l.b16 %v80
  %v1296 = vunpack.c.h.b16 %v80
  %v1297 = vpack.c.b16 %v1201, %v1169
  %v1298 = vpack.c.b16 %v1202, %v1170
  %v1299 = vpack.c.b16 %v1203, %v1171
  %v1300 = vpack.c.b16 %v1204, %v1172
  %v1301 = vpack.c.b16 %v1205, %v1173
  %v1302 = vpack.c.b16 %v1206, %v1174
  %v1303 = vpack.c.b16 %v1207, %v1175
  %v1304 = vpack.c.b16 %v1208, %v1176
  %v1305 = vpack.c.b16 %v1209, %v1177
  %v1306 = vpack.c.b16 %v1210, %v1178
  %v1307 = vpack.c.b16 %v1211, %v1179
  %v1308 = vpack.c.b16 %v1212, %v1180
  %v1309 = vpack.c.b16 %v1213, %v1181
  %v1310 = vpack.c.b16 %v1214, %v1182
  %v1311 = vpack.c.b16 %v1215, %v1183
  %v1312 = vpack.c.b16 %v1216, %v1184
  %v1313 = vpack.c.b16 %v1217, %v1185
  %v1314 = vpack.c.b16 %v1218, %v1186
  %v1315 = vpack.c.b16 %v1219, %v1187
  %v1316 = vpack.c.b16 %v1220, %v1188
  %v1317 = vpack.c.b16 %v1221, %v1189
  %v1318 = vpack.c.b16 %v1222, %v1190
  %v1319 = vpack.c.b16 %v1223, %v1191
  %v1320 = vpack.c.b16 %v1224, %v1192
  %v1321 = vpack.c.b16 %v1225, %v1193
  %v1322 = vpack.c.b16 %v1226, %v1194
  %v1323 = vpack.c.b16 %v1227, %v1195
  %v1324 = vpack.c.b16 %v1228, %v1196
  %v1325 = vpack.c.b16 %v1229, %v1197
  %v1326 = vpack.c.b16 %v1230, %v1198
  %v1327 = vpack.c.b16 %v1231, %v1199
  %v1328 = vpack.c.b16 %v1232, %v1200
  %v1329 = vpack.c.b16 %v1265, %v1233
  %v1330 = vpack.c.b16 %v1266, %v1234
  %v1331 = vpack.c.b16 %v1267, %v1235
  %v1332 = vpack.c.b16 %v1268, %v1236
  %v1333 = vpack.c.b16 %v1269, %v1237
  %v1334 = vpack.c.b16 %v1270, %v1238
  %v1335 = vpack.c.b16 %v1271, %v1239
  %v1336 = vpack.c.b16 %v1272, %v1240
  %v1337 = vpack.c.b16 %v1273, %v1241
  %v1338 = vpack.c.b16 %v1274, %v1242
  %v1339 = vpack.c.b16 %v1275, %v1243
  %v1340 = vpack.c.b16 %v1276, %v1244
  %v1341 = vpack.c.b16 %v1277, %v1245
  %v1342 = vpack.c.b16 %v1278, %v1246
  %v1343 = vpack.c.b16 %v1279, %v1247
  %v1344 = vpack.c.b16 %v1280, %v1248
  %v1345 = vpack.c.b16 %v1281, %v1249
  %v1346 = vpack.c.b16 %v1282, %v1250
  %v1347 = vpack.c.b16 %v1283, %v1251
  %v1348 = vpack.c.b16 %v1284, %v1252
  %v1349 = vpack.c.b16 %v1285, %v1253
  %v1350 = vpack.c.b16 %v1286, %v1254
  %v1351 = vpack.c.b16 %v1287, %v1255
  %v1352 = vpack.c.b16 %v1288, %v1256
  %v1353 = vpack.c.b16 %v1289, %v1257
  %v1354 = vpack.c.b16 %v1290, %v1258
  %v1355 = vpack.c.b16 %v1291, %v1259
  %v1356 = vpack.c.b16 %v1292, %v1260
  %v1357 = vpack.c.b16 %v1293, %v1261
  %v1358 = vpack.c.b16 %v1294, %v1262
  %v1359 = vpack.c.b16 %v1295, %v1263
  %v1360 = vpack.c.b16 %v1296, %v1264
  %v2449 = vunpack.c.l.b16 %v81
  %v2450 = vunpack.c.h.b16 %v81
  %v2451 = vunpack.c.l.b16 %v82
  %v2452 = vunpack.c.h.b16 %v82
  %v2453 = vunpack.c.l.b16 %v83
  %v2454 = vunpack.c.h.b16 %v83
  %v2455 = vunpack.c.l.b16 %v84
  %v2456 = vunpack.c.h.b16 %v84
  %v2457 = vunpack.c.l.b16 %v85
  %v2458 = vunpack.c.h.b16 %v85
  %v2459 = vunpack.c.l.b16 %v86
  %v2460 = vunpack.c.h.b16 %v86
  %v2461 = vunpack.c.l.b16 %v87
  %v2462 = vunpack.c.h.b16 %v87
  %v2463 = vunpack.c.l.b16 %v88
  %v2464 = vunpack.c.h.b16 %v88
  %v2465 = vunpack.c.l.b16 %v89
  %v2466 = vunpack.c.h.b16 %v89
  %v2467 = vunpack.c.l.b16 %v90
  %v2468 = vunpack.c.h.b16 %v90
  %v2469 = vunpack.c.l.b16 %v91
  %v2470 = vunpack.c.h.b16 %v91
  %v2471 = vunpack.c.l.b16 %v92
  %v2472 = vunpack.c.h.b16 %v92
  %v2473 = vunpack.c.l.b16 %v93
  %v2474 = vunpack.c.h.b16 %v93
  %v2475 = vunpack.c.l.b16 %v94
  %v2476 = vunpack.c.h.b16 %v94
  %v2477 = vunpack.c.l.b16 %v95
  %v2478 = vunpack.c.h.b16 %v95
  %v2479 = vunpack.c.l.b16 %v96
  %v2480 = vunpack.c.h.b16 %v96
  %v2481 = vunpack.c.l.b16 %v97
  %v2482 = vunpack.c.h.b16 %v97
  %v2483 = vunpack.c.l.b16 %v98
  %v2484 = vunpack.c.h.b16 %v98
  %v2485 = vunpack.c.l.b16 %v99
  %v2486 = vunpack.c.h.b16 %v99
  %v2487 = vunpack.c.l.b16 %v100
  %v2488 = vunpack.c.h.b16 %v100
  %v2489 = vunpack.c.l.b16 %v101
  %v2490 = vunpack.c.h.b16 %v101
  %v2491 = vunpack.c.l.b16 %v102
  %v2492 = vunpack.c.h.b16 %v102
  %v2493 = vunpack.c.l.b16 %v103
  %v2494 = vunpack.c.h.b16 %v103
  %v2495 = vunpack.c.l.b16 %v104
  %v2496 = vunpack.c.h.b16 %v104
  %v2497 = vunpack.c.l.b16 %v105
  %v2498 = vunpack.c.h.b16 %v105
  %v2499 = vunpack.c.l.b16 %v106
  %v2500 = vunpack.c.h.b16 %v106
  %v2501 = vunpack.c.l.b16 %v107
  %v2502 = vunpack.c.h.b16 %v107
  %v2503 = vunpack.c.l.b16 %v108
  %v2504 = vunpack.c.h.b16 %v108
  %v2505 = vunpack.c.l.b16 %v109
  %v2506 = vunpack.c.h.b16 %v109
  %v2507 = vunpack.c.l.b16 %v110
  %v2508 = vunpack.c.h.b16 %v110
  %v2509 = vunpack.c.l.b16 %v111
  %v2510 = vunpack.c.h.b16 %v111
  %v2511 = vunpack.c.l.b16 %v112
  %v2512 = vunpack.c.h.b16 %v112
  %v2513 = vunpack.c.l.b16 %v113
  %v2514 = vunpack.c.h.b16 %v113
  %v2515 = vunpack.c.l.b16 %v114
  %v2516 = vunpack.c.h.b16 %v114
  %v2517 = vunpack.c.l.b16 %v115
  %v2518 = vunpack.c.h.b16 %v115
  %v2519 = vunpack.c.l.b16 %v116
  %v2520 = vunpack.c.h.b16 %v116
  %v2521 = vunpack.c.l.b16 %v117
  %v2522 = vunpack.c.h.b16 %v117
  %v2523 = vunpack.c.l.b16 %v118
  %v2524 = vunpack.c.h.b16 %v118
  %v2525 = vunpack.c.l.b16 %v119
  %v2526 = vunpack.c.h.b16 %v119
  %v2527 = vunpack.c.l.b16 %v120
  %v2528 = vunpack.c.h.b16 %v120
  %v2529 = vunpack.c.l.b16 %v121
  %v2530 = vunpack.c.h.b16 %v121
  %v2531 = vunpack.c.l.b16 %v122
  %v2532 = vunpack.c.h.b16 %v122
  %v2533 = vunpack.c.l.b16 %v123
  %v2534 = vunpack.c.h.b16 %v123
  %v2535 = vunpack.c.l.b16 %v124
  %v2536 = vunpack.c.h.b16 %v124
  %v2537 = vunpack.c.l.b16 %v125
  %v2538 = vunpack.c.h.b16 %v125
  %v2539 = vunpack.c.l.b16 %v126
  %v2540 = vunpack.c.h.b16 %v126
  %v2541 = vunpack.c.l.b16 %v127
  %v2542 = vunpack.c.h.b16 %v127
  %v2543 = vunpack.c.l.b16 %v128
  %v2544 = vunpack.c.h.b16 %v128
  %v2545 = vunpack.c.l.b16 %v129
  %v2546 = vunpack.c.h.b16 %v129
  %v2547 = vunpack.c.l.b16 %v130
  %v2548 = vunpack.c.h.b16 %v130
  %v2549 = vunpack.c.l.b16 %v131
  %v2550 = vunpack.c.h.b16 %v131
  %v2551 = vunpack.c.l.b16 %v132
  %v2552 = vunpack.c.h.b16 %v132
  %v2553 = vunpack.c.l.b16 %v133
  %v2554 = vunpack.c.h.b16 %v133
  %v2555 = vunpack.c.l.b16 %v134
  %v2556 = vunpack.c.h.b16 %v134
  %v2557 = vunpack.c.l.b16 %v135
  %v2558 = vunpack.c.h.b16 %v135
  %v2559 = vunpack.c.l.b16 %v136
  %v2560 = vunpack.c.h.b16 %v136
  %v2561 = vunpack.c.l.b16 %v137
  %v2562 = vunpack.c.h.b16 %v137
  %v2563 = vunpack.c.l.b16 %v138
  %v2564 = vunpack.c.h.b16 %v138
  %v2565 = vunpack.c.l.b16 %v139
  %v2566 = vunpack.c.h.b16 %v139
  %v2567 = vunpack.c.l.b16 %v140
  %v2568 = vunpack.c.h.b16 %v140
  %v2569 = vunpack.c.l.b16 %v141
  %v2570 = vunpack.c.h.b16 %v141
  %v2571 = vunpack.c.l.b16 %v142
  %v2572 = vunpack.c.h.b16 %v142
  %v2573 = vunpack.c.l.b16 %v143
  %v2574 = vunpack.c.h.b16 %v143
  %v2575 = vunpack.c.l.b16 %v144
  %v2576 = vunpack.c.h.b16 %v144
  %v2577 = vunpack.c.l.b16 %v145
  %v2578 = vunpack.c.h.b16 %v145
  %v2579 = vunpack.c.l.b16 %v146
  %v2580 = vunpack.c.h.b16 %v146
  %v2581 = vunpack.c.l.b16 %v147
  %v2582 = vunpack.c.h.b16 %v147
  %v2583 = vunpack.c.l.b16 %v148
  %v2584 = vunpack.c.h.b16 %v148
  %v2585 = vunpack.c.l.b16 %v149
  %v2586 = vunpack.c.h.b16 %v149
  %v2587 = vunpack.c.l.b16 %v150
  %v2588 = vunpack.c.h.b16 %v150
  %v2589 = vunpack.c.l.b16 %v151
  %v2590 = vunpack.c.h.b16 %v151
  %v2591 = vunpack.c.l.b16 %v152
  %v2592 = vunpack.c.h.b16 %v152
  %v2593 = vunpack.c.l.b16 %v153
  %v2594 = vunpack.c.h.b16 %v153
  %v2595 = vunpack.c.l.b16 %v154
  %v2596 = vunpack.c.h.b16 %v154
  %v2597 = vunpack.c.l.b16 %v155
  %v2598 = vunpack.c.h.b16 %v155
  %v2599 = vunpack.c.l.b16 %v156
  %v2600 = vunpack.c.h.b16 %v156
  %v2601 = vunpack.c.l.b16 %v157
  %v2602 = vunpack.c.h.b16 %v157
  %v2603 = vunpack.c.l.b16 %v158
  %v2604 = vunpack.c.h.b16 %v158
  %v2605 = vunpack.c.l.b16 %v159
  %v2606 = vunpack.c.h.b16 %v159
  %v2607 = vunpack.c.l.b16 %v160
  %v2608 = vunpack.c.h.b16 %v160
  %v2609 = vunpack.c.l.b16 %v161
  %v2610 = vunpack.c.h.b16 %v161
  %v2611 = vunpack.c.l.b16 %v162
  %v2612 = vunpack.c.h.b16 %v162
  %v2613 = vunpack.c.l.b16 %v163
  %v2614 = vunpack.c.h.b16 %v163
  %v2615 = vunpack.c.l.b16 %v164
  %v2616 = vunpack.c.h.b16 %v164
  %v2617 = vunpack.c.l.b16 %v165
  %v2618 = vunpack.c.h.b16 %v165
  %v2619 = vunpack.c.l.b16 %v166
  %v2620 = vunpack.c.h.b16 %v166
  %v2621 = vunpack.c.l.b16 %v167
  %v2622 = vunpack.c.h.b16 %v167
  %v2623 = vunpack.c.l.b16 %v168
  %v2624 = vunpack.c.h.b16 %v168
  %v2625 = vunpack.c.l.b16 %v169
  %v2626 = vunpack.c.h.b16 %v169
  %v2627 = vunpack.c.l.b16 %v170
  %v2628 = vunpack.c.h.b16 %v170
  %v2629 = vunpack.c.l.b16 %v171
  %v2630 = vunpack.c.h.b16 %v171
  %v2631 = vunpack.c.l.b16 %v172
  %v2632 = vunpack.c.h.b16 %v172
  %v2633 = vunpack.c.l.b16 %v173
  %v2634 = vunpack.c.h.b16 %v173
  %v2635 = vunpack.c.l.b16 %v174
  %v2636 = vunpack.c.h.b16 %v174
  %v2637 = vunpack.c.l.b16 %v175
  %v2638 = vunpack.c.h.b16 %v175
  %v2639 = vunpack.c.l.b16 %v176
  %v2640 = vunpack.c.h.b16 %v176
  %v2641 = vunpack.c.l.b16 %v177
  %v2642 = vunpack.c.h.b16 %v177
  %v2643 = vunpack.c.l.b16 %v178
  %v2644 = vunpack.c.h.b16 %v178
  %v2645 = vunpack.c.l.b16 %v179
  %v2646 = vunpack.c.h.b16 %v179
  %v2647 = vunpack.c.l.b16 %v180
  %v2648 = vunpack.c.h.b16 %v180
  %v2649 = vunpack.c.l.b16 %v181
  %v2650 = vunpack.c.h.b16 %v181
  %v2651 = vunpack.c.l.b16 %v182
  %v2652 = vunpack.c.h.b16 %v182
  %v2653 = vunpack.c.l.b16 %v183
  %v2654 = vunpack.c.h.b16 %v183
  %v2655 = vunpack.c.l.b16 %v184
  %v2656 = vunpack.c.h.b16 %v184
  %v2657 = vunpack.c.l.b16 %v185
  %v2658 = vunpack.c.h.b16 %v185
  %v2659 = vunpack.c.l.b16 %v186
  %v2660 = vunpack.c.h.b16 %v186
  %v2661 = vunpack.c.l.b16 %v187
  %v2662 = vunpack.c.h.b16 %v187
  %v2663 = vunpack.c.l.b16 %v188
  %v2664 = vunpack.c.h.b16 %v188
  %v2665 = vunpack.c.l.b16 %v189
  %v2666 = vunpack.c.h.b16 %v189
  %v2667 = vunpack.c.l.b16 %v190
  %v2668 = vunpack.c.h.b16 %v190
  %v2669 = vunpack.c.l.b16 %v191
  %v2670 = vunpack.c.h.b16 %v191
  %v2671 = vunpack.c.l.b16 %v192
  %v2672 = vunpack.c.h.b16 %v192
  %v2673 = vunpack.c.l.b16 %v193
  %v2674 = vunpack.c.h.b16 %v193
  %v2675 = vunpack.c.l.b16 %v194
  %v2676 = vunpack.c.h.b16 %v194
  %v2677 = vunpack.c.l.b16 %v195
  %v2678 = vunpack.c.h.b16 %v195
  %v2679 = vunpack.c.l.b16 %v196
  %v2680 = vunpack.c.h.b16 %v196
  %v2681 = vunpack.c.l.b16 %v197
  %v2682 = vunpack.c.h.b16 %v197
  %v2683 = vunpack.c.l.b16 %v198
  %v2684 = vunpack.c.h.b16 %v198
  %v2685 = vunpack.c.l.b16 %v199
  %v2686 = vunpack.c.h.b16 %v199
  %v2687 = vunpack.c.l.b16 %v200
  %v2688 = vunpack.c.h.b16 %v200
  %v2689 = vunpack.c.l.b16 %v201
  %v2690 = vunpack.c.h.b16 %v201
  %v2691 = vunpack.c.l.b16 %v202
  %v2692 = vunpack.c.h.b16 %v202
  %v2693 = vunpack.c.l.b16 %v203
  %v2694 = vunpack.c.h.b16 %v203
  %v2695 = vunpack.c.l.b16 %v204
  %v2696 = vunpack.c.h.b16 %v204
  %v2697 = vunpack.c.l.b16 %v205
  %v2698 = vunpack.c.h.b16 %v205
  %v2699 = vunpack.c.l.b16 %v206
  %v2700 = vunpack.c.h.b16 %v206
  %v2701 = vunpack.c.l.b16 %v207
  %v2702 = vunpack.c.h.b16 %v207
  %v2703 = vunpack.c.l.b16 %v208
  %v2704 = vunpack.c.h.b16 %v208
  %v2705 = vunpack.c.l.b16 %v209
  %v2706 = vunpack.c.h.b16 %v209
  %v2707 = vunpack.c.l.b16 %v210
  %v2708 = vunpack.c.h.b16 %v210
  %v2709 = vunpack.c.l.b16 %v211
  %v2710 = vunpack.c.h.b16 %v211
  %v2711 = vunpack.c.l.b16 %v212
  %v2712 = vunpack.c.h.b16 %v212
  %v2713 = vunpack.c.l.b16 %v213
  %v2714 = vunpack.c.h.b16 %v213
  %v2715 = vunpack.c.l.b16 %v214
  %v2716 = vunpack.c.h.b16 %v214
  %v2717 = vunpack.c.l.b16 %v215
  %v2718 = vunpack.c.h.b16 %v215
  %v2719 = vunpack.c.l.b16 %v216
  %v2720 = vunpack.c.h.b16 %v216
  %v2721 = vunpack.c.l.b16 %v217
  %v2722 = vunpack.c.h.b16 %v217
  %v2723 = vunpack.c.l.b16 %v218
  %v2724 = vunpack.c.h.b16 %v218
  %v2725 = vunpack.c.l.b16 %v219
  %v2726 = vunpack.c.h.b16 %v219
  %v2727 = vunpack.c.l.b16 %v220
  %v2728 = vunpack.c.h.b16 %v220
  %v2729 = vunpack.c.l.b16 %v221
  %v2730 = vunpack.c.h.b16 %v221
  %v2731 = vunpack.c.l.b16 %v222
  %v2732 = vunpack.c.h.b16 %v222
  %v2733 = vunpack.c.l.b16 %v223
  %v2734 = vunpack.c.h.b16 %v223
  %v2735 = vunpack.c.l.b16 %v224
  %v2736 = vunpack.c.h.b16 %v224
  %v2737 = vunpack.c.l.b16 %v225
  %v2738 = vunpack.c.h.b16 %v225
  %v2739 = vunpack.c.l.b16 %v226
  %v2740 = vunpack.c.h.b16 %v226
  %v2741 = vunpack.c.l.b16 %v227
  %v2742 = vunpack.c.h.b16 %v227
  %v2743 = vunpack.c.l.b16 %v228
  %v2744 = vunpack.c.h.b16 %v228
  %v2745 = vunpack.c.l.b16 %v229
  %v2746 = vunpack.c.h.b16 %v229
  %v2747 = vunpack.c.l.b16 %v230
  %v2748 = vunpack.c.h.b16 %v230
  %v2749 = vunpack.c.l.b16 %v231
  %v2750 = vunpack.c.h.b16 %v231
  %v2751 = vunpack.c.l.b16 %v232
  %v2752 = vunpack.c.h.b16 %v232
  %v2753 = vunpack.c.l.b16 %v233
  %v2754 = vunpack.c.h.b16 %v233
  %v2755 = vunpack.c.l.b16 %v234
  %v2756 = vunpack.c.h.b16 %v234
  %v2757 = vunpack.c.l.b16 %v235
  %v2758 = vunpack.c.h.b16 %v235
  %v2759 = vunpack.c.l.b16 %v236
  %v2760 = vunpack.c.h.b16 %v236
  %v2761 = vunpack.c.l.b16 %v237
  %v2762 = vunpack.c.h.b16 %v237
  %v2763 = vunpack.c.l.b16 %v238
  %v2764 = vunpack.c.h.b16 %v238
  %v2765 = vunpack.c.l.b16 %v239
  %v2766 = vunpack.c.h.b16 %v239
  %v2767 = vunpack.c.l.b16 %v240
  %v2768 = vunpack.c.h.b16 %v240
  %v2769 = vunpack.c.l.b16 %v241
  %v2770 = vunpack.c.h.b16 %v241
  %v2771 = vunpack.c.l.b16 %v242
  %v2772 = vunpack.c.h.b16 %v242
  %v2773 = vunpack.c.l.b16 %v243
  %v2774 = vunpack.c.h.b16 %v243
  %v2775 = vunpack.c.l.b16 %v244
  %v2776 = vunpack.c.h.b16 %v244
  %v2777 = vunpack.c.l.b16 %v245
  %v2778 = vunpack.c.h.b16 %v245
  %v2779 = vunpack.c.l.b16 %v246
  %v2780 = vunpack.c.h.b16 %v246
  %v2781 = vunpack.c.l.b16 %v247
  %v2782 = vunpack.c.h.b16 %v247
  %v2783 = vunpack.c.l.b16 %v248
  %v2784 = vunpack.c.h.b16 %v248
  %v2785 = vunpack.c.l.b16 %v249
  %v2786 = vunpack.c.h.b16 %v249
  %v2787 = vunpack.c.l.b16 %v250
  %v2788 = vunpack.c.h.b16 %v250
  %v2789 = vunpack.c.l.b16 %v251
  %v2790 = vunpack.c.h.b16 %v251
  %v2791 = vunpack.c.l.b16 %v252
  %v2792 = vunpack.c.h.b16 %v252
  %v2793 = vunpack.c.l.b16 %v253
  %v2794 = vunpack.c.h.b16 %v253
  %v2795 = vunpack.c.l.b16 %v254
  %v2796 = vunpack.c.h.b16 %v254
  %v2797 = vunpack.c.l.b16 %v255
  %v2798 = vunpack.c.h.b16 %v255
  %v2799 = vunpack.c.l.b16 %v256
  %v2800 = vunpack.c.h.b16 %v256
  %v2801 = vunpack.c.l.b16 %v257
  %v2802 = vunpack.c.h.b16 %v257
  %v2803 = vunpack.c.l.b16 %v258
  %v2804 = vunpack.c.h.b16 %v258
  %v2805 = vunpack.c.l.b16 %v259
  %v2806 = vunpack.c.h.b16 %v259
  %v2807 = vunpack.c.l.b16 %v260
  %v2808 = vunpack.c.h.b16 %v260
  %v2809 = vunpack.c.l.b16 %v261
  %v2810 = vunpack.c.h.b16 %v261
  %v2811 = vunpack.c.l.b16 %v262
  %v2812 = vunpack.c.h.b16 %v262
  %v2813 = vunpack.c.l.b16 %v263
  %v2814 = vunpack.c.h.b16 %v263
  %v2815 = vunpack.c.l.b16 %v264
  %v2816 = vunpack.c.h.b16 %v264
  %v2817 = vunpack.c.l.b16 %v265
  %v2818 = vunpack.c.h.b16 %v265
  %v2819 = vunpack.c.l.b16 %v266
  %v2820 = vunpack.c.h.b16 %v266
  %v2821 = vunpack.c.l.b16 %v267
  %v2822 = vunpack.c.h.b16 %v267
  %v2823 = vunpack.c.l.b16 %v268
  %v2824 = vunpack.c.h.b16 %v268
  %v2825 = vunpack.c.l.b16 %v269
  %v2826 = vunpack.c.h.b16 %v269
  %v2827 = vunpack.c.l.b16 %v270
  %v2828 = vunpack.c.h.b16 %v270
  %v2829 = vunpack.c.l.b16 %v271
  %v2830 = vunpack.c.h.b16 %v271
  %v2831 = vunpack.c.l.b16 %v272
  %v2832 = vunpack.c.h.b16 %v272
  %v2833 = vunpack.c.l.b16 %v273
  %v2834 = vunpack.c.h.b16 %v273
  %v2835 = vunpack.c.l.b16 %v274
  %v2836 = vunpack.c.h.b16 %v274
  %v2837 = vunpack.c.l.b16 %v275
  %v2838 = vunpack.c.h.b16 %v275
  %v2839 = vunpack.c.l.b16 %v276
  %v2840 = vunpack.c.h.b16 %v276
  %v2841 = vunpack.c.l.b16 %v277
  %v2842 = vunpack.c.h.b16 %v277
  %v2843 = vunpack.c.l.b16 %v278
  %v2844 = vunpack.c.h.b16 %v278
  %v2845 = vunpack.c.l.b16 %v279
  %v2846 = vunpack.c.h.b16 %v279
  %v2847 = vunpack.c.l.b16 %v280
  %v2848 = vunpack.c.h.b16 %v280
  %v2849 = vunpack.c.l.b16 %v281
  %v2850 = vunpack.c.h.b16 %v281
  %v2851 = vunpack.c.l.b16 %v282
  %v2852 = vunpack.c.h.b16 %v282
  %v2853 = vunpack.c.l.b16 %v283
  %v2854 = vunpack.c.h.b16 %v283
  %v2855 = vunpack.c.l.b16 %v284
  %v2856 = vunpack.c.h.b16 %v284
  %v2857 = vunpack.c.l.b16 %v285
  %v2858 = vunpack.c.h.b16 %v285
  %v2859 = vunpack.c.l.b16 %v286
  %v2860 = vunpack.c.h.b16 %v286
  %v2861 = vunpack.c.l.b16 %v287
  %v2862 = vunpack.c.h.b16 %v287
  %v2863 = vunpack.c.l.b16 %v288
  %v2864 = vunpack.c.h.b16 %v288
  %v2865 = vunpack.c.l.b16 %v289
  %v2866 = vunpack.c.h.b16 %v289
  %v2867 = vunpack.c.l.b16 %v290
  %v2868 = vunpack.c.h.b16 %v290
  %v2869 = vunpack.c.l.b16 %v291
  %v2870 = vunpack.c.h.b16 %v291
  %v2871 = vunpack.c.l.b16 %v292
  %v2872 = vunpack.c.h.b16 %v292
  %v2873 = vunpack.c.l.b16 %v293
  %v2874 = vunpack.c.h.b16 %v293
  %v2875 = vunpack.c.l.b16 %v294
  %v2876 = vunpack.c.h.b16 %v294
  %v2877 = vunpack.c.l.b16 %v295
  %v2878 = vunpack.c.h.b16 %v295
  %v2879 = vunpack.c.l.b16 %v296
  %v2880 = vunpack.c.h.b16 %v296
  %v2881 = vunpack.c.l.b16 %v297
  %v2882 = vunpack.c.h.b16 %v297
  %v2883 = vunpack.c.l.b16 %v298
  %v2884 = vunpack.c.h.b16 %v298
  %v2885 = vunpack.c.l.b16 %v299
  %v2886 = vunpack.c.h.b16 %v299
  %v2887 = vunpack.c.l.b16 %v300
  %v2888 = vunpack.c.h.b16 %v300
  %v2889 = vunpack.c.l.b16 %v301
  %v2890 = vunpack.c.h.b16 %v301
  %v2891 = vunpack.c.l.b16 %v302
  %v2892 = vunpack.c.h.b16 %v302
  %v2893 = vunpack.c.l.b16 %v303
  %v2894 = vunpack.c.h.b16 %v303
  %v2895 = vunpack.c.l.b16 %v304
  %v2896 = vunpack.c.h.b16 %v304
  %v2897 = vunpack.c.l.b16 %v305
  %v2898 = vunpack.c.h.b16 %v305
  %v2899 = vunpack.c.l.b16 %v306
  %v2900 = vunpack.c.h.b16 %v306
  %v2901 = vunpack.c.l.b16 %v307
  %v2902 = vunpack.c.h.b16 %v307
  %v2903 = vunpack.c.l.b16 %v308
  %v2904 = vunpack.c.h.b16 %v308
  %v2905 = vunpack.c.l.b16 %v309
  %v2906 = vunpack.c.h.b16 %v309
  %v2907 = vunpack.c.l.b16 %v310
  %v2908 = vunpack.c.h.b16 %v310
  %v2909 = vunpack.c.l.b16 %v311
  %v2910 = vunpack.c.h.b16 %v311
  %v2911 = vunpack.c.l.b16 %v312
  %v2912 = vunpack.c.h.b16 %v312
  %v2913 = vunpack.c.l.b16 %v313
  %v2914 = vunpack.c.h.b16 %v313
  %v2915 = vunpack.c.l.b16 %v314
  %v2916 = vunpack.c.h.b16 %v314
  %v2917 = vunpack.c.l.b16 %v315
  %v2918 = vunpack.c.h.b16 %v315
  %v2919 = vunpack.c.l.b16 %v316
  %v2920 = vunpack.c.h.b16 %v316
  %v2921 = vunpack.c.l.b16 %v317
  %v2922 = vunpack.c.h.b16 %v317
  %v2923 = vunpack.c.l.b16 %v318
  %v2924 = vunpack.c.h.b16 %v318
  %v2925 = vunpack.c.l.b16 %v319
  %v2926 = vunpack.c.h.b16 %v319
  %v2927 = vunpack.c.l.b16 %v320
  %v2928 = vunpack.c.h.b16 %v320
  %v2929 = vunpack.c.l.b16 %v321
  %v2930 = vunpack.c.h.b16 %v321
  %v2931 = vunpack.c.l.b16 %v322
  %v2932 = vunpack.c.h.b16 %v322
  %v2933 = vunpack.c.l.b16 %v323
  %v2934 = vunpack.c.h.b16 %v323
  %v2935 = vunpack.c.l.b16 %v324
  %v2936 = vunpack.c.h.b16 %v324
  %v2937 = vunpack.c.l.b16 %v325
  %v2938 = vunpack.c.h.b16 %v325
  %v2939 = vunpack.c.l.b16 %v326
  %v2940 = vunpack.c.h.b16 %v326
  %v2941 = vunpack.c.l.b16 %v327
  %v2942 = vunpack.c.h.b16 %v327
  %v2943 = vunpack.c.l.b16 %v328
  %v2944 = vunpack.c.h.b16 %v328
  %v2945 = vunpack.c.l.b16 %v329
  %v2946 = vunpack.c.h.b16 %v329
  %v2947 = vunpack.c.l.b16 %v330
  %v2948 = vunpack.c.h.b16 %v330
  %v2949 = vunpack.c.l.b16 %v331
  %v2950 = vunpack.c.h.b16 %v331
  %v2951 = vunpack.c.l.b16 %v332
  %v2952 = vunpack.c.h.b16 %v332
  %v2953 = vunpack.c.l.b16 %v333
  %v2954 = vunpack.c.h.b16 %v333
  %v2955 = vunpack.c.l.b16 %v334
  %v2956 = vunpack.c.h.b16 %v334
  %v2957 = vunpack.c.l.b16 %v335
  %v2958 = vunpack.c.h.b16 %v335
  %v2959 = vunpack.c.l.b16 %v336
  %v2960 = vunpack.c.h.b16 %v336
  %v2961 = vunpack.c.l.b16 %v337
  %v2962 = vunpack.c.h.b16 %v337
  %v2963 = vunpack.c.l.b16 %v338
  %v2964 = vunpack.c.h.b16 %v338
  %v2965 = vunpack.c.l.b16 %v339
  %v2966 = vunpack.c.h.b16 %v339
  %v2967 = vunpack.c.l.b16 %v340
  %v2968 = vunpack.c.h.b16 %v340
  %v2969 = vunpack.c.l.b16 %v341
  %v2970 = vunpack.c.h.b16 %v341
  %v2971 = vunpack.c.l.b16 %v342
  %v2972 = vunpack.c.h.b16 %v342
  %v2973 = vunpack.c.l.b16 %v343
  %v2974 = vunpack.c.h.b16 %v343
  %v2975 = vunpack.c.l.b16 %v344
  %v2976 = vunpack.c.h.b16 %v344
  %v2977 = vunpack.c.l.b16 %v345
  %v2978 = vunpack.c.h.b16 %v345
  %v2979 = vunpack.c.l.b16 %v346
  %v2980 = vunpack.c.h.b16 %v346
  %v2981 = vunpack.c.l.b16 %v347
  %v2982 = vunpack.c.h.b16 %v347
  %v2983 = vunpack.c.l.b16 %v348
  %v2984 = vunpack.c.h.b16 %v348
  %v2985 = vunpack.c.l.b16 %v349
  %v2986 = vunpack.c.h.b16 %v349
  %v2987 = vunpack.c.l.b16 %v350
  %v2988 = vunpack.c.h.b16 %v350
  %v2989 = vunpack.c.l.b16 %v351
  %v2990 = vunpack.c.h.b16 %v351
  %v2991 = vunpack.c.l.b16 %v352
  %v2992 = vunpack.c.h.b16 %v352
  %v2993 = vunpack.c.l.b16 %v353
  %v2994 = vunpack.c.h.b16 %v353
  %v2995 = vunpack.c.l.b16 %v354
  %v2996 = vunpack.c.h.b16 %v354
  %v2997 = vunpack.c.l.b16 %v355
  %v2998 = vunpack.c.h.b16 %v355
  %v2999 = vunpack.c.l.b16 %v356
  %v3000 = vunpack.c.h.b16 %v356
  %v3001 = vunpack.c.l.b16 %v357
  %v3002 = vunpack.c.h.b16 %v357
  %v3003 = vunpack.c.l.b16 %v358
  %v3004 = vunpack.c.h.b16 %v358
  %v3005 = vunpack.c.l.b16 %v359
  %v3006 = vunpack.c.h.b16 %v359
  %v3007 = vunpack.c.l.b16 %v360
  %v3008 = vunpack.c.h.b16 %v360
  %v3009 = vunpack.c.l.b16 %v361
  %v3010 = vunpack.c.h.b16 %v361
  %v3011 = vunpack.c.l.b16 %v362
  %v3012 = vunpack.c.h.b16 %v362
  %v3013 = vunpack.c.l.b16 %v363
  %v3014 = vunpack.c.h.b16 %v363
  %v3015 = vunpack.c.l.b16 %v364
  %v3016 = vunpack.c.h.b16 %v364
  %v3017 = vunpack.c.l.b16 %v365
  %v3018 = vunpack.c.h.b16 %v365
  %v3019 = vunpack.c.l.b16 %v366
  %v3020 = vunpack.c.h.b16 %v366
  %v3021 = vunpack.c.l.b16 %v367
  %v3022 = vunpack.c.h.b16 %v367
  %v3023 = vunpack.c.l.b16 %v368
  %v3024 = vunpack.c.h.b16 %v368
  %v3025 = vunpack.c.l.b16 %v369
  %v3026 = vunpack.c.h.b16 %v369
  %v3027 = vunpack.c.l.b16 %v370
  %v3028 = vunpack.c.h.b16 %v370
  %v3029 = vunpack.c.l.b16 %v371
  %v3030 = vunpack.c.h.b16 %v371
  %v3031 = vunpack.c.l.b16 %v372
  %v3032 = vunpack.c.h.b16 %v372
  %v3033 = vunpack.c.l.b16 %v373
  %v3034 = vunpack.c.h.b16 %v373
  %v3035 = vunpack.c.l.b16 %v374
  %v3036 = vunpack.c.h.b16 %v374
  %v3037 = vunpack.c.l.b16 %v375
  %v3038 = vunpack.c.h.b16 %v375
  %v3039 = vunpack.c.l.b16 %v376
  %v3040 = vunpack.c.h.b16 %v376
  %v3041 = vunpack.c.l.b16 %v377
  %v3042 = vunpack.c.h.b16 %v377
  %v3043 = vunpack.c.l.b16 %v378
  %v3044 = vunpack.c.h.b16 %v378
  %v3045 = vunpack.c.l.b16 %v379
  %v3046 = vunpack.c.h.b16 %v379
  %v3047 = vunpack.c.l.b16 %v380
  %v3048 = vunpack.c.h.b16 %v380
  %v3049 = vunpack.c.l.b16 %v381
  %v3050 = vunpack.c.h.b16 %v381
  %v3051 = vunpack.c.l.b16 %v382
  %v3052 = vunpack.c.h.b16 %v382
  %v3053 = vunpack.c.l.b16 %v383
  %v3054 = vunpack.c.h.b16 %v383
  %v3055 = vunpack.c.l.b16 %v384
  %v3056 = vunpack.c.h.b16 %v384
  %v3057 = vunpack.c.l.b16 %v385
  %v3058 = vunpack.c.h.b16 %v385
  %v3059 = vunpack.c.l.b16 %v386
  %v3060 = vunpack.c.h.b16 %v386
  %v3061 = vunpack.c.l.b16 %v387
  %v3062 = vunpack.c.h.b16 %v387
  %v3063 = vunpack.c.l.b16 %v388
  %v3064 = vunpack.c.h.b16 %v388
  %v3065 = vunpack.c.l.b16 %v389
  %v3066 = vunpack.c.h.b16 %v389
  %v3067 = vunpack.c.l.b16 %v390
  %v3068 = vunpack.c.h.b16 %v390
  %v3069 = vunpack.c.l.b16 %v391
  %v3070 = vunpack.c.h.b16 %v391
  %v3071 = vunpack.c.l.b16 %v392
  %v3072 = vunpack.c.h.b16 %v392
  %v3073 = vunpack.c.l.b16 %v393
  %v3074 = vunpack.c.h.b16 %v393
  %v3075 = vunpack.c.l.b16 %v394
  %v3076 = vunpack.c.h.b16 %v394
  %v3077 = vunpack.c.l.b16 %v395
  %v3078 = vunpack.c.h.b16 %v395
  %v3079 = vunpack.c.l.b16 %v396
  %v3080 = vunpack.c.h.b16 %v396
  %v3081 = vunpack.c.l.b16 %v397
  %v3082 = vunpack.c.h.b16 %v397
  %v3083 = vunpack.c.l.b16 %v398
  %v3084 = vunpack.c.h.b16 %v398
  %v3085 = vunpack.c.l.b16 %v399
  %v3086 = vunpack.c.h.b16 %v399
  %v3087 = vunpack.c.l.b16 %v400
  %v3088 = vunpack.c.h.b16 %v400
  %v3089 = vunpack.c.l.b16 %v401
  %v3090 = vunpack.c.h.b16 %v401
  %v3091 = vunpack.c.l.b16 %v402
  %v3092 = vunpack.c.h.b16 %v402
  %v3093 = vunpack.c.l.b16 %v403
  %v3094 = vunpack.c.h.b16 %v403
  %v3095 = vunpack.c.l.b16 %v404
  %v3096 = vunpack.c.h.b16 %v404
  %v3097 = vunpack.c.l.b16 %v405
  %v3098 = vunpack.c.h.b16 %v405
  %v3099 = vunpack.c.l.b16 %v406
  %v3100 = vunpack.c.h.b16 %v406
  %v3101 = vunpack.c.l.b16 %v407
  %v3102 = vunpack.c.h.b16 %v407
  %v3103 = vunpack.c.l.b16 %v408
  %v3104 = vunpack.c.h.b16 %v408
  %v3105 = vunpack.c.l.b16 %v409
  %v3106 = vunpack.c.h.b16 %v409
  %v3107 = vunpack.c.l.b16 %v410
  %v3108 = vunpack.c.h.b16 %v410
  %v3109 = vunpack.c.l.b16 %v411
  %v3110 = vunpack.c.h.b16 %v411
  %v3111 = vunpack.c.l.b16 %v412
  %v3112 = vunpack.c.h.b16 %v412
  %v3113 = vunpack.c.l.b16 %v413
  %v3114 = vunpack.c.h.b16 %v413
  %v3115 = vunpack.c.l.b16 %v414
  %v3116 = vunpack.c.h.b16 %v414
  %v3117 = vunpack.c.l.b16 %v415
  %v3118 = vunpack.c.h.b16 %v415
  %v3119 = vunpack.c.l.b16 %v416
  %v3120 = vunpack.c.h.b16 %v416
  %v3121 = vunpack.c.l.b16 %v417
  %v3122 = vunpack.c.h.b16 %v417
  %v3123 = vunpack.c.l.b16 %v418
  %v3124 = vunpack.c.h.b16 %v418
  %v3125 = vunpack.c.l.b16 %v419
  %v3126 = vunpack.c.h.b16 %v419
  %v3127 = vunpack.c.l.b16 %v420
  %v3128 = vunpack.c.h.b16 %v420
  %v3129 = vunpack.c.l.b16 %v421
  %v3130 = vunpack.c.h.b16 %v421
  %v3131 = vunpack.c.l.b16 %v422
  %v3132 = vunpack.c.h.b16 %v422
  %v3133 = vunpack.c.l.b16 %v423
  %v3134 = vunpack.c.h.b16 %v423
  %v3135 = vunpack.c.l.b16 %v424
  %v3136 = vunpack.c.h.b16 %v424
  %v3137 = vunpack.c.l.b16 %v425
  %v3138 = vunpack.c.h.b16 %v425
  %v3139 = vunpack.c.l.b16 %v426
  %v3140 = vunpack.c.h.b16 %v426
  %v3141 = vunpack.c.l.b16 %v427
  %v3142 = vunpack.c.h.b16 %v427
  %v3143 = vunpack.c.l.b16 %v428
  %v3144 = vunpack.c.h.b16 %v428
  %v3145 = vunpack.c.l.b16 %v429
  %v3146 = vunpack.c.h.b16 %v429
  %v3147 = vunpack.c.l.b16 %v430
  %v3148 = vunpack.c.h.b16 %v430
  %v3149 = vunpack.c.l.b16 %v431
  %v3150 = vunpack.c.h.b16 %v431
  %v3151 = vunpack.c.l.b16 %v432
  %v3152 = vunpack.c.h.b16 %v432
  %v3153 = vunpack.c.l.b16 %v433
  %v3154 = vunpack.c.h.b16 %v433
  %v3155 = vunpack.c.l.b16 %v434
  %v3156 = vunpack.c.h.b16 %v434
  %v3157 = vunpack.c.l.b16 %v435
  %v3158 = vunpack.c.h.b16 %v435
  %v3159 = vunpack.c.l.b16 %v436
  %v3160 = vunpack.c.h.b16 %v436
  %v3161 = vunpack.c.l.b16 %v437
  %v3162 = vunpack.c.h.b16 %v437
  %v3163 = vunpack.c.l.b16 %v438
  %v3164 = vunpack.c.h.b16 %v438
  %v3165 = vunpack.c.l.b16 %v439
  %v3166 = vunpack.c.h.b16 %v439
  %v3167 = vunpack.c.l.b16 %v440
  %v3168 = vunpack.c.h.b16 %v440
  %v3169 = vunpack.c.l.b16 %v441
  %v3170 = vunpack.c.h.b16 %v441
  %v3171 = vunpack.c.l.b16 %v442
  %v3172 = vunpack.c.h.b16 %v442
  %v3173 = vunpack.c.l.b16 %v443
  %v3174 = vunpack.c.h.b16 %v443
  %v3175 = vunpack.c.l.b16 %v444
  %v3176 = vunpack.c.h.b16 %v444
  %v3177 = vunpack.c.l.b16 %v445
  %v3178 = vunpack.c.h.b16 %v445
  %v3179 = vunpack.c.l.b16 %v446
  %v3180 = vunpack.c.h.b16 %v446
  %v3181 = vunpack.c.l.b16 %v447
  %v3182 = vunpack.c.h.b16 %v447
  %v3183 = vunpack.c.l.b16 %v448
  %v3184 = vunpack.c.h.b16 %v448
  %v3185 = vunpack.c.l.b16 %v449
  %v3186 = vunpack.c.h.b16 %v449
  %v3187 = vunpack.c.l.b16 %v450
  %v3188 = vunpack.c.h.b16 %v450
  %v3189 = vunpack.c.l.b16 %v451
  %v3190 = vunpack.c.h.b16 %v451
  %v3191 = vunpack.c.l.b16 %v452
  %v3192 = vunpack.c.h.b16 %v452
  %v3193 = vunpack.c.l.b16 %v453
  %v3194 = vunpack.c.h.b16 %v453
  %v3195 = vunpack.c.l.b16 %v454
  %v3196 = vunpack.c.h.b16 %v454
  %v3197 = vunpack.c.l.b16 %v455
  %v3198 = vunpack.c.h.b16 %v455
  %v3199 = vunpack.c.l.b16 %v456
  %v3200 = vunpack.c.h.b16 %v456
  %v3201 = vunpack.c.l.b16 %v457
  %v3202 = vunpack.c.h.b16 %v457
  %v3203 = vunpack.c.l.b16 %v458
  %v3204 = vunpack.c.h.b16 %v458
  %v3205 = vunpack.c.l.b16 %v459
  %v3206 = vunpack.c.h.b16 %v459
  %v3207 = vunpack.c.l.b16 %v460
  %v3208 = vunpack.c.h.b16 %v460
  %v3209 = vunpack.c.l.b16 %v461
  %v3210 = vunpack.c.h.b16 %v461
  %v3211 = vunpack.c.l.b16 %v462
  %v3212 = vunpack.c.h.b16 %v462
  %v3213 = vunpack.c.l.b16 %v463
  %v3214 = vunpack.c.h.b16 %v463
  %v3215 = vunpack.c.l.b16 %v464
  %v3216 = vunpack.c.h.b16 %v464
  %v3217 = vunpack.c.l.b16 %v465
  %v3218 = vunpack.c.h.b16 %v465
  %v3219 = vunpack.c.l.b16 %v466
  %v3220 = vunpack.c.h.b16 %v466
  %v3221 = vunpack.c.l.b16 %v467
  %v3222 = vunpack.c.h.b16 %v467
  %v3223 = vunpack.c.l.b16 %v468
  %v3224 = vunpack.c.h.b16 %v468
  %v3225 = vunpack.c.l.b16 %v469
  %v3226 = vunpack.c.h.b16 %v469
  %v3227 = vunpack.c.l.b16 %v470
  %v3228 = vunpack.c.h.b16 %v470
  %v3229 = vunpack.c.l.b16 %v471
  %v3230 = vunpack.c.h.b16 %v471
  %v3231 = vunpack.c.l.b16 %v472
  %v3232 = vunpack.c.h.b16 %v472
  %v3233 = vunpack.c.l.b16 %v473
  %v3234 = vunpack.c.h.b16 %v473
  %v3235 = vunpack.c.l.b16 %v474
  %v3236 = vunpack.c.h.b16 %v474
  %v3237 = vunpack.c.l.b16 %v475
  %v3238 = vunpack.c.h.b16 %v475
  %v3239 = vunpack.c.l.b16 %v476
  %v3240 = vunpack.c.h.b16 %v476
  %v3241 = vunpack.c.l.b16 %v477
  %v3242 = vunpack.c.h.b16 %v477
  %v3243 = vunpack.c.l.b16 %v478
  %v3244 = vunpack.c.h.b16 %v478
  %v3245 = vunpack.c.l.b16 %v479
  %v3246 = vunpack.c.h.b16 %v479
  %v3247 = vunpack.c.l.b16 %v480
  %v3248 = vunpack.c.h.b16 %v480
  %v3249 = vunpack.c.l.b16 %v481
  %v3250 = vunpack.c.h.b16 %v481
  %v3251 = vunpack.c.l.b16 %v482
  %v3252 = vunpack.c.h.b16 %v482
  %v3253 = vunpack.c.l.b16 %v483
  %v3254 = vunpack.c.h.b16 %v483
  %v3255 = vunpack.c.l.b16 %v484
  %v3256 = vunpack.c.h.b16 %v484
  %v3257 = vunpack.c.l.b16 %v485
  %v3258 = vunpack.c.h.b16 %v485
  %v3259 = vunpack.c.l.b16 %v486
  %v3260 = vunpack.c.h.b16 %v486
  %v3261 = vunpack.c.l.b16 %v487
  %v3262 = vunpack.c.h.b16 %v487
  %v3263 = vunpack.c.l.b16 %v488
  %v3264 = vunpack.c.h.b16 %v488
  %v3265 = vunpack.c.l.b16 %v489
  %v3266 = vunpack.c.h.b16 %v489
  %v3267 = vunpack.c.l.b16 %v490
  %v3268 = vunpack.c.h.b16 %v490
  %v3269 = vunpack.c.l.b16 %v491
  %v3270 = vunpack.c.h.b16 %v491
  %v3271 = vunpack.c.l.b16 %v492
  %v3272 = vunpack.c.h.b16 %v492
  %v3273 = vunpack.c.l.b16 %v493
  %v3274 = vunpack.c.h.b16 %v493
  %v3275 = vunpack.c.l.b16 %v494
  %v3276 = vunpack.c.h.b16 %v494
  %v3277 = vunpack.c.l.b16 %v495
  %v3278 = vunpack.c.h.b16 %v495
  %v3279 = vunpack.c.l.b16 %v496
  %v3280 = vunpack.c.h.b16 %v496
  %v3281 = vunpack.c.l.b16 %v497
  %v3282 = vunpack.c.h.b16 %v497
  %v3283 = vunpack.c.l.b16 %v498
  %v3284 = vunpack.c.h.b16 %v498
  %v3285 = vunpack.c.l.b16 %v499
  %v3286 = vunpack.c.h.b16 %v499
  %v3287 = vunpack.c.l.b16 %v500
  %v3288 = vunpack.c.h.b16 %v500
  %v3289 = vunpack.c.l.b16 %v501
  %v3290 = vunpack.c.h.b16 %v501
  %v3291 = vunpack.c.l.b16 %v502
  %v3292 = vunpack.c.h.b16 %v502
  %v3293 = vunpack.c.l.b16 %v503
  %v3294 = vunpack.c.h.b16 %v503
  %v3295 = vunpack.c.l.b16 %v504
  %v3296 = vunpack.c.h.b16 %v504
  %v3297 = vunpack.c.l.b16 %v505
  %v3298 = vunpack.c.h.b16 %v505
  %v3299 = vunpack.c.l.b16 %v506
  %v3300 = vunpack.c.h.b16 %v506
  %v3301 = vunpack.c.l.b16 %v507
  %v3302 = vunpack.c.h.b16 %v507
  %v3303 = vunpack.c.l.b16 %v508
  %v3304 = vunpack.c.h.b16 %v508
  %v3305 = vunpack.c.l.b16 %v509
  %v3306 = vunpack.c.h.b16 %v509
  %v3307 = vunpack.c.l.b16 %v510
  %v3308 = vunpack.c.h.b16 %v510
  %v3309 = vunpack.c.l.b16 %v511
  %v3310 = vunpack.c.h.b16 %v511
  %v3311 = vunpack.c.l.b16 %v512
  %v3312 = vunpack.c.h.b16 %v512
  %v3313 = vunpack.c.l.b16 %v513
  %v3314 = vunpack.c.h.b16 %v513
  %v3315 = vunpack.c.l.b16 %v514
  %v3316 = vunpack.c.h.b16 %v514
  %v3317 = vunpack.c.l.b16 %v515
  %v3318 = vunpack.c.h.b16 %v515
  %v3319 = vunpack.c.l.b16 %v516
  %v3320 = vunpack.c.h.b16 %v516
  %v3321 = vunpack.c.l.b16 %v517
  %v3322 = vunpack.c.h.b16 %v517
  %v3323 = vunpack.c.l.b16 %v518
  %v3324 = vunpack.c.h.b16 %v518
  %v3325 = vunpack.c.l.b16 %v519
  %v3326 = vunpack.c.h.b16 %v519
  %v3327 = vunpack.c.l.b16 %v520
  %v3328 = vunpack.c.h.b16 %v520
  %v3329 = vunpack.c.l.b16 %v521
  %v3330 = vunpack.c.h.b16 %v521
  %v3331 = vunpack.c.l.b16 %v522
  %v3332 = vunpack.c.h.b16 %v522
  %v3333 = vunpack.c.l.b16 %v523
  %v3334 = vunpack.c.h.b16 %v523
  %v3335 = vunpack.c.l.b16 %v524
  %v3336 = vunpack.c.h.b16 %v524
  %v3337 = vunpack.c.l.b16 %v525
  %v3338 = vunpack.c.h.b16 %v525
  %v3339 = vunpack.c.l.b16 %v526
  %v3340 = vunpack.c.h.b16 %v526
  %v3341 = vunpack.c.l.b16 %v527
  %v3342 = vunpack.c.h.b16 %v527
  %v3343 = vunpack.c.l.b16 %v528
  %v3344 = vunpack.c.h.b16 %v528
  %v3345 = vunpack.c.l.b16 %v529
  %v3346 = vunpack.c.h.b16 %v529
  %v3347 = vunpack.c.l.b16 %v530
  %v3348 = vunpack.c.h.b16 %v530
  %v3349 = vunpack.c.l.b16 %v531
  %v3350 = vunpack.c.h.b16 %v531
  %v3351 = vunpack.c.l.b16 %v532
  %v3352 = vunpack.c.h.b16 %v532
  %v3353 = vunpack.c.l.b16 %v533
  %v3354 = vunpack.c.h.b16 %v533
  %v3355 = vunpack.c.l.b16 %v534
  %v3356 = vunpack.c.h.b16 %v534
  %v3357 = vunpack.c.l.b16 %v535
  %v3358 = vunpack.c.h.b16 %v535
  %v3359 = vunpack.c.l.b16 %v536
  %v3360 = vunpack.c.h.b16 %v536
  %v3361 = vunpack.c.l.b16 %v537
  %v3362 = vunpack.c.h.b16 %v537
  %v3363 = vunpack.c.l.b16 %v538
  %v3364 = vunpack.c.h.b16 %v538
  %v3365 = vunpack.c.l.b16 %v539
  %v3366 = vunpack.c.h.b16 %v539
  %v3367 = vunpack.c.l.b16 %v540
  %v3368 = vunpack.c.h.b16 %v540
  %v3369 = vunpack.c.l.b16 %v541
  %v3370 = vunpack.c.h.b16 %v541
  %v3371 = vunpack.c.l.b16 %v542
  %v3372 = vunpack.c.h.b16 %v542
  %v3373 = vunpack.c.l.b16 %v543
  %v3374 = vunpack.c.h.b16 %v543
  %v3375 = vunpack.c.l.b16 %v544
  %v3376 = vunpack.c.h.b16 %v544
  %v3377 = vunpack.c.l.b16 %v545
  %v3378 = vunpack.c.h.b16 %v545
  %v3379 = vunpack.c.l.b16 %v546
  %v3380 = vunpack.c.h.b16 %v546
  %v3381 = vunpack.c.l.b16 %v547
  %v3382 = vunpack.c.h.b16 %v547
  %v3383 = vunpack.c.l.b16 %v548
  %v3384 = vunpack.c.h.b16 %v548
  %v3385 = vunpack.c.l.b16 %v549
  %v3386 = vunpack.c.h.b16 %v549
  %v3387 = vunpack.c.l.b16 %v550
  %v3388 = vunpack.c.h.b16 %v550
  %v3389 = vunpack.c.l.b16 %v551
  %v3390 = vunpack.c.h.b16 %v551
  %v3391 = vunpack.c.l.b16 %v552
  %v3392 = vunpack.c.h.b16 %v552
  %v3393 = vunpack.c.l.b16 %v553
  %v3394 = vunpack.c.h.b16 %v553
  %v3395 = vunpack.c.l.b16 %v554
  %v3396 = vunpack.c.h.b16 %v554
  %v3397 = vunpack.c.l.b16 %v555
  %v3398 = vunpack.c.h.b16 %v555
  %v3399 = vunpack.c.l.b16 %v556
  %v3400 = vunpack.c.h.b16 %v556
  %v3401 = vunpack.c.l.b16 %v557
  %v3402 = vunpack.c.h.b16 %v557
  %v3403 = vunpack.c.l.b16 %v558
  %v3404 = vunpack.c.h.b16 %v558
  %v3405 = vunpack.c.l.b16 %v559
  %v3406 = vunpack.c.h.b16 %v559
  %v3407 = vunpack.c.l.b16 %v560
  %v3408 = vunpack.c.h.b16 %v560
  %v3409 = vunpack.c.l.b16 %v561
  %v3410 = vunpack.c.h.b16 %v561
  %v3411 = vunpack.c.l.b16 %v562
  %v3412 = vunpack.c.h.b16 %v562
  %v3413 = vunpack.c.l.b16 %v563
  %v3414 = vunpack.c.h.b16 %v563
  %v3415 = vunpack.c.l.b16 %v564
  %v3416 = vunpack.c.h.b16 %v564
  %v3417 = vunpack.c.l.b16 %v565
  %v3418 = vunpack.c.h.b16 %v565
  %v3419 = vunpack.c.l.b16 %v566
  %v3420 = vunpack.c.h.b16 %v566
  %v3421 = vunpack.c.l.b16 %v567
  %v3422 = vunpack.c.h.b16 %v567
  %v3423 = vunpack.c.l.b16 %v568
  %v3424 = vunpack.c.h.b16 %v568
  %v3425 = vunpack.c.l.b16 %v569
  %v3426 = vunpack.c.h.b16 %v569
  %v3427 = vunpack.c.l.b16 %v570
  %v3428 = vunpack.c.h.b16 %v570
  %v3429 = vunpack.c.l.b16 %v571
  %v3430 = vunpack.c.h.b16 %v571
  %v3431 = vunpack.c.l.b16 %v572
  %v3432 = vunpack.c.h.b16 %v572
  %v3433 = vunpack.c.l.b16 %v573
  %v3434 = vunpack.c.h.b16 %v573
  %v3435 = vunpack.c.l.b16 %v574
  %v3436 = vunpack.c.h.b16 %v574
  %v3437 = vunpack.c.l.b16 %v575
  %v3438 = vunpack.c.h.b16 %v575
  %v3439 = vunpack.c.l.b16 %v576
  %v3440 = vunpack.c.h.b16 %v576
  %v3441 = vunpack.c.l.b16 %v577
  %v3442 = vunpack.c.h.b16 %v577
  %v3443 = vunpack.c.l.b16 %v578
  %v3444 = vunpack.c.h.b16 %v578
  %v3445 = vunpack.c.l.b16 %v579
  %v3446 = vunpack.c.h.b16 %v579
  %v3447 = vunpack.c.l.b16 %v580
  %v3448 = vunpack.c.h.b16 %v580
  %v3449 = vunpack.c.l.b16 %v581
  %v3450 = vunpack.c.h.b16 %v581
  %v3451 = vunpack.c.l.b16 %v582
  %v3452 = vunpack.c.h.b16 %v582
  %v3453 = vunpack.c.l.b16 %v583
  %v3454 = vunpack.c.h.b16 %v583
  %v3455 = vunpack.c.l.b16 %v584
  %v3456 = vunpack.c.h.b16 %v584
  %v3457 = vunpack.c.l.b16 %v585
  %v3458 = vunpack.c.h.b16 %v585
  %v3459 = vunpack.c.l.b16 %v586
  %v3460 = vunpack.c.h.b16 %v586
  %v3461 = vunpack.c.l.b16 %v587
  %v3462 = vunpack.c.h.b16 %v587
  %v3463 = vunpack.c.l.b16 %v588
  %v3464 = vunpack.c.h.b16 %v588
  %v3465 = vunpack.c.l.b16 %v589
  %v3466 = vunpack.c.h.b16 %v589
  %v3467 = vunpack.c.l.b16 %v590
  %v3468 = vunpack.c.h.b16 %v590
  %v3469 = vunpack.c.l.b16 %v591
  %v3470 = vunpack.c.h.b16 %v591
  %v3471 = vunpack.c.l.b16 %v592
  %v3472 = vunpack.c.h.b16 %v592
  %v3473 = vunpack.c.l.b16 %v593
  %v3474 = vunpack.c.h.b16 %v593
  %v3475 = vunpack.c.l.b16 %v594
  %v3476 = vunpack.c.h.b16 %v594
  %v3477 = vunpack.c.l.b16 %v595
  %v3478 = vunpack.c.h.b16 %v595
  %v3479 = vunpack.c.l.b16 %v596
  %v3480 = vunpack.c.h.b16 %v596
  %v3481 = vunpack.c.l.b16 %v597
  %v3482 = vunpack.c.h.b16 %v597
  %v3483 = vunpack.c.l.b16 %v598
  %v3484 = vunpack.c.h.b16 %v598
  %v3485 = vunpack.c.l.b16 %v599
  %v3486 = vunpack.c.h.b16 %v599
  %v3487 = vunpack.c.l.b16 %v600
  %v3488 = vunpack.c.h.b16 %v600
  %v3489 = vunpack.c.l.b16 %v601
  %v3490 = vunpack.c.h.b16 %v601
  %v3491 = vunpack.c.l.b16 %v602
  %v3492 = vunpack.c.h.b16 %v602
  %v3493 = vunpack.c.l.b16 %v603
  %v3494 = vunpack.c.h.b16 %v603
  %v3495 = vunpack.c.l.b16 %v604
  %v3496 = vunpack.c.h.b16 %v604
  %v3497 = vunpack.c.l.b16 %v605
  %v3498 = vunpack.c.h.b16 %v605
  %v3499 = vunpack.c.l.b16 %v606
  %v3500 = vunpack.c.h.b16 %v606
  %v3501 = vunpack.c.l.b16 %v607
  %v3502 = vunpack.c.h.b16 %v607
  %v3503 = vunpack.c.l.b16 %v608
  %v3504 = vunpack.c.h.b16 %v608
  %v3505 = vunpack.c.l.b16 %v609
  %v3506 = vunpack.c.h.b16 %v609
  %v3507 = vunpack.c.l.b16 %v610
  %v3508 = vunpack.c.h.b16 %v610
  %v3509 = vunpack.c.l.b16 %v611
  %v3510 = vunpack.c.h.b16 %v611
  %v3511 = vunpack.c.l.b16 %v612
  %v3512 = vunpack.c.h.b16 %v612
  %v3513 = vunpack.c.l.b16 %v613
  %v3514 = vunpack.c.h.b16 %v613
  %v3515 = vunpack.c.l.b16 %v614
  %v3516 = vunpack.c.h.b16 %v614
  %v3517 = vunpack.c.l.b16 %v615
  %v3518 = vunpack.c.h.b16 %v615
  %v3519 = vunpack.c.l.b16 %v616
  %v3520 = vunpack.c.h.b16 %v616
  %v3521 = vunpack.c.l.b16 %v617
  %v3522 = vunpack.c.h.b16 %v617
  %v3523 = vunpack.c.l.b16 %v618
  %v3524 = vunpack.c.h.b16 %v618
  %v3525 = vunpack.c.l.b16 %v619
  %v3526 = vunpack.c.h.b16 %v619
  %v3527 = vunpack.c.l.b16 %v620
  %v3528 = vunpack.c.h.b16 %v620
  %v3529 = vunpack.c.l.b16 %v621
  %v3530 = vunpack.c.h.b16 %v621
  %v3531 = vunpack.c.l.b16 %v622
  %v3532 = vunpack.c.h.b16 %v622
  %v3533 = vunpack.c.l.b16 %v623
  %v3534 = vunpack.c.h.b16 %v623
  %v3535 = vunpack.c.l.b16 %v624
  %v3536 = vunpack.c.h.b16 %v624
  %v3537 = vunpack.c.l.b16 %v625
  %v3538 = vunpack.c.h.b16 %v625
  %v3539 = vunpack.c.l.b16 %v626
  %v3540 = vunpack.c.h.b16 %v626
  %v3541 = vunpack.c.l.b16 %v627
  %v3542 = vunpack.c.h.b16 %v627
  %v3543 = vunpack.c.l.b16 %v628
  %v3544 = vunpack.c.h.b16 %v628
  %v3545 = vunpack.c.l.b16 %v629
  %v3546 = vunpack.c.h.b16 %v629
  %v3547 = vunpack.c.l.b16 %v630
  %v3548 = vunpack.c.h.b16 %v630
  %v3549 = vunpack.c.l.b16 %v631
  %v3550 = vunpack.c.h.b16 %v631
  %v3551 = vunpack.c.l.b16 %v632
  %v3552 = vunpack.c.h.b16 %v632
  %v3553 = vunpack.c.l.b16 %v633
  %v3554 = vunpack.c.h.b16 %v633
  %v3555 = vunpack.c.l.b16 %v634
  %v3556 = vunpack.c.h.b16 %v634
  %v3557 = vunpack.c.l.b16 %v635
  %v3558 = vunpack.c.h.b16 %v635
  %v3559 = vunpack.c.l.b16 %v636
  %v3560 = vunpack.c.h.b16 %v636
  %v3561 = vunpack.c.l.b16 %v637
  %v3562 = vunpack.c.h.b16 %v637
  %v3563 = vunpack.c.l.b16 %v638
  %v3564 = vunpack.c.h.b16 %v638
  %v3565 = vunpack.c.l.b16 %v639
  %v3566 = vunpack.c.h.b16 %v639
  %v3567 = vunpack.c.l.b16 %v640
  %v3568 = vunpack.c.h.b16 %v640
  %v3569 = vunpack.c.l.b16 %v641
  %v3570 = vunpack.c.h.b16 %v641
  %v3571 = vunpack.c.l.b16 %v642
  %v3572 = vunpack.c.h.b16 %v642
  %v3573 = vunpack.c.l.b16 %v643
  %v3574 = vunpack.c.h.b16 %v643
  %v3575 = vunpack.c.l.b16 %v644
  %v3576 = vunpack.c.h.b16 %v644
  %v3577 = vunpack.c.l.b16 %v645
  %v3578 = vunpack.c.h.b16 %v645
  %v3579 = vunpack.c.l.b16 %v646
  %v3580 = vunpack.c.h.b16 %v646
  %v3581 = vunpack.c.l.b16 %v647
  %v3582 = vunpack.c.h.b16 %v647
  %v3583 = vunpack.c.l.b16 %v648
  %v3584 = vunpack.c.h.b16 %v648
  %v3585 = vunpack.c.l.b16 %v649
  %v3586 = vunpack.c.h.b16 %v649
  %v3587 = vunpack.c.l.b16 %v650
  %v3588 = vunpack.c.h.b16 %v650
  %v3589 = vunpack.c.l.b16 %v651
  %v3590 = vunpack.c.h.b16 %v651
  %v3591 = vunpack.c.l.b16 %v652
  %v3592 = vunpack.c.h.b16 %v652
  %v3593 = vunpack.c.l.b16 %v653
  %v3594 = vunpack.c.h.b16 %v653
  %v3595 = vunpack.c.l.b16 %v654
  %v3596 = vunpack.c.h.b16 %v654
  %v3597 = vunpack.c.l.b16 %v655
  %v3598 = vunpack.c.h.b16 %v655
  %v3599 = vunpack.c.l.b16 %v656
  %v3600 = vunpack.c.h.b16 %v656
  %v3601 = vunpack.c.l.b16 %v657
  %v3602 = vunpack.c.h.b16 %v657
  %v3603 = vunpack.c.l.b16 %v658
  %v3604 = vunpack.c.h.b16 %v658
  %v3605 = vunpack.c.l.b16 %v659
  %v3606 = vunpack.c.h.b16 %v659
  %v3607 = vunpack.c.l.b16 %v660
  %v3608 = vunpack.c.h.b16 %v660
  %v3609 = vunpack.c.l.b16 %v661
  %v3610 = vunpack.c.h.b16 %v661
  %v3611 = vunpack.c.l.b16 %v662
  %v3612 = vunpack.c.h.b16 %v662
  %v3613 = vunpack.c.l.b16 %v663
  %v3614 = vunpack.c.h.b16 %v663
  %v3615 = vunpack.c.l.b16 %v664
  %v3616 = vunpack.c.h.b16 %v664
  %v3617 = vunpack.c.l.b16 %v665
  %v3618 = vunpack.c.h.b16 %v665
  %v3619 = vunpack.c.l.b16 %v666
  %v3620 = vunpack.c.h.b16 %v666
  %v3621 = vunpack.c.l.b16 %v667
  %v3622 = vunpack.c.h.b16 %v667
  %v3623 = vunpack.c.l.b16 %v668
  %v3624 = vunpack.c.h.b16 %v668
  %v3625 = vunpack.c.l.b16 %v669
  %v3626 = vunpack.c.h.b16 %v669
  %v3627 = vunpack.c.l.b16 %v670
  %v3628 = vunpack.c.h.b16 %v670
  %v3629 = vunpack.c.l.b16 %v671
  %v3630 = vunpack.c.h.b16 %v671
  %v3631 = vunpack.c.l.b16 %v672
  %v3632 = vunpack.c.h.b16 %v672
  %v3633 = vunpack.c.l.b16 %v673
  %v3634 = vunpack.c.h.b16 %v673
  %v3635 = vunpack.c.l.b16 %v674
  %v3636 = vunpack.c.h.b16 %v674
  %v3637 = vunpack.c.l.b16 %v675
  %v3638 = vunpack.c.h.b16 %v675
  %v3639 = vunpack.c.l.b16 %v676
  %v3640 = vunpack.c.h.b16 %v676
  %v3641 = vunpack.c.l.b16 %v677
  %v3642 = vunpack.c.h.b16 %v677
  %v3643 = vunpack.c.l.b16 %v678
  %v3644 = vunpack.c.h.b16 %v678
  %v3645 = vunpack.c.l.b16 %v679
  %v3646 = vunpack.c.h.b16 %v679
  %v3647 = vunpack.c.l.b16 %v680
  %v3648 = vunpack.c.h.b16 %v680
  %v3649 = vunpack.c.l.b16 %v681
  %v3650 = vunpack.c.h.b16 %v681
  %v3651 = vunpack.c.l.b16 %v682
  %v3652 = vunpack.c.h.b16 %v682
  %v3653 = vunpack.c.l.b16 %v683
  %v3654 = vunpack.c.h.b16 %v683
  %v3655 = vunpack.c.l.b16 %v684
  %v3656 = vunpack.c.h.b16 %v684
  %v3657 = vunpack.c.l.b16 %v685
  %v3658 = vunpack.c.h.b16 %v685
  %v3659 = vunpack.c.l.b16 %v686
  %v3660 = vunpack.c.h.b16 %v686
  %v3661 = vunpack.c.l.b16 %v687
  %v3662 = vunpack.c.h.b16 %v687
  %v3663 = vunpack.c.l.b16 %v688
  %v3664 = vunpack.c.h.b16 %v688
  %v3665 = vunpack.c.l.b16 %v689
  %v3666 = vunpack.c.h.b16 %v689
  %v3667 = vunpack.c.l.b16 %v690
  %v3668 = vunpack.c.h.b16 %v690
  %v3669 = vunpack.c.l.b16 %v691
  %v3670 = vunpack.c.h.b16 %v691
  %v3671 = vunpack.c.l.b16 %v692
  %v3672 = vunpack.c.h.b16 %v692
  %v3673 = vunpack.c.l.b16 %v693
  %v3674 = vunpack.c.h.b16 %v693
  %v3675 = vunpack.c.l.b16 %v694
  %v3676 = vunpack.c.h.b16 %v694
  %v3677 = vunpack.c.l.b16 %v695
  %v3678 = vunpack.c.h.b16 %v695
  %v3679 = vunpack.c.l.b16 %v696
  %v3680 = vunpack.c.h.b16 %v696
  %v3681 = vunpack.c.l.b16 %v697
  %v3682 = vunpack.c.h.b16 %v697
  %v3683 = vunpack.c.l.b16 %v698
  %v3684 = vunpack.c.h.b16 %v698
  %v3685 = vunpack.c.l.b16 %v699
  %v3686 = vunpack.c.h.b16 %v699
  %v3687 = vunpack.c.l.b16 %v700
  %v3688 = vunpack.c.h.b16 %v700
  %v3689 = vunpack.c.l.b16 %v701
  %v3690 = vunpack.c.h.b16 %v701
  %v3691 = vunpack.c.l.b16 %v702
  %v3692 = vunpack.c.h.b16 %v702
  %v3693 = vunpack.c.l.b16 %v703
  %v3694 = vunpack.c.h.b16 %v703
  %v3695 = vunpack.c.l.b16 %v704
  %v3696 = vunpack.c.h.b16 %v704
  %v3697 = vunpack.c.l.b16 %v705
  %v3698 = vunpack.c.h.b16 %v705
  %v3699 = vunpack.c.l.b16 %v706
  %v3700 = vunpack.c.h.b16 %v706
  %v3701 = vunpack.c.l.b16 %v707
  %v3702 = vunpack.c.h.b16 %v707
  %v3703 = vunpack.c.l.b16 %v708
  %v3704 = vunpack.c.h.b16 %v708
  %v3705 = vunpack.c.l.b16 %v709
  %v3706 = vunpack.c.h.b16 %v709
  %v3707 = vunpack.c.l.b16 %v710
  %v3708 = vunpack.c.h.b16 %v710
  %v3709 = vunpack.c.l.b16 %v711
  %v3710 = vunpack.c.h.b16 %v711
  %v3711 = vunpack.c.l.b16 %v712
  %v3712 = vunpack.c.h.b16 %v712
  %v3713 = vunpack.c.l.b16 %v713
  %v3714 = vunpack.c.h.b16 %v713
  %v3715 = vunpack.c.l.b16 %v714
  %v3716 = vunpack.c.h.b16 %v714
  %v3717 = vunpack.c.l.b16 %v715
  %v3718 = vunpack.c.h.b16 %v715
  %v3719 = vunpack.c.l.b16 %v716
  %v3720 = vunpack.c.h.b16 %v716
  %v3721 = vunpack.c.l.b16 %v717
  %v3722 = vunpack.c.h.b16 %v717
  %v3723 = vunpack.c.l.b16 %v718
  %v3724 = vunpack.c.h.b16 %v718
  %v3725 = vunpack.c.l.b16 %v719
  %v3726 = vunpack.c.h.b16 %v719
  %v3727 = vunpack.c.l.b16 %v720
  %v3728 = vunpack.c.h.b16 %v720
  %v3729 = vunpack.c.l.b16 %v721
  %v3730 = vunpack.c.h.b16 %v721
  %v3731 = vunpack.c.l.b16 %v722
  %v3732 = vunpack.c.h.b16 %v722
  %v3733 = vunpack.c.l.b16 %v723
  %v3734 = vunpack.c.h.b16 %v723
  %v3735 = vunpack.c.l.b16 %v724
  %v3736 = vunpack.c.h.b16 %v724
  %v3737 = vunpack.c.l.b16 %v725
  %v3738 = vunpack.c.h.b16 %v725
  %v3739 = vunpack.c.l.b16 %v726
  %v3740 = vunpack.c.h.b16 %v726
  %v3741 = vunpack.c.l.b16 %v727
  %v3742 = vunpack.c.h.b16 %v727
  %v3743 = vunpack.c.l.b16 %v728
  %v3744 = vunpack.c.h.b16 %v728
  %v3745 = vunpack.c.l.b16 %v729
  %v3746 = vunpack.c.h.b16 %v729
  %v3747 = vunpack.c.l.b16 %v730
  %v3748 = vunpack.c.h.b16 %v730
  %v3749 = vunpack.c.l.b16 %v731
  %v3750 = vunpack.c.h.b16 %v731
  %v3751 = vunpack.c.l.b16 %v732
  %v3752 = vunpack.c.h.b16 %v732
  %v3753 = vunpack.c.l.b16 %v733
  %v3754 = vunpack.c.h.b16 %v733
  %v3755 = vunpack.c.l.b16 %v734
  %v3756 = vunpack.c.h.b16 %v734
  %v3757 = vunpack.c.l.b16 %v735
  %v3758 = vunpack.c.h.b16 %v735
  %v3759 = vunpack.c.l.b16 %v736
  %v3760 = vunpack.c.h.b16 %v736
  %v3761 = vunpack.c.l.b16 %v737
  %v3762 = vunpack.c.h.b16 %v737
  %v3763 = vunpack.c.l.b16 %v738
  %v3764 = vunpack.c.h.b16 %v738
  %v3765 = vunpack.c.l.b16 %v739
  %v3766 = vunpack.c.h.b16 %v739
  %v3767 = vunpack.c.l.b16 %v740
  %v3768 = vunpack.c.h.b16 %v740
  %v3769 = vunpack.c.l.b16 %v741
  %v3770 = vunpack.c.h.b16 %v741
  %v3771 = vunpack.c.l.b16 %v742
  %v3772 = vunpack.c.h.b16 %v742
  %v3773 = vunpack.c.l.b16 %v743
  %v3774 = vunpack.c.h.b16 %v743
  %v3775 = vunpack.c.l.b16 %v744
  %v3776 = vunpack.c.h.b16 %v744
  %v3777 = vunpack.c.l.b16 %v745
  %v3778 = vunpack.c.h.b16 %v745
  %v3779 = vunpack.c.l.b16 %v746
  %v3780 = vunpack.c.h.b16 %v746
  %v3781 = vunpack.c.l.b16 %v747
  %v3782 = vunpack.c.h.b16 %v747
  %v3783 = vunpack.c.l.b16 %v748
  %v3784 = vunpack.c.h.b16 %v748
  %v3785 = vunpack.c.l.b16 %v749
  %v3786 = vunpack.c.h.b16 %v749
  %v3787 = vunpack.c.l.b16 %v750
  %v3788 = vunpack.c.h.b16 %v750
  %v3789 = vunpack.c.l.b16 %v751
  %v3790 = vunpack.c.h.b16 %v751
  %v3791 = vunpack.c.l.b16 %v752
  %v3792 = vunpack.c.h.b16 %v752
  %v3793 = vunpack.c.l.b16 %v753
  %v3794 = vunpack.c.h.b16 %v753
  %v3795 = vunpack.c.l.b16 %v754
  %v3796 = vunpack.c.h.b16 %v754
  %v3797 = vunpack.c.l.b16 %v755
  %v3798 = vunpack.c.h.b16 %v755
  %v3799 = vunpack.c.l.b16 %v756
  %v3800 = vunpack.c.h.b16 %v756
  %v3801 = vunpack.c.l.b16 %v757
  %v3802 = vunpack.c.h.b16 %v757
  %v3803 = vunpack.c.l.b16 %v758
  %v3804 = vunpack.c.h.b16 %v758
  %v3805 = vunpack.c.l.b16 %v759
  %v3806 = vunpack.c.h.b16 %v759
  %v3807 = vunpack.c.l.b16 %v760
  %v3808 = vunpack.c.h.b16 %v760
  %v3809 = vunpack.c.l.b16 %v761
  %v3810 = vunpack.c.h.b16 %v761
  %v3811 = vunpack.c.l.b16 %v762
  %v3812 = vunpack.c.h.b16 %v762
  %v3813 = vunpack.c.l.b16 %v763
  %v3814 = vunpack.c.h.b16 %v763
  %v3815 = vunpack.c.l.b16 %v764
  %v3816 = vunpack.c.h.b16 %v764
  %v3817 = vunpack.c.l.b16 %v765
  %v3818 = vunpack.c.h.b16 %v765
  %v3819 = vunpack.c.l.b16 %v766
  %v3820 = vunpack.c.h.b16 %v766
  %v3821 = vunpack.c.l.b16 %v767
  %v3822 = vunpack.c.h.b16 %v767
  %v3823 = vunpack.c.l.b16 %v768
  %v3824 = vunpack.c.h.b16 %v768
  %v3825 = vunpack.c.l.b16 %v769
  %v3826 = vunpack.c.h.b16 %v769
  %v3827 = vunpack.c.l.b16 %v770
  %v3828 = vunpack.c.h.b16 %v770
  %v3829 = vunpack.c.l.b16 %v771
  %v3830 = vunpack.c.h.b16 %v771
  %v3831 = vunpack.c.l.b16 %v772
  %v3832 = vunpack.c.h.b16 %v772
  %v3833 = vunpack.c.l.b16 %v773
  %v3834 = vunpack.c.h.b16 %v773
  %v3835 = vunpack.c.l.b16 %v774
  %v3836 = vunpack.c.h.b16 %v774
  %v3837 = vunpack.c.l.b16 %v775
  %v3838 = vunpack.c.h.b16 %v775
  %v3839 = vunpack.c.l.b16 %v776
  %v3840 = vunpack.c.h.b16 %v776
  %v3841 = vunpack.c.l.b16 %v777
  %v3842 = vunpack.c.h.b16 %v777
  %v3843 = vunpack.c.l.b16 %v778
  %v3844 = vunpack.c.h.b16 %v778
  %v3845 = vunpack.c.l.b16 %v779
  %v3846 = vunpack.c.h.b16 %v779
  %v3847 = vunpack.c.l.b16 %v780
  %v3848 = vunpack.c.h.b16 %v780
  %v3849 = vunpack.c.l.b16 %v781
  %v3850 = vunpack.c.h.b16 %v781
  %v3851 = vunpack.c.l.b16 %v782
  %v3852 = vunpack.c.h.b16 %v782
  %v3853 = vunpack.c.l.b16 %v783
  %v3854 = vunpack.c.h.b16 %v783
  %v3855 = vunpack.c.l.b16 %v784
  %v3856 = vunpack.c.h.b16 %v784
  %v3857 = vunpack.c.l.b16 %v785
  %v3858 = vunpack.c.h.b16 %v785
  %v3859 = vunpack.c.l.b16 %v786
  %v3860 = vunpack.c.h.b16 %v786
  %v3861 = vunpack.c.l.b16 %v787
  %v3862 = vunpack.c.h.b16 %v787
  %v3863 = vunpack.c.l.b16 %v788
  %v3864 = vunpack.c.h.b16 %v788
  %v3865 = vunpack.c.l.b16 %v789
  %v3866 = vunpack.c.h.b16 %v789
  %v3867 = vunpack.c.l.b16 %v790
  %v3868 = vunpack.c.h.b16 %v790
  %v3869 = vunpack.c.l.b16 %v791
  %v3870 = vunpack.c.h.b16 %v791
  %v3871 = vunpack.c.l.b16 %v792
  %v3872 = vunpack.c.h.b16 %v792
  %v3873 = vunpack.c.l.b16 %v793
  %v3874 = vunpack.c.h.b16 %v793
  %v3875 = vunpack.c.l.b16 %v794
  %v3876 = vunpack.c.h.b16 %v794
  %v3877 = vunpack.c.l.b16 %v795
  %v3878 = vunpack.c.h.b16 %v795
  %v3879 = vunpack.c.l.b16 %v796
  %v3880 = vunpack.c.h.b16 %v796
  %v3881 = vunpack.c.l.b16 %v797
  %v3882 = vunpack.c.h.b16 %v797
  %v3883 = vunpack.c.l.b16 %v798
  %v3884 = vunpack.c.h.b16 %v798
  %v3885 = vunpack.c.l.b16 %v799
  %v3886 = vunpack.c.h.b16 %v799
  %v3887 = vunpack.c.l.b16 %v800
  %v3888 = vunpack.c.h.b16 %v800
  %v3889 = vunpack.c.l.b16 %v801
  %v3890 = vunpack.c.h.b16 %v801
  %v3891 = vunpack.c.l.b16 %v802
  %v3892 = vunpack.c.h.b16 %v802
  %v3893 = vunpack.c.l.b16 %v803
  %v3894 = vunpack.c.h.b16 %v803
  %v3895 = vunpack.c.l.b16 %v804
  %v3896 = vunpack.c.h.b16 %v804
  %v3897 = vunpack.c.l.b16 %v805
  %v3898 = vunpack.c.h.b16 %v805
  %v3899 = vunpack.c.l.b16 %v806
  %v3900 = vunpack.c.h.b16 %v806
  %v3901 = vunpack.c.l.b16 %v807
  %v3902 = vunpack.c.h.b16 %v807
  %v3903 = vunpack.c.l.b16 %v808
  %v3904 = vunpack.c.h.b16 %v808
  %v3905 = vunpack.c.l.b16 %v809
  %v3906 = vunpack.c.h.b16 %v809
  %v3907 = vunpack.c.l.b16 %v810
  %v3908 = vunpack.c.h.b16 %v810
  %v3909 = vunpack.c.l.b16 %v811
  %v3910 = vunpack.c.h.b16 %v811
  %v3911 = vunpack.c.l.b16 %v812
  %v3912 = vunpack.c.h.b16 %v812
  %v3913 = vunpack.c.l.b16 %v813
  %v3914 = vunpack.c.h.b16 %v813
  %v3915 = vunpack.c.l.b16 %v814
  %v3916 = vunpack.c.h.b16 %v814
  %v3917 = vunpack.c.l.b16 %v815
  %v3918 = vunpack.c.h.b16 %v815
  %v3919 = vunpack.c.l.b16 %v816
  %v3920 = vunpack.c.h.b16 %v816
  %v3921 = vunpack.c.l.b16 %v817
  %v3922 = vunpack.c.h.b16 %v817
  %v3923 = vunpack.c.l.b16 %v818
  %v3924 = vunpack.c.h.b16 %v818
  %v3925 = vunpack.c.l.b16 %v819
  %v3926 = vunpack.c.h.b16 %v819
  %v3927 = vunpack.c.l.b16 %v820
  %v3928 = vunpack.c.h.b16 %v820
  %v3929 = vunpack.c.l.b16 %v821
  %v3930 = vunpack.c.h.b16 %v821
  %v3931 = vunpack.c.l.b16 %v822
  %v3932 = vunpack.c.h.b16 %v822
  %v3933 = vunpack.c.l.b16 %v823
  %v3934 = vunpack.c.h.b16 %v823
  %v3935 = vunpack.c.l.b16 %v824
  %v3936 = vunpack.c.h.b16 %v824
  %v3937 = vunpack.c.l.b16 %v825
  %v3938 = vunpack.c.h.b16 %v825
  %v3939 = vunpack.c.l.b16 %v826
  %v3940 = vunpack.c.h.b16 %v826
  %v3941 = vunpack.c.l.b16 %v827
  %v3942 = vunpack.c.h.b16 %v827
  %v3943 = vunpack.c.l.b16 %v828
  %v3944 = vunpack.c.h.b16 %v828
  %v3945 = vunpack.c.l.b16 %v829
  %v3946 = vunpack.c.h.b16 %v829
  %v3947 = vunpack.c.l.b16 %v830
  %v3948 = vunpack.c.h.b16 %v830
  %v3949 = vunpack.c.l.b16 %v831
  %v3950 = vunpack.c.h.b16 %v831
  %v3951 = vunpack.c.l.b16 %v832
  %v3952 = vunpack.c.h.b16 %v832
  %v3953 = vunpack.c.l.b16 %v833
  %v3954 = vunpack.c.h.b16 %v833
  %v3955 = vunpack.c.l.b16 %v834
  %v3956 = vunpack.c.h.b16 %v834
  %v3957 = vunpack.c.l.b16 %v835
  %v3958 = vunpack.c.h.b16 %v835
  %v3959 = vunpack.c.l.b16 %v836
  %v3960 = vunpack.c.h.b16 %v836
  %v3961 = vunpack.c.l.b16 %v837
  %v3962 = vunpack.c.h.b16 %v837
  %v3963 = vunpack.c.l.b16 %v838
  %v3964 = vunpack.c.h.b16 %v838
  %v3965 = vunpack.c.l.b16 %v839
  %v3966 = vunpack.c.h.b16 %v839
  %v3967 = vunpack.c.l.b16 %v840
  %v3968 = vunpack.c.h.b16 %v840
  %v3969 = vunpack.c.l.b16 %v841
  %v3970 = vunpack.c.h.b16 %v841
  %v3971 = vunpack.c.l.b16 %v842
  %v3972 = vunpack.c.h.b16 %v842
  %v3973 = vunpack.c.l.b16 %v843
  %v3974 = vunpack.c.h.b16 %v843
  %v3975 = vunpack.c.l.b16 %v844
  %v3976 = vunpack.c.h.b16 %v844
  %v3977 = vunpack.c.l.b16 %v845
  %v3978 = vunpack.c.h.b16 %v845
  %v3979 = vunpack.c.l.b16 %v846
  %v3980 = vunpack.c.h.b16 %v846
  %v3981 = vunpack.c.l.b16 %v847
  %v3982 = vunpack.c.h.b16 %v847
  %v3983 = vunpack.c.l.b16 %v848
  %v3984 = vunpack.c.h.b16 %v848
  %v3985 = vunpack.c.l.b16 %v849
  %v3986 = vunpack.c.h.b16 %v849
  %v3987 = vunpack.c.l.b16 %v850
  %v3988 = vunpack.c.h.b16 %v850
  %v3989 = vunpack.c.l.b16 %v851
  %v3990 = vunpack.c.h.b16 %v851
  %v3991 = vunpack.c.l.b16 %v852
  %v3992 = vunpack.c.h.b16 %v852
  %v3993 = vunpack.c.l.b16 %v853
  %v3994 = vunpack.c.h.b16 %v853
  %v3995 = vunpack.c.l.b16 %v854
  %v3996 = vunpack.c.h.b16 %v854
  %v3997 = vunpack.c.l.b16 %v855
  %v3998 = vunpack.c.h.b16 %v855
  %v3999 = vunpack.c.l.b16 %v856
  %v4000 = vunpack.c.h.b16 %v856
  %v4001 = vunpack.c.l.b16 %v857
  %v4002 = vunpack.c.h.b16 %v857
  %v4003 = vunpack.c.l.b16 %v858
  %v4004 = vunpack.c.h.b16 %v858
  %v4005 = vunpack.c.l.b16 %v859
  %v4006 = vunpack.c.h.b16 %v859
  %v4007 = vunpack.c.l.b16 %v860
  %v4008 = vunpack.c.h.b16 %v860
  %v4009 = vunpack.c.l.b16 %v861
  %v4010 = vunpack.c.h.b16 %v861
  %v4011 = vunpack.c.l.b16 %v862
  %v4012 = vunpack.c.h.b16 %v862
  %v4013 = vunpack.c.l.b16 %v863
  %v4014 = vunpack.c.h.b16 %v863
  %v4015 = vunpack.c.l.b16 %v864
  %v4016 = vunpack.c.h.b16 %v864
  %v4017 = vunpack.c.l.b16 %v865
  %v4018 = vunpack.c.h.b16 %v865
  %v4019 = vunpack.c.l.b16 %v866
  %v4020 = vunpack.c.h.b16 %v866
  %v4021 = vunpack.c.l.b16 %v867
  %v4022 = vunpack.c.h.b16 %v867
  %v4023 = vunpack.c.l.b16 %v868
  %v4024 = vunpack.c.h.b16 %v868
  %v4025 = vunpack.c.l.b16 %v869
  %v4026 = vunpack.c.h.b16 %v869
  %v4027 = vunpack.c.l.b16 %v870
  %v4028 = vunpack.c.h.b16 %v870
  %v4029 = vunpack.c.l.b16 %v871
  %v4030 = vunpack.c.h.b16 %v871
  %v4031 = vunpack.c.l.b16 %v872
  %v4032 = vunpack.c.h.b16 %v872
  %v4033 = vunpack.c.l.b16 %v873
  %v4034 = vunpack.c.h.b16 %v873
  %v4035 = vunpack.c.l.b16 %v874
  %v4036 = vunpack.c.h.b16 %v874
  %v4037 = vunpack.c.l.b16 %v875
  %v4038 = vunpack.c.h.b16 %v875
  %v4039 = vunpack.c.l.b16 %v876
  %v4040 = vunpack.c.h.b16 %v876
  %v4041 = vunpack.c.l.b16 %v877
  %v4042 = vunpack.c.h.b16 %v877
  %v4043 = vunpack.c.l.b16 %v878
  %v4044 = vunpack.c.h.b16 %v878
  %v4045 = vunpack.c.l.b16 %v879
  %v4046 = vunpack.c.h.b16 %v879
  %v4047 = vunpack.c.l.b16 %v880
  %v4048 = vunpack.c.h.b16 %v880
  %v4049 = vunpack.c.l.b16 %v881
  %v4050 = vunpack.c.h.b16 %v881
  %v4051 = vunpack.c.l.b16 %v882
  %v4052 = vunpack.c.h.b16 %v882
  %v4053 = vunpack.c.l.b16 %v883
  %v4054 = vunpack.c.h.b16 %v883
  %v4055 = vunpack.c.l.b16 %v884
  %v4056 = vunpack.c.h.b16 %v884
  %v4057 = vunpack.c.l.b16 %v885
  %v4058 = vunpack.c.h.b16 %v885
  %v4059 = vunpack.c.l.b16 %v886
  %v4060 = vunpack.c.h.b16 %v886
  %v4061 = vunpack.c.l.b16 %v887
  %v4062 = vunpack.c.h.b16 %v887
  %v4063 = vunpack.c.l.b16 %v888
  %v4064 = vunpack.c.h.b16 %v888
  %v4065 = vunpack.c.l.b16 %v889
  %v4066 = vunpack.c.h.b16 %v889
  %v4067 = vunpack.c.l.b16 %v890
  %v4068 = vunpack.c.h.b16 %v890
  %v4069 = vunpack.c.l.b16 %v891
  %v4070 = vunpack.c.h.b16 %v891
  %v4071 = vunpack.c.l.b16 %v892
  %v4072 = vunpack.c.h.b16 %v892
  %v4073 = vunpack.c.l.b16 %v893
  %v4074 = vunpack.c.h.b16 %v893
  %v4075 = vunpack.c.l.b16 %v894
  %v4076 = vunpack.c.h.b16 %v894
  %v4077 = vunpack.c.l.b16 %v895
  %v4078 = vunpack.c.h.b16 %v895
  %v4079 = vunpack.c.l.b16 %v896
  %v4080 = vunpack.c.h.b16 %v896
  %v4081 = vunpack.c.l.b16 %v897
  %v4082 = vunpack.c.h.b16 %v897
  %v4083 = vunpack.c.l.b16 %v898
  %v4084 = vunpack.c.h.b16 %v898
  %v4085 = vunpack.c.l.b16 %v899
  %v4086 = vunpack.c.h.b16 %v899
  %v4087 = vunpack.c.l.b16 %v900
  %v4088 = vunpack.c.h.b16 %v900
  %v4089 = vunpack.c.l.b16 %v901
  %v4090 = vunpack.c.h.b16 %v901
  %v4091 = vunpack.c.l.b16 %v902
  %v4092 = vunpack.c.h.b16 %v902
  %v4093 = vunpack.c.l.b16 %v903
  %v4094 = vunpack.c.h.b16 %v903
  %v4095 = vunpack.c.l.b16 %v904
  %v4096 = vunpack.c.h.b16 %v904
  %v4097 = vunpack.c.l.b16 %v905
  %v4098 = vunpack.c.h.b16 %v905
  %v4099 = vunpack.c.l.b16 %v906
  %v4100 = vunpack.c.h.b16 %v906
  %v4101 = vunpack.c.l.b16 %v907
  %v4102 = vunpack.c.h.b16 %v907
  %v4103 = vunpack.c.l.b16 %v908
  %v4104 = vunpack.c.h.b16 %v908
  %v4105 = vunpack.c.l.b16 %v909
  %v4106 = vunpack.c.h.b16 %v909
  %v4107 = vunpack.c.l.b16 %v910
  %v4108 = vunpack.c.h.b16 %v910
  %v4109 = vunpack.c.l.b16 %v911
  %v4110 = vunpack.c.h.b16 %v911
  %v4111 = vunpack.c.l.b16 %v912
  %v4112 = vunpack.c.h.b16 %v912
  %v4113 = vunpack.c.l.b16 %v913
  %v4114 = vunpack.c.h.b16 %v913
  %v4115 = vunpack.c.l.b16 %v914
  %v4116 = vunpack.c.h.b16 %v914
  %v4117 = vunpack.c.l.b16 %v915
  %v4118 = vunpack.c.h.b16 %v915
  %v4119 = vunpack.c.l.b16 %v916
  %v4120 = vunpack.c.h.b16 %v916
  %v4121 = vunpack.c.l.b16 %v917
  %v4122 = vunpack.c.h.b16 %v917
  %v4123 = vunpack.c.l.b16 %v918
  %v4124 = vunpack.c.h.b16 %v918
  %v4125 = vunpack.c.l.b16 %v919
  %v4126 = vunpack.c.h.b16 %v919
  %v4127 = vunpack.c.l.b16 %v920
  %v4128 = vunpack.c.h.b16 %v920
  %v4129 = vunpack.c.l.b16 %v921
  %v4130 = vunpack.c.h.b16 %v921
  %v4131 = vunpack.c.l.b16 %v922
  %v4132 = vunpack.c.h.b16 %v922
  %v4133 = vunpack.c.l.b16 %v923
  %v4134 = vunpack.c.h.b16 %v923
  %v4135 = vunpack.c.l.b16 %v924
  %v4136 = vunpack.c.h.b16 %v924
  %v4137 = vunpack.c.l.b16 %v925
  %v4138 = vunpack.c.h.b16 %v925
  %v4139 = vunpack.c.l.b16 %v926
  %v4140 = vunpack.c.h.b16 %v926
  %v4141 = vunpack.c.l.b16 %v927
  %v4142 = vunpack.c.h.b16 %v927
  %v4143 = vunpack.c.l.b16 %v928
  %v4144 = vunpack.c.h.b16 %v928
  %v4145 = vunpack.c.l.b16 %v929
  %v4146 = vunpack.c.h.b16 %v929
  %v4147 = vunpack.c.l.b16 %v930
  %v4148 = vunpack.c.h.b16 %v930
  %v4149 = vunpack.c.l.b16 %v931
  %v4150 = vunpack.c.h.b16 %v931
  %v4151 = vunpack.c.l.b16 %v932
  %v4152 = vunpack.c.h.b16 %v932
  %v4153 = vunpack.c.l.b16 %v933
  %v4154 = vunpack.c.h.b16 %v933
  %v4155 = vunpack.c.l.b16 %v934
  %v4156 = vunpack.c.h.b16 %v934
  %v4157 = vunpack.c.l.b16 %v935
  %v4158 = vunpack.c.h.b16 %v935
  %v4159 = vunpack.c.l.b16 %v936
  %v4160 = vunpack.c.h.b16 %v936
  %v4161 = vunpack.c.l.b16 %v937
  %v4162 = vunpack.c.h.b16 %v937
  %v4163 = vunpack.c.l.b16 %v938
  %v4164 = vunpack.c.h.b16 %v938
  %v4165 = vunpack.c.l.b16 %v939
  %v4166 = vunpack.c.h.b16 %v939
  %v4167 = vunpack.c.l.b16 %v940
  %v4168 = vunpack.c.h.b16 %v940
  %v4169 = vunpack.c.l.b16 %v941
  %v4170 = vunpack.c.h.b16 %v941
  %v4171 = vunpack.c.l.b16 %v942
  %v4172 = vunpack.c.h.b16 %v942
  %v4173 = vunpack.c.l.b16 %v943
  %v4174 = vunpack.c.h.b16 %v943
  %v4175 = vunpack.c.l.b16 %v944
  %v4176 = vunpack.c.h.b16 %v944
  %v4177 = vunpack.c.l.b16 %v945
  %v4178 = vunpack.c.h.b16 %v945
  %v4179 = vunpack.c.l.b16 %v946
  %v4180 = vunpack.c.h.b16 %v946
  %v4181 = vunpack.c.l.b16 %v947
  %v4182 = vunpack.c.h.b16 %v947
  %v4183 = vunpack.c.l.b16 %v948
  %v4184 = vunpack.c.h.b16 %v948
  %v4185 = vunpack.c.l.b16 %v949
  %v4186 = vunpack.c.h.b16 %v949
  %v4187 = vunpack.c.l.b16 %v950
  %v4188 = vunpack.c.h.b16 %v950
  %v4189 = vunpack.c.l.b16 %v951
  %v4190 = vunpack.c.h.b16 %v951
  %v4191 = vunpack.c.l.b16 %v952
  %v4192 = vunpack.c.h.b16 %v952
  %v4193 = vunpack.c.l.b16 %v953
  %v4194 = vunpack.c.h.b16 %v953
  %v4195 = vunpack.c.l.b16 %v954
  %v4196 = vunpack.c.h.b16 %v954
  %v4197 = vunpack.c.l.b16 %v955
  %v4198 = vunpack.c.h.b16 %v955
  %v4199 = vunpack.c.l.b16 %v956
  %v4200 = vunpack.c.h.b16 %v956
  %v4201 = vunpack.c.l.b16 %v957
  %v4202 = vunpack.c.h.b16 %v957
  %v4203 = vunpack.c.l.b16 %v958
  %v4204 = vunpack.c.h.b16 %v958
  %v4205 = vunpack.c.l.b16 %v959
  %v4206 = vunpack.c.h.b16 %v959
  %v4207 = vunpack.c.l.b16 %v960
  %v4208 = vunpack.c.h.b16 %v960
  %v4209 = vunpack.c.l.b16 %v961
  %v4210 = vunpack.c.h.b16 %v961
  %v4211 = vunpack.c.l.b16 %v962
  %v4212 = vunpack.c.h.b16 %v962
  %v4213 = vunpack.c.l.b16 %v963
  %v4214 = vunpack.c.h.b16 %v963
  %v4215 = vunpack.c.l.b16 %v964
  %v4216 = vunpack.c.h.b16 %v964
  %v4217 = vunpack.c.l.b16 %v965
  %v4218 = vunpack.c.h.b16 %v965
  %v4219 = vunpack.c.l.b16 %v966
  %v4220 = vunpack.c.h.b16 %v966
  %v4221 = vunpack.c.l.b16 %v967
  %v4222 = vunpack.c.h.b16 %v967
  %v4223 = vunpack.c.l.b16 %v968
  %v4224 = vunpack.c.h.b16 %v968
  %v4225 = vunpack.c.l.b16 %v969
  %v4226 = vunpack.c.h.b16 %v969
  %v4227 = vunpack.c.l.b16 %v970
  %v4228 = vunpack.c.h.b16 %v970
  %v4229 = vunpack.c.l.b16 %v971
  %v4230 = vunpack.c.h.b16 %v971
  %v4231 = vunpack.c.l.b16 %v972
  %v4232 = vunpack.c.h.b16 %v972
  %v4233 = vunpack.c.l.b16 %v973
  %v4234 = vunpack.c.h.b16 %v973
  %v4235 = vunpack.c.l.b16 %v974
  %v4236 = vunpack.c.h.b16 %v974
  %v4237 = vunpack.c.l.b16 %v975
  %v4238 = vunpack.c.h.b16 %v975
  %v4239 = vunpack.c.l.b16 %v976
  %v4240 = vunpack.c.h.b16 %v976
  %v4241 = vunpack.c.l.b16 %v977
  %v4242 = vunpack.c.h.b16 %v977
  %v4243 = vunpack.c.l.b16 %v978
  %v4244 = vunpack.c.h.b16 %v978
  %v4245 = vunpack.c.l.b16 %v979
  %v4246 = vunpack.c.h.b16 %v979
  %v4247 = vunpack.c.l.b16 %v980
  %v4248 = vunpack.c.h.b16 %v980
  %v4249 = vunpack.c.l.b16 %v981
  %v4250 = vunpack.c.h.b16 %v981
  %v4251 = vunpack.c.l.b16 %v982
  %v4252 = vunpack.c.h.b16 %v982
  %v4253 = vunpack.c.l.b16 %v983
  %v4254 = vunpack.c.h.b16 %v983
  %v4255 = vunpack.c.l.b16 %v984
  %v4256 = vunpack.c.h.b16 %v984
  %v4257 = vunpack.c.l.b16 %v985
  %v4258 = vunpack.c.h.b16 %v985
  %v4259 = vunpack.c.l.b16 %v986
  %v4260 = vunpack.c.h.b16 %v986
  %v4261 = vunpack.c.l.b16 %v987
  %v4262 = vunpack.c.h.b16 %v987
  %v4263 = vunpack.c.l.b16 %v988
  %v4264 = vunpack.c.h.b16 %v988
  %v4265 = vunpack.c.l.b16 %v989
  %v4266 = vunpack.c.h.b16 %v989
  %v4267 = vunpack.c.l.b16 %v990
  %v4268 = vunpack.c.h.b16 %v990
  %v4269 = vunpack.c.l.b16 %v991
  %v4270 = vunpack.c.h.b16 %v991
  %v4271 = vunpack.c.l.b16 %v992
  %v4272 = vunpack.c.h.b16 %v992
  %v4273 = vunpack.c.l.b16 %v993
  %v4274 = vunpack.c.h.b16 %v993
  %v4275 = vunpack.c.l.b16 %v994
  %v4276 = vunpack.c.h.b16 %v994
  %v4277 = vunpack.c.l.b16 %v995
  %v4278 = vunpack.c.h.b16 %v995
  %v4279 = vunpack.c.l.b16 %v996
  %v4280 = vunpack.c.h.b16 %v996
  %v4281 = vunpack.c.l.b16 %v997
  %v4282 = vunpack.c.h.b16 %v997
  %v4283 = vunpack.c.l.b16 %v998
  %v4284 = vunpack.c.h.b16 %v998
  %v4285 = vunpack.c.l.b16 %v999
  %v4286 = vunpack.c.h.b16 %v999
  %v4287 = vunpack.c.l.b16 %v1000
  %v4288 = vunpack.c.h.b16 %v1000
  %v4289 = vunpack.c.l.b16 %v1001
  %v4290 = vunpack.c.h.b16 %v1001
  %v4291 = vunpack.c.l.b16 %v1002
  %v4292 = vunpack.c.h.b16 %v1002
  %v4293 = vunpack.c.l.b16 %v1003
  %v4294 = vunpack.c.h.b16 %v1003
  %v4295 = vunpack.c.l.b16 %v1004
  %v4296 = vunpack.c.h.b16 %v1004
  %v4297 = vunpack.c.l.b16 %v1005
  %v4298 = vunpack.c.h.b16 %v1005
  %v4299 = vunpack.c.l.b16 %v1006
  %v4300 = vunpack.c.h.b16 %v1006
  %v4301 = vunpack.c.l.b16 %v1007
  %v4302 = vunpack.c.h.b16 %v1007
  %v4303 = vunpack.c.l.b16 %v1008
  %v4304 = vunpack.c.h.b16 %v1008
  %v4305 = vunpack.c.l.b16 %v1009
  %v4306 = vunpack.c.h.b16 %v1009
  %v4307 = vunpack.c.l.b16 %v1010
  %v4308 = vunpack.c.h.b16 %v1010
  %v4309 = vunpack.c.l.b16 %v1011
  %v4310 = vunpack.c.h.b16 %v1011
  %v4311 = vunpack.c.l.b16 %v1012
  %v4312 = vunpack.c.h.b16 %v1012
  %v4313 = vunpack.c.l.b16 %v1013
  %v4314 = vunpack.c.h.b16 %v1013
  %v4315 = vunpack.c.l.b16 %v1014
  %v4316 = vunpack.c.h.b16 %v1014
  %v4317 = vunpack.c.l.b16 %v1015
  %v4318 = vunpack.c.h.b16 %v1015
  %v4319 = vunpack.c.l.b16 %v1016
  %v4320 = vunpack.c.h.b16 %v1016
  %v4321 = vunpack.c.l.b16 %v1017
  %v4322 = vunpack.c.h.b16 %v1017
  %v4323 = vunpack.c.l.b16 %v1018
  %v4324 = vunpack.c.h.b16 %v1018
  %v4325 = vunpack.c.l.b16 %v1019
  %v4326 = vunpack.c.h.b16 %v1019
  %v4327 = vunpack.c.l.b16 %v1020
  %v4328 = vunpack.c.h.b16 %v1020
  %v4329 = vunpack.c.l.b16 %v1021
  %v4330 = vunpack.c.h.b16 %v1021
  %v4331 = vunpack.c.l.b16 %v1022
  %v4332 = vunpack.c.h.b16 %v1022
  %v4333 = vunpack.c.l.b16 %v1023
  %v4334 = vunpack.c.h.b16 %v1023
  %v4335 = vunpack.c.l.b16 %v1024
  %v4336 = vunpack.c.h.b16 %v1024
  %v4337 = vunpack.c.l.b16 %v1025
  %v4338 = vunpack.c.h.b16 %v1025
  %v4339 = vunpack.c.l.b16 %v1026
  %v4340 = vunpack.c.h.b16 %v1026
  %v4341 = vunpack.c.l.b16 %v1027
  %v4342 = vunpack.c.h.b16 %v1027
  %v4343 = vunpack.c.l.b16 %v1028
  %v4344 = vunpack.c.h.b16 %v1028
  %v4345 = vunpack.c.l.b16 %v1029
  %v4346 = vunpack.c.h.b16 %v1029
  %v4347 = vunpack.c.l.b16 %v1030
  %v4348 = vunpack.c.h.b16 %v1030
  %v4349 = vunpack.c.l.b16 %v1031
  %v4350 = vunpack.c.h.b16 %v1031
  %v4351 = vunpack.c.l.b16 %v1032
  %v4352 = vunpack.c.h.b16 %v1032
  %v4353 = vunpack.c.l.b16 %v1033
  %v4354 = vunpack.c.h.b16 %v1033
  %v4355 = vunpack.c.l.b16 %v1034
  %v4356 = vunpack.c.h.b16 %v1034
  %v4357 = vunpack.c.l.b16 %v1035
  %v4358 = vunpack.c.h.b16 %v1035
  %v4359 = vunpack.c.l.b16 %v1036
  %v4360 = vunpack.c.h.b16 %v1036
  %v4361 = vunpack.c.l.b16 %v1037
  %v4362 = vunpack.c.h.b16 %v1037
  %v4363 = vunpack.c.l.b16 %v1038
  %v4364 = vunpack.c.h.b16 %v1038
  %v4365 = vunpack.c.l.b16 %v1039
  %v4366 = vunpack.c.h.b16 %v1039
  %v4367 = vunpack.c.l.b16 %v1040
  %v4368 = vunpack.c.h.b16 %v1040
  %v4369 = vunpack.c.l.b16 %v1041
  %v4370 = vunpack.c.h.b16 %v1041
  %v4371 = vunpack.c.l.b16 %v1042
  %v4372 = vunpack.c.h.b16 %v1042
  %v4373 = vunpack.c.l.b16 %v1043
  %v4374 = vunpack.c.h.b16 %v1043
  %v4375 = vunpack.c.l.b16 %v1044
  %v4376 = vunpack.c.h.b16 %v1044
  %v4377 = vunpack.c.l.b16 %v1045
  %v4378 = vunpack.c.h.b16 %v1045
  %v4379 = vunpack.c.l.b16 %v1046
  %v4380 = vunpack.c.h.b16 %v1046
  %v4381 = vunpack.c.l.b16 %v1047
  %v4382 = vunpack.c.h.b16 %v1047
  %v4383 = vunpack.c.l.b16 %v1048
  %v4384 = vunpack.c.h.b16 %v1048
  %v4385 = vunpack.c.l.b16 %v1049
  %v4386 = vunpack.c.h.b16 %v1049
  %v4387 = vunpack.c.l.b16 %v1050
  %v4388 = vunpack.c.h.b16 %v1050
  %v4389 = vunpack.c.l.b16 %v1051
  %v4390 = vunpack.c.h.b16 %v1051
  %v4391 = vunpack.c.l.b16 %v1052
  %v4392 = vunpack.c.h.b16 %v1052
  %v4393 = vunpack.c.l.b16 %v1053
  %v4394 = vunpack.c.h.b16 %v1053
  %v4395 = vunpack.c.l.b16 %v1054
  %v4396 = vunpack.c.h.b16 %v1054
  %v4397 = vunpack.c.l.b16 %v1055
  %v4398 = vunpack.c.h.b16 %v1055
  %v4399 = vunpack.c.l.b16 %v1056
  %v4400 = vunpack.c.h.b16 %v1056
  %v4401 = vunpack.c.l.b16 %v1057
  %v4402 = vunpack.c.h.b16 %v1057
  %v4403 = vunpack.c.l.b16 %v1058
  %v4404 = vunpack.c.h.b16 %v1058
  %v4405 = vunpack.c.l.b16 %v1059
  %v4406 = vunpack.c.h.b16 %v1059
  %v4407 = vunpack.c.l.b16 %v1060
  %v4408 = vunpack.c.h.b16 %v1060
  %v4409 = vunpack.c.l.b16 %v1061
  %v4410 = vunpack.c.h.b16 %v1061
  %v4411 = vunpack.c.l.b16 %v1062
  %v4412 = vunpack.c.h.b16 %v1062
  %v4413 = vunpack.c.l.b16 %v1063
  %v4414 = vunpack.c.h.b16 %v1063
  %v4415 = vunpack.c.l.b16 %v1064
  %v4416 = vunpack.c.h.b16 %v1064
  %v4417 = vunpack.c.l.b16 %v1065
  %v4418 = vunpack.c.h.b16 %v1065
  %v4419 = vunpack.c.l.b16 %v1066
  %v4420 = vunpack.c.h.b16 %v1066
  %v4421 = vunpack.c.l.b16 %v1067
  %v4422 = vunpack.c.h.b16 %v1067
  %v4423 = vunpack.c.l.b16 %v1068
  %v4424 = vunpack.c.h.b16 %v1068
  %v4425 = vunpack.c.l.b16 %v1069
  %v4426 = vunpack.c.h.b16 %v1069
  %v4427 = vunpack.c.l.b16 %v1070
  %v4428 = vunpack.c.h.b16 %v1070
  %v4429 = vunpack.c.l.b16 %v1071
  %v4430 = vunpack.c.h.b16 %v1071
  %v4431 = vunpack.c.l.b16 %v1072
  %v4432 = vunpack.c.h.b16 %v1072
  %v4433 = vunpack.c.l.b16 %v1073
  %v4434 = vunpack.c.h.b16 %v1073
  %v4435 = vunpack.c.l.b16 %v1074
  %v4436 = vunpack.c.h.b16 %v1074
  %v4437 = vunpack.c.l.b16 %v1075
  %v4438 = vunpack.c.h.b16 %v1075
  %v4439 = vunpack.c.l.b16 %v1076
  %v4440 = vunpack.c.h.b16 %v1076
  %v4441 = vunpack.c.l.b16 %v1077
  %v4442 = vunpack.c.h.b16 %v1077
  %v4443 = vunpack.c.l.b16 %v1078
  %v4444 = vunpack.c.h.b16 %v1078
  %v4445 = vunpack.c.l.b16 %v1079
  %v4446 = vunpack.c.h.b16 %v1079
  %v4447 = vunpack.c.l.b16 %v1080
  %v4448 = vunpack.c.h.b16 %v1080
  %v4449 = vunpack.c.l.b16 %v1081
  %v4450 = vunpack.c.h.b16 %v1081
  %v4451 = vunpack.c.l.b16 %v1082
  %v4452 = vunpack.c.h.b16 %v1082
  %v4453 = vunpack.c.l.b16 %v1083
  %v4454 = vunpack.c.h.b16 %v1083
  %v4455 = vunpack.c.l.b16 %v1084
  %v4456 = vunpack.c.h.b16 %v1084
  %v4457 = vunpack.c.l.b16 %v1085
  %v4458 = vunpack.c.h.b16 %v1085
  %v4459 = vunpack.c.l.b16 %v1086
  %v4460 = vunpack.c.h.b16 %v1086
  %v4461 = vunpack.c.l.b16 %v1087
  %v4462 = vunpack.c.h.b16 %v1087
  %v4463 = vunpack.c.l.b16 %v1088
  %v4464 = vunpack.c.h.b16 %v1088
  %v4465 = vunpack.c.l.b16 %v1089
  %v4466 = vunpack.c.h.b16 %v1089
  %v4467 = vunpack.c.l.b16 %v1090
  %v4468 = vunpack.c.h.b16 %v1090
  %v4469 = vunpack.c.l.b16 %v1091
  %v4470 = vunpack.c.h.b16 %v1091
  %v4471 = vunpack.c.l.b16 %v1092
  %v4472 = vunpack.c.h.b16 %v1092
  %v4473 = vunpack.c.l.b16 %v1093
  %v4474 = vunpack.c.h.b16 %v1093
  %v4475 = vunpack.c.l.b16 %v1094
  %v4476 = vunpack.c.h.b16 %v1094
  %v4477 = vunpack.c.l.b16 %v1095
  %v4478 = vunpack.c.h.b16 %v1095
  %v4479 = vunpack.c.l.b16 %v1096
  %v4480 = vunpack.c.h.b16 %v1096
  %v4481 = vunpack.c.l.b16 %v1097
  %v4482 = vunpack.c.h.b16 %v1097
  %v4483 = vunpack.c.l.b16 %v1098
  %v4484 = vunpack.c.h.b16 %v1098
  %v4485 = vunpack.c.l.b16 %v1099
  %v4486 = vunpack.c.h.b16 %v1099
  %v4487 = vunpack.c.l.b16 %v1100
  %v4488 = vunpack.c.h.b16 %v1100
  %v4489 = vunpack.c.l.b16 %v1101
  %v4490 = vunpack.c.h.b16 %v1101
  %v4491 = vunpack.c.l.b16 %v1102
  %v4492 = vunpack.c.h.b16 %v1102
  %v4493 = vunpack.c.l.b16 %v1103
  %v4494 = vunpack.c.h.b16 %v1103
  %v4495 = vunpack.c.l.b16 %v1104
  %v4496 = vunpack.c.h.b16 %v1104
  %v4497 = vpack.c.b16 %v2453, %v2449
  %v4498 = vpack.c.b16 %v2454, %v2450
  %v4499 = vpack.c.b16 %v2455, %v2451
  %v4500 = vpack.c.b16 %v2456, %v2452
  %v4501 = vpack.c.b16 %v2461, %v2457
  %v4502 = vpack.c.b16 %v2462, %v2458
  %v4503 = vpack.c.b16 %v2463, %v2459
  %v4504 = vpack.c.b16 %v2464, %v2460
  %v4505 = vpack.c.b16 %v2469, %v2465
  %v4506 = vpack.c.b16 %v2470, %v2466
  %v4507 = vpack.c.b16 %v2471, %v2467
  %v4508 = vpack.c.b16 %v2472, %v2468
  %v4509 = vpack.c.b16 %v2477, %v2473
  %v4510 = vpack.c.b16 %v2478, %v2474
  %v4511 = vpack.c.b16 %v2479, %v2475
  %v4512 = vpack.c.b16 %v2480, %v2476
  %v4513 = vpack.c.b16 %v2485, %v2481
  %v4514 = vpack.c.b16 %v2486, %v2482
  %v4515 = vpack.c.b16 %v2487, %v2483
  %v4516 = vpack.c.b16 %v2488, %v2484
  %v4517 = vpack.c.b16 %v2493, %v2489
  %v4518 = vpack.c.b16 %v2494, %v2490
  %v4519 = vpack.c.b16 %v2495, %v2491
  %v4520 = vpack.c.b16 %v2496, %v2492
  %v4521 = vpack.c.b16 %v2501, %v2497
  %v4522 = vpack.c.b16 %v2502, %v2498
  %v4523 = vpack.c.b16 %v2503, %v2499
  %v4524 = vpack.c.b16 %v2504, %v2500
  %v4525 = vpack.c.b16 %v2509, %v2505
  %v4526 = vpack.c.b16 %v2510, %v2506
  %v4527 = vpack.c.b16 %v2511, %v2507
  %v4528 = vpack.c.b16 %v2512, %v2508
  %v4529 = vpack.c.b16 %v2517, %v2513
  %v4530 = vpack.c.b16 %v2518, %v2514
  %v4531 = vpack.c.b16 %v2519, %v2515
  %v4532 = vpack.c.b16 %v2520, %v2516
  %v4533 = vpack.c.b16 %v2525, %v2521
  %v4534 = vpack.c.b16 %v2526, %v2522
  %v4535 = vpack.c.b16 %v2527, %v2523
  %v4536 = vpack.c.b16 %v2528, %v2524
  %v4537 = vpack.c.b16 %v2533, %v2529
  %v4538 = vpack.c.b16 %v2534, %v2530
  %v4539 = vpack.c.b16 %v2535, %v2531
  %v4540 = vpack.c.b16 %v2536, %v2532
  %v4541 = vpack.c.b16 %v2541, %v2537
  %v4542 = vpack.c.b16 %v2542, %v2538
  %v4543 = vpack.c.b16 %v2543, %v2539
  %v4544 = vpack.c.b16 %v2544, %v2540
  %v4545 = vpack.c.b16 %v2549, %v2545
  %v4546 = vpack.c.b16 %v2550, %v2546
  %v4547 = vpack.c.b16 %v2551, %v2547
  %v4548 = vpack.c.b16 %v2552, %v2548
  %v4549 = vpack.c.b16 %v2557, %v2553
  %v4550 = vpack.c.b16 %v2558, %v2554
  %v4551 = vpack.c.b16 %v2559, %v2555
  %v4552 = vpack.c.b16 %v2560, %v2556
  %v4553 = vpack.c.b16 %v2565, %v2561
  %v4554 = vpack.c.b16 %v2566, %v2562
  %v4555 = vpack.c.b16 %v2567, %v2563
  %v4556 = vpack.c.b16 %v2568, %v2564
  %v4557 = vpack.c.b16 %v2573, %v2569
  %v4558 = vpack.c.b16 %v2574, %v2570
  %v4559 = vpack.c.b16 %v2575, %v2571
  %v4560 = vpack.c.b16 %v2576, %v2572
  %v4561 = vpack.c.b16 %v2581, %v2577
  %v4562 = vpack.c.b16 %v2582, %v2578
  %v4563 = vpack.c.b16 %v2583, %v2579
  %v4564 = vpack.c.b16 %v2584, %v2580
  %v4565 = vpack.c.b16 %v2589, %v2585
  %v4566 = vpack.c.b16 %v2590, %v2586
  %v4567 = vpack.c.b16 %v2591, %v2587
  %v4568 = vpack.c.b16 %v2592, %v2588
  %v4569 = vpack.c.b16 %v2597, %v2593
  %v4570 = vpack.c.b16 %v2598, %v2594
  %v4571 = vpack.c.b16 %v2599, %v2595
  %v4572 = vpack.c.b16 %v2600, %v2596
  %v4573 = vpack.c.b16 %v2605, %v2601
  %v4574 = vpack.c.b16 %v2606, %v2602
  %v4575 = vpack.c.b16 %v2607, %v2603
  %v4576 = vpack.c.b16 %v2608, %v2604
  %v4577 = vpack.c.b16 %v2613, %v2609
  %v4578 = vpack.c.b16 %v2614, %v2610
  %v4579 = vpack.c.b16 %v2615, %v2611
  %v4580 = vpack.c.b16 %v2616, %v2612
  %v4581 = vpack.c.b16 %v2621, %v2617
  %v4582 = vpack.c.b16 %v2622, %v2618
  %v4583 = vpack.c.b16 %v2623, %v2619
  %v4584 = vpack.c.b16 %v2624, %v2620
  %v4585 = vpack.c.b16 %v2629, %v2625
  %v4586 = vpack.c.b16 %v2630, %v2626
  %v4587 = vpack.c.b16 %v2631, %v2627
  %v4588 = vpack.c.b16 %v2632, %v2628
  %v4589 = vpack.c.b16 %v2637, %v2633
  %v4590 = vpack.c.b16 %v2638, %v2634
  %v4591 = vpack.c.b16 %v2639, %v2635
  %v4592 = vpack.c.b16 %v2640, %v2636
  %v4593 = vpack.c.b16 %v2645, %v2641
  %v4594 = vpack.c.b16 %v2646, %v2642
  %v4595 = vpack.c.b16 %v2647, %v2643
  %v4596 = vpack.c.b16 %v2648, %v2644
  %v4597 = vpack.c.b16 %v2653, %v2649
  %v4598 = vpack.c.b16 %v2654, %v2650
  %v4599 = vpack.c.b16 %v2655, %v2651
  %v4600 = vpack.c.b16 %v2656, %v2652
  %v4601 = vpack.c.b16 %v2661, %v2657
  %v4602 = vpack.c.b16 %v2662, %v2658
  %v4603 = vpack.c.b16 %v2663, %v2659
  %v4604 = vpack.c.b16 %v2664, %v2660
  %v4605 = vpack.c.b16 %v2669, %v2665
  %v4606 = vpack.c.b16 %v2670, %v2666
  %v4607 = vpack.c.b16 %v2671, %v2667
  %v4608 = vpack.c.b16 %v2672, %v2668
  %v4609 = vpack.c.b16 %v2677, %v2673
  %v4610 = vpack.c.b16 %v2678, %v2674
  %v4611 = vpack.c.b16 %v2679, %v2675
  %v4612 = vpack.c.b16 %v2680, %v2676
  %v4613 = vpack.c.b16 %v2685, %v2681
  %v4614 = vpack.c.b16 %v2686, %v2682
  %v4615 = vpack.c.b16 %v2687, %v2683
  %v4616 = vpack.c.b16 %v2688, %v2684
  %v4617 = vpack.c.b16 %v2693, %v2689
  %v4618 = vpack.c.b16 %v2694, %v2690
  %v4619 = vpack.c.b16 %v2695, %v2691
  %v4620 = vpack.c.b16 %v2696, %v2692
  %v4621 = vpack.c.b16 %v2701, %v2697
  %v4622 = vpack.c.b16 %v2702, %v2698
  %v4623 = vpack.c.b16 %v2703, %v2699
  %v4624 = vpack.c.b16 %v2704, %v2700
  %v4625 = vpack.c.b16 %v2709, %v2705
  %v4626 = vpack.c.b16 %v2710, %v2706
  %v4627 = vpack.c.b16 %v2711, %v2707
  %v4628 = vpack.c.b16 %v2712, %v2708
  %v4629 = vpack.c.b16 %v2717, %v2713
  %v4630 = vpack.c.b16 %v2718, %v2714
  %v4631 = vpack.c.b16 %v2719, %v2715
  %v4632 = vpack.c.b16 %v2720, %v2716
  %v4633 = vpack.c.b16 %v2725, %v2721
  %v4634 = vpack.c.b16 %v2726, %v2722
  %v4635 = vpack.c.b16 %v2727, %v2723
  %v4636 = vpack.c.b16 %v2728, %v2724
  %v4637 = vpack.c.b16 %v2733, %v2729
  %v4638 = vpack.c.b16 %v2734, %v2730
  %v4639 = vpack.c.b16 %v2735, %v2731
  %v4640 = vpack.c.b16 %v2736, %v2732
  %v4641 = vpack.c.b16 %v2741, %v2737
  %v4642 = vpack.c.b16 %v2742, %v2738
  %v4643 = vpack.c.b16 %v2743, %v2739
  %v4644 = vpack.c.b16 %v2744, %v2740
  %v4645 = vpack.c.b16 %v2749, %v2745
  %v4646 = vpack.c.b16 %v2750, %v2746
  %v4647 = vpack.c.b16 %v2751, %v2747
  %v4648 = vpack.c.b16 %v2752, %v2748
  %v4649 = vpack.c.b16 %v2757, %v2753
  %v4650 = vpack.c.b16 %v2758, %v2754
  %v4651 = vpack.c.b16 %v2759, %v2755
  %v4652 = vpack.c.b16 %v2760, %v2756
  %v4653 = vpack.c.b16 %v2765, %v2761
  %v4654 = vpack.c.b16 %v2766, %v2762
  %v4655 = vpack.c.b16 %v2767, %v2763
  %v4656 = vpack.c.b16 %v2768, %v2764
  %v4657 = vpack.c.b16 %v2773, %v2769
  %v4658 = vpack.c.b16 %v2774, %v2770
  %v4659 = vpack.c.b16 %v2775, %v2771
  %v4660 = vpack.c.b16 %v2776, %v2772
  %v4661 = vpack.c.b16 %v2781, %v2777
  %v4662 = vpack.c.b16 %v2782, %v2778
  %v4663 = vpack.c.b16 %v2783, %v2779
  %v4664 = vpack.c.b16 %v2784, %v2780
  %v4665 = vpack.c.b16 %v2789, %v2785
  %v4666 = vpack.c.b16 %v2790, %v2786
  %v4667 = vpack.c.b16 %v2791, %v2787
  %v4668 = vpack.c.b16 %v2792, %v2788
  %v4669 = vpack.c.b16 %v2797, %v2793
  %v4670 = vpack.c.b16 %v2798, %v2794
  %v4671 = vpack.c.b16 %v2799, %v2795
  %v4672 = vpack.c.b16 %v2800, %v2796
  %v4673 = vpack.c.b16 %v2805, %v2801
  %v4674 = vpack.c.b16 %v2806, %v2802
  %v4675 = vpack.c.b16 %v2807, %v2803
  %v4676 = vpack.c.b16 %v2808, %v2804
  %v4677 = vpack.c.b16 %v2813, %v2809
  %v4678 = vpack.c.b16 %v2814, %v2810
  %v4679 = vpack.c.b16 %v2815, %v2811
  %v4680 = vpack.c.b16 %v2816, %v2812
  %v4681 = vpack.c.b16 %v2821, %v2817
  %v4682 = vpack.c.b16 %v2822, %v2818
  %v4683 = vpack.c.b16 %v2823, %v2819
  %v4684 = vpack.c.b16 %v2824, %v2820
  %v4685 = vpack.c.b16 %v2829, %v2825
  %v4686 = vpack.c.b16 %v2830, %v2826
  %v4687 = vpack.c.b16 %v2831, %v2827
  %v4688 = vpack.c.b16 %v2832, %v2828
  %v4689 = vpack.c.b16 %v2837, %v2833
  %v4690 = vpack.c.b16 %v2838, %v2834
  %v4691 = vpack.c.b16 %v2839, %v2835
  %v4692 = vpack.c.b16 %v2840, %v2836
  %v4693 = vpack.c.b16 %v2845, %v2841
  %v4694 = vpack.c.b16 %v2846, %v2842
  %v4695 = vpack.c.b16 %v2847, %v2843
  %v4696 = vpack.c.b16 %v2848, %v2844
  %v4697 = vpack.c.b16 %v2853, %v2849
  %v4698 = vpack.c.b16 %v2854, %v2850
  %v4699 = vpack.c.b16 %v2855, %v2851
  %v4700 = vpack.c.b16 %v2856, %v2852
  %v4701 = vpack.c.b16 %v2861, %v2857
  %v4702 = vpack.c.b16 %v2862, %v2858
  %v4703 = vpack.c.b16 %v2863, %v2859
  %v4704 = vpack.c.b16 %v2864, %v2860
  %v4705 = vpack.c.b16 %v2869, %v2865
  %v4706 = vpack.c.b16 %v2870, %v2866
  %v4707 = vpack.c.b16 %v2871, %v2867
  %v4708 = vpack.c.b16 %v2872, %v2868
  %v4709 = vpack.c.b16 %v2877, %v2873
  %v4710 = vpack.c.b16 %v2878, %v2874
  %v4711 = vpack.c.b16 %v2879, %v2875
  %v4712 = vpack.c.b16 %v2880, %v2876
  %v4713 = vpack.c.b16 %v2885, %v2881
  %v4714 = vpack.c.b16 %v2886, %v2882
  %v4715 = vpack.c.b16 %v2887, %v2883
  %v4716 = vpack.c.b16 %v2888, %v2884
  %v4717 = vpack.c.b16 %v2893, %v2889
  %v4718 = vpack.c.b16 %v2894, %v2890
  %v4719 = vpack.c.b16 %v2895, %v2891
  %v4720 = vpack.c.b16 %v2896, %v2892
  %v4721 = vpack.c.b16 %v2901, %v2897
  %v4722 = vpack.c.b16 %v2902, %v2898
  %v4723 = vpack.c.b16 %v2903, %v2899
  %v4724 = vpack.c.b16 %v2904, %v2900
  %v4725 = vpack.c.b16 %v2909, %v2905
  %v4726 = vpack.c.b16 %v2910, %v2906
  %v4727 = vpack.c.b16 %v2911, %v2907
  %v4728 = vpack.c.b16 %v2912, %v2908
  %v4729 = vpack.c.b16 %v2917, %v2913
  %v4730 = vpack.c.b16 %v2918, %v2914
  %v4731 = vpack.c.b16 %v2919, %v2915
  %v4732 = vpack.c.b16 %v2920, %v2916
  %v4733 = vpack.c.b16 %v2925, %v2921
  %v4734 = vpack.c.b16 %v2926, %v2922
  %v4735 = vpack.c.b16 %v2927, %v2923
  %v4736 = vpack.c.b16 %v2928, %v2924
  %v4737 = vpack.c.b16 %v2933, %v2929
  %v4738 = vpack.c.b16 %v2934, %v2930
  %v4739 = vpack.c.b16 %v2935, %v2931
  %v4740 = vpack.c.b16 %v2936, %v2932
  %v4741 = vpack.c.b16 %v2941, %v2937
  %v4742 = vpack.c.b16 %v2942, %v2938
  %v4743 = vpack.c.b16 %v2943, %v2939
  %v4744 = vpack.c.b16 %v2944, %v2940
  %v4745 = vpack.c.b16 %v2949, %v2945
  %v4746 = vpack.c.b16 %v2950, %v2946
  %v4747 = vpack.c.b16 %v2951, %v2947
  %v4748 = vpack.c.b16 %v2952, %v2948
  %v4749 = vpack.c.b16 %v2957, %v2953
  %v4750 = vpack.c.b16 %v2958, %v2954
  %v4751 = vpack.c.b16 %v2959, %v2955
  %v4752 = vpack.c.b16 %v2960, %v2956
  %v4753 = vpack.c.b16 %v2965, %v2961
  %v4754 = vpack.c.b16 %v2966, %v2962
  %v4755 = vpack.c.b16 %v2967, %v2963
  %v4756 = vpack.c.b16 %v2968, %v2964
  %v4757 = vpack.c.b16 %v2973, %v2969
  %v4758 = vpack.c.b16 %v2974, %v2970
  %v4759 = vpack.c.b16 %v2975, %v2971
  %v4760 = vpack.c.b16 %v2976, %v2972
  %v4761 = vpack.c.b16 %v2981, %v2977
  %v4762 = vpack.c.b16 %v2982, %v2978
  %v4763 = vpack.c.b16 %v2983, %v2979
  %v4764 = vpack.c.b16 %v2984, %v2980
  %v4765 = vpack.c.b16 %v2989, %v2985
  %v4766 = vpack.c.b16 %v2990, %v2986
  %v4767 = vpack.c.b16 %v2991, %v2987
  %v4768 = vpack.c.b16 %v2992, %v2988
  %v4769 = vpack.c.b16 %v2997, %v2993
  %v4770 = vpack.c.b16 %v2998, %v2994
  %v4771 = vpack.c.b16 %v2999, %v2995
  %v4772 = vpack.c.b16 %v3000, %v2996
  %v4773 = vpack.c.b16 %v3005, %v3001
  %v4774 = vpack.c.b16 %v3006, %v3002
  %v4775 = vpack.c.b16 %v3007, %v3003
  %v4776 = vpack.c.b16 %v3008, %v3004
  %v4777 = vpack.c.b16 %v3013, %v3009
  %v4778 = vpack.c.b16 %v3014, %v3010
  %v4779 = vpack.c.b16 %v3015, %v3011
  %v4780 = vpack.c.b16 %v3016, %v3012
  %v4781 = vpack.c.b16 %v3021, %v3017
  %v4782 = vpack.c.b16 %v3022, %v3018
  %v4783 = vpack.c.b16 %v3023, %v3019
  %v4784 = vpack.c.b16 %v3024, %v3020
  %v4785 = vpack.c.b16 %v3029, %v3025
  %v4786 = vpack.c.b16 %v3030, %v3026
  %v4787 = vpack.c.b16 %v3031, %v3027
  %v4788 = vpack.c.b16 %v3032, %v3028
  %v4789 = vpack.c.b16 %v3037, %v3033
  %v4790 = vpack.c.b16 %v3038, %v3034
  %v4791 = vpack.c.b16 %v3039, %v3035
  %v4792 = vpack.c.b16 %v3040, %v3036
  %v4793 = vpack.c.b16 %v3045, %v3041
  %v4794 = vpack.c.b16 %v3046, %v3042
  %v4795 = vpack.c.b16 %v3047, %v3043
  %v4796 = vpack.c.b16 %v3048, %v3044
  %v4797 = vpack.c.b16 %v3053, %v3049
  %v4798 = vpack.c.b16 %v3054, %v3050
  %v4799 = vpack.c.b16 %v3055, %v3051
  %v4800 = vpack.c.b16 %v3056, %v3052
  %v4801 = vpack.c.b16 %v3061, %v3057
  %v4802 = vpack.c.b16 %v3062, %v3058
  %v4803 = vpack.c.b16 %v3063, %v3059
  %v4804 = vpack.c.b16 %v3064, %v3060
  %v4805 = vpack.c.b16 %v3069, %v3065
  %v4806 = vpack.c.b16 %v3070, %v3066
  %v4807 = vpack.c.b16 %v3071, %v3067
  %v4808 = vpack.c.b16 %v3072, %v3068
  %v4809 = vpack.c.b16 %v3077, %v3073
  %v4810 = vpack.c.b16 %v3078, %v3074
  %v4811 = vpack.c.b16 %v3079, %v3075
  %v4812 = vpack.c.b16 %v3080, %v3076
  %v4813 = vpack.c.b16 %v3085, %v3081
  %v4814 = vpack.c.b16 %v3086, %v3082
  %v4815 = vpack.c.b16 %v3087, %v3083
  %v4816 = vpack.c.b16 %v3088, %v3084
  %v4817 = vpack.c.b16 %v3093, %v3089
  %v4818 = vpack.c.b16 %v3094, %v3090
  %v4819 = vpack.c.b16 %v3095, %v3091
  %v4820 = vpack.c.b16 %v3096, %v3092
  %v4821 = vpack.c.b16 %v3101, %v3097
  %v4822 = vpack.c.b16 %v3102, %v3098
  %v4823 = vpack.c.b16 %v3103, %v3099
  %v4824 = vpack.c.b16 %v3104, %v3100
  %v4825 = vpack.c.b16 %v3109, %v3105
  %v4826 = vpack.c.b16 %v3110, %v3106
  %v4827 = vpack.c.b16 %v3111, %v3107
  %v4828 = vpack.c.b16 %v3112, %v3108
  %v4829 = vpack.c.b16 %v3117, %v3113
  %v4830 = vpack.c.b16 %v3118, %v3114
  %v4831 = vpack.c.b16 %v3119, %v3115
  %v4832 = vpack.c.b16 %v3120, %v3116
  %v4833 = vpack.c.b16 %v3125, %v3121
  %v4834 = vpack.c.b16 %v3126, %v3122
  %v4835 = vpack.c.b16 %v3127, %v3123
  %v4836 = vpack.c.b16 %v3128, %v3124
  %v4837 = vpack.c.b16 %v3133, %v3129
  %v4838 = vpack.c.b16 %v3134, %v3130
  %v4839 = vpack.c.b16 %v3135, %v3131
  %v4840 = vpack.c.b16 %v3136, %v3132
  %v4841 = vpack.c.b16 %v3141, %v3137
  %v4842 = vpack.c.b16 %v3142, %v3138
  %v4843 = vpack.c.b16 %v3143, %v3139
  %v4844 = vpack.c.b16 %v3144, %v3140
  %v4845 = vpack.c.b16 %v3149, %v3145
  %v4846 = vpack.c.b16 %v3150, %v3146
  %v4847 = vpack.c.b16 %v3151, %v3147
  %v4848 = vpack.c.b16 %v3152, %v3148
  %v4849 = vpack.c.b16 %v3157, %v3153
  %v4850 = vpack.c.b16 %v3158, %v3154
  %v4851 = vpack.c.b16 %v3159, %v3155
  %v4852 = vpack.c.b16 %v3160, %v3156
  %v4853 = vpack.c.b16 %v3165, %v3161
  %v4854 = vpack.c.b16 %v3166, %v3162
  %v4855 = vpack.c.b16 %v3167, %v3163
  %v4856 = vpack.c.b16 %v3168, %v3164
  %v4857 = vpack.c.b16 %v3173, %v3169
  %v4858 = vpack.c.b16 %v3174, %v3170
  %v4859 = vpack.c.b16 %v3175, %v3171
  %v4860 = vpack.c.b16 %v3176, %v3172
  %v4861 = vpack.c.b16 %v3181, %v3177
  %v4862 = vpack.c.b16 %v3182, %v3178
  %v4863 = vpack.c.b16 %v3183, %v3179
  %v4864 = vpack.c.b16 %v3184, %v3180
  %v4865 = vpack.c.b16 %v3189, %v3185
  %v4866 = vpack.c.b16 %v3190, %v3186
  %v4867 = vpack.c.b16 %v3191, %v3187
  %v4868 = vpack.c.b16 %v3192, %v3188
  %v4869 = vpack.c.b16 %v3197, %v3193
  %v4870 = vpack.c.b16 %v3198, %v3194
  %v4871 = vpack.c.b16 %v3199, %v3195
  %v4872 = vpack.c.b16 %v3200, %v3196
  %v4873 = vpack.c.b16 %v3205, %v3201
  %v4874 = vpack.c.b16 %v3206, %v3202
  %v4875 = vpack.c.b16 %v3207, %v3203
  %v4876 = vpack.c.b16 %v3208, %v3204
  %v4877 = vpack.c.b16 %v3213, %v3209
  %v4878 = vpack.c.b16 %v3214, %v3210
  %v4879 = vpack.c.b16 %v3215, %v3211
  %v4880 = vpack.c.b16 %v3216, %v3212
  %v4881 = vpack.c.b16 %v3221, %v3217
  %v4882 = vpack.c.b16 %v3222, %v3218
  %v4883 = vpack.c.b16 %v3223, %v3219
  %v4884 = vpack.c.b16 %v3224, %v3220
  %v4885 = vpack.c.b16 %v3229, %v3225
  %v4886 = vpack.c.b16 %v3230, %v3226
  %v4887 = vpack.c.b16 %v3231, %v3227
  %v4888 = vpack.c.b16 %v3232, %v3228
  %v4889 = vpack.c.b16 %v3237, %v3233
  %v4890 = vpack.c.b16 %v3238, %v3234
  %v4891 = vpack.c.b16 %v3239, %v3235
  %v4892 = vpack.c.b16 %v3240, %v3236
  %v4893 = vpack.c.b16 %v3245, %v3241
  %v4894 = vpack.c.b16 %v3246, %v3242
  %v4895 = vpack.c.b16 %v3247, %v3243
  %v4896 = vpack.c.b16 %v3248, %v3244
  %v4897 = vpack.c.b16 %v3253, %v3249
  %v4898 = vpack.c.b16 %v3254, %v3250
  %v4899 = vpack.c.b16 %v3255, %v3251
  %v4900 = vpack.c.b16 %v3256, %v3252
  %v4901 = vpack.c.b16 %v3261, %v3257
  %v4902 = vpack.c.b16 %v3262, %v3258
  %v4903 = vpack.c.b16 %v3263, %v3259
  %v4904 = vpack.c.b16 %v3264, %v3260
  %v4905 = vpack.c.b16 %v3269, %v3265
  %v4906 = vpack.c.b16 %v3270, %v3266
  %v4907 = vpack.c.b16 %v3271, %v3267
  %v4908 = vpack.c.b16 %v3272, %v3268
  %v4909 = vpack.c.b16 %v3277, %v3273
  %v4910 = vpack.c.b16 %v3278, %v3274
  %v4911 = vpack.c.b16 %v3279, %v3275
  %v4912 = vpack.c.b16 %v3280, %v3276
  %v4913 = vpack.c.b16 %v3285, %v3281
  %v4914 = vpack.c.b16 %v3286, %v3282
  %v4915 = vpack.c.b16 %v3287, %v3283
  %v4916 = vpack.c.b16 %v3288, %v3284
  %v4917 = vpack.c.b16 %v3293, %v3289
  %v4918 = vpack.c.b16 %v3294, %v3290
  %v4919 = vpack.c.b16 %v3295, %v3291
  %v4920 = vpack.c.b16 %v3296, %v3292
  %v4921 = vpack.c.b16 %v3301, %v3297
  %v4922 = vpack.c.b16 %v3302, %v3298
  %v4923 = vpack.c.b16 %v3303, %v3299
  %v4924 = vpack.c.b16 %v3304, %v3300
  %v4925 = vpack.c.b16 %v3309, %v3305
  %v4926 = vpack.c.b16 %v3310, %v3306
  %v4927 = vpack.c.b16 %v3311, %v3307
  %v4928 = vpack.c.b16 %v3312, %v3308
  %v4929 = vpack.c.b16 %v3317, %v3313
  %v4930 = vpack.c.b16 %v3318, %v3314
  %v4931 = vpack.c.b16 %v3319, %v3315
  %v4932 = vpack.c.b16 %v3320, %v3316
  %v4933 = vpack.c.b16 %v3325, %v3321
  %v4934 = vpack.c.b16 %v3326, %v3322
  %v4935 = vpack.c.b16 %v3327, %v3323
  %v4936 = vpack.c.b16 %v3328, %v3324
  %v4937 = vpack.c.b16 %v3333, %v3329
  %v4938 = vpack.c.b16 %v3334, %v3330
  %v4939 = vpack.c.b16 %v3335, %v3331
  %v4940 = vpack.c.b16 %v3336, %v3332
  %v4941 = vpack.c.b16 %v3341, %v3337
  %v4942 = vpack.c.b16 %v3342, %v3338
  %v4943 = vpack.c.b16 %v3343, %v3339
  %v4944 = vpack.c.b16 %v3344, %v3340
  %v4945 = vpack.c.b16 %v3349, %v3345
  %v4946 = vpack.c.b16 %v3350, %v3346
  %v4947 = vpack.c.b16 %v3351, %v3347
  %v4948 = vpack.c.b16 %v3352, %v3348
  %v4949 = vpack.c.b16 %v3357, %v3353
  %v4950 = vpack.c.b16 %v3358, %v3354
  %v4951 = vpack.c.b16 %v3359, %v3355
  %v4952 = vpack.c.b16 %v3360, %v3356
  %v4953 = vpack.c.b16 %v3365, %v3361
  %v4954 = vpack.c.b16 %v3366, %v3362
  %v4955 = vpack.c.b16 %v3367, %v3363
  %v4956 = vpack.c.b16 %v3368, %v3364
  %v4957 = vpack.c.b16 %v3373, %v3369
  %v4958 = vpack.c.b16 %v3374, %v3370
  %v4959 = vpack.c.b16 %v3375, %v3371
  %v4960 = vpack.c.b16 %v3376, %v3372
  %v4961 = vpack.c.b16 %v3381, %v3377
  %v4962 = vpack.c.b16 %v3382, %v3378
  %v4963 = vpack.c.b16 %v3383, %v3379
  %v4964 = vpack.c.b16 %v3384, %v3380
  %v4965 = vpack.c.b16 %v3389, %v3385
  %v4966 = vpack.c.b16 %v3390, %v3386
  %v4967 = vpack.c.b16 %v3391, %v3387
  %v4968 = vpack.c.b16 %v3392, %v3388
  %v4969 = vpack.c.b16 %v3397, %v3393
  %v4970 = vpack.c.b16 %v3398, %v3394
  %v4971 = vpack.c.b16 %v3399, %v3395
  %v4972 = vpack.c.b16 %v3400, %v3396
  %v4973 = vpack.c.b16 %v3405, %v3401
  %v4974 = vpack.c.b16 %v3406, %v3402
  %v4975 = vpack.c.b16 %v3407, %v3403
  %v4976 = vpack.c.b16 %v3408, %v3404
  %v4977 = vpack.c.b16 %v3413, %v3409
  %v4978 = vpack.c.b16 %v3414, %v3410
  %v4979 = vpack.c.b16 %v3415, %v3411
  %v4980 = vpack.c.b16 %v3416, %v3412
  %v4981 = vpack.c.b16 %v3421, %v3417
  %v4982 = vpack.c.b16 %v3422, %v3418
  %v4983 = vpack.c.b16 %v3423, %v3419
  %v4984 = vpack.c.b16 %v3424, %v3420
  %v4985 = vpack.c.b16 %v3429, %v3425
  %v4986 = vpack.c.b16 %v3430, %v3426
  %v4987 = vpack.c.b16 %v3431, %v3427
  %v4988 = vpack.c.b16 %v3432, %v3428
  %v4989 = vpack.c.b16 %v3437, %v3433
  %v4990 = vpack.c.b16 %v3438, %v3434
  %v4991 = vpack.c.b16 %v3439, %v3435
  %v4992 = vpack.c.b16 %v3440, %v3436
  %v4993 = vpack.c.b16 %v3445, %v3441
  %v4994 = vpack.c.b16 %v3446, %v3442
  %v4995 = vpack.c.b16 %v3447, %v3443
  %v4996 = vpack.c.b16 %v3448, %v3444
  %v4997 = vpack.c.b16 %v3453, %v3449
  %v4998 = vpack.c.b16 %v3454, %v3450
  %v4999 = vpack.c.b16 %v3455, %v3451
  %v5000 = vpack.c.b16 %v3456, %v3452
  %v5001 = vpack.c.b16 %v3461, %v3457
  %v5002 = vpack.c.b16 %v3462, %v3458
  %v5003 = vpack.c.b16 %v3463, %v3459
  %v5004 = vpack.c.b16 %v3464, %v3460
  %v5005 = vpack.c.b16 %v3469, %v3465
  %v5006 = vpack.c.b16 %v3470, %v3466
  %v5007 = vpack.c.b16 %v3471, %v3467
  %v5008 = vpack.c.b16 %v3472, %v3468
  %v5009 = vpack.c.b16 %v3477, %v3473
  %v5010 = vpack.c.b16 %v3478, %v3474
  %v5011 = vpack.c.b16 %v3479, %v3475
  %v5012 = vpack.c.b16 %v3480, %v3476
  %v5013 = vpack.c.b16 %v3485, %v3481
  %v5014 = vpack.c.b16 %v3486, %v3482
  %v5015 = vpack.c.b16 %v3487, %v3483
  %v5016 = vpack.c.b16 %v3488, %v3484
  %v5017 = vpack.c.b16 %v3493, %v3489
  %v5018 = vpack.c.b16 %v3494, %v3490
  %v5019 = vpack.c.b16 %v3495, %v3491
  %v5020 = vpack.c.b16 %v3496, %v3492
  %v5021 = vpack.c.b16 %v3501, %v3497
  %v5022 = vpack.c.b16 %v3502, %v3498
  %v5023 = vpack.c.b16 %v3503, %v3499
  %v5024 = vpack.c.b16 %v3504, %v3500
  %v5025 = vpack.c.b16 %v3509, %v3505
  %v5026 = vpack.c.b16 %v3510, %v3506
  %v5027 = vpack.c.b16 %v3511, %v3507
  %v5028 = vpack.c.b16 %v3512, %v3508
  %v5029 = vpack.c.b16 %v3517, %v3513
  %v5030 = vpack.c.b16 %v3518, %v3514
  %v5031 = vpack.c.b16 %v3519, %v3515
  %v5032 = vpack.c.b16 %v3520, %v3516
  %v5033 = vpack.c.b16 %v3525, %v3521
  %v5034 = vpack.c.b16 %v3526, %v3522
  %v5035 = vpack.c.b16 %v3527, %v3523
  %v5036 = vpack.c.b16 %v3528, %v3524
  %v5037 = vpack.c.b16 %v3533, %v3529
  %v5038 = vpack.c.b16 %v3534, %v3530
  %v5039 = vpack.c.b16 %v3535, %v3531
  %v5040 = vpack.c.b16 %v3536, %v3532
  %v5041 = vpack.c.b16 %v3541, %v3537
  %v5042 = vpack.c.b16 %v3542, %v3538
  %v5043 = vpack.c.b16 %v3543, %v3539
  %v5044 = vpack.c.b16 %v3544, %v3540
  %v5045 = vpack.c.b16 %v3549, %v3545
  %v5046 = vpack.c.b16 %v3550, %v3546
  %v5047 = vpack.c.b16 %v3551, %v3547
  %v5048 = vpack.c.b16 %v3552, %v3548
  %v5049 = vpack.c.b16 %v3557, %v3553
  %v5050 = vpack.c.b16 %v3558, %v3554
  %v5051 = vpack.c.b16 %v3559, %v3555
  %v5052 = vpack.c.b16 %v3560, %v3556
  %v5053 = vpack.c.b16 %v3565, %v3561
  %v5054 = vpack.c.b16 %v3566, %v3562
  %v5055 = vpack.c.b16 %v3567, %v3563
  %v5056 = vpack.c.b16 %v3568, %v3564
  %v5057 = vpack.c.b16 %v3573, %v3569
  %v5058 = vpack.c.b16 %v3574, %v3570
  %v5059 = vpack.c.b16 %v3575, %v3571
  %v5060 = vpack.c.b16 %v3576, %v3572
  %v5061 = vpack.c.b16 %v3581, %v3577
  %v5062 = vpack.c.b16 %v3582, %v3578
  %v5063 = vpack.c.b16 %v3583, %v3579
  %v5064 = vpack.c.b16 %v3584, %v3580
  %v5065 = vpack.c.b16 %v3589, %v3585
  %v5066 = vpack.c.b16 %v3590, %v3586
  %v5067 = vpack.c.b16 %v3591, %v3587
  %v5068 = vpack.c.b16 %v3592, %v3588
  %v5069 = vpack.c.b16 %v3597, %v3593
  %v5070 = vpack.c.b16 %v3598, %v3594
  %v5071 = vpack.c.b16 %v3599, %v3595
  %v5072 = vpack.c.b16 %v3600, %v3596
  %v5073 = vpack.c.b16 %v3605, %v3601
  %v5074 = vpack.c.b16 %v3606, %v3602
  %v5075 = vpack.c.b16 %v3607, %v3603
  %v5076 = vpack.c.b16 %v3608, %v3604
  %v5077 = vpack.c.b16 %v3613, %v3609
  %v5078 = vpack.c.b16 %v3614, %v3610
  %v5079 = vpack.c.b16 %v3615, %v3611
  %v5080 = vpack.c.b16 %v3616, %v3612
  %v5081 = vpack.c.b16 %v3621, %v3617
  %v5082 = vpack.c.b16 %v3622, %v3618
  %v5083 = vpack.c.b16 %v3623, %v3619
  %v5084 = vpack.c.b16 %v3624, %v3620
  %v5085 = vpack.c.b16 %v3629, %v3625
  %v5086 = vpack.c.b16 %v3630, %v3626
  %v5087 = vpack.c.b16 %v3631, %v3627
  %v5088 = vpack.c.b16 %v3632, %v3628
  %v5089 = vpack.c.b16 %v3637, %v3633
  %v5090 = vpack.c.b16 %v3638, %v3634
  %v5091 = vpack.c.b16 %v3639, %v3635
  %v5092 = vpack.c.b16 %v3640, %v3636
  %v5093 = vpack.c.b16 %v3645, %v3641
  %v5094 = vpack.c.b16 %v3646, %v3642
  %v5095 = vpack.c.b16 %v3647, %v3643
  %v5096 = vpack.c.b16 %v3648, %v3644
  %v5097 = vpack.c.b16 %v3653, %v3649
  %v5098 = vpack.c.b16 %v3654, %v3650
  %v5099 = vpack.c.b16 %v3655, %v3651
  %v5100 = vpack.c.b16 %v3656, %v3652
  %v5101 = vpack.c.b16 %v3661, %v3657
  %v5102 = vpack.c.b16 %v3662, %v3658
  %v5103 = vpack.c.b16 %v3663, %v3659
  %v5104 = vpack.c.b16 %v3664, %v3660
  %v5105 = vpack.c.b16 %v3669, %v3665
  %v5106 = vpack.c.b16 %v3670, %v3666
  %v5107 = vpack.c.b16 %v3671, %v3667
  %v5108 = vpack.c.b16 %v3672, %v3668
  %v5109 = vpack.c.b16 %v3677, %v3673
  %v5110 = vpack.c.b16 %v3678, %v3674
  %v5111 = vpack.c.b16 %v3679, %v3675
  %v5112 = vpack.c.b16 %v3680, %v3676
  %v5113 = vpack.c.b16 %v3685, %v3681
  %v5114 = vpack.c.b16 %v3686, %v3682
  %v5115 = vpack.c.b16 %v3687, %v3683
  %v5116 = vpack.c.b16 %v3688, %v3684
  %v5117 = vpack.c.b16 %v3693, %v3689
  %v5118 = vpack.c.b16 %v3694, %v3690
  %v5119 = vpack.c.b16 %v3695, %v3691
  %v5120 = vpack.c.b16 %v3696, %v3692
  %v5121 = vpack.c.b16 %v3701, %v3697
  %v5122 = vpack.c.b16 %v3702, %v3698
  %v5123 = vpack.c.b16 %v3703, %v3699
  %v5124 = vpack.c.b16 %v3704, %v3700
  %v5125 = vpack.c.b16 %v3709, %v3705
  %v5126 = vpack.c.b16 %v3710, %v3706
  %v5127 = vpack.c.b16 %v3711, %v3707
  %v5128 = vpack.c.b16 %v3712, %v3708
  %v5129 = vpack.c.b16 %v3717, %v3713
  %v5130 = vpack.c.b16 %v3718, %v3714
  %v5131 = vpack.c.b16 %v3719, %v3715
  %v5132 = vpack.c.b16 %v3720, %v3716
  %v5133 = vpack.c.b16 %v3725, %v3721
  %v5134 = vpack.c.b16 %v3726, %v3722
  %v5135 = vpack.c.b16 %v3727, %v3723
  %v5136 = vpack.c.b16 %v3728, %v3724
  %v5137 = vpack.c.b16 %v3733, %v3729
  %v5138 = vpack.c.b16 %v3734, %v3730
  %v5139 = vpack.c.b16 %v3735, %v3731
  %v5140 = vpack.c.b16 %v3736, %v3732
  %v5141 = vpack.c.b16 %v3741, %v3737
  %v5142 = vpack.c.b16 %v3742, %v3738
  %v5143 = vpack.c.b16 %v3743, %v3739
  %v5144 = vpack.c.b16 %v3744, %v3740
  %v5145 = vpack.c.b16 %v3749, %v3745
  %v5146 = vpack.c.b16 %v3750, %v3746
  %v5147 = vpack.c.b16 %v3751, %v3747
  %v5148 = vpack.c.b16 %v3752, %v3748
  %v5149 = vpack.c.b16 %v3757, %v3753
  %v5150 = vpack.c.b16 %v3758, %v3754
  %v5151 = vpack.c.b16 %v3759, %v3755
  %v5152 = vpack.c.b16 %v3760, %v3756
  %v5153 = vpack.c.b16 %v3765, %v3761
  %v5154 = vpack.c.b16 %v3766, %v3762
  %v5155 = vpack.c.b16 %v3767, %v3763
  %v5156 = vpack.c.b16 %v3768, %v3764
  %v5157 = vpack.c.b16 %v3773, %v3769
  %v5158 = vpack.c.b16 %v3774, %v3770
  %v5159 = vpack.c.b16 %v3775, %v3771
  %v5160 = vpack.c.b16 %v3776, %v3772
  %v5161 = vpack.c.b16 %v3781, %v3777
  %v5162 = vpack.c.b16 %v3782, %v3778
  %v5163 = vpack.c.b16 %v3783, %v3779
  %v5164 = vpack.c.b16 %v3784, %v3780
  %v5165 = vpack.c.b16 %v3789, %v3785
  %v5166 = vpack.c.b16 %v3790, %v3786
  %v5167 = vpack.c.b16 %v3791, %v3787
  %v5168 = vpack.c.b16 %v3792, %v3788
  %v5169 = vpack.c.b16 %v3797, %v3793
  %v5170 = vpack.c.b16 %v3798, %v3794
  %v5171 = vpack.c.b16 %v3799, %v3795
  %v5172 = vpack.c.b16 %v3800, %v3796
  %v5173 = vpack.c.b16 %v3805, %v3801
  %v5174 = vpack.c.b16 %v3806, %v3802
  %v5175 = vpack.c.b16 %v3807, %v3803
  %v5176 = vpack.c.b16 %v3808, %v3804
  %v5177 = vpack.c.b16 %v3813, %v3809
  %v5178 = vpack.c.b16 %v3814, %v3810
  %v5179 = vpack.c.b16 %v3815, %v3811
  %v5180 = vpack.c.b16 %v3816, %v3812
  %v5181 = vpack.c.b16 %v3821, %v3817
  %v5182 = vpack.c.b16 %v3822, %v3818
  %v5183 = vpack.c.b16 %v3823, %v3819
  %v5184 = vpack.c.b16 %v3824, %v3820
  %v5185 = vpack.c.b16 %v3829, %v3825
  %v5186 = vpack.c.b16 %v3830, %v3826
  %v5187 = vpack.c.b16 %v3831, %v3827
  %v5188 = vpack.c.b16 %v3832, %v3828
  %v5189 = vpack.c.b16 %v3837, %v3833
  %v5190 = vpack.c.b16 %v3838, %v3834
  %v5191 = vpack.c.b16 %v3839, %v3835
  %v5192 = vpack.c.b16 %v3840, %v3836
  %v5193 = vpack.c.b16 %v3845, %v3841
  %v5194 = vpack.c.b16 %v3846, %v3842
  %v5195 = vpack.c.b16 %v3847, %v3843
  %v5196 = vpack.c.b16 %v3848, %v3844
  %v5197 = vpack.c.b16 %v3853, %v3849
  %v5198 = vpack.c.b16 %v3854, %v3850
  %v5199 = vpack.c.b16 %v3855, %v3851
  %v5200 = vpack.c.b16 %v3856, %v3852
  %v5201 = vpack.c.b16 %v3861, %v3857
  %v5202 = vpack.c.b16 %v3862, %v3858
  %v5203 = vpack.c.b16 %v3863, %v3859
  %v5204 = vpack.c.b16 %v3864, %v3860
  %v5205 = vpack.c.b16 %v3869, %v3865
  %v5206 = vpack.c.b16 %v3870, %v3866
  %v5207 = vpack.c.b16 %v3871, %v3867
  %v5208 = vpack.c.b16 %v3872, %v3868
  %v5209 = vpack.c.b16 %v3877, %v3873
  %v5210 = vpack.c.b16 %v3878, %v3874
  %v5211 = vpack.c.b16 %v3879, %v3875
  %v5212 = vpack.c.b16 %v3880, %v3876
  %v5213 = vpack.c.b16 %v3885, %v3881
  %v5214 = vpack.c.b16 %v3886, %v3882
  %v5215 = vpack.c.b16 %v3887, %v3883
  %v5216 = vpack.c.b16 %v3888, %v3884
  %v5217 = vpack.c.b16 %v3893, %v3889
  %v5218 = vpack.c.b16 %v3894, %v3890
  %v5219 = vpack.c.b16 %v3895, %v3891
  %v5220 = vpack.c.b16 %v3896, %v3892
  %v5221 = vpack.c.b16 %v3901, %v3897
  %v5222 = vpack.c.b16 %v3902, %v3898
  %v5223 = vpack.c.b16 %v3903, %v3899
  %v5224 = vpack.c.b16 %v3904, %v3900
  %v5225 = vpack.c.b16 %v3909, %v3905
  %v5226 = vpack.c.b16 %v3910, %v3906
  %v5227 = vpack.c.b16 %v3911, %v3907
  %v5228 = vpack.c.b16 %v3912, %v3908
  %v5229 = vpack.c.b16 %v3917, %v3913
  %v5230 = vpack.c.b16 %v3918, %v3914
  %v5231 = vpack.c.b16 %v3919, %v3915
  %v5232 = vpack.c.b16 %v3920, %v3916
  %v5233 = vpack.c.b16 %v3925, %v3921
  %v5234 = vpack.c.b16 %v3926, %v3922
  %v5235 = vpack.c.b16 %v3927, %v3923
  %v5236 = vpack.c.b16 %v3928, %v3924
  %v5237 = vpack.c.b16 %v3933, %v3929
  %v5238 = vpack.c.b16 %v3934, %v3930
  %v5239 = vpack.c.b16 %v3935, %v3931
  %v5240 = vpack.c.b16 %v3936, %v3932
  %v5241 = vpack.c.b16 %v3941, %v3937
  %v5242 = vpack.c.b16 %v3942, %v3938
  %v5243 = vpack.c.b16 %v3943, %v3939
  %v5244 = vpack.c.b16 %v3944, %v3940
  %v5245 = vpack.c.b16 %v3949, %v3945
  %v5246 = vpack.c.b16 %v3950, %v3946
  %v5247 = vpack.c.b16 %v3951, %v3947
  %v5248 = vpack.c.b16 %v3952, %v3948
  %v5249 = vpack.c.b16 %v3957, %v3953
  %v5250 = vpack.c.b16 %v3958, %v3954
  %v5251 = vpack.c.b16 %v3959, %v3955
  %v5252 = vpack.c.b16 %v3960, %v3956
  %v5253 = vpack.c.b16 %v3965, %v3961
  %v5254 = vpack.c.b16 %v3966, %v3962
  %v5255 = vpack.c.b16 %v3967, %v3963
  %v5256 = vpack.c.b16 %v3968, %v3964
  %v5257 = vpack.c.b16 %v3973, %v3969
  %v5258 = vpack.c.b16 %v3974, %v3970
  %v5259 = vpack.c.b16 %v3975, %v3971
  %v5260 = vpack.c.b16 %v3976, %v3972
  %v5261 = vpack.c.b16 %v3981, %v3977
  %v5262 = vpack.c.b16 %v3982, %v3978
  %v5263 = vpack.c.b16 %v3983, %v3979
  %v5264 = vpack.c.b16 %v3984, %v3980
  %v5265 = vpack.c.b16 %v3989, %v3985
  %v5266 = vpack.c.b16 %v3990, %v3986
  %v5267 = vpack.c.b16 %v3991, %v3987
  %v5268 = vpack.c.b16 %v3992, %v3988
  %v5269 = vpack.c.b16 %v3997, %v3993
  %v5270 = vpack.c.b16 %v3998, %v3994
  %v5271 = vpack.c.b16 %v3999, %v3995
  %v5272 = vpack.c.b16 %v4000, %v3996
  %v5273 = vpack.c.b16 %v4005, %v4001
  %v5274 = vpack.c.b16 %v4006, %v4002
  %v5275 = vpack.c.b16 %v4007, %v4003
  %v5276 = vpack.c.b16 %v4008, %v4004
  %v5277 = vpack.c.b16 %v4013, %v4009
  %v5278 = vpack.c.b16 %v4014, %v4010
  %v5279 = vpack.c.b16 %v4015, %v4011
  %v5280 = vpack.c.b16 %v4016, %v4012
  %v5281 = vpack.c.b16 %v4021, %v4017
  %v5282 = vpack.c.b16 %v4022, %v4018
  %v5283 = vpack.c.b16 %v4023, %v4019
  %v5284 = vpack.c.b16 %v4024, %v4020
  %v5285 = vpack.c.b16 %v4029, %v4025
  %v5286 = vpack.c.b16 %v4030, %v4026
  %v5287 = vpack.c.b16 %v4031, %v4027
  %v5288 = vpack.c.b16 %v4032, %v4028
  %v5289 = vpack.c.b16 %v4037, %v4033
  %v5290 = vpack.c.b16 %v4038, %v4034
  %v5291 = vpack.c.b16 %v4039, %v4035
  %v5292 = vpack.c.b16 %v4040, %v4036
  %v5293 = vpack.c.b16 %v4045, %v4041
  %v5294 = vpack.c.b16 %v4046, %v4042
  %v5295 = vpack.c.b16 %v4047, %v4043
  %v5296 = vpack.c.b16 %v4048, %v4044
  %v5297 = vpack.c.b16 %v4053, %v4049
  %v5298 = vpack.c.b16 %v4054, %v4050
  %v5299 = vpack.c.b16 %v4055, %v4051
  %v5300 = vpack.c.b16 %v4056, %v4052
  %v5301 = vpack.c.b16 %v4061, %v4057
  %v5302 = vpack.c.b16 %v4062, %v4058
  %v5303 = vpack.c.b16 %v4063, %v4059
  %v5304 = vpack.c.b16 %v4064, %v4060
  %v5305 = vpack.c.b16 %v4069, %v4065
  %v5306 = vpack.c.b16 %v4070, %v4066
  %v5307 = vpack.c.b16 %v4071, %v4067
  %v5308 = vpack.c.b16 %v4072, %v4068
  %v5309 = vpack.c.b16 %v4077, %v4073
  %v5310 = vpack.c.b16 %v4078, %v4074
  %v5311 = vpack.c.b16 %v4079, %v4075
  %v5312 = vpack.c.b16 %v4080, %v4076
  %v5313 = vpack.c.b16 %v4085, %v4081
  %v5314 = vpack.c.b16 %v4086, %v4082
  %v5315 = vpack.c.b16 %v4087, %v4083
  %v5316 = vpack.c.b16 %v4088, %v4084
  %v5317 = vpack.c.b16 %v4093, %v4089
  %v5318 = vpack.c.b16 %v4094, %v4090
  %v5319 = vpack.c.b16 %v4095, %v4091
  %v5320 = vpack.c.b16 %v4096, %v4092
  %v5321 = vpack.c.b16 %v4101, %v4097
  %v5322 = vpack.c.b16 %v4102, %v4098
  %v5323 = vpack.c.b16 %v4103, %v4099
  %v5324 = vpack.c.b16 %v4104, %v4100
  %v5325 = vpack.c.b16 %v4109, %v4105
  %v5326 = vpack.c.b16 %v4110, %v4106
  %v5327 = vpack.c.b16 %v4111, %v4107
  %v5328 = vpack.c.b16 %v4112, %v4108
  %v5329 = vpack.c.b16 %v4117, %v4113
  %v5330 = vpack.c.b16 %v4118, %v4114
  %v5331 = vpack.c.b16 %v4119, %v4115
  %v5332 = vpack.c.b16 %v4120, %v4116
  %v5333 = vpack.c.b16 %v4125, %v4121
  %v5334 = vpack.c.b16 %v4126, %v4122
  %v5335 = vpack.c.b16 %v4127, %v4123
  %v5336 = vpack.c.b16 %v4128, %v4124
  %v5337 = vpack.c.b16 %v4133, %v4129
  %v5338 = vpack.c.b16 %v4134, %v4130
  %v5339 = vpack.c.b16 %v4135, %v4131
  %v5340 = vpack.c.b16 %v4136, %v4132
  %v5341 = vpack.c.b16 %v4141, %v4137
  %v5342 = vpack.c.b16 %v4142, %v4138
  %v5343 = vpack.c.b16 %v4143, %v4139
  %v5344 = vpack.c.b16 %v4144, %v4140
  %v5345 = vpack.c.b16 %v4149, %v4145
  %v5346 = vpack.c.b16 %v4150, %v4146
  %v5347 = vpack.c.b16 %v4151, %v4147
  %v5348 = vpack.c.b16 %v4152, %v4148
  %v5349 = vpack.c.b16 %v4157, %v4153
  %v5350 = vpack.c.b16 %v4158, %v4154
  %v5351 = vpack.c.b16 %v4159, %v4155
  %v5352 = vpack.c.b16 %v4160, %v4156
  %v5353 = vpack.c.b16 %v4165, %v4161
  %v5354 = vpack.c.b16 %v4166, %v4162
  %v5355 = vpack.c.b16 %v4167, %v4163
  %v5356 = vpack.c.b16 %v4168, %v4164
  %v5357 = vpack.c.b16 %v4173, %v4169
  %v5358 = vpack.c.b16 %v4174, %v4170
  %v5359 = vpack.c.b16 %v4175, %v4171
  %v5360 = vpack.c.b16 %v4176, %v4172
  %v5361 = vpack.c.b16 %v4181, %v4177
  %v5362 = vpack.c.b16 %v4182, %v4178
  %v5363 = vpack.c.b16 %v4183, %v4179
  %v5364 = vpack.c.b16 %v4184, %v4180
  %v5365 = vpack.c.b16 %v4189, %v4185
  %v5366 = vpack.c.b16 %v4190, %v4186
  %v5367 = vpack.c.b16 %v4191, %v4187
  %v5368 = vpack.c.b16 %v4192, %v4188
  %v5369 = vpack.c.b16 %v4197, %v4193
  %v5370 = vpack.c.b16 %v4198, %v4194
  %v5371 = vpack.c.b16 %v4199, %v4195
  %v5372 = vpack.c.b16 %v4200, %v4196
  %v5373 = vpack.c.b16 %v4205, %v4201
  %v5374 = vpack.c.b16 %v4206, %v4202
  %v5375 = vpack.c.b16 %v4207, %v4203
  %v5376 = vpack.c.b16 %v4208, %v4204
  %v5377 = vpack.c.b16 %v4213, %v4209
  %v5378 = vpack.c.b16 %v4214, %v4210
  %v5379 = vpack.c.b16 %v4215, %v4211
  %v5380 = vpack.c.b16 %v4216, %v4212
  %v5381 = vpack.c.b16 %v4221, %v4217
  %v5382 = vpack.c.b16 %v4222, %v4218
  %v5383 = vpack.c.b16 %v4223, %v4219
  %v5384 = vpack.c.b16 %v4224, %v4220
  %v5385 = vpack.c.b16 %v4229, %v4225
  %v5386 = vpack.c.b16 %v4230, %v4226
  %v5387 = vpack.c.b16 %v4231, %v4227
  %v5388 = vpack.c.b16 %v4232, %v4228
  %v5389 = vpack.c.b16 %v4237, %v4233
  %v5390 = vpack.c.b16 %v4238, %v4234
  %v5391 = vpack.c.b16 %v4239, %v4235
  %v5392 = vpack.c.b16 %v4240, %v4236
  %v5393 = vpack.c.b16 %v4245, %v4241
  %v5394 = vpack.c.b16 %v4246, %v4242
  %v5395 = vpack.c.b16 %v4247, %v4243
  %v5396 = vpack.c.b16 %v4248, %v4244
  %v5397 = vpack.c.b16 %v4253, %v4249
  %v5398 = vpack.c.b16 %v4254, %v4250
  %v5399 = vpack.c.b16 %v4255, %v4251
  %v5400 = vpack.c.b16 %v4256, %v4252
  %v5401 = vpack.c.b16 %v4261, %v4257
  %v5402 = vpack.c.b16 %v4262, %v4258
  %v5403 = vpack.c.b16 %v4263, %v4259
  %v5404 = vpack.c.b16 %v4264, %v4260
  %v5405 = vpack.c.b16 %v4269, %v4265
  %v5406 = vpack.c.b16 %v4270, %v4266
  %v5407 = vpack.c.b16 %v4271, %v4267
  %v5408 = vpack.c.b16 %v4272, %v4268
  %v5409 = vpack.c.b16 %v4277, %v4273
  %v5410 = vpack.c.b16 %v4278, %v4274
  %v5411 = vpack.c.b16 %v4279, %v4275
  %v5412 = vpack.c.b16 %v4280, %v4276
  %v5413 = vpack.c.b16 %v4285, %v4281
  %v5414 = vpack.c.b16 %v4286, %v4282
  %v5415 = vpack.c.b16 %v4287, %v4283
  %v5416 = vpack.c.b16 %v4288, %v4284
  %v5417 = vpack.c.b16 %v4293, %v4289
  %v5418 = vpack.c.b16 %v4294, %v4290
  %v5419 = vpack.c.b16 %v4295, %v4291
  %v5420 = vpack.c.b16 %v4296, %v4292
  %v5421 = vpack.c.b16 %v4301, %v4297
  %v5422 = vpack.c.b16 %v4302, %v4298
  %v5423 = vpack.c.b16 %v4303, %v4299
  %v5424 = vpack.c.b16 %v4304, %v4300
  %v5425 = vpack.c.b16 %v4309, %v4305
  %v5426 = vpack.c.b16 %v4310, %v4306
  %v5427 = vpack.c.b16 %v4311, %v4307
  %v5428 = vpack.c.b16 %v4312, %v4308
  %v5429 = vpack.c.b16 %v4317, %v4313
  %v5430 = vpack.c.b16 %v4318, %v4314
  %v5431 = vpack.c.b16 %v4319, %v4315
  %v5432 = vpack.c.b16 %v4320, %v4316
  %v5433 = vpack.c.b16 %v4325, %v4321
  %v5434 = vpack.c.b16 %v4326, %v4322
  %v5435 = vpack.c.b16 %v4327, %v4323
  %v5436 = vpack.c.b16 %v4328, %v4324
  %v5437 = vpack.c.b16 %v4333, %v4329
  %v5438 = vpack.c.b16 %v4334, %v4330
  %v5439 = vpack.c.b16 %v4335, %v4331
  %v5440 = vpack.c.b16 %v4336, %v4332
  %v5441 = vpack.c.b16 %v4341, %v4337
  %v5442 = vpack.c.b16 %v4342, %v4338
  %v5443 = vpack.c.b16 %v4343, %v4339
  %v5444 = vpack.c.b16 %v4344, %v4340
  %v5445 = vpack.c.b16 %v4349, %v4345
  %v5446 = vpack.c.b16 %v4350, %v4346
  %v5447 = vpack.c.b16 %v4351, %v4347
  %v5448 = vpack.c.b16 %v4352, %v4348
  %v5449 = vpack.c.b16 %v4357, %v4353
  %v5450 = vpack.c.b16 %v4358, %v4354
  %v5451 = vpack.c.b16 %v4359, %v4355
  %v5452 = vpack.c.b16 %v4360, %v4356
  %v5453 = vpack.c.b16 %v4365, %v4361
  %v5454 = vpack.c.b16 %v4366, %v4362
  %v5455 = vpack.c.b16 %v4367, %v4363
  %v5456 = vpack.c.b16 %v4368, %v4364
  %v5457 = vpack.c.b16 %v4373, %v4369
  %v5458 = vpack.c.b16 %v4374, %v4370
  %v5459 = vpack.c.b16 %v4375, %v4371
  %v5460 = vpack.c.b16 %v4376, %v4372
  %v5461 = vpack.c.b16 %v4381, %v4377
  %v5462 = vpack.c.b16 %v4382, %v4378
  %v5463 = vpack.c.b16 %v4383, %v4379
  %v5464 = vpack.c.b16 %v4384, %v4380
  %v5465 = vpack.c.b16 %v4389, %v4385
  %v5466 = vpack.c.b16 %v4390, %v4386
  %v5467 = vpack.c.b16 %v4391, %v4387
  %v5468 = vpack.c.b16 %v4392, %v4388
  %v5469 = vpack.c.b16 %v4397, %v4393
  %v5470 = vpack.c.b16 %v4398, %v4394
  %v5471 = vpack.c.b16 %v4399, %v4395
  %v5472 = vpack.c.b16 %v4400, %v4396
  %v5473 = vpack.c.b16 %v4405, %v4401
  %v5474 = vpack.c.b16 %v4406, %v4402
  %v5475 = vpack.c.b16 %v4407, %v4403
  %v5476 = vpack.c.b16 %v4408, %v4404
  %v5477 = vpack.c.b16 %v4413, %v4409
  %v5478 = vpack.c.b16 %v4414, %v4410
  %v5479 = vpack.c.b16 %v4415, %v4411
  %v5480 = vpack.c.b16 %v4416, %v4412
  %v5481 = vpack.c.b16 %v4421, %v4417
  %v5482 = vpack.c.b16 %v4422, %v4418
  %v5483 = vpack.c.b16 %v4423, %v4419
  %v5484 = vpack.c.b16 %v4424, %v4420
  %v5485 = vpack.c.b16 %v4429, %v4425
  %v5486 = vpack.c.b16 %v4430, %v4426
  %v5487 = vpack.c.b16 %v4431, %v4427
  %v5488 = vpack.c.b16 %v4432, %v4428
  %v5489 = vpack.c.b16 %v4437, %v4433
  %v5490 = vpack.c.b16 %v4438, %v4434
  %v5491 = vpack.c.b16 %v4439, %v4435
  %v5492 = vpack.c.b16 %v4440, %v4436
  %v5493 = vpack.c.b16 %v4445, %v4441
  %v5494 = vpack.c.b16 %v4446, %v4442
  %v5495 = vpack.c.b16 %v4447, %v4443
  %v5496 = vpack.c.b16 %v4448, %v4444
  %v5497 = vpack.c.b16 %v4453, %v4449
  %v5498 = vpack.c.b16 %v4454, %v4450
  %v5499 = vpack.c.b16 %v4455, %v4451
  %v5500 = vpack.c.b16 %v4456, %v4452
  %v5501 = vpack.c.b16 %v4461, %v4457
  %v5502 = vpack.c.b16 %v4462, %v4458
  %v5503 = vpack.c.b16 %v4463, %v4459
  %v5504 = vpack.c.b16 %v4464, %v4460
  %v5505 = vpack.c.b16 %v4469, %v4465
  %v5506 = vpack.c.b16 %v4470, %v4466
  %v5507 = vpack.c.b16 %v4471, %v4467
  %v5508 = vpack.c.b16 %v4472, %v4468
  %v5509 = vpack.c.b16 %v4477, %v4473
  %v5510 = vpack.c.b16 %v4478, %v4474
  %v5511 = vpack.c.b16 %v4479, %v4475
  %v5512 = vpack.c.b16 %v4480, %v4476
  %v5513 = vpack.c.b16 %v4485, %v4481
  %v5514 = vpack.c.b16 %v4486, %v4482
  %v5515 = vpack.c.b16 %v4487, %v4483
  %v5516 = vpack.c.b16 %v4488, %v4484
  %v5517 = vpack.c.b16 %v4493, %v4489
  %v5518 = vpack.c.b16 %v4494, %v4490
  %v5519 = vpack.c.b16 %v4495, %v4491
  %v5520 = vpack.c.b16 %v4496, %v4492
  %6545 = vmatpush.bf16.msra.mxu0 %v4525
  %6546 = vmatpush.bf16.msra.mxu0 %v4521
  %6547 = vmatpush.bf16.msra.mxu0 %v4517
  %6548 = vmatpush.bf16.msra.mxu0 %v4513
  %6549 = vmatpush.bf16.msra.mxu0 %v4509
  %6550 = vmatpush.bf16.msra.mxu0 %v4505
  %6551 = vmatpush.bf16.msra.mxu0 %v4501
  %6552 = vmatpush.bf16.msra.mxu0 %v4497
  %6553 = vmatmul.bf16.gmra.mxu0 %v1297
  %v6554 = vpop.f32.mrf.mxu0
  %v6555 = vadd.f32 0.0, %v6554
  %v6556 = vpop.f32.mrf.mxu0
  %v6557 = vadd.f32 0.0, %v6556
  %6558 = vmatmul.bf16.gmra.mxu0 %v1329
  %v6559 = vpop.f32.mrf.mxu0
  %v6560 = vadd.f32 0.0, %v6559
  %v6561 = vpop.f32.mrf.mxu0
  %v6562 = vadd.f32 0.0, %v6561
  %6563 = vdwg.mxu0
  %6564 = vmatpush.bf16.msra.mxu0 %v4557
  %6565 = vmatpush.bf16.msra.mxu0 %v4553
  %6566 = vmatpush.bf16.msra.mxu0 %v4549
  %6567 = vmatpush.bf16.msra.mxu0 %v4545
  %6568 = vmatpush.bf16.msra.mxu0 %v4541
  %6569 = vmatpush.bf16.msra.mxu0 %v4537
  %6570 = vmatpush.bf16.msra.mxu0 %v4533
  %6571 = vmatpush.bf16.msra.mxu0 %v4529
  %6572 = vmatmul.bf16.gmra.mxu0 %v1298
  %v6573 = vpop.f32.mrf.mxu0
  %v6574 = vadd.f32 %v6555, %v6573
  %v6575 = vpop.f32.mrf.mxu0
  %v6576 = vadd.f32 %v6557, %v6575
  %6577 = vmatmul.bf16.gmra.mxu0 %v1330
  %v6578 = vpop.f32.mrf.mxu0
  %v6579 = vadd.f32 %v6560, %v6578
  %v6580 = vpop.f32.mrf.mxu0
  %v6581 = vadd.f32 %v6562, %v6580
  %6582 = vdwg.mxu0
  %6583 = vmatpush.bf16.msra.mxu0 %v4589
  %6584 = vmatpush.bf16.msra.mxu0 %v4585
  %6585 = vmatpush.bf16.msra.mxu0 %v4581
  %6586 = vmatpush.bf16.msra.mxu0 %v4577
  %6587 = vmatpush.bf16.msra.mxu0 %v4573
  %6588 = vmatpush.bf16.msra.mxu0 %v4569
  %6589 = vmatpush.bf16.msra.mxu0 %v4565
  %6590 = vmatpush.bf16.msra.mxu0 %v4561
  %6591 = vmatmul.bf16.gmra.mxu0 %v1299
  %v6592 = vpop.f32.mrf.mxu0
  %v6593 = vadd.f32 %v6574, %v6592
  %v6594 = vpop.f32.mrf.mxu0
  %v6595 = vadd.f32 %v6576, %v6594
  %6596 = vmatmul.bf16.gmra.mxu0 %v1331
  %v6597 = vpop.f32.mrf.mxu0
  %v6598 = vadd.f32 %v6579, %v6597
  %v6599 = vpop.f32.mrf.mxu0
  %v6600 = vadd.f32 %v6581, %v6599
  %6601 = vdwg.mxu0
  %6602 = vmatpush.bf16.msra.mxu0 %v4621
  %6603 = vmatpush.bf16.msra.mxu0 %v4617
  %6604 = vmatpush.bf16.msra.mxu0 %v4613
  %6605 = vmatpush.bf16.msra.mxu0 %v4609
  %6606 = vmatpush.bf16.msra.mxu0 %v4605
  %6607 = vmatpush.bf16.msra.mxu0 %v4601
  %6608 = vmatpush.bf16.msra.mxu0 %v4597
  %6609 = vmatpush.bf16.msra.mxu0 %v4593
  %6610 = vmatmul.bf16.gmra.mxu0 %v1300
  %v6611 = vpop.f32.mrf.mxu0
  %v6612 = vadd.f32 %v6593, %v6611
  %v6613 = vpop.f32.mrf.mxu0
  %v6614 = vadd.f32 %v6595, %v6613
  %6615 = vmatmul.bf16.gmra.mxu0 %v1332
  %v6616 = vpop.f32.mrf.mxu0
  %v6617 = vadd.f32 %v6598, %v6616
  %v6618 = vpop.f32.mrf.mxu0
  %v6619 = vadd.f32 %v6600, %v6618
  %6620 = vdwg.mxu0
  %6621 = vmatpush.bf16.msra.mxu0 %v4653
  %6622 = vmatpush.bf16.msra.mxu0 %v4649
  %6623 = vmatpush.bf16.msra.mxu0 %v4645
  %6624 = vmatpush.bf16.msra.mxu0 %v4641
  %6625 = vmatpush.bf16.msra.mxu0 %v4637
  %6626 = vmatpush.bf16.msra.mxu0 %v4633
  %6627 = vmatpush.bf16.msra.mxu0 %v4629
  %6628 = vmatpush.bf16.msra.mxu0 %v4625
  %6629 = vmatmul.bf16.gmra.mxu0 %v1301
  %v6630 = vpop.f32.mrf.mxu0
  %v6631 = vadd.f32 %v6612, %v6630
  %v6632 = vpop.f32.mrf.mxu0
  %v6633 = vadd.f32 %v6614, %v6632
  %6634 = vmatmul.bf16.gmra.mxu0 %v1333
  %v6635 = vpop.f32.mrf.mxu0
  %v6636 = vadd.f32 %v6617, %v6635
  %v6637 = vpop.f32.mrf.mxu0
  %v6638 = vadd.f32 %v6619, %v6637
  %6639 = vdwg.mxu0
  %6640 = vmatpush.bf16.msra.mxu0 %v4685
  %6641 = vmatpush.bf16.msra.mxu0 %v4681
  %6642 = vmatpush.bf16.msra.mxu0 %v4677
  %6643 = vmatpush.bf16.msra.mxu0 %v4673
  %6644 = vmatpush.bf16.msra.mxu0 %v4669
  %6645 = vmatpush.bf16.msra.mxu0 %v4665
  %6646 = vmatpush.bf16.msra.mxu0 %v4661
  %6647 = vmatpush.bf16.msra.mxu0 %v4657
  %6648 = vmatmul.bf16.gmra.mxu0 %v1302
  %v6649 = vpop.f32.mrf.mxu0
  %v6650 = vadd.f32 %v6631, %v6649
  %v6651 = vpop.f32.mrf.mxu0
  %v6652 = vadd.f32 %v6633, %v6651
  %6653 = vmatmul.bf16.gmra.mxu0 %v1334
  %v6654 = vpop.f32.mrf.mxu0
  %v6655 = vadd.f32 %v6636, %v6654
  %v6656 = vpop.f32.mrf.mxu0
  %v6657 = vadd.f32 %v6638, %v6656
  %6658 = vdwg.mxu0
  %6659 = vmatpush.bf16.msra.mxu0 %v4717
  %6660 = vmatpush.bf16.msra.mxu0 %v4713
  %6661 = vmatpush.bf16.msra.mxu0 %v4709
  %6662 = vmatpush.bf16.msra.mxu0 %v4705
  %6663 = vmatpush.bf16.msra.mxu0 %v4701
  %6664 = vmatpush.bf16.msra.mxu0 %v4697
  %6665 = vmatpush.bf16.msra.mxu0 %v4693
  %6666 = vmatpush.bf16.msra.mxu0 %v4689
  %6667 = vmatmul.bf16.gmra.mxu0 %v1303
  %v6668 = vpop.f32.mrf.mxu0
  %v6669 = vadd.f32 %v6650, %v6668
  %v6670 = vpop.f32.mrf.mxu0
  %v6671 = vadd.f32 %v6652, %v6670
  %6672 = vmatmul.bf16.gmra.mxu0 %v1335
  %v6673 = vpop.f32.mrf.mxu0
  %v6674 = vadd.f32 %v6655, %v6673
  %v6675 = vpop.f32.mrf.mxu0
  %v6676 = vadd.f32 %v6657, %v6675
  %6677 = vdwg.mxu0
  %6678 = vmatpush.bf16.msra.mxu0 %v4749
  %6679 = vmatpush.bf16.msra.mxu0 %v4745
  %6680 = vmatpush.bf16.msra.mxu0 %v4741
  %6681 = vmatpush.bf16.msra.mxu0 %v4737
  %6682 = vmatpush.bf16.msra.mxu0 %v4733
  %6683 = vmatpush.bf16.msra.mxu0 %v4729
  %6684 = vmatpush.bf16.msra.mxu0 %v4725
  %6685 = vmatpush.bf16.msra.mxu0 %v4721
  %6686 = vmatmul.bf16.gmra.mxu0 %v1304
  %v6687 = vpop.f32.mrf.mxu0
  %v6688 = vadd.f32 %v6669, %v6687
  %v6689 = vpop.f32.mrf.mxu0
  %v6690 = vadd.f32 %v6671, %v6689
  %6691 = vmatmul.bf16.gmra.mxu0 %v1336
  %v6692 = vpop.f32.mrf.mxu0
  %v6693 = vadd.f32 %v6674, %v6692
  %v6694 = vpop.f32.mrf.mxu0
  %v6695 = vadd.f32 %v6676, %v6694
  %6696 = vdwg.mxu0
  %6697 = vmatpush.bf16.msra.mxu0 %v4781
  %6698 = vmatpush.bf16.msra.mxu0 %v4777
  %6699 = vmatpush.bf16.msra.mxu0 %v4773
  %6700 = vmatpush.bf16.msra.mxu0 %v4769
  %6701 = vmatpush.bf16.msra.mxu0 %v4765
  %6702 = vmatpush.bf16.msra.mxu0 %v4761
  %6703 = vmatpush.bf16.msra.mxu0 %v4757
  %6704 = vmatpush.bf16.msra.mxu0 %v4753
  %6705 = vmatmul.bf16.gmra.mxu0 %v1305
  %v6706 = vpop.f32.mrf.mxu0
  %v6707 = vadd.f32 %v6688, %v6706
  %v6708 = vpop.f32.mrf.mxu0
  %v6709 = vadd.f32 %v6690, %v6708
  %6710 = vmatmul.bf16.gmra.mxu0 %v1337
  %v6711 = vpop.f32.mrf.mxu0
  %v6712 = vadd.f32 %v6693, %v6711
  %v6713 = vpop.f32.mrf.mxu0
  %v6714 = vadd.f32 %v6695, %v6713
  %6715 = vdwg.mxu0
  %6716 = vmatpush.bf16.msra.mxu0 %v4813
  %6717 = vmatpush.bf16.msra.mxu0 %v4809
  %6718 = vmatpush.bf16.msra.mxu0 %v4805
  %6719 = vmatpush.bf16.msra.mxu0 %v4801
  %6720 = vmatpush.bf16.msra.mxu0 %v4797
  %6721 = vmatpush.bf16.msra.mxu0 %v4793
  %6722 = vmatpush.bf16.msra.mxu0 %v4789
  %6723 = vmatpush.bf16.msra.mxu0 %v4785
  %6724 = vmatmul.bf16.gmra.mxu0 %v1306
  %v6725 = vpop.f32.mrf.mxu0
  %v6726 = vadd.f32 %v6707, %v6725
  %v6727 = vpop.f32.mrf.mxu0
  %v6728 = vadd.f32 %v6709, %v6727
  %6729 = vmatmul.bf16.gmra.mxu0 %v1338
  %v6730 = vpop.f32.mrf.mxu0
  %v6731 = vadd.f32 %v6712, %v6730
  %v6732 = vpop.f32.mrf.mxu0
  %v6733 = vadd.f32 %v6714, %v6732
  %6734 = vdwg.mxu0
  %6735 = vmatpush.bf16.msra.mxu0 %v4845
  %6736 = vmatpush.bf16.msra.mxu0 %v4841
  %6737 = vmatpush.bf16.msra.mxu0 %v4837
  %6738 = vmatpush.bf16.msra.mxu0 %v4833
  %6739 = vmatpush.bf16.msra.mxu0 %v4829
  %6740 = vmatpush.bf16.msra.mxu0 %v4825
  %6741 = vmatpush.bf16.msra.mxu0 %v4821
  %6742 = vmatpush.bf16.msra.mxu0 %v4817
  %6743 = vmatmul.bf16.gmra.mxu0 %v1307
  %v6744 = vpop.f32.mrf.mxu0
  %v6745 = vadd.f32 %v6726, %v6744
  %v6746 = vpop.f32.mrf.mxu0
  %v6747 = vadd.f32 %v6728, %v6746
  %6748 = vmatmul.bf16.gmra.mxu0 %v1339
  %v6749 = vpop.f32.mrf.mxu0
  %v6750 = vadd.f32 %v6731, %v6749
  %v6751 = vpop.f32.mrf.mxu0
  %v6752 = vadd.f32 %v6733, %v6751
  %6753 = vdwg.mxu0
  %6754 = vmatpush.bf16.msra.mxu0 %v4877
  %6755 = vmatpush.bf16.msra.mxu0 %v4873
  %6756 = vmatpush.bf16.msra.mxu0 %v4869
  %6757 = vmatpush.bf16.msra.mxu0 %v4865
  %6758 = vmatpush.bf16.msra.mxu0 %v4861
  %6759 = vmatpush.bf16.msra.mxu0 %v4857
  %6760 = vmatpush.bf16.msra.mxu0 %v4853
  %6761 = vmatpush.bf16.msra.mxu0 %v4849
  %6762 = vmatmul.bf16.gmra.mxu0 %v1308
  %v6763 = vpop.f32.mrf.mxu0
  %v6764 = vadd.f32 %v6745, %v6763
  %v6765 = vpop.f32.mrf.mxu0
  %v6766 = vadd.f32 %v6747, %v6765
  %6767 = vmatmul.bf16.gmra.mxu0 %v1340
  %v6768 = vpop.f32.mrf.mxu0
  %v6769 = vadd.f32 %v6750, %v6768
  %v6770 = vpop.f32.mrf.mxu0
  %v6771 = vadd.f32 %v6752, %v6770
  %6772 = vdwg.mxu0
  %6773 = vmatpush.bf16.msra.mxu0 %v4909
  %6774 = vmatpush.bf16.msra.mxu0 %v4905
  %6775 = vmatpush.bf16.msra.mxu0 %v4901
  %6776 = vmatpush.bf16.msra.mxu0 %v4897
  %6777 = vmatpush.bf16.msra.mxu0 %v4893
  %6778 = vmatpush.bf16.msra.mxu0 %v4889
  %6779 = vmatpush.bf16.msra.mxu0 %v4885
  %6780 = vmatpush.bf16.msra.mxu0 %v4881
  %6781 = vmatmul.bf16.gmra.mxu0 %v1309
  %v6782 = vpop.f32.mrf.mxu0
  %v6783 = vadd.f32 %v6764, %v6782
  %v6784 = vpop.f32.mrf.mxu0
  %v6785 = vadd.f32 %v6766, %v6784
  %6786 = vmatmul.bf16.gmra.mxu0 %v1341
  %v6787 = vpop.f32.mrf.mxu0
  %v6788 = vadd.f32 %v6769, %v6787
  %v6789 = vpop.f32.mrf.mxu0
  %v6790 = vadd.f32 %v6771, %v6789
  %6791 = vdwg.mxu0
  %6792 = vmatpush.bf16.msra.mxu0 %v4941
  %6793 = vmatpush.bf16.msra.mxu0 %v4937
  %6794 = vmatpush.bf16.msra.mxu0 %v4933
  %6795 = vmatpush.bf16.msra.mxu0 %v4929
  %6796 = vmatpush.bf16.msra.mxu0 %v4925
  %6797 = vmatpush.bf16.msra.mxu0 %v4921
  %6798 = vmatpush.bf16.msra.mxu0 %v4917
  %6799 = vmatpush.bf16.msra.mxu0 %v4913
  %6800 = vmatmul.bf16.gmra.mxu0 %v1310
  %v6801 = vpop.f32.mrf.mxu0
  %v6802 = vadd.f32 %v6783, %v6801
  %v6803 = vpop.f32.mrf.mxu0
  %v6804 = vadd.f32 %v6785, %v6803
  %6805 = vmatmul.bf16.gmra.mxu0 %v1342
  %v6806 = vpop.f32.mrf.mxu0
  %v6807 = vadd.f32 %v6788, %v6806
  %v6808 = vpop.f32.mrf.mxu0
  %v6809 = vadd.f32 %v6790, %v6808
  %6810 = vdwg.mxu0
  %6811 = vmatpush.bf16.msra.mxu0 %v4973
  %6812 = vmatpush.bf16.msra.mxu0 %v4969
  %6813 = vmatpush.bf16.msra.mxu0 %v4965
  %6814 = vmatpush.bf16.msra.mxu0 %v4961
  %6815 = vmatpush.bf16.msra.mxu0 %v4957
  %6816 = vmatpush.bf16.msra.mxu0 %v4953
  %6817 = vmatpush.bf16.msra.mxu0 %v4949
  %6818 = vmatpush.bf16.msra.mxu0 %v4945
  %6819 = vmatmul.bf16.gmra.mxu0 %v1311
  %v6820 = vpop.f32.mrf.mxu0
  %v6821 = vadd.f32 %v6802, %v6820
  %v6822 = vpop.f32.mrf.mxu0
  %v6823 = vadd.f32 %v6804, %v6822
  %6824 = vmatmul.bf16.gmra.mxu0 %v1343
  %v6825 = vpop.f32.mrf.mxu0
  %v6826 = vadd.f32 %v6807, %v6825
  %v6827 = vpop.f32.mrf.mxu0
  %v6828 = vadd.f32 %v6809, %v6827
  %6829 = vdwg.mxu0
  %6830 = vmatpush.bf16.msra.mxu0 %v5005
  %6831 = vmatpush.bf16.msra.mxu0 %v5001
  %6832 = vmatpush.bf16.msra.mxu0 %v4997
  %6833 = vmatpush.bf16.msra.mxu0 %v4993
  %6834 = vmatpush.bf16.msra.mxu0 %v4989
  %6835 = vmatpush.bf16.msra.mxu0 %v4985
  %6836 = vmatpush.bf16.msra.mxu0 %v4981
  %6837 = vmatpush.bf16.msra.mxu0 %v4977
  %6838 = vmatmul.bf16.gmra.mxu0 %v1312
  %v6839 = vpop.f32.mrf.mxu0
  %v6840 = vadd.f32 %v6821, %v6839
  %v6841 = vpop.f32.mrf.mxu0
  %v6842 = vadd.f32 %v6823, %v6841
  %6843 = vmatmul.bf16.gmra.mxu0 %v1344
  %v6844 = vpop.f32.mrf.mxu0
  %v6845 = vadd.f32 %v6826, %v6844
  %v6846 = vpop.f32.mrf.mxu0
  %v6847 = vadd.f32 %v6828, %v6846
  %6848 = vdwg.mxu0
  %6849 = vmatpush.bf16.msra.mxu0 %v5037
  %6850 = vmatpush.bf16.msra.mxu0 %v5033
  %6851 = vmatpush.bf16.msra.mxu0 %v5029
  %6852 = vmatpush.bf16.msra.mxu0 %v5025
  %6853 = vmatpush.bf16.msra.mxu0 %v5021
  %6854 = vmatpush.bf16.msra.mxu0 %v5017
  %6855 = vmatpush.bf16.msra.mxu0 %v5013
  %6856 = vmatpush.bf16.msra.mxu0 %v5009
  %6857 = vmatmul.bf16.gmra.mxu0 %v1313
  %v6858 = vpop.f32.mrf.mxu0
  %v6859 = vadd.f32 %v6840, %v6858
  %v6860 = vpop.f32.mrf.mxu0
  %v6861 = vadd.f32 %v6842, %v6860
  %6862 = vmatmul.bf16.gmra.mxu0 %v1345
  %v6863 = vpop.f32.mrf.mxu0
  %v6864 = vadd.f32 %v6845, %v6863
  %v6865 = vpop.f32.mrf.mxu0
  %v6866 = vadd.f32 %v6847, %v6865
  %6867 = vdwg.mxu0
  %6868 = vmatpush.bf16.msra.mxu0 %v5069
  %6869 = vmatpush.bf16.msra.mxu0 %v5065
  %6870 = vmatpush.bf16.msra.mxu0 %v5061
  %6871 = vmatpush.bf16.msra.mxu0 %v5057
  %6872 = vmatpush.bf16.msra.mxu0 %v5053
  %6873 = vmatpush.bf16.msra.mxu0 %v5049
  %6874 = vmatpush.bf16.msra.mxu0 %v5045
  %6875 = vmatpush.bf16.msra.mxu0 %v5041
  %6876 = vmatmul.bf16.gmra.mxu0 %v1314
  %v6877 = vpop.f32.mrf.mxu0
  %v6878 = vadd.f32 %v6859, %v6877
  %v6879 = vpop.f32.mrf.mxu0
  %v6880 = vadd.f32 %v6861, %v6879
  %6881 = vmatmul.bf16.gmra.mxu0 %v1346
  %v6882 = vpop.f32.mrf.mxu0
  %v6883 = vadd.f32 %v6864, %v6882
  %v6884 = vpop.f32.mrf.mxu0
  %v6885 = vadd.f32 %v6866, %v6884
  %6886 = vdwg.mxu0
  %6887 = vmatpush.bf16.msra.mxu0 %v5101
  %6888 = vmatpush.bf16.msra.mxu0 %v5097
  %6889 = vmatpush.bf16.msra.mxu0 %v5093
  %6890 = vmatpush.bf16.msra.mxu0 %v5089
  %6891 = vmatpush.bf16.msra.mxu0 %v5085
  %6892 = vmatpush.bf16.msra.mxu0 %v5081
  %6893 = vmatpush.bf16.msra.mxu0 %v5077
  %6894 = vmatpush.bf16.msra.mxu0 %v5073
  %6895 = vmatmul.bf16.gmra.mxu0 %v1315
  %v6896 = vpop.f32.mrf.mxu0
  %v6897 = vadd.f32 %v6878, %v6896
  %v6898 = vpop.f32.mrf.mxu0
  %v6899 = vadd.f32 %v6880, %v6898
  %6900 = vmatmul.bf16.gmra.mxu0 %v1347
  %v6901 = vpop.f32.mrf.mxu0
  %v6902 = vadd.f32 %v6883, %v6901
  %v6903 = vpop.f32.mrf.mxu0
  %v6904 = vadd.f32 %v6885, %v6903
  %6905 = vdwg.mxu0
  %6906 = vmatpush.bf16.msra.mxu0 %v5133
  %6907 = vmatpush.bf16.msra.mxu0 %v5129
  %6908 = vmatpush.bf16.msra.mxu0 %v5125
  %6909 = vmatpush.bf16.msra.mxu0 %v5121
  %6910 = vmatpush.bf16.msra.mxu0 %v5117
  %6911 = vmatpush.bf16.msra.mxu0 %v5113
  %6912 = vmatpush.bf16.msra.mxu0 %v5109
  %6913 = vmatpush.bf16.msra.mxu0 %v5105
  %6914 = vmatmul.bf16.gmra.mxu0 %v1316
  %v6915 = vpop.f32.mrf.mxu0
  %v6916 = vadd.f32 %v6897, %v6915
  %v6917 = vpop.f32.mrf.mxu0
  %v6918 = vadd.f32 %v6899, %v6917
  %6919 = vmatmul.bf16.gmra.mxu0 %v1348
  %v6920 = vpop.f32.mrf.mxu0
  %v6921 = vadd.f32 %v6902, %v6920
  %v6922 = vpop.f32.mrf.mxu0
  %v6923 = vadd.f32 %v6904, %v6922
  %6924 = vdwg.mxu0
  %6925 = vmatpush.bf16.msra.mxu0 %v5165
  %6926 = vmatpush.bf16.msra.mxu0 %v5161
  %6927 = vmatpush.bf16.msra.mxu0 %v5157
  %6928 = vmatpush.bf16.msra.mxu0 %v5153
  %6929 = vmatpush.bf16.msra.mxu0 %v5149
  %6930 = vmatpush.bf16.msra.mxu0 %v5145
  %6931 = vmatpush.bf16.msra.mxu0 %v5141
  %6932 = vmatpush.bf16.msra.mxu0 %v5137
  %6933 = vmatmul.bf16.gmra.mxu0 %v1317
  %v6934 = vpop.f32.mrf.mxu0
  %v6935 = vadd.f32 %v6916, %v6934
  %v6936 = vpop.f32.mrf.mxu0
  %v6937 = vadd.f32 %v6918, %v6936
  %6938 = vmatmul.bf16.gmra.mxu0 %v1349
  %v6939 = vpop.f32.mrf.mxu0
  %v6940 = vadd.f32 %v6921, %v6939
  %v6941 = vpop.f32.mrf.mxu0
  %v6942 = vadd.f32 %v6923, %v6941
  %6943 = vdwg.mxu0
  %6944 = vmatpush.bf16.msra.mxu0 %v5197
  %6945 = vmatpush.bf16.msra.mxu0 %v5193
  %6946 = vmatpush.bf16.msra.mxu0 %v5189
  %6947 = vmatpush.bf16.msra.mxu0 %v5185
  %6948 = vmatpush.bf16.msra.mxu0 %v5181
  %6949 = vmatpush.bf16.msra.mxu0 %v5177
  %6950 = vmatpush.bf16.msra.mxu0 %v5173
  %6951 = vmatpush.bf16.msra.mxu0 %v5169
  %6952 = vmatmul.bf16.gmra.mxu0 %v1318
  %v6953 = vpop.f32.mrf.mxu0
  %v6954 = vadd.f32 %v6935, %v6953
  %v6955 = vpop.f32.mrf.mxu0
  %v6956 = vadd.f32 %v6937, %v6955
  %6957 = vmatmul.bf16.gmra.mxu0 %v1350
  %v6958 = vpop.f32.mrf.mxu0
  %v6959 = vadd.f32 %v6940, %v6958
  %v6960 = vpop.f32.mrf.mxu0
  %v6961 = vadd.f32 %v6942, %v6960
  %6962 = vdwg.mxu0
  %6963 = vmatpush.bf16.msra.mxu0 %v5229
  %6964 = vmatpush.bf16.msra.mxu0 %v5225
  %6965 = vmatpush.bf16.msra.mxu0 %v5221
  %6966 = vmatpush.bf16.msra.mxu0 %v5217
  %6967 = vmatpush.bf16.msra.mxu0 %v5213
  %6968 = vmatpush.bf16.msra.mxu0 %v5209
  %6969 = vmatpush.bf16.msra.mxu0 %v5205
  %6970 = vmatpush.bf16.msra.mxu0 %v5201
  %6971 = vmatmul.bf16.gmra.mxu0 %v1319
  %v6972 = vpop.f32.mrf.mxu0
  %v6973 = vadd.f32 %v6954, %v6972
  %v6974 = vpop.f32.mrf.mxu0
  %v6975 = vadd.f32 %v6956, %v6974
  %6976 = vmatmul.bf16.gmra.mxu0 %v1351
  %v6977 = vpop.f32.mrf.mxu0
  %v6978 = vadd.f32 %v6959, %v6977
  %v6979 = vpop.f32.mrf.mxu0
  %v6980 = vadd.f32 %v6961, %v6979
  %6981 = vdwg.mxu0
  %6982 = vmatpush.bf16.msra.mxu0 %v5261
  %6983 = vmatpush.bf16.msra.mxu0 %v5257
  %6984 = vmatpush.bf16.msra.mxu0 %v5253
  %6985 = vmatpush.bf16.msra.mxu0 %v5249
  %6986 = vmatpush.bf16.msra.mxu0 %v5245
  %6987 = vmatpush.bf16.msra.mxu0 %v5241
  %6988 = vmatpush.bf16.msra.mxu0 %v5237
  %6989 = vmatpush.bf16.msra.mxu0 %v5233
  %6990 = vmatmul.bf16.gmra.mxu0 %v1320
  %v6991 = vpop.f32.mrf.mxu0
  %v6992 = vadd.f32 %v6973, %v6991
  %v6993 = vpop.f32.mrf.mxu0
  %v6994 = vadd.f32 %v6975, %v6993
  %6995 = vmatmul.bf16.gmra.mxu0 %v1352
  %v6996 = vpop.f32.mrf.mxu0
  %v6997 = vadd.f32 %v6978, %v6996
  %v6998 = vpop.f32.mrf.mxu0
  %v6999 = vadd.f32 %v6980, %v6998
  %7000 = vdwg.mxu0
  %7001 = vmatpush.bf16.msra.mxu0 %v5293
  %7002 = vmatpush.bf16.msra.mxu0 %v5289
  %7003 = vmatpush.bf16.msra.mxu0 %v5285
  %7004 = vmatpush.bf16.msra.mxu0 %v5281
  %7005 = vmatpush.bf16.msra.mxu0 %v5277
  %7006 = vmatpush.bf16.msra.mxu0 %v5273
  %7007 = vmatpush.bf16.msra.mxu0 %v5269
  %7008 = vmatpush.bf16.msra.mxu0 %v5265
  %7009 = vmatmul.bf16.gmra.mxu0 %v1321
  %v7010 = vpop.f32.mrf.mxu0
  %v7011 = vadd.f32 %v6992, %v7010
  %v7012 = vpop.f32.mrf.mxu0
  %v7013 = vadd.f32 %v6994, %v7012
  %7014 = vmatmul.bf16.gmra.mxu0 %v1353
  %v7015 = vpop.f32.mrf.mxu0
  %v7016 = vadd.f32 %v6997, %v7015
  %v7017 = vpop.f32.mrf.mxu0
  %v7018 = vadd.f32 %v6999, %v7017
  %7019 = vdwg.mxu0
  %7020 = vmatpush.bf16.msra.mxu0 %v5325
  %7021 = vmatpush.bf16.msra.mxu0 %v5321
  %7022 = vmatpush.bf16.msra.mxu0 %v5317
  %7023 = vmatpush.bf16.msra.mxu0 %v5313
  %7024 = vmatpush.bf16.msra.mxu0 %v5309
  %7025 = vmatpush.bf16.msra.mxu0 %v5305
  %7026 = vmatpush.bf16.msra.mxu0 %v5301
  %7027 = vmatpush.bf16.msra.mxu0 %v5297
  %7028 = vmatmul.bf16.gmra.mxu0 %v1322
  %v7029 = vpop.f32.mrf.mxu0
  %v7030 = vadd.f32 %v7011, %v7029
  %v7031 = vpop.f32.mrf.mxu0
  %v7032 = vadd.f32 %v7013, %v7031
  %7033 = vmatmul.bf16.gmra.mxu0 %v1354
  %v7034 = vpop.f32.mrf.mxu0
  %v7035 = vadd.f32 %v7016, %v7034
  %v7036 = vpop.f32.mrf.mxu0
  %v7037 = vadd.f32 %v7018, %v7036
  %7038 = vdwg.mxu0
  %7039 = vmatpush.bf16.msra.mxu0 %v5357
  %7040 = vmatpush.bf16.msra.mxu0 %v5353
  %7041 = vmatpush.bf16.msra.mxu0 %v5349
  %7042 = vmatpush.bf16.msra.mxu0 %v5345
  %7043 = vmatpush.bf16.msra.mxu0 %v5341
  %7044 = vmatpush.bf16.msra.mxu0 %v5337
  %7045 = vmatpush.bf16.msra.mxu0 %v5333
  %7046 = vmatpush.bf16.msra.mxu0 %v5329
  %7047 = vmatmul.bf16.gmra.mxu0 %v1323
  %v7048 = vpop.f32.mrf.mxu0
  %v7049 = vadd.f32 %v7030, %v7048
  %v7050 = vpop.f32.mrf.mxu0
  %v7051 = vadd.f32 %v7032, %v7050
  %7052 = vmatmul.bf16.gmra.mxu0 %v1355
  %v7053 = vpop.f32.mrf.mxu0
  %v7054 = vadd.f32 %v7035, %v7053
  %v7055 = vpop.f32.mrf.mxu0
  %v7056 = vadd.f32 %v7037, %v7055
  %7057 = vdwg.mxu0
  %7058 = vmatpush.bf16.msra.mxu0 %v5389
  %7059 = vmatpush.bf16.msra.mxu0 %v5385
  %7060 = vmatpush.bf16.msra.mxu0 %v5381
  %7061 = vmatpush.bf16.msra.mxu0 %v5377
  %7062 = vmatpush.bf16.msra.mxu0 %v5373
  %7063 = vmatpush.bf16.msra.mxu0 %v5369
  %7064 = vmatpush.bf16.msra.mxu0 %v5365
  %7065 = vmatpush.bf16.msra.mxu0 %v5361
  %7066 = vmatmul.bf16.gmra.mxu0 %v1324
  %v7067 = vpop.f32.mrf.mxu0
  %v7068 = vadd.f32 %v7049, %v7067
  %v7069 = vpop.f32.mrf.mxu0
  %v7070 = vadd.f32 %v7051, %v7069
  %7071 = vmatmul.bf16.gmra.mxu0 %v1356
  %v7072 = vpop.f32.mrf.mxu0
  %v7073 = vadd.f32 %v7054, %v7072
  %v7074 = vpop.f32.mrf.mxu0
  %v7075 = vadd.f32 %v7056, %v7074
  %7076 = vdwg.mxu0
  %7077 = vmatpush.bf16.msra.mxu0 %v5421
  %7078 = vmatpush.bf16.msra.mxu0 %v5417
  %7079 = vmatpush.bf16.msra.mxu0 %v5413
  %7080 = vmatpush.bf16.msra.mxu0 %v5409
  %7081 = vmatpush.bf16.msra.mxu0 %v5405
  %7082 = vmatpush.bf16.msra.mxu0 %v5401
  %7083 = vmatpush.bf16.msra.mxu0 %v5397
  %7084 = vmatpush.bf16.msra.mxu0 %v5393
  %7085 = vmatmul.bf16.gmra.mxu0 %v1325
  %v7086 = vpop.f32.mrf.mxu0
  %v7087 = vadd.f32 %v7068, %v7086
  %v7088 = vpop.f32.mrf.mxu0
  %v7089 = vadd.f32 %v7070, %v7088
  %7090 = vmatmul.bf16.gmra.mxu0 %v1357
  %v7091 = vpop.f32.mrf.mxu0
  %v7092 = vadd.f32 %v7073, %v7091
  %v7093 = vpop.f32.mrf.mxu0
  %v7094 = vadd.f32 %v7075, %v7093
  %7095 = vdwg.mxu0
  %7096 = vmatpush.bf16.msra.mxu0 %v5453
  %7097 = vmatpush.bf16.msra.mxu0 %v5449
  %7098 = vmatpush.bf16.msra.mxu0 %v5445
  %7099 = vmatpush.bf16.msra.mxu0 %v5441
  %7100 = vmatpush.bf16.msra.mxu0 %v5437
  %7101 = vmatpush.bf16.msra.mxu0 %v5433
  %7102 = vmatpush.bf16.msra.mxu0 %v5429
  %7103 = vmatpush.bf16.msra.mxu0 %v5425
  %7104 = vmatmul.bf16.gmra.mxu0 %v1326
  %v7105 = vpop.f32.mrf.mxu0
  %v7106 = vadd.f32 %v7087, %v7105
  %v7107 = vpop.f32.mrf.mxu0
  %v7108 = vadd.f32 %v7089, %v7107
  %7109 = vmatmul.bf16.gmra.mxu0 %v1358
  %v7110 = vpop.f32.mrf.mxu0
  %v7111 = vadd.f32 %v7092, %v7110
  %v7112 = vpop.f32.mrf.mxu0
  %v7113 = vadd.f32 %v7094, %v7112
  %7114 = vdwg.mxu0
  %7115 = vmatpush.bf16.msra.mxu0 %v5485
  %7116 = vmatpush.bf16.msra.mxu0 %v5481
  %7117 = vmatpush.bf16.msra.mxu0 %v5477
  %7118 = vmatpush.bf16.msra.mxu0 %v5473
  %7119 = vmatpush.bf16.msra.mxu0 %v5469
  %7120 = vmatpush.bf16.msra.mxu0 %v5465
  %7121 = vmatpush.bf16.msra.mxu0 %v5461
  %7122 = vmatpush.bf16.msra.mxu0 %v5457
  %7123 = vmatmul.bf16.gmra.mxu0 %v1327
  %v7124 = vpop.f32.mrf.mxu0
  %v7125 = vadd.f32 %v7106, %v7124
  %v7126 = vpop.f32.mrf.mxu0
  %v7127 = vadd.f32 %v7108, %v7126
  %7128 = vmatmul.bf16.gmra.mxu0 %v1359
  %v7129 = vpop.f32.mrf.mxu0
  %v7130 = vadd.f32 %v7111, %v7129
  %v7131 = vpop.f32.mrf.mxu0
  %v7132 = vadd.f32 %v7113, %v7131
  %7133 = vdwg.mxu0
  %7134 = vmatpush.bf16.msra.mxu0 %v5517
  %7135 = vmatpush.bf16.msra.mxu0 %v5513
  %7136 = vmatpush.bf16.msra.mxu0 %v5509
  %7137 = vmatpush.bf16.msra.mxu0 %v5505
  %7138 = vmatpush.bf16.msra.mxu0 %v5501
  %7139 = vmatpush.bf16.msra.mxu0 %v5497
  %7140 = vmatpush.bf16.msra.mxu0 %v5493
  %7141 = vmatpush.bf16.msra.mxu0 %v5489
  %7142 = vmatmul.bf16.gmra.mxu0 %v1328
  %v7143 = vpop.f32.mrf.mxu0
  %v7144 = vadd.f32 %v7125, %v7143
  %v7145 = vpop.f32.mrf.mxu0
  %v7146 = vadd.f32 %v7127, %v7145
  %7147 = vmatmul.bf16.gmra.mxu0 %v1360
  %v7148 = vpop.f32.mrf.mxu0
  %v7149 = vadd.f32 %v7130, %v7148
  %v7150 = vpop.f32.mrf.mxu0
  %v7151 = vadd.f32 %v7132, %v7150
  %7152 = vdwg.mxu0
  %7153 = vmatpush.bf16.msra.mxu0 %v4526
  %7154 = vmatpush.bf16.msra.mxu0 %v4522
  %7155 = vmatpush.bf16.msra.mxu0 %v4518
  %7156 = vmatpush.bf16.msra.mxu0 %v4514
  %7157 = vmatpush.bf16.msra.mxu0 %v4510
  %7158 = vmatpush.bf16.msra.mxu0 %v4506
  %7159 = vmatpush.bf16.msra.mxu0 %v4502
  %7160 = vmatpush.bf16.msra.mxu0 %v4498
  %7161 = vmatmul.bf16.gmra.mxu0 %v1297
  %v7162 = vpop.f32.mrf.mxu0
  %v7163 = vadd.f32 0.0, %v7162
  %v7164 = vpop.f32.mrf.mxu0
  %v7165 = vadd.f32 0.0, %v7164
  %7166 = vmatmul.bf16.gmra.mxu0 %v1329
  %v7167 = vpop.f32.mrf.mxu0
  %v7168 = vadd.f32 0.0, %v7167
  %v7169 = vpop.f32.mrf.mxu0
  %v7170 = vadd.f32 0.0, %v7169
  %7171 = vdwg.mxu0
  %7172 = vmatpush.bf16.msra.mxu0 %v4558
  %7173 = vmatpush.bf16.msra.mxu0 %v4554
  %7174 = vmatpush.bf16.msra.mxu0 %v4550
  %7175 = vmatpush.bf16.msra.mxu0 %v4546
  %7176 = vmatpush.bf16.msra.mxu0 %v4542
  %7177 = vmatpush.bf16.msra.mxu0 %v4538
  %7178 = vmatpush.bf16.msra.mxu0 %v4534
  %7179 = vmatpush.bf16.msra.mxu0 %v4530
  %7180 = vmatmul.bf16.gmra.mxu0 %v1298
  %v7181 = vpop.f32.mrf.mxu0
  %v7182 = vadd.f32 %v7163, %v7181
  %v7183 = vpop.f32.mrf.mxu0
  %v7184 = vadd.f32 %v7165, %v7183
  %7185 = vmatmul.bf16.gmra.mxu0 %v1330
  %v7186 = vpop.f32.mrf.mxu0
  %v7187 = vadd.f32 %v7168, %v7186
  %v7188 = vpop.f32.mrf.mxu0
  %v7189 = vadd.f32 %v7170, %v7188
  %7190 = vdwg.mxu0
  %7191 = vmatpush.bf16.msra.mxu0 %v4590
  %7192 = vmatpush.bf16.msra.mxu0 %v4586
  %7193 = vmatpush.bf16.msra.mxu0 %v4582
  %7194 = vmatpush.bf16.msra.mxu0 %v4578
  %7195 = vmatpush.bf16.msra.mxu0 %v4574
  %7196 = vmatpush.bf16.msra.mxu0 %v4570
  %7197 = vmatpush.bf16.msra.mxu0 %v4566
  %7198 = vmatpush.bf16.msra.mxu0 %v4562
  %7199 = vmatmul.bf16.gmra.mxu0 %v1299
  %v7200 = vpop.f32.mrf.mxu0
  %v7201 = vadd.f32 %v7182, %v7200
  %v7202 = vpop.f32.mrf.mxu0
  %v7203 = vadd.f32 %v7184, %v7202
  %7204 = vmatmul.bf16.gmra.mxu0 %v1331
  %v7205 = vpop.f32.mrf.mxu0
  %v7206 = vadd.f32 %v7187, %v7205
  %v7207 = vpop.f32.mrf.mxu0
  %v7208 = vadd.f32 %v7189, %v7207
  %7209 = vdwg.mxu0
  %7210 = vmatpush.bf16.msra.mxu0 %v4622
  %7211 = vmatpush.bf16.msra.mxu0 %v4618
  %7212 = vmatpush.bf16.msra.mxu0 %v4614
  %7213 = vmatpush.bf16.msra.mxu0 %v4610
  %7214 = vmatpush.bf16.msra.mxu0 %v4606
  %7215 = vmatpush.bf16.msra.mxu0 %v4602
  %7216 = vmatpush.bf16.msra.mxu0 %v4598
  %7217 = vmatpush.bf16.msra.mxu0 %v4594
  %7218 = vmatmul.bf16.gmra.mxu0 %v1300
  %v7219 = vpop.f32.mrf.mxu0
  %v7220 = vadd.f32 %v7201, %v7219
  %v7221 = vpop.f32.mrf.mxu0
  %v7222 = vadd.f32 %v7203, %v7221
  %7223 = vmatmul.bf16.gmra.mxu0 %v1332
  %v7224 = vpop.f32.mrf.mxu0
  %v7225 = vadd.f32 %v7206, %v7224
  %v7226 = vpop.f32.mrf.mxu0
  %v7227 = vadd.f32 %v7208, %v7226
  %7228 = vdwg.mxu0
  %7229 = vmatpush.bf16.msra.mxu0 %v4654
  %7230 = vmatpush.bf16.msra.mxu0 %v4650
  %7231 = vmatpush.bf16.msra.mxu0 %v4646
  %7232 = vmatpush.bf16.msra.mxu0 %v4642
  %7233 = vmatpush.bf16.msra.mxu0 %v4638
  %7234 = vmatpush.bf16.msra.mxu0 %v4634
  %7235 = vmatpush.bf16.msra.mxu0 %v4630
  %7236 = vmatpush.bf16.msra.mxu0 %v4626
  %7237 = vmatmul.bf16.gmra.mxu0 %v1301
  %v7238 = vpop.f32.mrf.mxu0
  %v7239 = vadd.f32 %v7220, %v7238
  %v7240 = vpop.f32.mrf.mxu0
  %v7241 = vadd.f32 %v7222, %v7240
  %7242 = vmatmul.bf16.gmra.mxu0 %v1333
  %v7243 = vpop.f32.mrf.mxu0
  %v7244 = vadd.f32 %v7225, %v7243
  %v7245 = vpop.f32.mrf.mxu0
  %v7246 = vadd.f32 %v7227, %v7245
  %7247 = vdwg.mxu0
  %7248 = vmatpush.bf16.msra.mxu0 %v4686
  %7249 = vmatpush.bf16.msra.mxu0 %v4682
  %7250 = vmatpush.bf16.msra.mxu0 %v4678
  %7251 = vmatpush.bf16.msra.mxu0 %v4674
  %7252 = vmatpush.bf16.msra.mxu0 %v4670
  %7253 = vmatpush.bf16.msra.mxu0 %v4666
  %7254 = vmatpush.bf16.msra.mxu0 %v4662
  %7255 = vmatpush.bf16.msra.mxu0 %v4658
  %7256 = vmatmul.bf16.gmra.mxu0 %v1302
  %v7257 = vpop.f32.mrf.mxu0
  %v7258 = vadd.f32 %v7239, %v7257
  %v7259 = vpop.f32.mrf.mxu0
  %v7260 = vadd.f32 %v7241, %v7259
  %7261 = vmatmul.bf16.gmra.mxu0 %v1334
  %v7262 = vpop.f32.mrf.mxu0
  %v7263 = vadd.f32 %v7244, %v7262
  %v7264 = vpop.f32.mrf.mxu0
  %v7265 = vadd.f32 %v7246, %v7264
  %7266 = vdwg.mxu0
  %7267 = vmatpush.bf16.msra.mxu0 %v4718
  %7268 = vmatpush.bf16.msra.mxu0 %v4714
  %7269 = vmatpush.bf16.msra.mxu0 %v4710
  %7270 = vmatpush.bf16.msra.mxu0 %v4706
  %7271 = vmatpush.bf16.msra.mxu0 %v4702
  %7272 = vmatpush.bf16.msra.mxu0 %v4698
  %7273 = vmatpush.bf16.msra.mxu0 %v4694
  %7274 = vmatpush.bf16.msra.mxu0 %v4690
  %7275 = vmatmul.bf16.gmra.mxu0 %v1303
  %v7276 = vpop.f32.mrf.mxu0
  %v7277 = vadd.f32 %v7258, %v7276
  %v7278 = vpop.f32.mrf.mxu0
  %v7279 = vadd.f32 %v7260, %v7278
  %7280 = vmatmul.bf16.gmra.mxu0 %v1335
  %v7281 = vpop.f32.mrf.mxu0
  %v7282 = vadd.f32 %v7263, %v7281
  %v7283 = vpop.f32.mrf.mxu0
  %v7284 = vadd.f32 %v7265, %v7283
  %7285 = vdwg.mxu0
  %7286 = vmatpush.bf16.msra.mxu0 %v4750
  %7287 = vmatpush.bf16.msra.mxu0 %v4746
  %7288 = vmatpush.bf16.msra.mxu0 %v4742
  %7289 = vmatpush.bf16.msra.mxu0 %v4738
  %7290 = vmatpush.bf16.msra.mxu0 %v4734
  %7291 = vmatpush.bf16.msra.mxu0 %v4730
  %7292 = vmatpush.bf16.msra.mxu0 %v4726
  %7293 = vmatpush.bf16.msra.mxu0 %v4722
  %7294 = vmatmul.bf16.gmra.mxu0 %v1304
  %v7295 = vpop.f32.mrf.mxu0
  %v7296 = vadd.f32 %v7277, %v7295
  %v7297 = vpop.f32.mrf.mxu0
  %v7298 = vadd.f32 %v7279, %v7297
  %7299 = vmatmul.bf16.gmra.mxu0 %v1336
  %v7300 = vpop.f32.mrf.mxu0
  %v7301 = vadd.f32 %v7282, %v7300
  %v7302 = vpop.f32.mrf.mxu0
  %v7303 = vadd.f32 %v7284, %v7302
  %7304 = vdwg.mxu0
  %7305 = vmatpush.bf16.msra.mxu0 %v4782
  %7306 = vmatpush.bf16.msra.mxu0 %v4778
  %7307 = vmatpush.bf16.msra.mxu0 %v4774
  %7308 = vmatpush.bf16.msra.mxu0 %v4770
  %7309 = vmatpush.bf16.msra.mxu0 %v4766
  %7310 = vmatpush.bf16.msra.mxu0 %v4762
  %7311 = vmatpush.bf16.msra.mxu0 %v4758
  %7312 = vmatpush.bf16.msra.mxu0 %v4754
  %7313 = vmatmul.bf16.gmra.mxu0 %v1305
  %v7314 = vpop.f32.mrf.mxu0
  %v7315 = vadd.f32 %v7296, %v7314
  %v7316 = vpop.f32.mrf.mxu0
  %v7317 = vadd.f32 %v7298, %v7316
  %7318 = vmatmul.bf16.gmra.mxu0 %v1337
  %v7319 = vpop.f32.mrf.mxu0
  %v7320 = vadd.f32 %v7301, %v7319
  %v7321 = vpop.f32.mrf.mxu0
  %v7322 = vadd.f32 %v7303, %v7321
  %7323 = vdwg.mxu0
  %7324 = vmatpush.bf16.msra.mxu0 %v4814
  %7325 = vmatpush.bf16.msra.mxu0 %v4810
  %7326 = vmatpush.bf16.msra.mxu0 %v4806
  %7327 = vmatpush.bf16.msra.mxu0 %v4802
  %7328 = vmatpush.bf16.msra.mxu0 %v4798
  %7329 = vmatpush.bf16.msra.mxu0 %v4794
  %7330 = vmatpush.bf16.msra.mxu0 %v4790
  %7331 = vmatpush.bf16.msra.mxu0 %v4786
  %7332 = vmatmul.bf16.gmra.mxu0 %v1306
  %v7333 = vpop.f32.mrf.mxu0
  %v7334 = vadd.f32 %v7315, %v7333
  %v7335 = vpop.f32.mrf.mxu0
  %v7336 = vadd.f32 %v7317, %v7335
  %7337 = vmatmul.bf16.gmra.mxu0 %v1338
  %v7338 = vpop.f32.mrf.mxu0
  %v7339 = vadd.f32 %v7320, %v7338
  %v7340 = vpop.f32.mrf.mxu0
  %v7341 = vadd.f32 %v7322, %v7340
  %7342 = vdwg.mxu0
  %7343 = vmatpush.bf16.msra.mxu0 %v4846
  %7344 = vmatpush.bf16.msra.mxu0 %v4842
  %7345 = vmatpush.bf16.msra.mxu0 %v4838
  %7346 = vmatpush.bf16.msra.mxu0 %v4834
  %7347 = vmatpush.bf16.msra.mxu0 %v4830
  %7348 = vmatpush.bf16.msra.mxu0 %v4826
  %7349 = vmatpush.bf16.msra.mxu0 %v4822
  %7350 = vmatpush.bf16.msra.mxu0 %v4818
  %7351 = vmatmul.bf16.gmra.mxu0 %v1307
  %v7352 = vpop.f32.mrf.mxu0
  %v7353 = vadd.f32 %v7334, %v7352
  %v7354 = vpop.f32.mrf.mxu0
  %v7355 = vadd.f32 %v7336, %v7354
  %7356 = vmatmul.bf16.gmra.mxu0 %v1339
  %v7357 = vpop.f32.mrf.mxu0
  %v7358 = vadd.f32 %v7339, %v7357
  %v7359 = vpop.f32.mrf.mxu0
  %v7360 = vadd.f32 %v7341, %v7359
  %7361 = vdwg.mxu0
  %7362 = vmatpush.bf16.msra.mxu0 %v4878
  %7363 = vmatpush.bf16.msra.mxu0 %v4874
  %7364 = vmatpush.bf16.msra.mxu0 %v4870
  %7365 = vmatpush.bf16.msra.mxu0 %v4866
  %7366 = vmatpush.bf16.msra.mxu0 %v4862
  %7367 = vmatpush.bf16.msra.mxu0 %v4858
  %7368 = vmatpush.bf16.msra.mxu0 %v4854
  %7369 = vmatpush.bf16.msra.mxu0 %v4850
  %7370 = vmatmul.bf16.gmra.mxu0 %v1308
  %v7371 = vpop.f32.mrf.mxu0
  %v7372 = vadd.f32 %v7353, %v7371
  %v7373 = vpop.f32.mrf.mxu0
  %v7374 = vadd.f32 %v7355, %v7373
  %7375 = vmatmul.bf16.gmra.mxu0 %v1340
  %v7376 = vpop.f32.mrf.mxu0
  %v7377 = vadd.f32 %v7358, %v7376
  %v7378 = vpop.f32.mrf.mxu0
  %v7379 = vadd.f32 %v7360, %v7378
  %7380 = vdwg.mxu0
  %7381 = vmatpush.bf16.msra.mxu0 %v4910
  %7382 = vmatpush.bf16.msra.mxu0 %v4906
  %7383 = vmatpush.bf16.msra.mxu0 %v4902
  %7384 = vmatpush.bf16.msra.mxu0 %v4898
  %7385 = vmatpush.bf16.msra.mxu0 %v4894
  %7386 = vmatpush.bf16.msra.mxu0 %v4890
  %7387 = vmatpush.bf16.msra.mxu0 %v4886
  %7388 = vmatpush.bf16.msra.mxu0 %v4882
  %7389 = vmatmul.bf16.gmra.mxu0 %v1309
  %v7390 = vpop.f32.mrf.mxu0
  %v7391 = vadd.f32 %v7372, %v7390
  %v7392 = vpop.f32.mrf.mxu0
  %v7393 = vadd.f32 %v7374, %v7392
  %7394 = vmatmul.bf16.gmra.mxu0 %v1341
  %v7395 = vpop.f32.mrf.mxu0
  %v7396 = vadd.f32 %v7377, %v7395
  %v7397 = vpop.f32.mrf.mxu0
  %v7398 = vadd.f32 %v7379, %v7397
  %7399 = vdwg.mxu0
  %7400 = vmatpush.bf16.msra.mxu0 %v4942
  %7401 = vmatpush.bf16.msra.mxu0 %v4938
  %7402 = vmatpush.bf16.msra.mxu0 %v4934
  %7403 = vmatpush.bf16.msra.mxu0 %v4930
  %7404 = vmatpush.bf16.msra.mxu0 %v4926
  %7405 = vmatpush.bf16.msra.mxu0 %v4922
  %7406 = vmatpush.bf16.msra.mxu0 %v4918
  %7407 = vmatpush.bf16.msra.mxu0 %v4914
  %7408 = vmatmul.bf16.gmra.mxu0 %v1310
  %v7409 = vpop.f32.mrf.mxu0
  %v7410 = vadd.f32 %v7391, %v7409
  %v7411 = vpop.f32.mrf.mxu0
  %v7412 = vadd.f32 %v7393, %v7411
  %7413 = vmatmul.bf16.gmra.mxu0 %v1342
  %v7414 = vpop.f32.mrf.mxu0
  %v7415 = vadd.f32 %v7396, %v7414
  %v7416 = vpop.f32.mrf.mxu0
  %v7417 = vadd.f32 %v7398, %v7416
  %7418 = vdwg.mxu0
  %7419 = vmatpush.bf16.msra.mxu0 %v4974
  %7420 = vmatpush.bf16.msra.mxu0 %v4970
  %7421 = vmatpush.bf16.msra.mxu0 %v4966
  %7422 = vmatpush.bf16.msra.mxu0 %v4962
  %7423 = vmatpush.bf16.msra.mxu0 %v4958
  %7424 = vmatpush.bf16.msra.mxu0 %v4954
  %7425 = vmatpush.bf16.msra.mxu0 %v4950
  %7426 = vmatpush.bf16.msra.mxu0 %v4946
  %7427 = vmatmul.bf16.gmra.mxu0 %v1311
  %v7428 = vpop.f32.mrf.mxu0
  %v7429 = vadd.f32 %v7410, %v7428
  %v7430 = vpop.f32.mrf.mxu0
  %v7431 = vadd.f32 %v7412, %v7430
  %7432 = vmatmul.bf16.gmra.mxu0 %v1343
  %v7433 = vpop.f32.mrf.mxu0
  %v7434 = vadd.f32 %v7415, %v7433
  %v7435 = vpop.f32.mrf.mxu0
  %v7436 = vadd.f32 %v7417, %v7435
  %7437 = vdwg.mxu0
  %7438 = vmatpush.bf16.msra.mxu0 %v5006
  %7439 = vmatpush.bf16.msra.mxu0 %v5002
  %7440 = vmatpush.bf16.msra.mxu0 %v4998
  %7441 = vmatpush.bf16.msra.mxu0 %v4994
  %7442 = vmatpush.bf16.msra.mxu0 %v4990
  %7443 = vmatpush.bf16.msra.mxu0 %v4986
  %7444 = vmatpush.bf16.msra.mxu0 %v4982
  %7445 = vmatpush.bf16.msra.mxu0 %v4978
  %7446 = vmatmul.bf16.gmra.mxu0 %v1312
  %v7447 = vpop.f32.mrf.mxu0
  %v7448 = vadd.f32 %v7429, %v7447
  %v7449 = vpop.f32.mrf.mxu0
  %v7450 = vadd.f32 %v7431, %v7449
  %7451 = vmatmul.bf16.gmra.mxu0 %v1344
  %v7452 = vpop.f32.mrf.mxu0
  %v7453 = vadd.f32 %v7434, %v7452
  %v7454 = vpop.f32.mrf.mxu0
  %v7455 = vadd.f32 %v7436, %v7454
  %7456 = vdwg.mxu0
  %7457 = vmatpush.bf16.msra.mxu0 %v5038
  %7458 = vmatpush.bf16.msra.mxu0 %v5034
  %7459 = vmatpush.bf16.msra.mxu0 %v5030
  %7460 = vmatpush.bf16.msra.mxu0 %v5026
  %7461 = vmatpush.bf16.msra.mxu0 %v5022
  %7462 = vmatpush.bf16.msra.mxu0 %v5018
  %7463 = vmatpush.bf16.msra.mxu0 %v5014
  %7464 = vmatpush.bf16.msra.mxu0 %v5010
  %7465 = vmatmul.bf16.gmra.mxu0 %v1313
  %v7466 = vpop.f32.mrf.mxu0
  %v7467 = vadd.f32 %v7448, %v7466
  %v7468 = vpop.f32.mrf.mxu0
  %v7469 = vadd.f32 %v7450, %v7468
  %7470 = vmatmul.bf16.gmra.mxu0 %v1345
  %v7471 = vpop.f32.mrf.mxu0
  %v7472 = vadd.f32 %v7453, %v7471
  %v7473 = vpop.f32.mrf.mxu0
  %v7474 = vadd.f32 %v7455, %v7473
  %7475 = vdwg.mxu0
  %7476 = vmatpush.bf16.msra.mxu0 %v5070
  %7477 = vmatpush.bf16.msra.mxu0 %v5066
  %7478 = vmatpush.bf16.msra.mxu0 %v5062
  %7479 = vmatpush.bf16.msra.mxu0 %v5058
  %7480 = vmatpush.bf16.msra.mxu0 %v5054
  %7481 = vmatpush.bf16.msra.mxu0 %v5050
  %7482 = vmatpush.bf16.msra.mxu0 %v5046
  %7483 = vmatpush.bf16.msra.mxu0 %v5042
  %7484 = vmatmul.bf16.gmra.mxu0 %v1314
  %v7485 = vpop.f32.mrf.mxu0
  %v7486 = vadd.f32 %v7467, %v7485
  %v7487 = vpop.f32.mrf.mxu0
  %v7488 = vadd.f32 %v7469, %v7487
  %7489 = vmatmul.bf16.gmra.mxu0 %v1346
  %v7490 = vpop.f32.mrf.mxu0
  %v7491 = vadd.f32 %v7472, %v7490
  %v7492 = vpop.f32.mrf.mxu0
  %v7493 = vadd.f32 %v7474, %v7492
  %7494 = vdwg.mxu0
  %7495 = vmatpush.bf16.msra.mxu0 %v5102
  %7496 = vmatpush.bf16.msra.mxu0 %v5098
  %7497 = vmatpush.bf16.msra.mxu0 %v5094
  %7498 = vmatpush.bf16.msra.mxu0 %v5090
  %7499 = vmatpush.bf16.msra.mxu0 %v5086
  %7500 = vmatpush.bf16.msra.mxu0 %v5082
  %7501 = vmatpush.bf16.msra.mxu0 %v5078
  %7502 = vmatpush.bf16.msra.mxu0 %v5074
  %7503 = vmatmul.bf16.gmra.mxu0 %v1315
  %v7504 = vpop.f32.mrf.mxu0
  %v7505 = vadd.f32 %v7486, %v7504
  %v7506 = vpop.f32.mrf.mxu0
  %v7507 = vadd.f32 %v7488, %v7506
  %7508 = vmatmul.bf16.gmra.mxu0 %v1347
  %v7509 = vpop.f32.mrf.mxu0
  %v7510 = vadd.f32 %v7491, %v7509
  %v7511 = vpop.f32.mrf.mxu0
  %v7512 = vadd.f32 %v7493, %v7511
  %7513 = vdwg.mxu0
  %7514 = vmatpush.bf16.msra.mxu0 %v5134
  %7515 = vmatpush.bf16.msra.mxu0 %v5130
  %7516 = vmatpush.bf16.msra.mxu0 %v5126
  %7517 = vmatpush.bf16.msra.mxu0 %v5122
  %7518 = vmatpush.bf16.msra.mxu0 %v5118
  %7519 = vmatpush.bf16.msra.mxu0 %v5114
  %7520 = vmatpush.bf16.msra.mxu0 %v5110
  %7521 = vmatpush.bf16.msra.mxu0 %v5106
  %7522 = vmatmul.bf16.gmra.mxu0 %v1316
  %v7523 = vpop.f32.mrf.mxu0
  %v7524 = vadd.f32 %v7505, %v7523
  %v7525 = vpop.f32.mrf.mxu0
  %v7526 = vadd.f32 %v7507, %v7525
  %7527 = vmatmul.bf16.gmra.mxu0 %v1348
  %v7528 = vpop.f32.mrf.mxu0
  %v7529 = vadd.f32 %v7510, %v7528
  %v7530 = vpop.f32.mrf.mxu0
  %v7531 = vadd.f32 %v7512, %v7530
  %7532 = vdwg.mxu0
  %7533 = vmatpush.bf16.msra.mxu0 %v5166
  %7534 = vmatpush.bf16.msra.mxu0 %v5162
  %7535 = vmatpush.bf16.msra.mxu0 %v5158
  %7536 = vmatpush.bf16.msra.mxu0 %v5154
  %7537 = vmatpush.bf16.msra.mxu0 %v5150
  %7538 = vmatpush.bf16.msra.mxu0 %v5146
  %7539 = vmatpush.bf16.msra.mxu0 %v5142
  %7540 = vmatpush.bf16.msra.mxu0 %v5138
  %7541 = vmatmul.bf16.gmra.mxu0 %v1317
  %v7542 = vpop.f32.mrf.mxu0
  %v7543 = vadd.f32 %v7524, %v7542
  %v7544 = vpop.f32.mrf.mxu0
  %v7545 = vadd.f32 %v7526, %v7544
  %7546 = vmatmul.bf16.gmra.mxu0 %v1349
  %v7547 = vpop.f32.mrf.mxu0
  %v7548 = vadd.f32 %v7529, %v7547
  %v7549 = vpop.f32.mrf.mxu0
  %v7550 = vadd.f32 %v7531, %v7549
  %7551 = vdwg.mxu0
  %7552 = vmatpush.bf16.msra.mxu0 %v5198
  %7553 = vmatpush.bf16.msra.mxu0 %v5194
  %7554 = vmatpush.bf16.msra.mxu0 %v5190
  %7555 = vmatpush.bf16.msra.mxu0 %v5186
  %7556 = vmatpush.bf16.msra.mxu0 %v5182
  %7557 = vmatpush.bf16.msra.mxu0 %v5178
  %7558 = vmatpush.bf16.msra.mxu0 %v5174
  %7559 = vmatpush.bf16.msra.mxu0 %v5170
  %7560 = vmatmul.bf16.gmra.mxu0 %v1318
  %v7561 = vpop.f32.mrf.mxu0
  %v7562 = vadd.f32 %v7543, %v7561
  %v7563 = vpop.f32.mrf.mxu0
  %v7564 = vadd.f32 %v7545, %v7563
  %7565 = vmatmul.bf16.gmra.mxu0 %v1350
  %v7566 = vpop.f32.mrf.mxu0
  %v7567 = vadd.f32 %v7548, %v7566
  %v7568 = vpop.f32.mrf.mxu0
  %v7569 = vadd.f32 %v7550, %v7568
  %7570 = vdwg.mxu0
  %7571 = vmatpush.bf16.msra.mxu0 %v5230
  %7572 = vmatpush.bf16.msra.mxu0 %v5226
  %7573 = vmatpush.bf16.msra.mxu0 %v5222
  %7574 = vmatpush.bf16.msra.mxu0 %v5218
  %7575 = vmatpush.bf16.msra.mxu0 %v5214
  %7576 = vmatpush.bf16.msra.mxu0 %v5210
  %7577 = vmatpush.bf16.msra.mxu0 %v5206
  %7578 = vmatpush.bf16.msra.mxu0 %v5202
  %7579 = vmatmul.bf16.gmra.mxu0 %v1319
  %v7580 = vpop.f32.mrf.mxu0
  %v7581 = vadd.f32 %v7562, %v7580
  %v7582 = vpop.f32.mrf.mxu0
  %v7583 = vadd.f32 %v7564, %v7582
  %7584 = vmatmul.bf16.gmra.mxu0 %v1351
  %v7585 = vpop.f32.mrf.mxu0
  %v7586 = vadd.f32 %v7567, %v7585
  %v7587 = vpop.f32.mrf.mxu0
  %v7588 = vadd.f32 %v7569, %v7587
  %7589 = vdwg.mxu0
  %7590 = vmatpush.bf16.msra.mxu0 %v5262
  %7591 = vmatpush.bf16.msra.mxu0 %v5258
  %7592 = vmatpush.bf16.msra.mxu0 %v5254
  %7593 = vmatpush.bf16.msra.mxu0 %v5250
  %7594 = vmatpush.bf16.msra.mxu0 %v5246
  %7595 = vmatpush.bf16.msra.mxu0 %v5242
  %7596 = vmatpush.bf16.msra.mxu0 %v5238
  %7597 = vmatpush.bf16.msra.mxu0 %v5234
  %7598 = vmatmul.bf16.gmra.mxu0 %v1320
  %v7599 = vpop.f32.mrf.mxu0
  %v7600 = vadd.f32 %v7581, %v7599
  %v7601 = vpop.f32.mrf.mxu0
  %v7602 = vadd.f32 %v7583, %v7601
  %7603 = vmatmul.bf16.gmra.mxu0 %v1352
  %v7604 = vpop.f32.mrf.mxu0
  %v7605 = vadd.f32 %v7586, %v7604
  %v7606 = vpop.f32.mrf.mxu0
  %v7607 = vadd.f32 %v7588, %v7606
  %7608 = vdwg.mxu0
  %7609 = vmatpush.bf16.msra.mxu0 %v5294
  %7610 = vmatpush.bf16.msra.mxu0 %v5290
  %7611 = vmatpush.bf16.msra.mxu0 %v5286
  %7612 = vmatpush.bf16.msra.mxu0 %v5282
  %7613 = vmatpush.bf16.msra.mxu0 %v5278
  %7614 = vmatpush.bf16.msra.mxu0 %v5274
  %7615 = vmatpush.bf16.msra.mxu0 %v5270
  %7616 = vmatpush.bf16.msra.mxu0 %v5266
  %7617 = vmatmul.bf16.gmra.mxu0 %v1321
  %v7618 = vpop.f32.mrf.mxu0
  %v7619 = vadd.f32 %v7600, %v7618
  %v7620 = vpop.f32.mrf.mxu0
  %v7621 = vadd.f32 %v7602, %v7620
  %7622 = vmatmul.bf16.gmra.mxu0 %v1353
  %v7623 = vpop.f32.mrf.mxu0
  %v7624 = vadd.f32 %v7605, %v7623
  %v7625 = vpop.f32.mrf.mxu0
  %v7626 = vadd.f32 %v7607, %v7625
  %7627 = vdwg.mxu0
  %7628 = vmatpush.bf16.msra.mxu0 %v5326
  %7629 = vmatpush.bf16.msra.mxu0 %v5322
  %7630 = vmatpush.bf16.msra.mxu0 %v5318
  %7631 = vmatpush.bf16.msra.mxu0 %v5314
  %7632 = vmatpush.bf16.msra.mxu0 %v5310
  %7633 = vmatpush.bf16.msra.mxu0 %v5306
  %7634 = vmatpush.bf16.msra.mxu0 %v5302
  %7635 = vmatpush.bf16.msra.mxu0 %v5298
  %7636 = vmatmul.bf16.gmra.mxu0 %v1322
  %v7637 = vpop.f32.mrf.mxu0
  %v7638 = vadd.f32 %v7619, %v7637
  %v7639 = vpop.f32.mrf.mxu0
  %v7640 = vadd.f32 %v7621, %v7639
  %7641 = vmatmul.bf16.gmra.mxu0 %v1354
  %v7642 = vpop.f32.mrf.mxu0
  %v7643 = vadd.f32 %v7624, %v7642
  %v7644 = vpop.f32.mrf.mxu0
  %v7645 = vadd.f32 %v7626, %v7644
  %7646 = vdwg.mxu0
  %7647 = vmatpush.bf16.msra.mxu0 %v5358
  %7648 = vmatpush.bf16.msra.mxu0 %v5354
  %7649 = vmatpush.bf16.msra.mxu0 %v5350
  %7650 = vmatpush.bf16.msra.mxu0 %v5346
  %7651 = vmatpush.bf16.msra.mxu0 %v5342
  %7652 = vmatpush.bf16.msra.mxu0 %v5338
  %7653 = vmatpush.bf16.msra.mxu0 %v5334
  %7654 = vmatpush.bf16.msra.mxu0 %v5330
  %7655 = vmatmul.bf16.gmra.mxu0 %v1323
  %v7656 = vpop.f32.mrf.mxu0
  %v7657 = vadd.f32 %v7638, %v7656
  %v7658 = vpop.f32.mrf.mxu0
  %v7659 = vadd.f32 %v7640, %v7658
  %7660 = vmatmul.bf16.gmra.mxu0 %v1355
  %v7661 = vpop.f32.mrf.mxu0
  %v7662 = vadd.f32 %v7643, %v7661
  %v7663 = vpop.f32.mrf.mxu0
  %v7664 = vadd.f32 %v7645, %v7663
  %7665 = vdwg.mxu0
  %7666 = vmatpush.bf16.msra.mxu0 %v5390
  %7667 = vmatpush.bf16.msra.mxu0 %v5386
  %7668 = vmatpush.bf16.msra.mxu0 %v5382
  %7669 = vmatpush.bf16.msra.mxu0 %v5378
  %7670 = vmatpush.bf16.msra.mxu0 %v5374
  %7671 = vmatpush.bf16.msra.mxu0 %v5370
  %7672 = vmatpush.bf16.msra.mxu0 %v5366
  %7673 = vmatpush.bf16.msra.mxu0 %v5362
  %7674 = vmatmul.bf16.gmra.mxu0 %v1324
  %v7675 = vpop.f32.mrf.mxu0
  %v7676 = vadd.f32 %v7657, %v7675
  %v7677 = vpop.f32.mrf.mxu0
  %v7678 = vadd.f32 %v7659, %v7677
  %7679 = vmatmul.bf16.gmra.mxu0 %v1356
  %v7680 = vpop.f32.mrf.mxu0
  %v7681 = vadd.f32 %v7662, %v7680
  %v7682 = vpop.f32.mrf.mxu0
  %v7683 = vadd.f32 %v7664, %v7682
  %7684 = vdwg.mxu0
  %7685 = vmatpush.bf16.msra.mxu0 %v5422
  %7686 = vmatpush.bf16.msra.mxu0 %v5418
  %7687 = vmatpush.bf16.msra.mxu0 %v5414
  %7688 = vmatpush.bf16.msra.mxu0 %v5410
  %7689 = vmatpush.bf16.msra.mxu0 %v5406
  %7690 = vmatpush.bf16.msra.mxu0 %v5402
  %7691 = vmatpush.bf16.msra.mxu0 %v5398
  %7692 = vmatpush.bf16.msra.mxu0 %v5394
  %7693 = vmatmul.bf16.gmra.mxu0 %v1325
  %v7694 = vpop.f32.mrf.mxu0
  %v7695 = vadd.f32 %v7676, %v7694
  %v7696 = vpop.f32.mrf.mxu0
  %v7697 = vadd.f32 %v7678, %v7696
  %7698 = vmatmul.bf16.gmra.mxu0 %v1357
  %v7699 = vpop.f32.mrf.mxu0
  %v7700 = vadd.f32 %v7681, %v7699
  %v7701 = vpop.f32.mrf.mxu0
  %v7702 = vadd.f32 %v7683, %v7701
  %7703 = vdwg.mxu0
  %7704 = vmatpush.bf16.msra.mxu0 %v5454
  %7705 = vmatpush.bf16.msra.mxu0 %v5450
  %7706 = vmatpush.bf16.msra.mxu0 %v5446
  %7707 = vmatpush.bf16.msra.mxu0 %v5442
  %7708 = vmatpush.bf16.msra.mxu0 %v5438
  %7709 = vmatpush.bf16.msra.mxu0 %v5434
  %7710 = vmatpush.bf16.msra.mxu0 %v5430
  %7711 = vmatpush.bf16.msra.mxu0 %v5426
  %7712 = vmatmul.bf16.gmra.mxu0 %v1326
  %v7713 = vpop.f32.mrf.mxu0
  %v7714 = vadd.f32 %v7695, %v7713
  %v7715 = vpop.f32.mrf.mxu0
  %v7716 = vadd.f32 %v7697, %v7715
  %7717 = vmatmul.bf16.gmra.mxu0 %v1358
  %v7718 = vpop.f32.mrf.mxu0
  %v7719 = vadd.f32 %v7700, %v7718
  %v7720 = vpop.f32.mrf.mxu0
  %v7721 = vadd.f32 %v7702, %v7720
  %7722 = vdwg.mxu0
  %7723 = vmatpush.bf16.msra.mxu0 %v5486
  %7724 = vmatpush.bf16.msra.mxu0 %v5482
  %7725 = vmatpush.bf16.msra.mxu0 %v5478
  %7726 = vmatpush.bf16.msra.mxu0 %v5474
  %7727 = vmatpush.bf16.msra.mxu0 %v5470
  %7728 = vmatpush.bf16.msra.mxu0 %v5466
  %7729 = vmatpush.bf16.msra.mxu0 %v5462
  %7730 = vmatpush.bf16.msra.mxu0 %v5458
  %7731 = vmatmul.bf16.gmra.mxu0 %v1327
  %v7732 = vpop.f32.mrf.mxu0
  %v7733 = vadd.f32 %v7714, %v7732
  %v7734 = vpop.f32.mrf.mxu0
  %v7735 = vadd.f32 %v7716, %v7734
  %7736 = vmatmul.bf16.gmra.mxu0 %v1359
  %v7737 = vpop.f32.mrf.mxu0
  %v7738 = vadd.f32 %v7719, %v7737
  %v7739 = vpop.f32.mrf.mxu0
  %v7740 = vadd.f32 %v7721, %v7739
  %7741 = vdwg.mxu0
  %7742 = vmatpush.bf16.msra.mxu0 %v5518
  %7743 = vmatpush.bf16.msra.mxu0 %v5514
  %7744 = vmatpush.bf16.msra.mxu0 %v5510
  %7745 = vmatpush.bf16.msra.mxu0 %v5506
  %7746 = vmatpush.bf16.msra.mxu0 %v5502
  %7747 = vmatpush.bf16.msra.mxu0 %v5498
  %7748 = vmatpush.bf16.msra.mxu0 %v5494
  %7749 = vmatpush.bf16.msra.mxu0 %v5490
  %7750 = vmatmul.bf16.gmra.mxu0 %v1328
  %v7751 = vpop.f32.mrf.mxu0
  %v7752 = vadd.f32 %v7733, %v7751
  %v7753 = vpop.f32.mrf.mxu0
  %v7754 = vadd.f32 %v7735, %v7753
  %7755 = vmatmul.bf16.gmra.mxu0 %v1360
  %v7756 = vpop.f32.mrf.mxu0
  %v7757 = vadd.f32 %v7738, %v7756
  %v7758 = vpop.f32.mrf.mxu0
  %v7759 = vadd.f32 %v7740, %v7758
  %7760 = vdwg.mxu0
  %7761 = vmatpush.bf16.msra.mxu0 %v4527
  %7762 = vmatpush.bf16.msra.mxu0 %v4523
  %7763 = vmatpush.bf16.msra.mxu0 %v4519
  %7764 = vmatpush.bf16.msra.mxu0 %v4515
  %7765 = vmatpush.bf16.msra.mxu0 %v4511
  %7766 = vmatpush.bf16.msra.mxu0 %v4507
  %7767 = vmatpush.bf16.msra.mxu0 %v4503
  %7768 = vmatpush.bf16.msra.mxu0 %v4499
  %7769 = vmatmul.bf16.gmra.mxu0 %v1297
  %v7770 = vpop.f32.mrf.mxu0
  %v7771 = vadd.f32 0.0, %v7770
  %v7772 = vpop.f32.mrf.mxu0
  %v7773 = vadd.f32 0.0, %v7772
  %7774 = vmatmul.bf16.gmra.mxu0 %v1329
  %v7775 = vpop.f32.mrf.mxu0
  %v7776 = vadd.f32 0.0, %v7775
  %v7777 = vpop.f32.mrf.mxu0
  %v7778 = vadd.f32 0.0, %v7777
  %7779 = vdwg.mxu0
  %7780 = vmatpush.bf16.msra.mxu0 %v4559
  %7781 = vmatpush.bf16.msra.mxu0 %v4555
  %7782 = vmatpush.bf16.msra.mxu0 %v4551
  %7783 = vmatpush.bf16.msra.mxu0 %v4547
  %7784 = vmatpush.bf16.msra.mxu0 %v4543
  %7785 = vmatpush.bf16.msra.mxu0 %v4539
  %7786 = vmatpush.bf16.msra.mxu0 %v4535
  %7787 = vmatpush.bf16.msra.mxu0 %v4531
  %7788 = vmatmul.bf16.gmra.mxu0 %v1298
  %v7789 = vpop.f32.mrf.mxu0
  %v7790 = vadd.f32 %v7771, %v7789
  %v7791 = vpop.f32.mrf.mxu0
  %v7792 = vadd.f32 %v7773, %v7791
  %7793 = vmatmul.bf16.gmra.mxu0 %v1330
  %v7794 = vpop.f32.mrf.mxu0
  %v7795 = vadd.f32 %v7776, %v7794
  %v7796 = vpop.f32.mrf.mxu0
  %v7797 = vadd.f32 %v7778, %v7796
  %7798 = vdwg.mxu0
  %7799 = vmatpush.bf16.msra.mxu0 %v4591
  %7800 = vmatpush.bf16.msra.mxu0 %v4587
  %7801 = vmatpush.bf16.msra.mxu0 %v4583
  %7802 = vmatpush.bf16.msra.mxu0 %v4579
  %7803 = vmatpush.bf16.msra.mxu0 %v4575
  %7804 = vmatpush.bf16.msra.mxu0 %v4571
  %7805 = vmatpush.bf16.msra.mxu0 %v4567
  %7806 = vmatpush.bf16.msra.mxu0 %v4563
  %7807 = vmatmul.bf16.gmra.mxu0 %v1299
  %v7808 = vpop.f32.mrf.mxu0
  %v7809 = vadd.f32 %v7790, %v7808
  %v7810 = vpop.f32.mrf.mxu0
  %v7811 = vadd.f32 %v7792, %v7810
  %7812 = vmatmul.bf16.gmra.mxu0 %v1331
  %v7813 = vpop.f32.mrf.mxu0
  %v7814 = vadd.f32 %v7795, %v7813
  %v7815 = vpop.f32.mrf.mxu0
  %v7816 = vadd.f32 %v7797, %v7815
  %7817 = vdwg.mxu0
  %7818 = vmatpush.bf16.msra.mxu0 %v4623
  %7819 = vmatpush.bf16.msra.mxu0 %v4619
  %7820 = vmatpush.bf16.msra.mxu0 %v4615
  %7821 = vmatpush.bf16.msra.mxu0 %v4611
  %7822 = vmatpush.bf16.msra.mxu0 %v4607
  %7823 = vmatpush.bf16.msra.mxu0 %v4603
  %7824 = vmatpush.bf16.msra.mxu0 %v4599
  %7825 = vmatpush.bf16.msra.mxu0 %v4595
  %7826 = vmatmul.bf16.gmra.mxu0 %v1300
  %v7827 = vpop.f32.mrf.mxu0
  %v7828 = vadd.f32 %v7809, %v7827
  %v7829 = vpop.f32.mrf.mxu0
  %v7830 = vadd.f32 %v7811, %v7829
  %7831 = vmatmul.bf16.gmra.mxu0 %v1332
  %v7832 = vpop.f32.mrf.mxu0
  %v7833 = vadd.f32 %v7814, %v7832
  %v7834 = vpop.f32.mrf.mxu0
  %v7835 = vadd.f32 %v7816, %v7834
  %7836 = vdwg.mxu0
  %7837 = vmatpush.bf16.msra.mxu0 %v4655
  %7838 = vmatpush.bf16.msra.mxu0 %v4651
  %7839 = vmatpush.bf16.msra.mxu0 %v4647
  %7840 = vmatpush.bf16.msra.mxu0 %v4643
  %7841 = vmatpush.bf16.msra.mxu0 %v4639
  %7842 = vmatpush.bf16.msra.mxu0 %v4635
  %7843 = vmatpush.bf16.msra.mxu0 %v4631
  %7844 = vmatpush.bf16.msra.mxu0 %v4627
  %7845 = vmatmul.bf16.gmra.mxu0 %v1301
  %v7846 = vpop.f32.mrf.mxu0
  %v7847 = vadd.f32 %v7828, %v7846
  %v7848 = vpop.f32.mrf.mxu0
  %v7849 = vadd.f32 %v7830, %v7848
  %7850 = vmatmul.bf16.gmra.mxu0 %v1333
  %v7851 = vpop.f32.mrf.mxu0
  %v7852 = vadd.f32 %v7833, %v7851
  %v7853 = vpop.f32.mrf.mxu0
  %v7854 = vadd.f32 %v7835, %v7853
  %7855 = vdwg.mxu0
  %7856 = vmatpush.bf16.msra.mxu0 %v4687
  %7857 = vmatpush.bf16.msra.mxu0 %v4683
  %7858 = vmatpush.bf16.msra.mxu0 %v4679
  %7859 = vmatpush.bf16.msra.mxu0 %v4675
  %7860 = vmatpush.bf16.msra.mxu0 %v4671
  %7861 = vmatpush.bf16.msra.mxu0 %v4667
  %7862 = vmatpush.bf16.msra.mxu0 %v4663
  %7863 = vmatpush.bf16.msra.mxu0 %v4659
  %7864 = vmatmul.bf16.gmra.mxu0 %v1302
  %v7865 = vpop.f32.mrf.mxu0
  %v7866 = vadd.f32 %v7847, %v7865
  %v7867 = vpop.f32.mrf.mxu0
  %v7868 = vadd.f32 %v7849, %v7867
  %7869 = vmatmul.bf16.gmra.mxu0 %v1334
  %v7870 = vpop.f32.mrf.mxu0
  %v7871 = vadd.f32 %v7852, %v7870
  %v7872 = vpop.f32.mrf.mxu0
  %v7873 = vadd.f32 %v7854, %v7872
  %7874 = vdwg.mxu0
  %7875 = vmatpush.bf16.msra.mxu0 %v4719
  %7876 = vmatpush.bf16.msra.mxu0 %v4715
  %7877 = vmatpush.bf16.msra.mxu0 %v4711
  %7878 = vmatpush.bf16.msra.mxu0 %v4707
  %7879 = vmatpush.bf16.msra.mxu0 %v4703
  %7880 = vmatpush.bf16.msra.mxu0 %v4699
  %7881 = vmatpush.bf16.msra.mxu0 %v4695
  %7882 = vmatpush.bf16.msra.mxu0 %v4691
  %7883 = vmatmul.bf16.gmra.mxu0 %v1303
  %v7884 = vpop.f32.mrf.mxu0
  %v7885 = vadd.f32 %v7866, %v7884
  %v7886 = vpop.f32.mrf.mxu0
  %v7887 = vadd.f32 %v7868, %v7886
  %7888 = vmatmul.bf16.gmra.mxu0 %v1335
  %v7889 = vpop.f32.mrf.mxu0
  %v7890 = vadd.f32 %v7871, %v7889
  %v7891 = vpop.f32.mrf.mxu0
  %v7892 = vadd.f32 %v7873, %v7891
  %7893 = vdwg.mxu0
  %7894 = vmatpush.bf16.msra.mxu0 %v4751
  %7895 = vmatpush.bf16.msra.mxu0 %v4747
  %7896 = vmatpush.bf16.msra.mxu0 %v4743
  %7897 = vmatpush.bf16.msra.mxu0 %v4739
  %7898 = vmatpush.bf16.msra.mxu0 %v4735
  %7899 = vmatpush.bf16.msra.mxu0 %v4731
  %7900 = vmatpush.bf16.msra.mxu0 %v4727
  %7901 = vmatpush.bf16.msra.mxu0 %v4723
  %7902 = vmatmul.bf16.gmra.mxu0 %v1304
  %v7903 = vpop.f32.mrf.mxu0
  %v7904 = vadd.f32 %v7885, %v7903
  %v7905 = vpop.f32.mrf.mxu0
  %v7906 = vadd.f32 %v7887, %v7905
  %7907 = vmatmul.bf16.gmra.mxu0 %v1336
  %v7908 = vpop.f32.mrf.mxu0
  %v7909 = vadd.f32 %v7890, %v7908
  %v7910 = vpop.f32.mrf.mxu0
  %v7911 = vadd.f32 %v7892, %v7910
  %7912 = vdwg.mxu0
  %7913 = vmatpush.bf16.msra.mxu0 %v4783
  %7914 = vmatpush.bf16.msra.mxu0 %v4779
  %7915 = vmatpush.bf16.msra.mxu0 %v4775
  %7916 = vmatpush.bf16.msra.mxu0 %v4771
  %7917 = vmatpush.bf16.msra.mxu0 %v4767
  %7918 = vmatpush.bf16.msra.mxu0 %v4763
  %7919 = vmatpush.bf16.msra.mxu0 %v4759
  %7920 = vmatpush.bf16.msra.mxu0 %v4755
  %7921 = vmatmul.bf16.gmra.mxu0 %v1305
  %v7922 = vpop.f32.mrf.mxu0
  %v7923 = vadd.f32 %v7904, %v7922
  %v7924 = vpop.f32.mrf.mxu0
  %v7925 = vadd.f32 %v7906, %v7924
  %7926 = vmatmul.bf16.gmra.mxu0 %v1337
  %v7927 = vpop.f32.mrf.mxu0
  %v7928 = vadd.f32 %v7909, %v7927
  %v7929 = vpop.f32.mrf.mxu0
  %v7930 = vadd.f32 %v7911, %v7929
  %7931 = vdwg.mxu0
  %7932 = vmatpush.bf16.msra.mxu0 %v4815
  %7933 = vmatpush.bf16.msra.mxu0 %v4811
  %7934 = vmatpush.bf16.msra.mxu0 %v4807
  %7935 = vmatpush.bf16.msra.mxu0 %v4803
  %7936 = vmatpush.bf16.msra.mxu0 %v4799
  %7937 = vmatpush.bf16.msra.mxu0 %v4795
  %7938 = vmatpush.bf16.msra.mxu0 %v4791
  %7939 = vmatpush.bf16.msra.mxu0 %v4787
  %7940 = vmatmul.bf16.gmra.mxu0 %v1306
  %v7941 = vpop.f32.mrf.mxu0
  %v7942 = vadd.f32 %v7923, %v7941
  %v7943 = vpop.f32.mrf.mxu0
  %v7944 = vadd.f32 %v7925, %v7943
  %7945 = vmatmul.bf16.gmra.mxu0 %v1338
  %v7946 = vpop.f32.mrf.mxu0
  %v7947 = vadd.f32 %v7928, %v7946
  %v7948 = vpop.f32.mrf.mxu0
  %v7949 = vadd.f32 %v7930, %v7948
  %7950 = vdwg.mxu0
  %7951 = vmatpush.bf16.msra.mxu0 %v4847
  %7952 = vmatpush.bf16.msra.mxu0 %v4843
  %7953 = vmatpush.bf16.msra.mxu0 %v4839
  %7954 = vmatpush.bf16.msra.mxu0 %v4835
  %7955 = vmatpush.bf16.msra.mxu0 %v4831
  %7956 = vmatpush.bf16.msra.mxu0 %v4827
  %7957 = vmatpush.bf16.msra.mxu0 %v4823
  %7958 = vmatpush.bf16.msra.mxu0 %v4819
  %7959 = vmatmul.bf16.gmra.mxu0 %v1307
  %v7960 = vpop.f32.mrf.mxu0
  %v7961 = vadd.f32 %v7942, %v7960
  %v7962 = vpop.f32.mrf.mxu0
  %v7963 = vadd.f32 %v7944, %v7962
  %7964 = vmatmul.bf16.gmra.mxu0 %v1339
  %v7965 = vpop.f32.mrf.mxu0
  %v7966 = vadd.f32 %v7947, %v7965
  %v7967 = vpop.f32.mrf.mxu0
  %v7968 = vadd.f32 %v7949, %v7967
  %7969 = vdwg.mxu0
  %7970 = vmatpush.bf16.msra.mxu0 %v4879
  %7971 = vmatpush.bf16.msra.mxu0 %v4875
  %7972 = vmatpush.bf16.msra.mxu0 %v4871
  %7973 = vmatpush.bf16.msra.mxu0 %v4867
  %7974 = vmatpush.bf16.msra.mxu0 %v4863
  %7975 = vmatpush.bf16.msra.mxu0 %v4859
  %7976 = vmatpush.bf16.msra.mxu0 %v4855
  %7977 = vmatpush.bf16.msra.mxu0 %v4851
  %7978 = vmatmul.bf16.gmra.mxu0 %v1308
  %v7979 = vpop.f32.mrf.mxu0
  %v7980 = vadd.f32 %v7961, %v7979
  %v7981 = vpop.f32.mrf.mxu0
  %v7982 = vadd.f32 %v7963, %v7981
  %7983 = vmatmul.bf16.gmra.mxu0 %v1340
  %v7984 = vpop.f32.mrf.mxu0
  %v7985 = vadd.f32 %v7966, %v7984
  %v7986 = vpop.f32.mrf.mxu0
  %v7987 = vadd.f32 %v7968, %v7986
  %7988 = vdwg.mxu0
  %7989 = vmatpush.bf16.msra.mxu0 %v4911
  %7990 = vmatpush.bf16.msra.mxu0 %v4907
  %7991 = vmatpush.bf16.msra.mxu0 %v4903
  %7992 = vmatpush.bf16.msra.mxu0 %v4899
  %7993 = vmatpush.bf16.msra.mxu0 %v4895
  %7994 = vmatpush.bf16.msra.mxu0 %v4891
  %7995 = vmatpush.bf16.msra.mxu0 %v4887
  %7996 = vmatpush.bf16.msra.mxu0 %v4883
  %7997 = vmatmul.bf16.gmra.mxu0 %v1309
  %v7998 = vpop.f32.mrf.mxu0
  %v7999 = vadd.f32 %v7980, %v7998
  %v8000 = vpop.f32.mrf.mxu0
  %v8001 = vadd.f32 %v7982, %v8000
  %8002 = vmatmul.bf16.gmra.mxu0 %v1341
  %v8003 = vpop.f32.mrf.mxu0
  %v8004 = vadd.f32 %v7985, %v8003
  %v8005 = vpop.f32.mrf.mxu0
  %v8006 = vadd.f32 %v7987, %v8005
  %8007 = vdwg.mxu0
  %8008 = vmatpush.bf16.msra.mxu0 %v4943
  %8009 = vmatpush.bf16.msra.mxu0 %v4939
  %8010 = vmatpush.bf16.msra.mxu0 %v4935
  %8011 = vmatpush.bf16.msra.mxu0 %v4931
  %8012 = vmatpush.bf16.msra.mxu0 %v4927
  %8013 = vmatpush.bf16.msra.mxu0 %v4923
  %8014 = vmatpush.bf16.msra.mxu0 %v4919
  %8015 = vmatpush.bf16.msra.mxu0 %v4915
  %8016 = vmatmul.bf16.gmra.mxu0 %v1310
  %v8017 = vpop.f32.mrf.mxu0
  %v8018 = vadd.f32 %v7999, %v8017
  %v8019 = vpop.f32.mrf.mxu0
  %v8020 = vadd.f32 %v8001, %v8019
  %8021 = vmatmul.bf16.gmra.mxu0 %v1342
  %v8022 = vpop.f32.mrf.mxu0
  %v8023 = vadd.f32 %v8004, %v8022
  %v8024 = vpop.f32.mrf.mxu0
  %v8025 = vadd.f32 %v8006, %v8024
  %8026 = vdwg.mxu0
  %8027 = vmatpush.bf16.msra.mxu0 %v4975
  %8028 = vmatpush.bf16.msra.mxu0 %v4971
  %8029 = vmatpush.bf16.msra.mxu0 %v4967
  %8030 = vmatpush.bf16.msra.mxu0 %v4963
  %8031 = vmatpush.bf16.msra.mxu0 %v4959
  %8032 = vmatpush.bf16.msra.mxu0 %v4955
  %8033 = vmatpush.bf16.msra.mxu0 %v4951
  %8034 = vmatpush.bf16.msra.mxu0 %v4947
  %8035 = vmatmul.bf16.gmra.mxu0 %v1311
  %v8036 = vpop.f32.mrf.mxu0
  %v8037 = vadd.f32 %v8018, %v8036
  %v8038 = vpop.f32.mrf.mxu0
  %v8039 = vadd.f32 %v8020, %v8038
  %8040 = vmatmul.bf16.gmra.mxu0 %v1343
  %v8041 = vpop.f32.mrf.mxu0
  %v8042 = vadd.f32 %v8023, %v8041
  %v8043 = vpop.f32.mrf.mxu0
  %v8044 = vadd.f32 %v8025, %v8043
  %8045 = vdwg.mxu0
  %8046 = vmatpush.bf16.msra.mxu0 %v5007
  %8047 = vmatpush.bf16.msra.mxu0 %v5003
  %8048 = vmatpush.bf16.msra.mxu0 %v4999
  %8049 = vmatpush.bf16.msra.mxu0 %v4995
  %8050 = vmatpush.bf16.msra.mxu0 %v4991
  %8051 = vmatpush.bf16.msra.mxu0 %v4987
  %8052 = vmatpush.bf16.msra.mxu0 %v4983
  %8053 = vmatpush.bf16.msra.mxu0 %v4979
  %8054 = vmatmul.bf16.gmra.mxu0 %v1312
  %v8055 = vpop.f32.mrf.mxu0
  %v8056 = vadd.f32 %v8037, %v8055
  %v8057 = vpop.f32.mrf.mxu0
  %v8058 = vadd.f32 %v8039, %v8057
  %8059 = vmatmul.bf16.gmra.mxu0 %v1344
  %v8060 = vpop.f32.mrf.mxu0
  %v8061 = vadd.f32 %v8042, %v8060
  %v8062 = vpop.f32.mrf.mxu0
  %v8063 = vadd.f32 %v8044, %v8062
  %8064 = vdwg.mxu0
  %8065 = vmatpush.bf16.msra.mxu0 %v5039
  %8066 = vmatpush.bf16.msra.mxu0 %v5035
  %8067 = vmatpush.bf16.msra.mxu0 %v5031
  %8068 = vmatpush.bf16.msra.mxu0 %v5027
  %8069 = vmatpush.bf16.msra.mxu0 %v5023
  %8070 = vmatpush.bf16.msra.mxu0 %v5019
  %8071 = vmatpush.bf16.msra.mxu0 %v5015
  %8072 = vmatpush.bf16.msra.mxu0 %v5011
  %8073 = vmatmul.bf16.gmra.mxu0 %v1313
  %v8074 = vpop.f32.mrf.mxu0
  %v8075 = vadd.f32 %v8056, %v8074
  %v8076 = vpop.f32.mrf.mxu0
  %v8077 = vadd.f32 %v8058, %v8076
  %8078 = vmatmul.bf16.gmra.mxu0 %v1345
  %v8079 = vpop.f32.mrf.mxu0
  %v8080 = vadd.f32 %v8061, %v8079
  %v8081 = vpop.f32.mrf.mxu0
  %v8082 = vadd.f32 %v8063, %v8081
  %8083 = vdwg.mxu0
  %8084 = vmatpush.bf16.msra.mxu0 %v5071
  %8085 = vmatpush.bf16.msra.mxu0 %v5067
  %8086 = vmatpush.bf16.msra.mxu0 %v5063
  %8087 = vmatpush.bf16.msra.mxu0 %v5059
  %8088 = vmatpush.bf16.msra.mxu0 %v5055
  %8089 = vmatpush.bf16.msra.mxu0 %v5051
  %8090 = vmatpush.bf16.msra.mxu0 %v5047
  %8091 = vmatpush.bf16.msra.mxu0 %v5043
  %8092 = vmatmul.bf16.gmra.mxu0 %v1314
  %v8093 = vpop.f32.mrf.mxu0
  %v8094 = vadd.f32 %v8075, %v8093
  %v8095 = vpop.f32.mrf.mxu0
  %v8096 = vadd.f32 %v8077, %v8095
  %8097 = vmatmul.bf16.gmra.mxu0 %v1346
  %v8098 = vpop.f32.mrf.mxu0
  %v8099 = vadd.f32 %v8080, %v8098
  %v8100 = vpop.f32.mrf.mxu0
  %v8101 = vadd.f32 %v8082, %v8100
  %8102 = vdwg.mxu0
  %8103 = vmatpush.bf16.msra.mxu0 %v5103
  %8104 = vmatpush.bf16.msra.mxu0 %v5099
  %8105 = vmatpush.bf16.msra.mxu0 %v5095
  %8106 = vmatpush.bf16.msra.mxu0 %v5091
  %8107 = vmatpush.bf16.msra.mxu0 %v5087
  %8108 = vmatpush.bf16.msra.mxu0 %v5083
  %8109 = vmatpush.bf16.msra.mxu0 %v5079
  %8110 = vmatpush.bf16.msra.mxu0 %v5075
  %8111 = vmatmul.bf16.gmra.mxu0 %v1315
  %v8112 = vpop.f32.mrf.mxu0
  %v8113 = vadd.f32 %v8094, %v8112
  %v8114 = vpop.f32.mrf.mxu0
  %v8115 = vadd.f32 %v8096, %v8114
  %8116 = vmatmul.bf16.gmra.mxu0 %v1347
  %v8117 = vpop.f32.mrf.mxu0
  %v8118 = vadd.f32 %v8099, %v8117
  %v8119 = vpop.f32.mrf.mxu0
  %v8120 = vadd.f32 %v8101, %v8119
  %8121 = vdwg.mxu0
  %8122 = vmatpush.bf16.msra.mxu0 %v5135
  %8123 = vmatpush.bf16.msra.mxu0 %v5131
  %8124 = vmatpush.bf16.msra.mxu0 %v5127
  %8125 = vmatpush.bf16.msra.mxu0 %v5123
  %8126 = vmatpush.bf16.msra.mxu0 %v5119
  %8127 = vmatpush.bf16.msra.mxu0 %v5115
  %8128 = vmatpush.bf16.msra.mxu0 %v5111
  %8129 = vmatpush.bf16.msra.mxu0 %v5107
  %8130 = vmatmul.bf16.gmra.mxu0 %v1316
  %v8131 = vpop.f32.mrf.mxu0
  %v8132 = vadd.f32 %v8113, %v8131
  %v8133 = vpop.f32.mrf.mxu0
  %v8134 = vadd.f32 %v8115, %v8133
  %8135 = vmatmul.bf16.gmra.mxu0 %v1348
  %v8136 = vpop.f32.mrf.mxu0
  %v8137 = vadd.f32 %v8118, %v8136
  %v8138 = vpop.f32.mrf.mxu0
  %v8139 = vadd.f32 %v8120, %v8138
  %8140 = vdwg.mxu0
  %8141 = vmatpush.bf16.msra.mxu0 %v5167
  %8142 = vmatpush.bf16.msra.mxu0 %v5163
  %8143 = vmatpush.bf16.msra.mxu0 %v5159
  %8144 = vmatpush.bf16.msra.mxu0 %v5155
  %8145 = vmatpush.bf16.msra.mxu0 %v5151
  %8146 = vmatpush.bf16.msra.mxu0 %v5147
  %8147 = vmatpush.bf16.msra.mxu0 %v5143
  %8148 = vmatpush.bf16.msra.mxu0 %v5139
  %8149 = vmatmul.bf16.gmra.mxu0 %v1317
  %v8150 = vpop.f32.mrf.mxu0
  %v8151 = vadd.f32 %v8132, %v8150
  %v8152 = vpop.f32.mrf.mxu0
  %v8153 = vadd.f32 %v8134, %v8152
  %8154 = vmatmul.bf16.gmra.mxu0 %v1349
  %v8155 = vpop.f32.mrf.mxu0
  %v8156 = vadd.f32 %v8137, %v8155
  %v8157 = vpop.f32.mrf.mxu0
  %v8158 = vadd.f32 %v8139, %v8157
  %8159 = vdwg.mxu0
  %8160 = vmatpush.bf16.msra.mxu0 %v5199
  %8161 = vmatpush.bf16.msra.mxu0 %v5195
  %8162 = vmatpush.bf16.msra.mxu0 %v5191
  %8163 = vmatpush.bf16.msra.mxu0 %v5187
  %8164 = vmatpush.bf16.msra.mxu0 %v5183
  %8165 = vmatpush.bf16.msra.mxu0 %v5179
  %8166 = vmatpush.bf16.msra.mxu0 %v5175
  %8167 = vmatpush.bf16.msra.mxu0 %v5171
  %8168 = vmatmul.bf16.gmra.mxu0 %v1318
  %v8169 = vpop.f32.mrf.mxu0
  %v8170 = vadd.f32 %v8151, %v8169
  %v8171 = vpop.f32.mrf.mxu0
  %v8172 = vadd.f32 %v8153, %v8171
  %8173 = vmatmul.bf16.gmra.mxu0 %v1350
  %v8174 = vpop.f32.mrf.mxu0
  %v8175 = vadd.f32 %v8156, %v8174
  %v8176 = vpop.f32.mrf.mxu0
  %v8177 = vadd.f32 %v8158, %v8176
  %8178 = vdwg.mxu0
  %8179 = vmatpush.bf16.msra.mxu0 %v5231
  %8180 = vmatpush.bf16.msra.mxu0 %v5227
  %8181 = vmatpush.bf16.msra.mxu0 %v5223
  %8182 = vmatpush.bf16.msra.mxu0 %v5219
  %8183 = vmatpush.bf16.msra.mxu0 %v5215
  %8184 = vmatpush.bf16.msra.mxu0 %v5211
  %8185 = vmatpush.bf16.msra.mxu0 %v5207
  %8186 = vmatpush.bf16.msra.mxu0 %v5203
  %8187 = vmatmul.bf16.gmra.mxu0 %v1319
  %v8188 = vpop.f32.mrf.mxu0
  %v8189 = vadd.f32 %v8170, %v8188
  %v8190 = vpop.f32.mrf.mxu0
  %v8191 = vadd.f32 %v8172, %v8190
  %8192 = vmatmul.bf16.gmra.mxu0 %v1351
  %v8193 = vpop.f32.mrf.mxu0
  %v8194 = vadd.f32 %v8175, %v8193
  %v8195 = vpop.f32.mrf.mxu0
  %v8196 = vadd.f32 %v8177, %v8195
  %8197 = vdwg.mxu0
  %8198 = vmatpush.bf16.msra.mxu0 %v5263
  %8199 = vmatpush.bf16.msra.mxu0 %v5259
  %8200 = vmatpush.bf16.msra.mxu0 %v5255
  %8201 = vmatpush.bf16.msra.mxu0 %v5251
  %8202 = vmatpush.bf16.msra.mxu0 %v5247
  %8203 = vmatpush.bf16.msra.mxu0 %v5243
  %8204 = vmatpush.bf16.msra.mxu0 %v5239
  %8205 = vmatpush.bf16.msra.mxu0 %v5235
  %8206 = vmatmul.bf16.gmra.mxu0 %v1320
  %v8207 = vpop.f32.mrf.mxu0
  %v8208 = vadd.f32 %v8189, %v8207
  %v8209 = vpop.f32.mrf.mxu0
  %v8210 = vadd.f32 %v8191, %v8209
  %8211 = vmatmul.bf16.gmra.mxu0 %v1352
  %v8212 = vpop.f32.mrf.mxu0
  %v8213 = vadd.f32 %v8194, %v8212
  %v8214 = vpop.f32.mrf.mxu0
  %v8215 = vadd.f32 %v8196, %v8214
  %8216 = vdwg.mxu0
  %8217 = vmatpush.bf16.msra.mxu0 %v5295
  %8218 = vmatpush.bf16.msra.mxu0 %v5291
  %8219 = vmatpush.bf16.msra.mxu0 %v5287
  %8220 = vmatpush.bf16.msra.mxu0 %v5283
  %8221 = vmatpush.bf16.msra.mxu0 %v5279
  %8222 = vmatpush.bf16.msra.mxu0 %v5275
  %8223 = vmatpush.bf16.msra.mxu0 %v5271
  %8224 = vmatpush.bf16.msra.mxu0 %v5267
  %8225 = vmatmul.bf16.gmra.mxu0 %v1321
  %v8226 = vpop.f32.mrf.mxu0
  %v8227 = vadd.f32 %v8208, %v8226
  %v8228 = vpop.f32.mrf.mxu0
  %v8229 = vadd.f32 %v8210, %v8228
  %8230 = vmatmul.bf16.gmra.mxu0 %v1353
  %v8231 = vpop.f32.mrf.mxu0
  %v8232 = vadd.f32 %v8213, %v8231
  %v8233 = vpop.f32.mrf.mxu0
  %v8234 = vadd.f32 %v8215, %v8233
  %8235 = vdwg.mxu0
  %8236 = vmatpush.bf16.msra.mxu0 %v5327
  %8237 = vmatpush.bf16.msra.mxu0 %v5323
  %8238 = vmatpush.bf16.msra.mxu0 %v5319
  %8239 = vmatpush.bf16.msra.mxu0 %v5315
  %8240 = vmatpush.bf16.msra.mxu0 %v5311
  %8241 = vmatpush.bf16.msra.mxu0 %v5307
  %8242 = vmatpush.bf16.msra.mxu0 %v5303
  %8243 = vmatpush.bf16.msra.mxu0 %v5299
  %8244 = vmatmul.bf16.gmra.mxu0 %v1322
  %v8245 = vpop.f32.mrf.mxu0
  %v8246 = vadd.f32 %v8227, %v8245
  %v8247 = vpop.f32.mrf.mxu0
  %v8248 = vadd.f32 %v8229, %v8247
  %8249 = vmatmul.bf16.gmra.mxu0 %v1354
  %v8250 = vpop.f32.mrf.mxu0
  %v8251 = vadd.f32 %v8232, %v8250
  %v8252 = vpop.f32.mrf.mxu0
  %v8253 = vadd.f32 %v8234, %v8252
  %8254 = vdwg.mxu0
  %8255 = vmatpush.bf16.msra.mxu0 %v5359
  %8256 = vmatpush.bf16.msra.mxu0 %v5355
  %8257 = vmatpush.bf16.msra.mxu0 %v5351
  %8258 = vmatpush.bf16.msra.mxu0 %v5347
  %8259 = vmatpush.bf16.msra.mxu0 %v5343
  %8260 = vmatpush.bf16.msra.mxu0 %v5339
  %8261 = vmatpush.bf16.msra.mxu0 %v5335
  %8262 = vmatpush.bf16.msra.mxu0 %v5331
  %8263 = vmatmul.bf16.gmra.mxu0 %v1323
  %v8264 = vpop.f32.mrf.mxu0
  %v8265 = vadd.f32 %v8246, %v8264
  %v8266 = vpop.f32.mrf.mxu0
  %v8267 = vadd.f32 %v8248, %v8266
  %8268 = vmatmul.bf16.gmra.mxu0 %v1355
  %v8269 = vpop.f32.mrf.mxu0
  %v8270 = vadd.f32 %v8251, %v8269
  %v8271 = vpop.f32.mrf.mxu0
  %v8272 = vadd.f32 %v8253, %v8271
  %8273 = vdwg.mxu0
  %8274 = vmatpush.bf16.msra.mxu0 %v5391
  %8275 = vmatpush.bf16.msra.mxu0 %v5387
  %8276 = vmatpush.bf16.msra.mxu0 %v5383
  %8277 = vmatpush.bf16.msra.mxu0 %v5379
  %8278 = vmatpush.bf16.msra.mxu0 %v5375
  %8279 = vmatpush.bf16.msra.mxu0 %v5371
  %8280 = vmatpush.bf16.msra.mxu0 %v5367
  %8281 = vmatpush.bf16.msra.mxu0 %v5363
  %8282 = vmatmul.bf16.gmra.mxu0 %v1324
  %v8283 = vpop.f32.mrf.mxu0
  %v8284 = vadd.f32 %v8265, %v8283
  %v8285 = vpop.f32.mrf.mxu0
  %v8286 = vadd.f32 %v8267, %v8285
  %8287 = vmatmul.bf16.gmra.mxu0 %v1356
  %v8288 = vpop.f32.mrf.mxu0
  %v8289 = vadd.f32 %v8270, %v8288
  %v8290 = vpop.f32.mrf.mxu0
  %v8291 = vadd.f32 %v8272, %v8290
  %8292 = vdwg.mxu0
  %8293 = vmatpush.bf16.msra.mxu0 %v5423
  %8294 = vmatpush.bf16.msra.mxu0 %v5419
  %8295 = vmatpush.bf16.msra.mxu0 %v5415
  %8296 = vmatpush.bf16.msra.mxu0 %v5411
  %8297 = vmatpush.bf16.msra.mxu0 %v5407
  %8298 = vmatpush.bf16.msra.mxu0 %v5403
  %8299 = vmatpush.bf16.msra.mxu0 %v5399
  %8300 = vmatpush.bf16.msra.mxu0 %v5395
  %8301 = vmatmul.bf16.gmra.mxu0 %v1325
  %v8302 = vpop.f32.mrf.mxu0
  %v8303 = vadd.f32 %v8284, %v8302
  %v8304 = vpop.f32.mrf.mxu0
  %v8305 = vadd.f32 %v8286, %v8304
  %8306 = vmatmul.bf16.gmra.mxu0 %v1357
  %v8307 = vpop.f32.mrf.mxu0
  %v8308 = vadd.f32 %v8289, %v8307
  %v8309 = vpop.f32.mrf.mxu0
  %v8310 = vadd.f32 %v8291, %v8309
  %8311 = vdwg.mxu0
  %8312 = vmatpush.bf16.msra.mxu0 %v5455
  %8313 = vmatpush.bf16.msra.mxu0 %v5451
  %8314 = vmatpush.bf16.msra.mxu0 %v5447
  %8315 = vmatpush.bf16.msra.mxu0 %v5443
  %8316 = vmatpush.bf16.msra.mxu0 %v5439
  %8317 = vmatpush.bf16.msra.mxu0 %v5435
  %8318 = vmatpush.bf16.msra.mxu0 %v5431
  %8319 = vmatpush.bf16.msra.mxu0 %v5427
  %8320 = vmatmul.bf16.gmra.mxu0 %v1326
  %v8321 = vpop.f32.mrf.mxu0
  %v8322 = vadd.f32 %v8303, %v8321
  %v8323 = vpop.f32.mrf.mxu0
  %v8324 = vadd.f32 %v8305, %v8323
  %8325 = vmatmul.bf16.gmra.mxu0 %v1358
  %v8326 = vpop.f32.mrf.mxu0
  %v8327 = vadd.f32 %v8308, %v8326
  %v8328 = vpop.f32.mrf.mxu0
  %v8329 = vadd.f32 %v8310, %v8328
  %8330 = vdwg.mxu0
  %8331 = vmatpush.bf16.msra.mxu0 %v5487
  %8332 = vmatpush.bf16.msra.mxu0 %v5483
  %8333 = vmatpush.bf16.msra.mxu0 %v5479
  %8334 = vmatpush.bf16.msra.mxu0 %v5475
  %8335 = vmatpush.bf16.msra.mxu0 %v5471
  %8336 = vmatpush.bf16.msra.mxu0 %v5467
  %8337 = vmatpush.bf16.msra.mxu0 %v5463
  %8338 = vmatpush.bf16.msra.mxu0 %v5459
  %8339 = vmatmul.bf16.gmra.mxu0 %v1327
  %v8340 = vpop.f32.mrf.mxu0
  %v8341 = vadd.f32 %v8322, %v8340
  %v8342 = vpop.f32.mrf.mxu0
  %v8343 = vadd.f32 %v8324, %v8342
  %8344 = vmatmul.bf16.gmra.mxu0 %v1359
  %v8345 = vpop.f32.mrf.mxu0
  %v8346 = vadd.f32 %v8327, %v8345
  %v8347 = vpop.f32.mrf.mxu0
  %v8348 = vadd.f32 %v8329, %v8347
  %8349 = vdwg.mxu0
  %8350 = vmatpush.bf16.msra.mxu0 %v5519
  %8351 = vmatpush.bf16.msra.mxu0 %v5515
  %8352 = vmatpush.bf16.msra.mxu0 %v5511
  %8353 = vmatpush.bf16.msra.mxu0 %v5507
  %8354 = vmatpush.bf16.msra.mxu0 %v5503
  %8355 = vmatpush.bf16.msra.mxu0 %v5499
  %8356 = vmatpush.bf16.msra.mxu0 %v5495
  %8357 = vmatpush.bf16.msra.mxu0 %v5491
  %8358 = vmatmul.bf16.gmra.mxu0 %v1328
  %v8359 = vpop.f32.mrf.mxu0
  %v8360 = vadd.f32 %v8341, %v8359
  %v8361 = vpop.f32.mrf.mxu0
  %v8362 = vadd.f32 %v8343, %v8361
  %8363 = vmatmul.bf16.gmra.mxu0 %v1360
  %v8364 = vpop.f32.mrf.mxu0
  %v8365 = vadd.f32 %v8346, %v8364
  %v8366 = vpop.f32.mrf.mxu0
  %v8367 = vadd.f32 %v8348, %v8366
  %8368 = vdwg.mxu0
  %8369 = vmatpush.bf16.msra.mxu0 %v4528
  %8370 = vmatpush.bf16.msra.mxu0 %v4524
  %8371 = vmatpush.bf16.msra.mxu0 %v4520
  %8372 = vmatpush.bf16.msra.mxu0 %v4516
  %8373 = vmatpush.bf16.msra.mxu0 %v4512
  %8374 = vmatpush.bf16.msra.mxu0 %v4508
  %8375 = vmatpush.bf16.msra.mxu0 %v4504
  %8376 = vmatpush.bf16.msra.mxu0 %v4500
  %8377 = vmatmul.bf16.gmra.mxu0 %v1297
  %v8378 = vpop.f32.mrf.mxu0
  %v8379 = vadd.f32 0.0, %v8378
  %v8380 = vpop.f32.mrf.mxu0
  %v8381 = vadd.f32 0.0, %v8380
  %8382 = vmatmul.bf16.gmra.mxu0 %v1329
  %v8383 = vpop.f32.mrf.mxu0
  %v8384 = vadd.f32 0.0, %v8383
  %v8385 = vpop.f32.mrf.mxu0
  %v8386 = vadd.f32 0.0, %v8385
  %8387 = vdwg.mxu0
  %8388 = vmatpush.bf16.msra.mxu0 %v4560
  %8389 = vmatpush.bf16.msra.mxu0 %v4556
  %8390 = vmatpush.bf16.msra.mxu0 %v4552
  %8391 = vmatpush.bf16.msra.mxu0 %v4548
  %8392 = vmatpush.bf16.msra.mxu0 %v4544
  %8393 = vmatpush.bf16.msra.mxu0 %v4540
  %8394 = vmatpush.bf16.msra.mxu0 %v4536
  %8395 = vmatpush.bf16.msra.mxu0 %v4532
  %8396 = vmatmul.bf16.gmra.mxu0 %v1298
  %v8397 = vpop.f32.mrf.mxu0
  %v8398 = vadd.f32 %v8379, %v8397
  %v8399 = vpop.f32.mrf.mxu0
  %v8400 = vadd.f32 %v8381, %v8399
  %8401 = vmatmul.bf16.gmra.mxu0 %v1330
  %v8402 = vpop.f32.mrf.mxu0
  %v8403 = vadd.f32 %v8384, %v8402
  %v8404 = vpop.f32.mrf.mxu0
  %v8405 = vadd.f32 %v8386, %v8404
  %8406 = vdwg.mxu0
  %8407 = vmatpush.bf16.msra.mxu0 %v4592
  %8408 = vmatpush.bf16.msra.mxu0 %v4588
  %8409 = vmatpush.bf16.msra.mxu0 %v4584
  %8410 = vmatpush.bf16.msra.mxu0 %v4580
  %8411 = vmatpush.bf16.msra.mxu0 %v4576
  %8412 = vmatpush.bf16.msra.mxu0 %v4572
  %8413 = vmatpush.bf16.msra.mxu0 %v4568
  %8414 = vmatpush.bf16.msra.mxu0 %v4564
  %8415 = vmatmul.bf16.gmra.mxu0 %v1299
  %v8416 = vpop.f32.mrf.mxu0
  %v8417 = vadd.f32 %v8398, %v8416
  %v8418 = vpop.f32.mrf.mxu0
  %v8419 = vadd.f32 %v8400, %v8418
  %8420 = vmatmul.bf16.gmra.mxu0 %v1331
  %v8421 = vpop.f32.mrf.mxu0
  %v8422 = vadd.f32 %v8403, %v8421
  %v8423 = vpop.f32.mrf.mxu0
  %v8424 = vadd.f32 %v8405, %v8423
  %8425 = vdwg.mxu0
  %8426 = vmatpush.bf16.msra.mxu0 %v4624
  %8427 = vmatpush.bf16.msra.mxu0 %v4620
  %8428 = vmatpush.bf16.msra.mxu0 %v4616
  %8429 = vmatpush.bf16.msra.mxu0 %v4612
  %8430 = vmatpush.bf16.msra.mxu0 %v4608
  %8431 = vmatpush.bf16.msra.mxu0 %v4604
  %8432 = vmatpush.bf16.msra.mxu0 %v4600
  %8433 = vmatpush.bf16.msra.mxu0 %v4596
  %8434 = vmatmul.bf16.gmra.mxu0 %v1300
  %v8435 = vpop.f32.mrf.mxu0
  %v8436 = vadd.f32 %v8417, %v8435
  %v8437 = vpop.f32.mrf.mxu0
  %v8438 = vadd.f32 %v8419, %v8437
  %8439 = vmatmul.bf16.gmra.mxu0 %v1332
  %v8440 = vpop.f32.mrf.mxu0
  %v8441 = vadd.f32 %v8422, %v8440
  %v8442 = vpop.f32.mrf.mxu0
  %v8443 = vadd.f32 %v8424, %v8442
  %8444 = vdwg.mxu0
  %8445 = vmatpush.bf16.msra.mxu0 %v4656
  %8446 = vmatpush.bf16.msra.mxu0 %v4652
  %8447 = vmatpush.bf16.msra.mxu0 %v4648
  %8448 = vmatpush.bf16.msra.mxu0 %v4644
  %8449 = vmatpush.bf16.msra.mxu0 %v4640
  %8450 = vmatpush.bf16.msra.mxu0 %v4636
  %8451 = vmatpush.bf16.msra.mxu0 %v4632
  %8452 = vmatpush.bf16.msra.mxu0 %v4628
  %8453 = vmatmul.bf16.gmra.mxu0 %v1301
  %v8454 = vpop.f32.mrf.mxu0
  %v8455 = vadd.f32 %v8436, %v8454
  %v8456 = vpop.f32.mrf.mxu0
  %v8457 = vadd.f32 %v8438, %v8456
  %8458 = vmatmul.bf16.gmra.mxu0 %v1333
  %v8459 = vpop.f32.mrf.mxu0
  %v8460 = vadd.f32 %v8441, %v8459
  %v8461 = vpop.f32.mrf.mxu0
  %v8462 = vadd.f32 %v8443, %v8461
  %8463 = vdwg.mxu0
  %8464 = vmatpush.bf16.msra.mxu0 %v4688
  %8465 = vmatpush.bf16.msra.mxu0 %v4684
  %8466 = vmatpush.bf16.msra.mxu0 %v4680
  %8467 = vmatpush.bf16.msra.mxu0 %v4676
  %8468 = vmatpush.bf16.msra.mxu0 %v4672
  %8469 = vmatpush.bf16.msra.mxu0 %v4668
  %8470 = vmatpush.bf16.msra.mxu0 %v4664
  %8471 = vmatpush.bf16.msra.mxu0 %v4660
  %8472 = vmatmul.bf16.gmra.mxu0 %v1302
  %v8473 = vpop.f32.mrf.mxu0
  %v8474 = vadd.f32 %v8455, %v8473
  %v8475 = vpop.f32.mrf.mxu0
  %v8476 = vadd.f32 %v8457, %v8475
  %8477 = vmatmul.bf16.gmra.mxu0 %v1334
  %v8478 = vpop.f32.mrf.mxu0
  %v8479 = vadd.f32 %v8460, %v8478
  %v8480 = vpop.f32.mrf.mxu0
  %v8481 = vadd.f32 %v8462, %v8480
  %8482 = vdwg.mxu0
  %8483 = vmatpush.bf16.msra.mxu0 %v4720
  %8484 = vmatpush.bf16.msra.mxu0 %v4716
  %8485 = vmatpush.bf16.msra.mxu0 %v4712
  %8486 = vmatpush.bf16.msra.mxu0 %v4708
  %8487 = vmatpush.bf16.msra.mxu0 %v4704
  %8488 = vmatpush.bf16.msra.mxu0 %v4700
  %8489 = vmatpush.bf16.msra.mxu0 %v4696
  %8490 = vmatpush.bf16.msra.mxu0 %v4692
  %8491 = vmatmul.bf16.gmra.mxu0 %v1303
  %v8492 = vpop.f32.mrf.mxu0
  %v8493 = vadd.f32 %v8474, %v8492
  %v8494 = vpop.f32.mrf.mxu0
  %v8495 = vadd.f32 %v8476, %v8494
  %8496 = vmatmul.bf16.gmra.mxu0 %v1335
  %v8497 = vpop.f32.mrf.mxu0
  %v8498 = vadd.f32 %v8479, %v8497
  %v8499 = vpop.f32.mrf.mxu0
  %v8500 = vadd.f32 %v8481, %v8499
  %8501 = vdwg.mxu0
  %8502 = vmatpush.bf16.msra.mxu0 %v4752
  %8503 = vmatpush.bf16.msra.mxu0 %v4748
  %8504 = vmatpush.bf16.msra.mxu0 %v4744
  %8505 = vmatpush.bf16.msra.mxu0 %v4740
  %8506 = vmatpush.bf16.msra.mxu0 %v4736
  %8507 = vmatpush.bf16.msra.mxu0 %v4732
  %8508 = vmatpush.bf16.msra.mxu0 %v4728
  %8509 = vmatpush.bf16.msra.mxu0 %v4724
  %8510 = vmatmul.bf16.gmra.mxu0 %v1304
  %v8511 = vpop.f32.mrf.mxu0
  %v8512 = vadd.f32 %v8493, %v8511
  %v8513 = vpop.f32.mrf.mxu0
  %v8514 = vadd.f32 %v8495, %v8513
  %8515 = vmatmul.bf16.gmra.mxu0 %v1336
  %v8516 = vpop.f32.mrf.mxu0
  %v8517 = vadd.f32 %v8498, %v8516
  %v8518 = vpop.f32.mrf.mxu0
  %v8519 = vadd.f32 %v8500, %v8518
  %8520 = vdwg.mxu0
  %8521 = vmatpush.bf16.msra.mxu0 %v4784
  %8522 = vmatpush.bf16.msra.mxu0 %v4780
  %8523 = vmatpush.bf16.msra.mxu0 %v4776
  %8524 = vmatpush.bf16.msra.mxu0 %v4772
  %8525 = vmatpush.bf16.msra.mxu0 %v4768
  %8526 = vmatpush.bf16.msra.mxu0 %v4764
  %8527 = vmatpush.bf16.msra.mxu0 %v4760
  %8528 = vmatpush.bf16.msra.mxu0 %v4756
  %8529 = vmatmul.bf16.gmra.mxu0 %v1305
  %v8530 = vpop.f32.mrf.mxu0
  %v8531 = vadd.f32 %v8512, %v8530
  %v8532 = vpop.f32.mrf.mxu0
  %v8533 = vadd.f32 %v8514, %v8532
  %8534 = vmatmul.bf16.gmra.mxu0 %v1337
  %v8535 = vpop.f32.mrf.mxu0
  %v8536 = vadd.f32 %v8517, %v8535
  %v8537 = vpop.f32.mrf.mxu0
  %v8538 = vadd.f32 %v8519, %v8537
  %8539 = vdwg.mxu0
  %8540 = vmatpush.bf16.msra.mxu0 %v4816
  %8541 = vmatpush.bf16.msra.mxu0 %v4812
  %8542 = vmatpush.bf16.msra.mxu0 %v4808
  %8543 = vmatpush.bf16.msra.mxu0 %v4804
  %8544 = vmatpush.bf16.msra.mxu0 %v4800
  %8545 = vmatpush.bf16.msra.mxu0 %v4796
  %8546 = vmatpush.bf16.msra.mxu0 %v4792
  %8547 = vmatpush.bf16.msra.mxu0 %v4788
  %8548 = vmatmul.bf16.gmra.mxu0 %v1306
  %v8549 = vpop.f32.mrf.mxu0
  %v8550 = vadd.f32 %v8531, %v8549
  %v8551 = vpop.f32.mrf.mxu0
  %v8552 = vadd.f32 %v8533, %v8551
  %8553 = vmatmul.bf16.gmra.mxu0 %v1338
  %v8554 = vpop.f32.mrf.mxu0
  %v8555 = vadd.f32 %v8536, %v8554
  %v8556 = vpop.f32.mrf.mxu0
  %v8557 = vadd.f32 %v8538, %v8556
  %8558 = vdwg.mxu0
  %8559 = vmatpush.bf16.msra.mxu0 %v4848
  %8560 = vmatpush.bf16.msra.mxu0 %v4844
  %8561 = vmatpush.bf16.msra.mxu0 %v4840
  %8562 = vmatpush.bf16.msra.mxu0 %v4836
  %8563 = vmatpush.bf16.msra.mxu0 %v4832
  %8564 = vmatpush.bf16.msra.mxu0 %v4828
  %8565 = vmatpush.bf16.msra.mxu0 %v4824
  %8566 = vmatpush.bf16.msra.mxu0 %v4820
  %8567 = vmatmul.bf16.gmra.mxu0 %v1307
  %v8568 = vpop.f32.mrf.mxu0
  %v8569 = vadd.f32 %v8550, %v8568
  %v8570 = vpop.f32.mrf.mxu0
  %v8571 = vadd.f32 %v8552, %v8570
  %8572 = vmatmul.bf16.gmra.mxu0 %v1339
  %v8573 = vpop.f32.mrf.mxu0
  %v8574 = vadd.f32 %v8555, %v8573
  %v8575 = vpop.f32.mrf.mxu0
  %v8576 = vadd.f32 %v8557, %v8575
  %8577 = vdwg.mxu0
  %8578 = vmatpush.bf16.msra.mxu0 %v4880
  %8579 = vmatpush.bf16.msra.mxu0 %v4876
  %8580 = vmatpush.bf16.msra.mxu0 %v4872
  %8581 = vmatpush.bf16.msra.mxu0 %v4868
  %8582 = vmatpush.bf16.msra.mxu0 %v4864
  %8583 = vmatpush.bf16.msra.mxu0 %v4860
  %8584 = vmatpush.bf16.msra.mxu0 %v4856
  %8585 = vmatpush.bf16.msra.mxu0 %v4852
  %8586 = vmatmul.bf16.gmra.mxu0 %v1308
  %v8587 = vpop.f32.mrf.mxu0
  %v8588 = vadd.f32 %v8569, %v8587
  %v8589 = vpop.f32.mrf.mxu0
  %v8590 = vadd.f32 %v8571, %v8589
  %8591 = vmatmul.bf16.gmra.mxu0 %v1340
  %v8592 = vpop.f32.mrf.mxu0
  %v8593 = vadd.f32 %v8574, %v8592
  %v8594 = vpop.f32.mrf.mxu0
  %v8595 = vadd.f32 %v8576, %v8594
  %8596 = vdwg.mxu0
  %8597 = vmatpush.bf16.msra.mxu0 %v4912
  %8598 = vmatpush.bf16.msra.mxu0 %v4908
  %8599 = vmatpush.bf16.msra.mxu0 %v4904
  %8600 = vmatpush.bf16.msra.mxu0 %v4900
  %8601 = vmatpush.bf16.msra.mxu0 %v4896
  %8602 = vmatpush.bf16.msra.mxu0 %v4892
  %8603 = vmatpush.bf16.msra.mxu0 %v4888
  %8604 = vmatpush.bf16.msra.mxu0 %v4884
  %8605 = vmatmul.bf16.gmra.mxu0 %v1309
  %v8606 = vpop.f32.mrf.mxu0
  %v8607 = vadd.f32 %v8588, %v8606
  %v8608 = vpop.f32.mrf.mxu0
  %v8609 = vadd.f32 %v8590, %v8608
  %8610 = vmatmul.bf16.gmra.mxu0 %v1341
  %v8611 = vpop.f32.mrf.mxu0
  %v8612 = vadd.f32 %v8593, %v8611
  %v8613 = vpop.f32.mrf.mxu0
  %v8614 = vadd.f32 %v8595, %v8613
  %8615 = vdwg.mxu0
  %8616 = vmatpush.bf16.msra.mxu0 %v4944
  %8617 = vmatpush.bf16.msra.mxu0 %v4940
  %8618 = vmatpush.bf16.msra.mxu0 %v4936
  %8619 = vmatpush.bf16.msra.mxu0 %v4932
  %8620 = vmatpush.bf16.msra.mxu0 %v4928
  %8621 = vmatpush.bf16.msra.mxu0 %v4924
  %8622 = vmatpush.bf16.msra.mxu0 %v4920
  %8623 = vmatpush.bf16.msra.mxu0 %v4916
  %8624 = vmatmul.bf16.gmra.mxu0 %v1310
  %v8625 = vpop.f32.mrf.mxu0
  %v8626 = vadd.f32 %v8607, %v8625
  %v8627 = vpop.f32.mrf.mxu0
  %v8628 = vadd.f32 %v8609, %v8627
  %8629 = vmatmul.bf16.gmra.mxu0 %v1342
  %v8630 = vpop.f32.mrf.mxu0
  %v8631 = vadd.f32 %v8612, %v8630
  %v8632 = vpop.f32.mrf.mxu0
  %v8633 = vadd.f32 %v8614, %v8632
  %8634 = vdwg.mxu0
  %8635 = vmatpush.bf16.msra.mxu0 %v4976
  %8636 = vmatpush.bf16.msra.mxu0 %v4972
  %8637 = vmatpush.bf16.msra.mxu0 %v4968
  %8638 = vmatpush.bf16.msra.mxu0 %v4964
  %8639 = vmatpush.bf16.msra.mxu0 %v4960
  %8640 = vmatpush.bf16.msra.mxu0 %v4956
  %8641 = vmatpush.bf16.msra.mxu0 %v4952
  %8642 = vmatpush.bf16.msra.mxu0 %v4948
  %8643 = vmatmul.bf16.gmra.mxu0 %v1311
  %v8644 = vpop.f32.mrf.mxu0
  %v8645 = vadd.f32 %v8626, %v8644
  %v8646 = vpop.f32.mrf.mxu0
  %v8647 = vadd.f32 %v8628, %v8646
  %8648 = vmatmul.bf16.gmra.mxu0 %v1343
  %v8649 = vpop.f32.mrf.mxu0
  %v8650 = vadd.f32 %v8631, %v8649
  %v8651 = vpop.f32.mrf.mxu0
  %v8652 = vadd.f32 %v8633, %v8651
  %8653 = vdwg.mxu0
  %8654 = vmatpush.bf16.msra.mxu0 %v5008
  %8655 = vmatpush.bf16.msra.mxu0 %v5004
  %8656 = vmatpush.bf16.msra.mxu0 %v5000
  %8657 = vmatpush.bf16.msra.mxu0 %v4996
  %8658 = vmatpush.bf16.msra.mxu0 %v4992
  %8659 = vmatpush.bf16.msra.mxu0 %v4988
  %8660 = vmatpush.bf16.msra.mxu0 %v4984
  %8661 = vmatpush.bf16.msra.mxu0 %v4980
  %8662 = vmatmul.bf16.gmra.mxu0 %v1312
  %v8663 = vpop.f32.mrf.mxu0
  %v8664 = vadd.f32 %v8645, %v8663
  %v8665 = vpop.f32.mrf.mxu0
  %v8666 = vadd.f32 %v8647, %v8665
  %8667 = vmatmul.bf16.gmra.mxu0 %v1344
  %v8668 = vpop.f32.mrf.mxu0
  %v8669 = vadd.f32 %v8650, %v8668
  %v8670 = vpop.f32.mrf.mxu0
  %v8671 = vadd.f32 %v8652, %v8670
  %8672 = vdwg.mxu0
  %8673 = vmatpush.bf16.msra.mxu0 %v5040
  %8674 = vmatpush.bf16.msra.mxu0 %v5036
  %8675 = vmatpush.bf16.msra.mxu0 %v5032
  %8676 = vmatpush.bf16.msra.mxu0 %v5028
  %8677 = vmatpush.bf16.msra.mxu0 %v5024
  %8678 = vmatpush.bf16.msra.mxu0 %v5020
  %8679 = vmatpush.bf16.msra.mxu0 %v5016
  %8680 = vmatpush.bf16.msra.mxu0 %v5012
  %8681 = vmatmul.bf16.gmra.mxu0 %v1313
  %v8682 = vpop.f32.mrf.mxu0
  %v8683 = vadd.f32 %v8664, %v8682
  %v8684 = vpop.f32.mrf.mxu0
  %v8685 = vadd.f32 %v8666, %v8684
  %8686 = vmatmul.bf16.gmra.mxu0 %v1345
  %v8687 = vpop.f32.mrf.mxu0
  %v8688 = vadd.f32 %v8669, %v8687
  %v8689 = vpop.f32.mrf.mxu0
  %v8690 = vadd.f32 %v8671, %v8689
  %8691 = vdwg.mxu0
  %8692 = vmatpush.bf16.msra.mxu0 %v5072
  %8693 = vmatpush.bf16.msra.mxu0 %v5068
  %8694 = vmatpush.bf16.msra.mxu0 %v5064
  %8695 = vmatpush.bf16.msra.mxu0 %v5060
  %8696 = vmatpush.bf16.msra.mxu0 %v5056
  %8697 = vmatpush.bf16.msra.mxu0 %v5052
  %8698 = vmatpush.bf16.msra.mxu0 %v5048
  %8699 = vmatpush.bf16.msra.mxu0 %v5044
  %8700 = vmatmul.bf16.gmra.mxu0 %v1314
  %v8701 = vpop.f32.mrf.mxu0
  %v8702 = vadd.f32 %v8683, %v8701
  %v8703 = vpop.f32.mrf.mxu0
  %v8704 = vadd.f32 %v8685, %v8703
  %8705 = vmatmul.bf16.gmra.mxu0 %v1346
  %v8706 = vpop.f32.mrf.mxu0
  %v8707 = vadd.f32 %v8688, %v8706
  %v8708 = vpop.f32.mrf.mxu0
  %v8709 = vadd.f32 %v8690, %v8708
  %8710 = vdwg.mxu0
  %8711 = vmatpush.bf16.msra.mxu0 %v5104
  %8712 = vmatpush.bf16.msra.mxu0 %v5100
  %8713 = vmatpush.bf16.msra.mxu0 %v5096
  %8714 = vmatpush.bf16.msra.mxu0 %v5092
  %8715 = vmatpush.bf16.msra.mxu0 %v5088
  %8716 = vmatpush.bf16.msra.mxu0 %v5084
  %8717 = vmatpush.bf16.msra.mxu0 %v5080
  %8718 = vmatpush.bf16.msra.mxu0 %v5076
  %8719 = vmatmul.bf16.gmra.mxu0 %v1315
  %v8720 = vpop.f32.mrf.mxu0
  %v8721 = vadd.f32 %v8702, %v8720
  %v8722 = vpop.f32.mrf.mxu0
  %v8723 = vadd.f32 %v8704, %v8722
  %8724 = vmatmul.bf16.gmra.mxu0 %v1347
  %v8725 = vpop.f32.mrf.mxu0
  %v8726 = vadd.f32 %v8707, %v8725
  %v8727 = vpop.f32.mrf.mxu0
  %v8728 = vadd.f32 %v8709, %v8727
  %8729 = vdwg.mxu0
  %8730 = vmatpush.bf16.msra.mxu0 %v5136
  %8731 = vmatpush.bf16.msra.mxu0 %v5132
  %8732 = vmatpush.bf16.msra.mxu0 %v5128
  %8733 = vmatpush.bf16.msra.mxu0 %v5124
  %8734 = vmatpush.bf16.msra.mxu0 %v5120
  %8735 = vmatpush.bf16.msra.mxu0 %v5116
  %8736 = vmatpush.bf16.msra.mxu0 %v5112
  %8737 = vmatpush.bf16.msra.mxu0 %v5108
  %8738 = vmatmul.bf16.gmra.mxu0 %v1316
  %v8739 = vpop.f32.mrf.mxu0
  %v8740 = vadd.f32 %v8721, %v8739
  %v8741 = vpop.f32.mrf.mxu0
  %v8742 = vadd.f32 %v8723, %v8741
  %8743 = vmatmul.bf16.gmra.mxu0 %v1348
  %v8744 = vpop.f32.mrf.mxu0
  %v8745 = vadd.f32 %v8726, %v8744
  %v8746 = vpop.f32.mrf.mxu0
  %v8747 = vadd.f32 %v8728, %v8746
  %8748 = vdwg.mxu0
  %8749 = vmatpush.bf16.msra.mxu0 %v5168
  %8750 = vmatpush.bf16.msra.mxu0 %v5164
  %8751 = vmatpush.bf16.msra.mxu0 %v5160
  %8752 = vmatpush.bf16.msra.mxu0 %v5156
  %8753 = vmatpush.bf16.msra.mxu0 %v5152
  %8754 = vmatpush.bf16.msra.mxu0 %v5148
  %8755 = vmatpush.bf16.msra.mxu0 %v5144
  %8756 = vmatpush.bf16.msra.mxu0 %v5140
  %8757 = vmatmul.bf16.gmra.mxu0 %v1317
  %v8758 = vpop.f32.mrf.mxu0
  %v8759 = vadd.f32 %v8740, %v8758
  %v8760 = vpop.f32.mrf.mxu0
  %v8761 = vadd.f32 %v8742, %v8760
  %8762 = vmatmul.bf16.gmra.mxu0 %v1349
  %v8763 = vpop.f32.mrf.mxu0
  %v8764 = vadd.f32 %v8745, %v8763
  %v8765 = vpop.f32.mrf.mxu0
  %v8766 = vadd.f32 %v8747, %v8765
  %8767 = vdwg.mxu0
  %8768 = vmatpush.bf16.msra.mxu0 %v5200
  %8769 = vmatpush.bf16.msra.mxu0 %v5196
  %8770 = vmatpush.bf16.msra.mxu0 %v5192
  %8771 = vmatpush.bf16.msra.mxu0 %v5188
  %8772 = vmatpush.bf16.msra.mxu0 %v5184
  %8773 = vmatpush.bf16.msra.mxu0 %v5180
  %8774 = vmatpush.bf16.msra.mxu0 %v5176
  %8775 = vmatpush.bf16.msra.mxu0 %v5172
  %8776 = vmatmul.bf16.gmra.mxu0 %v1318
  %v8777 = vpop.f32.mrf.mxu0
  %v8778 = vadd.f32 %v8759, %v8777
  %v8779 = vpop.f32.mrf.mxu0
  %v8780 = vadd.f32 %v8761, %v8779
  %8781 = vmatmul.bf16.gmra.mxu0 %v1350
  %v8782 = vpop.f32.mrf.mxu0
  %v8783 = vadd.f32 %v8764, %v8782
  %v8784 = vpop.f32.mrf.mxu0
  %v8785 = vadd.f32 %v8766, %v8784
  %8786 = vdwg.mxu0
  %8787 = vmatpush.bf16.msra.mxu0 %v5232
  %8788 = vmatpush.bf16.msra.mxu0 %v5228
  %8789 = vmatpush.bf16.msra.mxu0 %v5224
  %8790 = vmatpush.bf16.msra.mxu0 %v5220
  %8791 = vmatpush.bf16.msra.mxu0 %v5216
  %8792 = vmatpush.bf16.msra.mxu0 %v5212
  %8793 = vmatpush.bf16.msra.mxu0 %v5208
  %8794 = vmatpush.bf16.msra.mxu0 %v5204
  %8795 = vmatmul.bf16.gmra.mxu0 %v1319
  %v8796 = vpop.f32.mrf.mxu0
  %v8797 = vadd.f32 %v8778, %v8796
  %v8798 = vpop.f32.mrf.mxu0
  %v8799 = vadd.f32 %v8780, %v8798
  %8800 = vmatmul.bf16.gmra.mxu0 %v1351
  %v8801 = vpop.f32.mrf.mxu0
  %v8802 = vadd.f32 %v8783, %v8801
  %v8803 = vpop.f32.mrf.mxu0
  %v8804 = vadd.f32 %v8785, %v8803
  %8805 = vdwg.mxu0
  %8806 = vmatpush.bf16.msra.mxu0 %v5264
  %8807 = vmatpush.bf16.msra.mxu0 %v5260
  %8808 = vmatpush.bf16.msra.mxu0 %v5256
  %8809 = vmatpush.bf16.msra.mxu0 %v5252
  %8810 = vmatpush.bf16.msra.mxu0 %v5248
  %8811 = vmatpush.bf16.msra.mxu0 %v5244
  %8812 = vmatpush.bf16.msra.mxu0 %v5240
  %8813 = vmatpush.bf16.msra.mxu0 %v5236
  %8814 = vmatmul.bf16.gmra.mxu0 %v1320
  %v8815 = vpop.f32.mrf.mxu0
  %v8816 = vadd.f32 %v8797, %v8815
  %v8817 = vpop.f32.mrf.mxu0
  %v8818 = vadd.f32 %v8799, %v8817
  %8819 = vmatmul.bf16.gmra.mxu0 %v1352
  %v8820 = vpop.f32.mrf.mxu0
  %v8821 = vadd.f32 %v8802, %v8820
  %v8822 = vpop.f32.mrf.mxu0
  %v8823 = vadd.f32 %v8804, %v8822
  %8824 = vdwg.mxu0
  %8825 = vmatpush.bf16.msra.mxu0 %v5296
  %8826 = vmatpush.bf16.msra.mxu0 %v5292
  %8827 = vmatpush.bf16.msra.mxu0 %v5288
  %8828 = vmatpush.bf16.msra.mxu0 %v5284
  %8829 = vmatpush.bf16.msra.mxu0 %v5280
  %8830 = vmatpush.bf16.msra.mxu0 %v5276
  %8831 = vmatpush.bf16.msra.mxu0 %v5272
  %8832 = vmatpush.bf16.msra.mxu0 %v5268
  %8833 = vmatmul.bf16.gmra.mxu0 %v1321
  %v8834 = vpop.f32.mrf.mxu0
  %v8835 = vadd.f32 %v8816, %v8834
  %v8836 = vpop.f32.mrf.mxu0
  %v8837 = vadd.f32 %v8818, %v8836
  %8838 = vmatmul.bf16.gmra.mxu0 %v1353
  %v8839 = vpop.f32.mrf.mxu0
  %v8840 = vadd.f32 %v8821, %v8839
  %v8841 = vpop.f32.mrf.mxu0
  %v8842 = vadd.f32 %v8823, %v8841
  %8843 = vdwg.mxu0
  %8844 = vmatpush.bf16.msra.mxu0 %v5328
  %8845 = vmatpush.bf16.msra.mxu0 %v5324
  %8846 = vmatpush.bf16.msra.mxu0 %v5320
  %8847 = vmatpush.bf16.msra.mxu0 %v5316
  %8848 = vmatpush.bf16.msra.mxu0 %v5312
  %8849 = vmatpush.bf16.msra.mxu0 %v5308
  %8850 = vmatpush.bf16.msra.mxu0 %v5304
  %8851 = vmatpush.bf16.msra.mxu0 %v5300
  %8852 = vmatmul.bf16.gmra.mxu0 %v1322
  %v8853 = vpop.f32.mrf.mxu0
  %v8854 = vadd.f32 %v8835, %v8853
  %v8855 = vpop.f32.mrf.mxu0
  %v8856 = vadd.f32 %v8837, %v8855
  %8857 = vmatmul.bf16.gmra.mxu0 %v1354
  %v8858 = vpop.f32.mrf.mxu0
  %v8859 = vadd.f32 %v8840, %v8858
  %v8860 = vpop.f32.mrf.mxu0
  %v8861 = vadd.f32 %v8842, %v8860
  %8862 = vdwg.mxu0
  %8863 = vmatpush.bf16.msra.mxu0 %v5360
  %8864 = vmatpush.bf16.msra.mxu0 %v5356
  %8865 = vmatpush.bf16.msra.mxu0 %v5352
  %8866 = vmatpush.bf16.msra.mxu0 %v5348
  %8867 = vmatpush.bf16.msra.mxu0 %v5344
  %8868 = vmatpush.bf16.msra.mxu0 %v5340
  %8869 = vmatpush.bf16.msra.mxu0 %v5336
  %8870 = vmatpush.bf16.msra.mxu0 %v5332
  %8871 = vmatmul.bf16.gmra.mxu0 %v1323
  %v8872 = vpop.f32.mrf.mxu0
  %v8873 = vadd.f32 %v8854, %v8872
  %v8874 = vpop.f32.mrf.mxu0
  %v8875 = vadd.f32 %v8856, %v8874
  %8876 = vmatmul.bf16.gmra.mxu0 %v1355
  %v8877 = vpop.f32.mrf.mxu0
  %v8878 = vadd.f32 %v8859, %v8877
  %v8879 = vpop.f32.mrf.mxu0
  %v8880 = vadd.f32 %v8861, %v8879
  %8881 = vdwg.mxu0
  %8882 = vmatpush.bf16.msra.mxu0 %v5392
  %8883 = vmatpush.bf16.msra.mxu0 %v5388
  %8884 = vmatpush.bf16.msra.mxu0 %v5384
  %8885 = vmatpush.bf16.msra.mxu0 %v5380
  %8886 = vmatpush.bf16.msra.mxu0 %v5376
  %8887 = vmatpush.bf16.msra.mxu0 %v5372
  %8888 = vmatpush.bf16.msra.mxu0 %v5368
  %8889 = vmatpush.bf16.msra.mxu0 %v5364
  %8890 = vmatmul.bf16.gmra.mxu0 %v1324
  %v8891 = vpop.f32.mrf.mxu0
  %v8892 = vadd.f32 %v8873, %v8891
  %v8893 = vpop.f32.mrf.mxu0
  %v8894 = vadd.f32 %v8875, %v8893
  %8895 = vmatmul.bf16.gmra.mxu0 %v1356
  %v8896 = vpop.f32.mrf.mxu0
  %v8897 = vadd.f32 %v8878, %v8896
  %v8898 = vpop.f32.mrf.mxu0
  %v8899 = vadd.f32 %v8880, %v8898
  %8900 = vdwg.mxu0
  %8901 = vmatpush.bf16.msra.mxu0 %v5424
  %8902 = vmatpush.bf16.msra.mxu0 %v5420
  %8903 = vmatpush.bf16.msra.mxu0 %v5416
  %8904 = vmatpush.bf16.msra.mxu0 %v5412
  %8905 = vmatpush.bf16.msra.mxu0 %v5408
  %8906 = vmatpush.bf16.msra.mxu0 %v5404
  %8907 = vmatpush.bf16.msra.mxu0 %v5400
  %8908 = vmatpush.bf16.msra.mxu0 %v5396
  %8909 = vmatmul.bf16.gmra.mxu0 %v1325
  %v8910 = vpop.f32.mrf.mxu0
  %v8911 = vadd.f32 %v8892, %v8910
  %v8912 = vpop.f32.mrf.mxu0
  %v8913 = vadd.f32 %v8894, %v8912
  %8914 = vmatmul.bf16.gmra.mxu0 %v1357
  %v8915 = vpop.f32.mrf.mxu0
  %v8916 = vadd.f32 %v8897, %v8915
  %v8917 = vpop.f32.mrf.mxu0
  %v8918 = vadd.f32 %v8899, %v8917
  %8919 = vdwg.mxu0
  %8920 = vmatpush.bf16.msra.mxu0 %v5456
  %8921 = vmatpush.bf16.msra.mxu0 %v5452
  %8922 = vmatpush.bf16.msra.mxu0 %v5448
  %8923 = vmatpush.bf16.msra.mxu0 %v5444
  %8924 = vmatpush.bf16.msra.mxu0 %v5440
  %8925 = vmatpush.bf16.msra.mxu0 %v5436
  %8926 = vmatpush.bf16.msra.mxu0 %v5432
  %8927 = vmatpush.bf16.msra.mxu0 %v5428
  %8928 = vmatmul.bf16.gmra.mxu0 %v1326
  %v8929 = vpop.f32.mrf.mxu0
  %v8930 = vadd.f32 %v8911, %v8929
  %v8931 = vpop.f32.mrf.mxu0
  %v8932 = vadd.f32 %v8913, %v8931
  %8933 = vmatmul.bf16.gmra.mxu0 %v1358
  %v8934 = vpop.f32.mrf.mxu0
  %v8935 = vadd.f32 %v8916, %v8934
  %v8936 = vpop.f32.mrf.mxu0
  %v8937 = vadd.f32 %v8918, %v8936
  %8938 = vdwg.mxu0
  %8939 = vmatpush.bf16.msra.mxu0 %v5488
  %8940 = vmatpush.bf16.msra.mxu0 %v5484
  %8941 = vmatpush.bf16.msra.mxu0 %v5480
  %8942 = vmatpush.bf16.msra.mxu0 %v5476
  %8943 = vmatpush.bf16.msra.mxu0 %v5472
  %8944 = vmatpush.bf16.msra.mxu0 %v5468
  %8945 = vmatpush.bf16.msra.mxu0 %v5464
  %8946 = vmatpush.bf16.msra.mxu0 %v5460
  %8947 = vmatmul.bf16.gmra.mxu0 %v1327
  %v8948 = vpop.f32.mrf.mxu0
  %v8949 = vadd.f32 %v8930, %v8948
  %v8950 = vpop.f32.mrf.mxu0
  %v8951 = vadd.f32 %v8932, %v8950
  %8952 = vmatmul.bf16.gmra.mxu0 %v1359
  %v8953 = vpop.f32.mrf.mxu0
  %v8954 = vadd.f32 %v8935, %v8953
  %v8955 = vpop.f32.mrf.mxu0
  %v8956 = vadd.f32 %v8937, %v8955
  %8957 = vdwg.mxu0
  %8958 = vmatpush.bf16.msra.mxu0 %v5520
  %8959 = vmatpush.bf16.msra.mxu0 %v5516
  %8960 = vmatpush.bf16.msra.mxu0 %v5512
  %8961 = vmatpush.bf16.msra.mxu0 %v5508
  %8962 = vmatpush.bf16.msra.mxu0 %v5504
  %8963 = vmatpush.bf16.msra.mxu0 %v5500
  %8964 = vmatpush.bf16.msra.mxu0 %v5496
  %8965 = vmatpush.bf16.msra.mxu0 %v5492
  %8966 = vmatmul.bf16.gmra.mxu0 %v1328
  %v8967 = vpop.f32.mrf.mxu0
  %v8968 = vadd.f32 %v8949, %v8967
  %v8969 = vpop.f32.mrf.mxu0
  %v8970 = vadd.f32 %v8951, %v8969
  %8971 = vmatmul.bf16.gmra.mxu0 %v1360
  %v8972 = vpop.f32.mrf.mxu0
  %v8973 = vadd.f32 %v8954, %v8972
  %v8974 = vpop.f32.mrf.mxu0
  %v8975 = vadd.f32 %v8956, %v8974
  %8976 = vdwg.mxu0
  %v8977 = vadd.f32 %v7144, %v7146
  %v8978 = vadd.f32 %v8977, %v7149
  %v8979 = vadd.f32 %v8978, %v7151
  %v8980 = vrot.slane %v8979, 4
  %v8981 = vadd.f32 %v8979, %v8980
  %v8982 = vrot.slane %v8981, 2
  %v8983 = vadd.f32 %v8981, %v8982
  %v8984 = vrot.slane %v8983, 1
  %v8985 = vadd.f32 %v8983, %v8984
  %v8986 = vadd.f32 %v7752, %v7754
  %v8987 = vadd.f32 %v8986, %v7757
  %v8988 = vadd.f32 %v8987, %v7759
  %v8989 = vrot.slane %v8988, 4
  %v8990 = vadd.f32 %v8988, %v8989
  %v8991 = vrot.slane %v8990, 2
  %v8992 = vadd.f32 %v8990, %v8991
  %v8993 = vrot.slane %v8992, 1
  %v8994 = vadd.f32 %v8992, %v8993
  %v8995 = vadd.f32 %v8360, %v8362
  %v8996 = vadd.f32 %v8995, %v8365
  %v8997 = vadd.f32 %v8996, %v8367
  %v8998 = vrot.slane %v8997, 4
  %v8999 = vadd.f32 %v8997, %v8998
  %v9000 = vrot.slane %v8999, 2
  %v9001 = vadd.f32 %v8999, %v9000
  %v9002 = vrot.slane %v9001, 1
  %v9003 = vadd.f32 %v9001, %v9002
  %v9004 = vadd.f32 %v8968, %v8970
  %v9005 = vadd.f32 %v9004, %v8973
  %v9006 = vadd.f32 %v9005, %v8975
  %v9007 = vrot.slane %v9006, 4
  %v9008 = vadd.f32 %v9006, %v9007
  %v9009 = vrot.slane %v9008, 2
  %v9010 = vadd.f32 %v9008, %v9009
  %v9011 = vrot.slane %v9010, 1
  %v9012 = vadd.f32 %v9010, %v9011
  %v9013 = vmul.f32 %v8985, 0.055555556
  %v9014 = vmul.f32 %v8994, 0.055555556
  %v9015 = vmul.f32 %v9003, 0.055555556
  %v9016 = vmul.f32 %v9012, 0.055555556
  %v9017 = vsub.f32 %v7144, %v9013
  %v9018 = vsub.f32 %v7752, %v9014
  %v9019 = vsub.f32 %v8360, %v9015
  %v9020 = vsub.f32 %v8968, %v9016
  %v9021 = vsub.f32 %v7146, %v9013
  %v9022 = vsub.f32 %v7754, %v9014
  %v9023 = vsub.f32 %v8362, %v9015
  %v9024 = vsub.f32 %v8970, %v9016
  %v9025 = vsub.f32 %v7149, %v9013
  %v9026 = vsub.f32 %v7757, %v9014
  %v9027 = vsub.f32 %v8365, %v9015
  %v9028 = vsub.f32 %v8973, %v9016
  %v9029 = vsub.f32 %v7151, %v9013
  %v9030 = vsub.f32 %v7759, %v9014
  %v9031 = vsub.f32 %v8367, %v9015
  %v9032 = vsub.f32 %v8975, %v9016
  %v9033 = vlaneseq
  %v9034 = vshrl.u32 %v9033, 7
  %v9035 = vadd.s32 %v9034, 8
  %v9036 = vadd.s32 %v9034, 16
  %v9037 = vadd.s32 %v9034, 24
  %vm9038 = vcmp.lt.s32.totalorder %v9034, 18
  %vm9039 = vcmp.lt.s32.totalorder %v9035, 18
  %vm9040 = vcmp.lt.s32.totalorder %v9036, 18
  %vm9041 = vcmp.lt.s32.totalorder %v9037, 18
  %v9042 = vsel %vm9038, %v9017, 0.0
  %v9043 = vsel %vm9038, %v9018, 0.0
  %v9044 = vsel %vm9038, %v9019, 0.0
  %v9045 = vsel %vm9038, %v9020, 0.0
  %v9046 = vsel %vm9039, %v9021, 0.0
  %v9047 = vsel %vm9039, %v9022, 0.0
  %v9048 = vsel %vm9039, %v9023, 0.0
  %v9049 = vsel %vm9039, %v9024, 0.0
  %v9050 = vsel %vm9040, %v9025, 0.0
  %v9051 = vsel %vm9040, %v9026, 0.0
  %v9052 = vsel %vm9040, %v9027, 0.0
  %v9053 = vsel %vm9040, %v9028, 0.0
  %v9054 = vsel %vm9041, %v9029, 0.0
  %v9055 = vsel %vm9041, %v9030, 0.0
  %v9056 = vsel %vm9041, %v9031, 0.0
  %v9057 = vsel %vm9041, %v9032, 0.0
  %v9058 = vmul.f32 %v9042, %v9042
  %v9059 = vmul.f32 %v9043, %v9043
  %v9060 = vmul.f32 %v9044, %v9044
  %v9061 = vmul.f32 %v9045, %v9045
  %v9062 = vmul.f32 %v9046, %v9046
  %v9063 = vmul.f32 %v9047, %v9047
  %v9064 = vmul.f32 %v9048, %v9048
  %v9065 = vmul.f32 %v9049, %v9049
  %v9066 = vmul.f32 %v9050, %v9050
  %v9067 = vmul.f32 %v9051, %v9051
  %v9068 = vmul.f32 %v9052, %v9052
  %v9069 = vmul.f32 %v9053, %v9053
  %v9070 = vmul.f32 %v9054, %v9054
  %v9071 = vmul.f32 %v9055, %v9055
  %v9072 = vmul.f32 %v9056, %v9056
  %v9073 = vmul.f32 %v9057, %v9057
  %v9074 = vadd.f32 %v9058, %v9062
  %v9075 = vadd.f32 %v9074, %v9066
  %v9076 = vadd.f32 %v9075, %v9070
  %v9077 = vrot.slane %v9076, 4
  %v9078 = vadd.f32 %v9076, %v9077
  %v9079 = vrot.slane %v9078, 2
  %v9080 = vadd.f32 %v9078, %v9079
  %v9081 = vrot.slane %v9080, 1
  %v9082 = vadd.f32 %v9080, %v9081
  %v9083 = vadd.f32 %v9059, %v9063
  %v9084 = vadd.f32 %v9083, %v9067
  %v9085 = vadd.f32 %v9084, %v9071
  %v9086 = vrot.slane %v9085, 4
  %v9087 = vadd.f32 %v9085, %v9086
  %v9088 = vrot.slane %v9087, 2
  %v9089 = vadd.f32 %v9087, %v9088
  %v9090 = vrot.slane %v9089, 1
  %v9091 = vadd.f32 %v9089, %v9090
  %v9092 = vadd.f32 %v9060, %v9064
  %v9093 = vadd.f32 %v9092, %v9068
  %v9094 = vadd.f32 %v9093, %v9072
  %v9095 = vrot.slane %v9094, 4
  %v9096 = vadd.f32 %v9094, %v9095
  %v9097 = vrot.slane %v9096, 2
  %v9098 = vadd.f32 %v9096, %v9097
  %v9099 = vrot.slane %v9098, 1
  %v9100 = vadd.f32 %v9098, %v9099
  %v9101 = vadd.f32 %v9061, %v9065
  %v9102 = vadd.f32 %v9101, %v9069
  %v9103 = vadd.f32 %v9102, %v9073
  %v9104 = vrot.slane %v9103, 4
  %v9105 = vadd.f32 %v9103, %v9104
  %v9106 = vrot.slane %v9105, 2
  %v9107 = vadd.f32 %v9105, %v9106
  %v9108 = vrot.slane %v9107, 1
  %v9109 = vadd.f32 %v9107, %v9108
  %v9110 = vmul.f32 %v9082, 0.055555556
  %v9111 = vmul.f32 %v9091, 0.055555556
  %v9112 = vmul.f32 %v9100, 0.055555556
  %v9113 = vmul.f32 %v9109, 0.055555556
  %v9114 = vld [vmem:[%s2] sm:$0xf]
  %v9115 = vadd.f32 %v9110, 1e-05
  %v9116 = vadd.f32 %v9111, 1e-05
  %v9117 = vadd.f32 %v9112, 1e-05
  %v9118 = vadd.f32 %v9113, 1e-05
  %v9119 = vrsqrt.pop %v9115
  %v9120 = vmul.f32 %v9119, %v9115
  %v9121 = vmul.f32 %v9120, %v9119
  %v9122 = vmul.f32 0.5, %v9121
  %v9123 = vsub.f32 1.5, %v9122
  %v9124 = vmul.f32 %v9119, %v9123
  %vm9125 = vweird.f32 %v9115
  %vm9126 = vweird.f32 %v9119
  %vm9127 = vmor %vm9125, %vm9126
  %v9128 = vsel %vm9127, %v9119, %v9124
  %v9129 = vrsqrt.pop %v9116
  %v9130 = vmul.f32 %v9129, %v9116
  %v9131 = vmul.f32 %v9130, %v9129
  %v9132 = vmul.f32 0.5, %v9131
  %v9133 = vsub.f32 1.5, %v9132
  %v9134 = vmul.f32 %v9129, %v9133
  %vm9135 = vweird.f32 %v9116
  %vm9136 = vweird.f32 %v9129
  %vm9137 = vmor %vm9135, %vm9136
  %v9138 = vsel %vm9137, %v9129, %v9134
  %v9139 = vrsqrt.pop %v9117
  %v9140 = vmul.f32 %v9139, %v9117
  %v9141 = vmul.f32 %v9140, %v9139
  %v9142 = vmul.f32 0.5, %v9141
  %v9143 = vsub.f32 1.5, %v9142
  %v9144 = vmul.f32 %v9139, %v9143
  %vm9145 = vweird.f32 %v9117
  %vm9146 = vweird.f32 %v9139
  %vm9147 = vmor %vm9145, %vm9146
  %v9148 = vsel %vm9147, %v9139, %v9144
  %v9149 = vrsqrt.pop %v9118
  %v9150 = vmul.f32 %v9149, %v9118
  %v9151 = vmul.f32 %v9150, %v9149
  %v9152 = vmul.f32 0.5, %v9151
  %v9153 = vsub.f32 1.5, %v9152
  %v9154 = vmul.f32 %v9149, %v9153
  %vm9155 = vweird.f32 %v9118
  %vm9156 = vweird.f32 %v9149
  %vm9157 = vmor %vm9155, %vm9156
  %v9158 = vsel %vm9157, %v9149, %v9154
  %v9163 = vrot.slane %v9138, 7
  %v9164 = vrot.slane %v9148, 6
  %v9165 = vrot.slane %v9158, 5
  %vm9166 = vcmask 1040384
  %v9167 = vsel %vm9166, %v9128, %v9163
  %vm9168 = vcmask 1042434
  %v9169 = vsel %vm9168, %v9164, %v9165
  %vm9170 = vcmask 1041408
  %v9171 = vsel %vm9170, %v9167, %v9169
  %v9173 = vmul.f32 %v9114, %v9171
  %v9174 = vld [vmem:[%s3] sm:$0xf]
  %v9176 = vperm.slane %v9173, 0
  %v9177 = vperm.slane %v9173, 1
  %v9178 = vperm.slane %v9173, 2
  %v9179 = vperm.slane %v9173, 3
  %v9184 = vmul.f32 %v9013, %v9176
  %v9185 = vmul.f32 %v9014, %v9177
  %v9186 = vmul.f32 %v9015, %v9178
  %v9187 = vmul.f32 %v9016, %v9179
  %v9192 = vrot.slane %v9185, 7
  %v9193 = vrot.slane %v9186, 6
  %v9194 = vrot.slane %v9187, 5
  %v9195 = vsel %vm9166, %v9184, %v9192
  %v9196 = vsel %vm9168, %v9193, %v9194
  %v9197 = vsel %vm9170, %v9195, %v9196
  %v9199 = vsub.f32 %v9174, %v9197
  %v9200 = vmul.f32 %v7144, %v9176
  %v9201 = vmul.f32 %v7752, %v9177
  %v9202 = vmul.f32 %v8360, %v9178
  %v9203 = vmul.f32 %v8968, %v9179
  %v9204 = vmul.f32 %v7146, %v9176
  %v9205 = vmul.f32 %v7754, %v9177
  %v9206 = vmul.f32 %v8362, %v9178
  %v9207 = vmul.f32 %v8970, %v9179
  %v9208 = vmul.f32 %v7149, %v9176
  %v9209 = vmul.f32 %v7757, %v9177
  %v9210 = vmul.f32 %v8365, %v9178
  %v9211 = vmul.f32 %v8973, %v9179
  %v9212 = vmul.f32 %v7151, %v9176
  %v9213 = vmul.f32 %v7759, %v9177
  %v9214 = vmul.f32 %v8367, %v9178
  %v9215 = vmul.f32 %v8975, %v9179
  %v9217 = vperm.slane %v9199, 0
  %v9218 = vperm.slane %v9199, 1
  %v9219 = vperm.slane %v9199, 2
  %v9220 = vperm.slane %v9199, 3
  %v9225 = vadd.f32 %v9200, %v9217
  %v9226 = vadd.f32 %v9201, %v9218
  %v9227 = vadd.f32 %v9202, %v9219
  %v9228 = vadd.f32 %v9203, %v9220
  %v9229 = vadd.f32 %v9204, %v9217
  %v9230 = vadd.f32 %v9205, %v9218
  %v9231 = vadd.f32 %v9206, %v9219
  %v9232 = vadd.f32 %v9207, %v9220
  %v9233 = vadd.f32 %v9208, %v9217
  %v9234 = vadd.f32 %v9209, %v9218
  %v9235 = vadd.f32 %v9210, %v9219
  %v9236 = vadd.f32 %v9211, %v9220
  %v9237 = vadd.f32 %v9212, %v9217
  %v9238 = vadd.f32 %v9213, %v9218
  %v9239 = vadd.f32 %v9214, %v9219
  %v9240 = vadd.f32 %v9215, %v9220
  %vm9241 = vcmp.gt.f32.partialorder %v9225, 0.0
  %vm9242 = vcmp.gt.f32.partialorder %v9226, 0.0
  %vm9243 = vcmp.gt.f32.partialorder %v9227, 0.0
  %vm9244 = vcmp.gt.f32.partialorder %v9228, 0.0
  %vm9245 = vcmp.gt.f32.partialorder %v9229, 0.0
  %vm9246 = vcmp.gt.f32.partialorder %v9230, 0.0
  %vm9247 = vcmp.gt.f32.partialorder %v9231, 0.0
  %vm9248 = vcmp.gt.f32.partialorder %v9232, 0.0
  %vm9249 = vcmp.gt.f32.partialorder %v9233, 0.0
  %vm9250 = vcmp.gt.f32.partialorder %v9234, 0.0
  %vm9251 = vcmp.gt.f32.partialorder %v9235, 0.0
  %vm9252 = vcmp.gt.f32.partialorder %v9236, 0.0
  %vm9253 = vcmp.gt.f32.partialorder %v9237, 0.0
  %vm9254 = vcmp.gt.f32.partialorder %v9238, 0.0
  %vm9255 = vcmp.gt.f32.partialorder %v9239, 0.0
  %vm9256 = vcmp.gt.f32.partialorder %v9240, 0.0
  %v9257 = vmul.f32 %v9225, 0.2
  %v9258 = vmul.f32 %v9226, 0.2
  %v9259 = vmul.f32 %v9227, 0.2
  %v9260 = vmul.f32 %v9228, 0.2
  %v9261 = vmul.f32 %v9229, 0.2
  %v9262 = vmul.f32 %v9230, 0.2
  %v9263 = vmul.f32 %v9231, 0.2
  %v9264 = vmul.f32 %v9232, 0.2
  %v9265 = vmul.f32 %v9233, 0.2
  %v9266 = vmul.f32 %v9234, 0.2
  %v9267 = vmul.f32 %v9235, 0.2
  %v9268 = vmul.f32 %v9236, 0.2
  %v9269 = vmul.f32 %v9237, 0.2
  %v9270 = vmul.f32 %v9238, 0.2
  %v9271 = vmul.f32 %v9239, 0.2
  %v9272 = vmul.f32 %v9240, 0.2
  %v9273 = vsel %vm9241, %v9225, %v9257
  %v9274 = vsel %vm9242, %v9226, %v9258
  %v9275 = vsel %vm9243, %v9227, %v9259
  %v9276 = vsel %vm9244, %v9228, %v9260
  %v9277 = vsel %vm9245, %v9229, %v9261
  %v9278 = vsel %vm9246, %v9230, %v9262
  %v9279 = vsel %vm9247, %v9231, %v9263
  %v9280 = vsel %vm9248, %v9232, %v9264
  %v9281 = vsel %vm9249, %v9233, %v9265
  %v9282 = vsel %vm9250, %v9234, %v9266
  %v9283 = vsel %vm9251, %v9235, %v9267
  %v9284 = vsel %vm9252, %v9236, %v9268
  %v9285 = vsel %vm9253, %v9237, %v9269
  %v9286 = vsel %vm9254, %v9238, %v9270
  %v9287 = vsel %vm9255, %v9239, %v9271
  %v9288 = vsel %vm9256, %v9240, %v9272
  %v9289 = vpack.c.bf16 %v9274, %v9273
  %v9290 = vpack.c.bf16 %v9276, %v9275
  %v9291 = vpack.c.bf16 %v9278, %v9277
  %v9292 = vpack.c.bf16 %v9280, %v9279
  %v9293 = vpack.c.bf16 %v9282, %v9281
  %v9294 = vpack.c.bf16 %v9284, %v9283
  %v9295 = vpack.c.bf16 %v9286, %v9285
  %v9296 = vpack.c.bf16 %v9288, %v9287
  %9297 = vst [vmem:[%s4] sm:$0xff] %v9289
  %9298 = vst [vmem:[%s4 + $0x8] sm:$0xff] %v9290
  %9299 = vst [vmem:[%s4 + $0x10] sm:$0xff] %v9291
  %9300 = vst [vmem:[%s4 + $0x18] sm:$0xff] %v9292
  %9301 = vst [vmem:[%s4 + $0x20] sm:$0xff] %v9293
  %9302 = vst [vmem:[%s4 + $0x28] sm:$0xff] %v9294
  %9303 = vst [vmem:[%s4 + $0x30] sm:$0xff] %v9295
  %9304 = vst [vmem:[%s4 + $0x38] sm:$0xff] %v9296
  // Predicated region
  $region18: #{_lambda_.8} parent=0 // pred_check
    _
  $region19: #{_lambda_.8} parent=0 // pred_check_branch
    %9306 = sbr.rel (0) target = $region21
  $region20: #{_lambda_.8} parent=0 // pred_region
    _
  $region21: #{_lambda_.8} parent=0 // pred_fallthru
    _
  // Predicated region
  $region22: #{_lambda_.8} parent=0 // pred_check
    _
  $region23: #{_lambda_.8} parent=0 // pred_check_branch
    %9308 = sbr.rel (0) target = $region25
  $region24: #{_lambda_.8} parent=0 // pred_region
    _
  $region25: #{_lambda_.8} parent=0 // pred_fallthru
    _

</llo_original>
